<compile_context>
chip_gen: v7x
topology: tpu7x:2x2x1
jax: 0.10.0
libtpu: 0.0.40
codegen_flags: <defaults>
</compile_context>

<pallas_src>
import jax
import jax.numpy as jnp
from jax.experimental import pallas as pl
from jax.experimental.pallas import tpu as pltpu

NUM_CLASSES = 91          # from the module
BOX_IN_FEATURES = 1024    # roi_heads.box_predictor.cls_score.in_features
MASK_IN_CHANNELS = 256    # roi_heads.mask_predictor.conv5_mask.in_channels
MASK_HIDDEN = 256         # dim_reduced passed to MaskRCNNPredictor
MASK_ROI_SIZE = 14        # mask head ROI feature spatial size in Mask R-CNN

BOX_OUT_PAD = 512                    # 91 + 4*91 = 455 -> lane-dense 512
MASK_PLANE_PAD = 128                 # 91 -> 128 lanes per sub-pixel plane
MASK_OUT_PAD = 4 * MASK_PLANE_PAD    # 512-lane mask output slab
DECONV_FUSED = 4 * MASK_HIDDEN       # 1024-wide fused deconv weight


def _round_up(x, m):
    return (x + m - 1) // m * m


# ----------------------------------------------------------------------------
# Kernel 1: FastRCNNPredictor — ONE fused, lane-dense matmul
# ----------------------------------------------------------------------------
def box_predictor_kernel(x_ref, w_ref, b_ref, out_ref):
    out_ref[...] = (
        jnp.dot(x_ref[...], w_ref[...], preferred_element_type=jnp.float32)
        + b_ref[...])                                    # (TN, 512) f32


def box_predictor(box_feats, w_cls, b_cls, w_bbox, b_bbox):
    n = box_feats.shape[0]
    tn = min(256, _round_up(n, 8))                       # MXU-sized row tiles
    n_pad = _round_up(n, tn)

    x = box_feats.astype(jnp.bfloat16)
    if n_pad != n:
        x = jnp.pad(x, ((0, n_pad - n), (0, 0)))

    # Fuse both Linear weights along the output dim and pad to 512 lanes.
    w = jnp.concatenate([w_cls.T, w_bbox.T], axis=1)                 # (1024, 455)
    w = jnp.pad(w, ((0, 0), (0, BOX_OUT_PAD - w.shape[1]))).astype(jnp.bfloat16)
    b = jnp.concatenate([b_cls, b_bbox])
    b = jnp.pad(b, (0, BOX_OUT_PAD - b.shape[0])).reshape(1, BOX_OUT_PAD)

    flops = 2 * n_pad * BOX_IN_FEATURES * BOX_OUT_PAD
    bytes_accessed = (n_pad * BOX_IN_FEATURES * 2
                      + BOX_IN_FEATURES * BOX_OUT_PAD * 2
                      + BOX_OUT_PAD * 4
                      + n_pad * BOX_OUT_PAD * 4)

    out = pl.pallas_call(
        box_predictor_kernel,
        out_shape=jax.ShapeDtypeStruct((n_pad, BOX_OUT_PAD), jnp.float32),
        grid=(n_pad // tn,),
        in_specs=[
            pl.BlockSpec((tn, BOX_IN_FEATURES), lambda i: (i, 0)),
            pl.BlockSpec((BOX_IN_FEATURES, BOX_OUT_PAD), lambda i: (0, 0)),
            pl.BlockSpec((1, BOX_OUT_PAD), lambda i: (0, 0)),
        ],
        out_specs=pl.BlockSpec((tn, BOX_OUT_PAD), lambda i: (i, 0)),
        compiler_params=pltpu.CompilerParams(
            dimension_semantics=("parallel",)),
        cost_estimate=pl.CostEstimate(
            flops=flops, transcendentals=0, bytes_accessed=bytes_accessed),
    )(x, w, b)

    cls_scores = out[:n, :NUM_CLASSES]
    bbox_deltas = out[:n, NUM_CLASSES:NUM_CLASSES + 4 * NUM_CLASSES]
    return cls_scores, bbox_deltas


# ----------------------------------------------------------------------------
# Kernel 2: MaskRCNNPredictor
#   ConvTranspose2d(k=2,s=2) == 4 sub-pixel 1x1 matmuls, fused into ONE
#   (TM,256)x(256,1024) MXU matmul; ReLU; then the 1x1-conv logits on the
#   four 256-lane-aligned slices, written as one lane-dense (TM,512) slab.
# ----------------------------------------------------------------------------
def mask_predictor_kernel(x_ref, wd_ref, bd_ref, wl_ref, bl_ref, out_ref):
    y = jnp.dot(x_ref[...], wd_ref[...],
                preferred_element_type=jnp.float32) + bd_ref[...]   # (TM, 1024)
    y = jnp.maximum(y, 0.0).astype(jnp.bfloat16)                    # ReLU
    wl = wl_ref[...]                                                # (256, 128)
    bl = bl_ref[...]                                                # (1, 128)
    planes = []
    for p in range(4):                    # static 256-lane-aligned slices
        yp = y[:, p * MASK_HIDDEN:(p + 1) * MASK_HIDDEN]
        planes.append(jnp.dot(yp, wl,
                              preferred_element_type=jnp.float32) + bl)
    out_ref[...] = jnp.concatenate(planes, axis=1)                  # (TM, 512)


def mask_predictor(mask_feats_nchw, w_deconv, b_deconv, w_logits, b_logits):
    n, cin, h, w = mask_feats_nchw.shape
    assert cin == MASK_IN_CHANNELS and h == MASK_ROI_SIZE and w == MASK_ROI_SIZE
    m = n * h * w
    tm = min(512, _round_up(m, 8))
    m_pad = _round_up(m, tm)

    # TODO(synk): downstream consumers could take NHWC directly and skip these
    # two full-tensor layout transposes (pure HBM read+write passes in XLA).
    x = jnp.transpose(mask_feats_nchw, (0, 2, 3, 1)).reshape(m, cin)
    x = x.astype(jnp.bfloat16)
    if m_pad != m:
        x = jnp.pad(x, ((0, m_pad - m), (0, 0)))

    # ConvTranspose2d weight (Cin, Cout, 2, 2) -> fused (Cin, 4*Cout); sub-pixel
    # plane p = dy*2 + dx occupies columns [p*Cout, (p+1)*Cout).
    wd = jnp.transpose(w_deconv, (0, 2, 3, 1)).reshape(cin, DECONV_FUSED)
    wd = wd.astype(jnp.bfloat16)
    bd = jnp.tile(b_deconv, 4).reshape(1, DECONV_FUSED)             # f32

    # Conv2d 1x1 weight (91, 256, 1, 1) -> (256, 91) -> pad to 128 lanes.
    wl = w_logits.reshape(NUM_CLASSES, MASK_HIDDEN).T
    wl = jnp.pad(wl, ((0, 0), (0, MASK_PLANE_PAD - NUM_CLASSES)))
    wl = wl.astype(jnp.bfloat16)
    bl = jnp.pad(b_logits, (0, MASK_PLANE_PAD - NUM_CLASSES))
    bl = bl.reshape(1, MASK_PLANE_PAD)                              # f32

    flops = (2 * m_pad * MASK_IN_CHANNELS * DECONV_FUSED
             + 2 * m_pad * MASK_HIDDEN * MASK_OUT_PAD)
    bytes_accessed = (m_pad * MASK_IN_CHANNELS * 2
                      + MASK_IN_CHANNELS * DECONV_FUSED * 2
                      + MASK_HIDDEN * MASK_PLANE_PAD * 2
                      + DECONV_FUSED * 4 + MASK_PLANE_PAD * 4
                      + m_pad * MASK_OUT_PAD * 4)

    out = pl.pallas_call(
        mask_predictor_kernel,
        out_shape=jax.ShapeDtypeStruct((m_pad, MASK_OUT_PAD), jnp.float32),
        grid=(m_pad // tm,),
        in_specs=[
            pl.BlockSpec((tm, MASK_IN_CHANNELS), lambda i: (i, 0)),
            pl.BlockSpec((MASK_IN_CHANNELS, DECONV_FUSED), lambda i: (0, 0)),
            pl.BlockSpec((1, DECONV_FUSED), lambda i: (0, 0)),
            pl.BlockSpec((MASK_HIDDEN, MASK_PLANE_PAD), lambda i: (0, 0)),
            pl.BlockSpec((1, MASK_PLANE_PAD), lambda i: (0, 0)),
        ],
        out_specs=pl.BlockSpec((tm, MASK_OUT_PAD), lambda i: (i, 0)),
        compiler_params=pltpu.CompilerParams(
            dimension_semantics=("parallel",)),
        cost_estimate=pl.CostEstimate(
            flops=flops, transcendentals=0, bytes_accessed=bytes_accessed),
    )(x, wd, bd, wl, bl)

    # De-interleave the 4 sub-pixel planes and drop the class padding.
    z = out[:m].reshape(n, h, w, 2, 2, MASK_PLANE_PAD)[..., :NUM_CLASSES]
    z = jnp.transpose(z, (0, 1, 3, 2, 4, 5))          # (n, h, dy, w, dx, c)
    z = z.reshape(n, 2 * h, 2 * w, NUM_CLASSES)       # NHWC, 28x28
    return jnp.transpose(z, (0, 3, 1, 2))             # NCHW (n, 91, 28, 28)


# ----------------------------------------------------------------------------
# Parameter construction (deterministic, in-script)
# ----------------------------------------------------------------------------
def init_params(key):
    ks = jax.random.split(key, 6)
    s = 0.02
    return {
        "w_cls":    s * jax.random.normal(ks[0], (NUM_CLASSES, BOX_IN_FEATURES), jnp.float32),
        "b_cls":    jnp.zeros((NUM_CLASSES,), jnp.float32),
        "w_bbox":   s * jax.random.normal(ks[1], (4 * NUM_CLASSES, BOX_IN_FEATURES), jnp.float32),
        "b_bbox":   jnp.zeros((4 * NUM_CLASSES,), jnp.float32),
        "w_deconv": s * jax.random.normal(ks[2], (MASK_IN_CHANNELS, MASK_HIDDEN, 2, 2), jnp.float32),
        "b_deconv": jnp.zeros((MASK_HIDDEN,), jnp.float32),
        "w_logits": s * jax.random.normal(ks[3], (NUM_CLASSES, MASK_HIDDEN, 1, 1), jnp.float32),
        "b_logits": jnp.zeros((NUM_CLASSES,), jnp.float32),
    }


def instance_segmentation_heads(box_feats, mask_feats_nchw, params):
    cls_scores, bbox_deltas = box_predictor(
        box_feats, params["w_cls"], params["b_cls"],
        params["w_bbox"], params["b_bbox"])
    mask_logits = mask_predictor(
        mask_feats_nchw, params["w_deconv"], params["b_deconv"],
        params["w_logits"], params["b_logits"])
    return cls_scores, bbox_deltas, mask_logits


# ----------------------------------------------------------------------------
# Pure-JAX reference (fp32) for a numerical sanity check.
# ----------------------------------------------------------------------------
def _reference_heads(box_feats, mask_feats_nchw, p):
    cls_ref = box_feats @ p["w_cls"].T + p["b_cls"]
    box_ref = box_feats @ p["w_bbox"].T + p["b_bbox"]
    # ConvTranspose2d(k=2,s=2):
    t = jnp.einsum("nihw,ioab->nohawb", mask_feats_nchw, p["w_deconv"])
    n, o, h, _, w, _ = t.shape
    y = t.reshape(n, o, 2 * h, 2 * w) + p["b_deconv"][None, :, None, None]
    y = jnp.maximum(y, 0.0)
    wl = p["w_logits"][:, :, 0, 0]
    logits = jnp.einsum("nohw,co->nchw", y, wl) + p["b_logits"][None, :, None, None]
    return cls_ref, box_ref, logits


if __name__ == "__main__":
    key = jax.random.PRNGKey(0)
    k_img, k_box, k_mask, k_param = jax.random.split(key, 4)

    # Small synthetic inputs mirroring the module's usage.
    images = jax.random.uniform(k_img, (2, 3, 64, 64), jnp.float32)  # stand-in images
    n_roi = 8
    # TODO(synk): box/mask ROI features would come from backbone+RPN+RoIAlign;
    # here they are synthetic ROI-pooled features of the correct head shapes.
    box_feats = jax.random.normal(k_box, (n_roi, BOX_IN_FEATURES), jnp.float32)
    mask_feats = jax.random.normal(
        k_mask, (n_roi, MASK_IN_CHANNELS, MASK_ROI_SIZE, MASK_ROI_SIZE), jnp.float32)

    params = init_params(k_param)

    cls_scores, bbox_deltas, mask_logits = jax.block_until_ready(
        jax.jit(instance_segmentation_heads)(box_feats, mask_feats, params))

    assert cls_scores.shape == (n_roi, NUM_CLASSES)
    assert bbox_deltas.shape == (n_roi, 4 * NUM_CLASSES)
    assert mask_logits.shape == (n_roi, NUM_CLASSES, 2 * MASK_ROI_SIZE, 2 * MASK_ROI_SIZE)
    assert cls_scores.dtype == jnp.float32
    assert mask_logits.dtype == jnp.float32

    # Numerical sanity check vs fp32 reference (bf16 matmuls -> loose tolerance).
    c_ref, b_ref, m_ref = _reference_heads(box_feats, mask_feats, params)
    assert float(jnp.max(jnp.abs(cls_scores - c_ref))) < 0.1
    assert float(jnp.max(jnp.abs(bbox_deltas - b_ref))) < 0.1
    assert float(jnp.max(jnp.abs(mask_logits - m_ref))) < 0.1

    print("KERNEL_OK")
</pallas_src>

<mosaic_0001>
module attributes {stable_mosaic.version = 11 : i64} {
  func.func @box_predictor_kernel(%arg0: i32, %arg1: memref<8x1024xbf16, #tpu.memory_space<vmem>>, %arg2: memref<1024x512xbf16, #tpu.memory_space<vmem>>, %arg3: memref<1x512xf32, #tpu.memory_space<vmem>>, %arg4: memref<8x512xf32, #tpu.memory_space<vmem>>) attributes {dimension_semantics = [#tpu.dimension_semantics<parallel>], iteration_bounds = array<i64: 1>, scalar_prefetch = 0 : i64, scratch_operands = 0 : i64, tpu.core_type = #tpu.core_type<tc>, window_params = [{transform_indices = @transform_0, window_bounds = array<i64: 8, 1024>}, {pipeline_mode = #tpu.pipeline_mode<synchronous>, transform_indices = @transform_1, window_bounds = array<i64: 1024, 512>}, {pipeline_mode = #tpu.pipeline_mode<synchronous>, transform_indices = @transform_2, window_bounds = array<i64: 1, 512>}, {transform_indices = @transform_3, window_bounds = array<i64: 8, 512>}]} {
    %c0 = arith.constant 0 : index
    %c0_0 = arith.constant 0 : index
    %0 = vector.load %arg1[%c0, %c0_0] : memref<8x1024xbf16, #tpu.memory_space<vmem>>, vector<8x1024xbf16>
    %c0_1 = arith.constant 0 : index
    %c0_2 = arith.constant 0 : index
    %1 = vector.load %arg2[%c0_1, %c0_2] : memref<1024x512xbf16, #tpu.memory_space<vmem>>, vector<1024x512xbf16>
    %cst = arith.constant dense<0.000000e+00> : vector<8x512xf32>
    %2 = tpu.matmul %0, %1, %cst {dimension_numbers = #tpu.dot_dimension_numbers<[1], [0], [0], [1], [0, 0, 1, 1], [], []>} : vector<8x1024xbf16>, vector<1024x512xbf16>, vector<8x512xf32> -> vector<8x512xf32>
    %c0_3 = arith.constant 0 : index
    %c0_4 = arith.constant 0 : index
    %3 = vector.load %arg3[%c0_3, %c0_4] : memref<1x512xf32, #tpu.memory_space<vmem>>, vector<1x512xf32>
    %4 = vector.broadcast %3 : vector<1x512xf32> to vector<8x512xf32>
    %5 = arith.addf %2, %4 : vector<8x512xf32>
    %c0_5 = arith.constant 0 : index
    %c0_6 = arith.constant 0 : index
    %6 = vector.load %arg4[%c0_5, %c0_6] : memref<8x512xf32, #tpu.memory_space<vmem>>, vector<8x512xf32>
    tpu.vector_store %arg4[%c0_5, %c0_6], %5 {strides = array<i32>} : memref<8x512xf32, #tpu.memory_space<vmem>>, vector<8x512xf32>,
    return
  }
  func.func @transform_0(%arg0: i32) -> (i32, i32) {
    %c0_i32 = arith.constant 0 : i32
    %c0_i32_0 = arith.constant 0 : i32
    return %arg0, %c0_i32 : i32, i32
  }
  func.func @transform_1(%arg0: i32) -> (i32, i32) {
    %c0_i32 = arith.constant 0 : i32
    %c0_i32_0 = arith.constant 0 : i32
    %c0_i32_1 = arith.constant 0 : i32
    return %c0_i32, %c0_i32_0 : i32, i32
  }
  func.func @transform_2(%arg0: i32) -> (i32, i32) {
    %c0_i32 = arith.constant 0 : i32
    %c0_i32_0 = arith.constant 0 : i32
    %c0_i32_1 = arith.constant 0 : i32
    return %c0_i32, %c0_i32_0 : i32, i32
  }
  func.func @transform_3(%arg0: i32) -> (i32, i32) {
    %c0_i32 = arith.constant 0 : i32
    %c0_i32_0 = arith.constant 0 : i32
    return %arg0, %c0_i32 : i32, i32
  }
}

module attributes {stable_mosaic.version = 11 : i64} {
  func.func @mask_predictor_kernel(%arg0: i32, %arg1: memref<512x256xbf16, #tpu.memory_space<vmem>>, %arg2: memref<256x1024xbf16, #tpu.memory_space<vmem>>, %arg3: memref<1x1024xf32, #tpu.memory_space<vmem>>, %arg4: memref<256x128xbf16, #tpu.memory_space<vmem>>, %arg5: memref<1x128xf32, #tpu.memory_space<vmem>>, %arg6: memref<512x512xf32, #tpu.memory_space<vmem>>) attributes {dimension_semantics = [#tpu.dimension_semantics<parallel>], iteration_bounds = array<i64: 4>, scalar_prefetch = 0 : i64, scratch_operands = 0 : i64, tpu.core_type = #tpu.core_type<tc>, window_params = [{transform_indices = @transform_0, window_bounds = array<i64: 512, 256>}, {pipeline_mode = #tpu.pipeline_mode<synchronous>, transform_indices = @transform_1, window_bounds = array<i64: 256, 1024>}, {pipeline_mode = #tpu.pipeline_mode<synchronous>, transform_indices = @transform_2, window_bounds = array<i64: 1, 1024>}, {pipeline_mode = #tpu.pipeline_mode<synchronous>, transform_indices = @transform_3, window_bounds = array<i64: 256, 128>}, {pipeline_mode = #tpu.pipeline_mode<synchronous>, transform_indices = @transform_4, window_bounds = array<i64: 1, 128>}, {transform_indices = @transform_5, window_bounds = array<i64: 512, 512>}]} {
    %c0 = arith.constant 0 : index
    %c0_0 = arith.constant 0 : index
    %0 = vector.load %arg1[%c0, %c0_0] : memref<512x256xbf16, #tpu.memory_space<vmem>>, vector<512x256xbf16>
    %c0_1 = arith.constant 0 : index
    %c0_2 = arith.constant 0 : index
    %1 = vector.load %arg2[%c0_1, %c0_2] : memref<256x1024xbf16, #tpu.memory_space<vmem>>, vector<256x1024xbf16>
    %cst = arith.constant dense<0.000000e+00> : vector<512x1024xf32>
    %2 = tpu.matmul %0, %1, %cst {dimension_numbers = #tpu.dot_dimension_numbers<[1], [0], [0], [1], [0, 0, 1, 1], [], []>} : vector<512x256xbf16>, vector<256x1024xbf16>, vector<512x1024xf32> -> vector<512x1024xf32>
    %c0_3 = arith.constant 0 : index
    %c0_4 = arith.constant 0 : index
    %3 = vector.load %arg3[%c0_3, %c0_4] : memref<1x1024xf32, #tpu.memory_space<vmem>>, vector<1x1024xf32>
    %4 = vector.broadcast %3 : vector<1x1024xf32> to vector<512x1024xf32>
    %5 = arith.addf %2, %4 : vector<512x1024xf32>
    %cst_5 = arith.constant 0.000000e+00 : f32
    %6 = vector.broadcast %cst_5 : f32 to vector<512x1024xf32>
    %7 = arith.maximumf %5, %6 : vector<512x1024xf32>
    %8 = arith.truncf %7 : vector<512x1024xf32> to vector<512x1024xbf16>
    %c0_6 = arith.constant 0 : index
    %c0_7 = arith.constant 0 : index
    %9 = vector.load %arg4[%c0_6, %c0_7] : memref<256x128xbf16, #tpu.memory_space<vmem>>, vector<256x128xbf16>
    %c0_8 = arith.constant 0 : index
    %c0_9 = arith.constant 0 : index
    %10 = vector.load %arg5[%c0_8, %c0_9] : memref<1x128xf32, #tpu.memory_space<vmem>>, vector<1x128xf32>
    %11 = vector.extract_strided_slice %8 {offsets = [0, 0], sizes = [512, 256], strides = [1, 1]} : vector<512x1024xbf16> to vector<512x256xbf16>
    %cst_10 = arith.constant dense<0.000000e+00> : vector<512x128xf32>
    %12 = tpu.matmul %11, %9, %cst_10 {dimension_numbers = #tpu.dot_dimension_numbers<[1], [0], [0], [1], [0, 0, 1, 1], [], []>} : vector<512x256xbf16>, vector<256x128xbf16>, vector<512x128xf32> -> vector<512x128xf32>
    %13 = vector.broadcast %10 : vector<1x128xf32> to vector<512x128xf32>
    %14 = arith.addf %12, %13 : vector<512x128xf32>
    %15 = vector.extract_strided_slice %8 {offsets = [0, 256], sizes = [512, 256], strides = [1, 1]} : vector<512x1024xbf16> to vector<512x256xbf16>
    %cst_11 = arith.constant dense<0.000000e+00> : vector<512x128xf32>
    %16 = tpu.matmul %15, %9, %cst_11 {dimension_numbers = #tpu.dot_dimension_numbers<[1], [0], [0], [1], [0, 0, 1, 1], [], []>} : vector<512x256xbf16>, vector<256x128xbf16>, vector<512x128xf32> -> vector<512x128xf32>
    %17 = vector.broadcast %10 : vector<1x128xf32> to vector<512x128xf32>
    %18 = arith.addf %16, %17 : vector<512x128xf32>
    %19 = vector.extract_strided_slice %8 {offsets = [0, 512], sizes = [512, 256], strides = [1, 1]} : vector<512x1024xbf16> to vector<512x256xbf16>
    %cst_12 = arith.constant dense<0.000000e+00> : vector<512x128xf32>
    %20 = tpu.matmul %19, %9, %cst_12 {dimension_numbers = #tpu.dot_dimension_numbers<[1], [0], [0], [1], [0, 0, 1, 1], [], []>} : vector<512x256xbf16>, vector<256x128xbf16>, vector<512x128xf32> -> vector<512x128xf32>
    %21 = vector.broadcast %10 : vector<1x128xf32> to vector<512x128xf32>
    %22 = arith.addf %20, %21 : vector<512x128xf32>
    %23 = vector.extract_strided_slice %8 {offsets = [0, 768], sizes = [512, 256], strides = [1, 1]} : vector<512x1024xbf16> to vector<512x256xbf16>
    %cst_13 = arith.constant dense<0.000000e+00> : vector<512x128xf32>
    %24 = tpu.matmul %23, %9, %cst_13 {dimension_numbers = #tpu.dot_dimension_numbers<[1], [0], [0], [1], [0, 0, 1, 1], [], []>} : vector<512x256xbf16>, vector<256x128xbf16>, vector<512x128xf32> -> vector<512x128xf32>
    %25 = vector.broadcast %10 : vector<1x128xf32> to vector<512x128xf32>
    %26 = arith.addf %24, %25 : vector<512x128xf32>
    %27 = tpu.concatenate %14, %18, %22, %26 in 1 : vector<512x128xf32>, vector<512x128xf32>, vector<512x128xf32>, vector<512x128xf32> -> vector<512x512xf32>
    %c0_14 = arith.constant 0 : index
    %c0_15 = arith.constant 0 : index
    %28 = vector.load %arg6[%c0_14, %c0_15] : memref<512x512xf32, #tpu.memory_space<vmem>>, vector<512x512xf32>
    tpu.vector_store %arg6[%c0_14, %c0_15], %27 {strides = array<i32>} : memref<512x512xf32, #tpu.memory_space<vmem>>, vector<512x512xf32>,
    return
  }
  func.func @transform_0(%arg0: i32) -> (i32, i32) {
    %c0_i32 = arith.constant 0 : i32
    %c0_i32_0 = arith.constant 0 : i32
    return %arg0, %c0_i32 : i32, i32
  }
  func.func @transform_1(%arg0: i32) -> (i32, i32) {
    %c0_i32 = arith.constant 0 : i32
    %c0_i32_0 = arith.constant 0 : i32
    %c0_i32_1 = arith.constant 0 : i32
    return %c0_i32, %c0_i32_0 : i32, i32
  }
  func.func @transform_2(%arg0: i32) -> (i32, i32) {
    %c0_i32 = arith.constant 0 : i32
    %c0_i32_0 = arith.constant 0 : i32
    %c0_i32_1 = arith.constant 0 : i32
    return %c0_i32, %c0_i32_0 : i32, i32
  }
  func.func @transform_3(%arg0: i32) -> (i32, i32) {
    %c0_i32 = arith.constant 0 : i32
    %c0_i32_0 = arith.constant 0 : i32
    %c0_i32_1 = arith.constant 0 : i32
    return %c0_i32, %c0_i32_0 : i32, i32
  }
  func.func @transform_4(%arg0: i32) -> (i32, i32) {
    %c0_i32 = arith.constant 0 : i32
    %c0_i32_0 = arith.constant 0 : i32
    %c0_i32_1 = arith.constant 0 : i32
    return %c0_i32, %c0_i32_0 : i32, i32
  }
  func.func @transform_5(%arg0: i32) -> (i32, i32) {
    %c0_i32 = arith.constant 0 : i32
    %c0_i32_0 = arith.constant 0 : i32
    return %arg0, %c0_i32 : i32, i32
  }
}

</mosaic_0001>

<llo_original>
// kernel: instance_segmentation_heads.2
$region0: #{instance_segmentation_heads.2}
  #allocation0 [shape = 'u32[]', space=smem, size = 0x4, offset = 0x4, fixed_abs, tag = 'smem constant byte address 0x4 - core index']
  #allocation1 [shape = 'u32[144,128]{1,0:T(1,128)}', space=vmem, size = 0x12000, scoped, tag = 'internal scratch']
  %s0 = inlined_call_operand.vmem [shape: bf16[8,1024], index: 0, kind: input, shape index: {}]
  %s1 = inlined_call_operand.vmem [shape: bf16[1024,512], index: 1, kind: input, shape index: {}]
  %s2 = inlined_call_operand.vmem [shape: f32[1,512], index: 2, kind: input, shape index: {}]
  %s3 = inlined_call_operand.vmem [shape: f32[8,512], index: 3, kind: output, shape index: {}]
  %s4 = sld [smem:[#allocation0]]
  $region22: #{instance_segmentation_heads.2} parent=0
    _
  %s6 = ssub.s32 1, %s4
  %s7 = scalar_select 0, %s6, %s4
  // Predicated region
  $region2: #{instance_segmentation_heads.2} parent=0 // pred_check
    _
  $region3: #{instance_segmentation_heads.2} parent=0 // pred_check_branch
    %9 = sbr.rel (0) target = $region5
  $region4: #{instance_segmentation_heads.2} parent=0 // pred_region
    _
  $region5: #{instance_segmentation_heads.2} parent=0 // pred_fallthru
    _
  // Predicated region
  $region6: #{instance_segmentation_heads.2} parent=0 // pred_check
    _
  $region7: #{instance_segmentation_heads.2} parent=0 // pred_check_branch
    %11 = sbr.rel (0) target = $region9
  $region8: #{instance_segmentation_heads.2} parent=0 // pred_region
    _
  $region9: #{instance_segmentation_heads.2} parent=0 // pred_fallthru
    _
  // Predicated region
  $region10: #{instance_segmentation_heads.2} parent=0 // pred_check
    _
  $region11: #{instance_segmentation_heads.2} parent=0 // pred_check_branch
    %13 = sbr.rel (0) target = $region13
  $region12: #{instance_segmentation_heads.2} parent=0 // pred_region
    _
  $region13: #{instance_segmentation_heads.2} parent=0 // pred_fallthru
    _
  %v14 = vld [vmem:[%s0] sm:$0xff]
  %v15 = vld [vmem:[%s0 + $0x8] sm:$0xff]
  %v16 = vld [vmem:[%s0 + $0x10] sm:$0xff]
  %v17 = vld [vmem:[%s0 + $0x18] sm:$0xff]
  %v18 = vld [vmem:[%s1] sm:$0xff]
  %v19 = vld [vmem:[%s1 + $0x8] sm:$0xff]
  %v20 = vld [vmem:[%s1 + $0x10] sm:$0xff]
  %v21 = vld [vmem:[%s1 + $0x18] sm:$0xff]
  %v22 = vld [vmem:[%s1 + $0x20] sm:$0xff]
  %v23 = vld [vmem:[%s1 + $0x28] sm:$0xff]
  %v24 = vld [vmem:[%s1 + $0x30] sm:$0xff]
  %v25 = vld [vmem:[%s1 + $0x38] sm:$0xff]
  %v26 = vld [vmem:[%s1 + $0x40] sm:$0xff]
  %v27 = vld [vmem:[%s1 + $0x48] sm:$0xff]
  %v28 = vld [vmem:[%s1 + $0x50] sm:$0xff]
  %v29 = vld [vmem:[%s1 + $0x58] sm:$0xff]
  %v30 = vld [vmem:[%s1 + $0x60] sm:$0xff]
  %v31 = vld [vmem:[%s1 + $0x68] sm:$0xff]
  %v32 = vld [vmem:[%s1 + $0x70] sm:$0xff]
  %v33 = vld [vmem:[%s1 + $0x78] sm:$0xff]
  %v34 = vld [vmem:[%s1 + $0x80] sm:$0xff]
  %v35 = vld [vmem:[%s1 + $0x88] sm:$0xff]
  %v36 = vld [vmem:[%s1 + $0x90] sm:$0xff]
  %v37 = vld [vmem:[%s1 + $0x98] sm:$0xff]
  %v38 = vld [vmem:[%s1 + $0xa0] sm:$0xff]
  %v39 = vld [vmem:[%s1 + $0xa8] sm:$0xff]
  %v40 = vld [vmem:[%s1 + $0xb0] sm:$0xff]
  %v41 = vld [vmem:[%s1 + $0xb8] sm:$0xff]
  %v42 = vld [vmem:[%s1 + $0xc0] sm:$0xff]
  %v43 = vld [vmem:[%s1 + $0xc8] sm:$0xff]
  %v44 = vld [vmem:[%s1 + $0xd0] sm:$0xff]
  %v45 = vld [vmem:[%s1 + $0xd8] sm:$0xff]
  %v46 = vld [vmem:[%s1 + $0xe0] sm:$0xff]
  %v47 = vld [vmem:[%s1 + $0xe8] sm:$0xff]
  %v48 = vld [vmem:[%s1 + $0xf0] sm:$0xff]
  %v49 = vld [vmem:[%s1 + $0xf8] sm:$0xff]
  %v50 = vld [vmem:[%s1 + $0x100] sm:$0xff]
  %v51 = vld [vmem:[%s1 + $0x108] sm:$0xff]
  %v52 = vld [vmem:[%s1 + $0x110] sm:$0xff]
  %v53 = vld [vmem:[%s1 + $0x118] sm:$0xff]
  %v54 = vld [vmem:[%s1 + $0x120] sm:$0xff]
  %v55 = vld [vmem:[%s1 + $0x128] sm:$0xff]
  %v56 = vld [vmem:[%s1 + $0x130] sm:$0xff]
  %v57 = vld [vmem:[%s1 + $0x138] sm:$0xff]
  %v58 = vld [vmem:[%s1 + $0x140] sm:$0xff]
  %v59 = vld [vmem:[%s1 + $0x148] sm:$0xff]
  %v60 = vld [vmem:[%s1 + $0x150] sm:$0xff]
  %v61 = vld [vmem:[%s1 + $0x158] sm:$0xff]
  %v62 = vld [vmem:[%s1 + $0x160] sm:$0xff]
  %v63 = vld [vmem:[%s1 + $0x168] sm:$0xff]
  %v64 = vld [vmem:[%s1 + $0x170] sm:$0xff]
  %v65 = vld [vmem:[%s1 + $0x178] sm:$0xff]
  %v66 = vld [vmem:[%s1 + $0x180] sm:$0xff]
  %v67 = vld [vmem:[%s1 + $0x188] sm:$0xff]
  %v68 = vld [vmem:[%s1 + $0x190] sm:$0xff]
  %v69 = vld [vmem:[%s1 + $0x198] sm:$0xff]
  %v70 = vld [vmem:[%s1 + $0x1a0] sm:$0xff]
  %v71 = vld [vmem:[%s1 + $0x1a8] sm:$0xff]
  %v72 = vld [vmem:[%s1 + $0x1b0] sm:$0xff]
  %v73 = vld [vmem:[%s1 + $0x1b8] sm:$0xff]
  %v74 = vld [vmem:[%s1 + $0x1c0] sm:$0xff]
  %v75 = vld [vmem:[%s1 + $0x1c8] sm:$0xff]
  %v76 = vld [vmem:[%s1 + $0x1d0] sm:$0xff]
  %v77 = vld [vmem:[%s1 + $0x1d8] sm:$0xff]
  %v78 = vld [vmem:[%s1 + $0x1e0] sm:$0xff]
  %v79 = vld [vmem:[%s1 + $0x1e8] sm:$0xff]
  %v80 = vld [vmem:[%s1 + $0x1f0] sm:$0xff]
  %v81 = vld [vmem:[%s1 + $0x1f8] sm:$0xff]
  %v82 = vld [vmem:[%s1 + $0x200] sm:$0xff]
  %v83 = vld [vmem:[%s1 + $0x208] sm:$0xff]
  %v84 = vld [vmem:[%s1 + $0x210] sm:$0xff]
  %v85 = vld [vmem:[%s1 + $0x218] sm:$0xff]
  %v86 = vld [vmem:[%s1 + $0x220] sm:$0xff]
  %v87 = vld [vmem:[%s1 + $0x228] sm:$0xff]
  %v88 = vld [vmem:[%s1 + $0x230] sm:$0xff]
  %v89 = vld [vmem:[%s1 + $0x238] sm:$0xff]
  %v90 = vld [vmem:[%s1 + $0x240] sm:$0xff]
  %v91 = vld [vmem:[%s1 + $0x248] sm:$0xff]
  %v92 = vld [vmem:[%s1 + $0x250] sm:$0xff]
  %v93 = vld [vmem:[%s1 + $0x258] sm:$0xff]
  %v94 = vld [vmem:[%s1 + $0x260] sm:$0xff]
  %v95 = vld [vmem:[%s1 + $0x268] sm:$0xff]
  %v96 = vld [vmem:[%s1 + $0x270] sm:$0xff]
  %v97 = vld [vmem:[%s1 + $0x278] sm:$0xff]
  %v98 = vld [vmem:[%s1 + $0x280] sm:$0xff]
  %v99 = vld [vmem:[%s1 + $0x288] sm:$0xff]
  %v100 = vld [vmem:[%s1 + $0x290] sm:$0xff]
  %v101 = vld [vmem:[%s1 + $0x298] sm:$0xff]
  %v102 = vld [vmem:[%s1 + $0x2a0] sm:$0xff]
  %v103 = vld [vmem:[%s1 + $0x2a8] sm:$0xff]
  %v104 = vld [vmem:[%s1 + $0x2b0] sm:$0xff]
  %v105 = vld [vmem:[%s1 + $0x2b8] sm:$0xff]
  %v106 = vld [vmem:[%s1 + $0x2c0] sm:$0xff]
  %v107 = vld [vmem:[%s1 + $0x2c8] sm:$0xff]
  %v108 = vld [vmem:[%s1 + $0x2d0] sm:$0xff]
  %v109 = vld [vmem:[%s1 + $0x2d8] sm:$0xff]
  %v110 = vld [vmem:[%s1 + $0x2e0] sm:$0xff]
  %v111 = vld [vmem:[%s1 + $0x2e8] sm:$0xff]
  %v112 = vld [vmem:[%s1 + $0x2f0] sm:$0xff]
  %v113 = vld [vmem:[%s1 + $0x2f8] sm:$0xff]
  %v114 = vld [vmem:[%s1 + $0x300] sm:$0xff]
  %v115 = vld [vmem:[%s1 + $0x308] sm:$0xff]
  %v116 = vld [vmem:[%s1 + $0x310] sm:$0xff]
  %v117 = vld [vmem:[%s1 + $0x318] sm:$0xff]
  %v118 = vld [vmem:[%s1 + $0x320] sm:$0xff]
  %v119 = vld [vmem:[%s1 + $0x328] sm:$0xff]
  %v120 = vld [vmem:[%s1 + $0x330] sm:$0xff]
  %v121 = vld [vmem:[%s1 + $0x338] sm:$0xff]
  %v122 = vld [vmem:[%s1 + $0x340] sm:$0xff]
  %v123 = vld [vmem:[%s1 + $0x348] sm:$0xff]
  %v124 = vld [vmem:[%s1 + $0x350] sm:$0xff]
  %v125 = vld [vmem:[%s1 + $0x358] sm:$0xff]
  %v126 = vld [vmem:[%s1 + $0x360] sm:$0xff]
  %v127 = vld [vmem:[%s1 + $0x368] sm:$0xff]
  %v128 = vld [vmem:[%s1 + $0x370] sm:$0xff]
  %v129 = vld [vmem:[%s1 + $0x378] sm:$0xff]
  %v130 = vld [vmem:[%s1 + $0x380] sm:$0xff]
  %v131 = vld [vmem:[%s1 + $0x388] sm:$0xff]
  %v132 = vld [vmem:[%s1 + $0x390] sm:$0xff]
  %v133 = vld [vmem:[%s1 + $0x398] sm:$0xff]
  %v134 = vld [vmem:[%s1 + $0x3a0] sm:$0xff]
  %v135 = vld [vmem:[%s1 + $0x3a8] sm:$0xff]
  %v136 = vld [vmem:[%s1 + $0x3b0] sm:$0xff]
  %v137 = vld [vmem:[%s1 + $0x3b8] sm:$0xff]
  %v138 = vld [vmem:[%s1 + $0x3c0] sm:$0xff]
  %v139 = vld [vmem:[%s1 + $0x3c8] sm:$0xff]
  %v140 = vld [vmem:[%s1 + $0x3d0] sm:$0xff]
  %v141 = vld [vmem:[%s1 + $0x3d8] sm:$0xff]
  %v142 = vld [vmem:[%s1 + $0x3e0] sm:$0xff]
  %v143 = vld [vmem:[%s1 + $0x3e8] sm:$0xff]
  %v144 = vld [vmem:[%s1 + $0x3f0] sm:$0xff]
  %v145 = vld [vmem:[%s1 + $0x3f8] sm:$0xff]
  %v146 = vld [vmem:[%s1 + $0x400] sm:$0xff]
  %v147 = vld [vmem:[%s1 + $0x408] sm:$0xff]
  %v148 = vld [vmem:[%s1 + $0x410] sm:$0xff]
  %v149 = vld [vmem:[%s1 + $0x418] sm:$0xff]
  %v150 = vld [vmem:[%s1 + $0x420] sm:$0xff]
  %v151 = vld [vmem:[%s1 + $0x428] sm:$0xff]
  %v152 = vld [vmem:[%s1 + $0x430] sm:$0xff]
  %v153 = vld [vmem:[%s1 + $0x438] sm:$0xff]
  %v154 = vld [vmem:[%s1 + $0x440] sm:$0xff]
  %v155 = vld [vmem:[%s1 + $0x448] sm:$0xff]
  %v156 = vld [vmem:[%s1 + $0x450] sm:$0xff]
  %v157 = vld [vmem:[%s1 + $0x458] sm:$0xff]
  %v158 = vld [vmem:[%s1 + $0x460] sm:$0xff]
  %v159 = vld [vmem:[%s1 + $0x468] sm:$0xff]
  %v160 = vld [vmem:[%s1 + $0x470] sm:$0xff]
  %v161 = vld [vmem:[%s1 + $0x478] sm:$0xff]
  %v162 = vld [vmem:[%s1 + $0x480] sm:$0xff]
  %v163 = vld [vmem:[%s1 + $0x488] sm:$0xff]
  %v164 = vld [vmem:[%s1 + $0x490] sm:$0xff]
  %v165 = vld [vmem:[%s1 + $0x498] sm:$0xff]
  %v166 = vld [vmem:[%s1 + $0x4a0] sm:$0xff]
  %v167 = vld [vmem:[%s1 + $0x4a8] sm:$0xff]
  %v168 = vld [vmem:[%s1 + $0x4b0] sm:$0xff]
  %v169 = vld [vmem:[%s1 + $0x4b8] sm:$0xff]
  %v170 = vld [vmem:[%s1 + $0x4c0] sm:$0xff]
  %v171 = vld [vmem:[%s1 + $0x4c8] sm:$0xff]
  %v172 = vld [vmem:[%s1 + $0x4d0] sm:$0xff]
  %v173 = vld [vmem:[%s1 + $0x4d8] sm:$0xff]
  %v174 = vld [vmem:[%s1 + $0x4e0] sm:$0xff]
  %v175 = vld [vmem:[%s1 + $0x4e8] sm:$0xff]
  %v176 = vld [vmem:[%s1 + $0x4f0] sm:$0xff]
  %v177 = vld [vmem:[%s1 + $0x4f8] sm:$0xff]
  %v178 = vld [vmem:[%s1 + $0x500] sm:$0xff]
  %v179 = vld [vmem:[%s1 + $0x508] sm:$0xff]
  %v180 = vld [vmem:[%s1 + $0x510] sm:$0xff]
  %v181 = vld [vmem:[%s1 + $0x518] sm:$0xff]
  %v182 = vld [vmem:[%s1 + $0x520] sm:$0xff]
  %v183 = vld [vmem:[%s1 + $0x528] sm:$0xff]
  %v184 = vld [vmem:[%s1 + $0x530] sm:$0xff]
  %v185 = vld [vmem:[%s1 + $0x538] sm:$0xff]
  %v186 = vld [vmem:[%s1 + $0x540] sm:$0xff]
  %v187 = vld [vmem:[%s1 + $0x548] sm:$0xff]
  %v188 = vld [vmem:[%s1 + $0x550] sm:$0xff]
  %v189 = vld [vmem:[%s1 + $0x558] sm:$0xff]
  %v190 = vld [vmem:[%s1 + $0x560] sm:$0xff]
  %v191 = vld [vmem:[%s1 + $0x568] sm:$0xff]
  %v192 = vld [vmem:[%s1 + $0x570] sm:$0xff]
  %v193 = vld [vmem:[%s1 + $0x578] sm:$0xff]
  %v194 = vld [vmem:[%s1 + $0x580] sm:$0xff]
  %v195 = vld [vmem:[%s1 + $0x588] sm:$0xff]
  %v196 = vld [vmem:[%s1 + $0x590] sm:$0xff]
  %v197 = vld [vmem:[%s1 + $0x598] sm:$0xff]
  %v198 = vld [vmem:[%s1 + $0x5a0] sm:$0xff]
  %v199 = vld [vmem:[%s1 + $0x5a8] sm:$0xff]
  %v200 = vld [vmem:[%s1 + $0x5b0] sm:$0xff]
  %v201 = vld [vmem:[%s1 + $0x5b8] sm:$0xff]
  %v202 = vld [vmem:[%s1 + $0x5c0] sm:$0xff]
  %v203 = vld [vmem:[%s1 + $0x5c8] sm:$0xff]
  %v204 = vld [vmem:[%s1 + $0x5d0] sm:$0xff]
  %v205 = vld [vmem:[%s1 + $0x5d8] sm:$0xff]
  %v206 = vld [vmem:[%s1 + $0x5e0] sm:$0xff]
  %v207 = vld [vmem:[%s1 + $0x5e8] sm:$0xff]
  %v208 = vld [vmem:[%s1 + $0x5f0] sm:$0xff]
  %v209 = vld [vmem:[%s1 + $0x5f8] sm:$0xff]
  %v210 = vld [vmem:[%s1 + $0x600] sm:$0xff]
  %v211 = vld [vmem:[%s1 + $0x608] sm:$0xff]
  %v212 = vld [vmem:[%s1 + $0x610] sm:$0xff]
  %v213 = vld [vmem:[%s1 + $0x618] sm:$0xff]
  %v214 = vld [vmem:[%s1 + $0x620] sm:$0xff]
  %v215 = vld [vmem:[%s1 + $0x628] sm:$0xff]
  %v216 = vld [vmem:[%s1 + $0x630] sm:$0xff]
  %v217 = vld [vmem:[%s1 + $0x638] sm:$0xff]
  %v218 = vld [vmem:[%s1 + $0x640] sm:$0xff]
  %v219 = vld [vmem:[%s1 + $0x648] sm:$0xff]
  %v220 = vld [vmem:[%s1 + $0x650] sm:$0xff]
  %v221 = vld [vmem:[%s1 + $0x658] sm:$0xff]
  %v222 = vld [vmem:[%s1 + $0x660] sm:$0xff]
  %v223 = vld [vmem:[%s1 + $0x668] sm:$0xff]
  %v224 = vld [vmem:[%s1 + $0x670] sm:$0xff]
  %v225 = vld [vmem:[%s1 + $0x678] sm:$0xff]
  %v226 = vld [vmem:[%s1 + $0x680] sm:$0xff]
  %v227 = vld [vmem:[%s1 + $0x688] sm:$0xff]
  %v228 = vld [vmem:[%s1 + $0x690] sm:$0xff]
  %v229 = vld [vmem:[%s1 + $0x698] sm:$0xff]
  %v230 = vld [vmem:[%s1 + $0x6a0] sm:$0xff]
  %v231 = vld [vmem:[%s1 + $0x6a8] sm:$0xff]
  %v232 = vld [vmem:[%s1 + $0x6b0] sm:$0xff]
  %v233 = vld [vmem:[%s1 + $0x6b8] sm:$0xff]
  %v234 = vld [vmem:[%s1 + $0x6c0] sm:$0xff]
  %v235 = vld [vmem:[%s1 + $0x6c8] sm:$0xff]
  %v236 = vld [vmem:[%s1 + $0x6d0] sm:$0xff]
  %v237 = vld [vmem:[%s1 + $0x6d8] sm:$0xff]
  %v238 = vld [vmem:[%s1 + $0x6e0] sm:$0xff]
  %v239 = vld [vmem:[%s1 + $0x6e8] sm:$0xff]
  %v240 = vld [vmem:[%s1 + $0x6f0] sm:$0xff]
  %v241 = vld [vmem:[%s1 + $0x6f8] sm:$0xff]
  %v242 = vld [vmem:[%s1 + $0x700] sm:$0xff]
  %v243 = vld [vmem:[%s1 + $0x708] sm:$0xff]
  %v244 = vld [vmem:[%s1 + $0x710] sm:$0xff]
  %v245 = vld [vmem:[%s1 + $0x718] sm:$0xff]
  %v246 = vld [vmem:[%s1 + $0x720] sm:$0xff]
  %v247 = vld [vmem:[%s1 + $0x728] sm:$0xff]
  %v248 = vld [vmem:[%s1 + $0x730] sm:$0xff]
  %v249 = vld [vmem:[%s1 + $0x738] sm:$0xff]
  %v250 = vld [vmem:[%s1 + $0x740] sm:$0xff]
  %v251 = vld [vmem:[%s1 + $0x748] sm:$0xff]
  %v252 = vld [vmem:[%s1 + $0x750] sm:$0xff]
  %v253 = vld [vmem:[%s1 + $0x758] sm:$0xff]
  %v254 = vld [vmem:[%s1 + $0x760] sm:$0xff]
  %v255 = vld [vmem:[%s1 + $0x768] sm:$0xff]
  %v256 = vld [vmem:[%s1 + $0x770] sm:$0xff]
  %v257 = vld [vmem:[%s1 + $0x778] sm:$0xff]
  %v258 = vld [vmem:[%s1 + $0x780] sm:$0xff]
  %v259 = vld [vmem:[%s1 + $0x788] sm:$0xff]
  %v260 = vld [vmem:[%s1 + $0x790] sm:$0xff]
  %v261 = vld [vmem:[%s1 + $0x798] sm:$0xff]
  %v262 = vld [vmem:[%s1 + $0x7a0] sm:$0xff]
  %v263 = vld [vmem:[%s1 + $0x7a8] sm:$0xff]
  %v264 = vld [vmem:[%s1 + $0x7b0] sm:$0xff]
  %v265 = vld [vmem:[%s1 + $0x7b8] sm:$0xff]
  %v266 = vld [vmem:[%s1 + $0x7c0] sm:$0xff]
  %v267 = vld [vmem:[%s1 + $0x7c8] sm:$0xff]
  %v268 = vld [vmem:[%s1 + $0x7d0] sm:$0xff]
  %v269 = vld [vmem:[%s1 + $0x7d8] sm:$0xff]
  %v270 = vld [vmem:[%s1 + $0x7e0] sm:$0xff]
  %v271 = vld [vmem:[%s1 + $0x7e8] sm:$0xff]
  %v272 = vld [vmem:[%s1 + $0x7f0] sm:$0xff]
  %v273 = vld [vmem:[%s1 + $0x7f8] sm:$0xff]
  %v274 = vld [vmem:[%s2] sm:$0xf]
  %v276 = vlaneseq
  %v277 = vshrl.u32 %v276, 7
  %v278 = vsub.s32 0, %v277
  %v279 = vrot.slane %v274, %v278
  %v280 = vlaneseq
  %v281 = vshrl.u32 %v280, 7
  %v282 = vsub.s32 1, %v281
  %v283 = vrot.slane %v274, %v282
  %v284 = vlaneseq
  %v285 = vshrl.u32 %v284, 7
  %v286 = vsub.s32 2, %v285
  %v287 = vrot.slane %v274, %v286
  %v288 = vlaneseq
  %v289 = vshrl.u32 %v288, 7
  %v290 = vsub.s32 3, %v289
  %v291 = vrot.slane %v274, %v290
  %v300 = vunpack.c.l.b16 %v14
  %v301 = vunpack.c.h.b16 %v14
  %v302 = vunpack.c.l.b16 %v15
  %v303 = vunpack.c.h.b16 %v15
  %v304 = vunpack.c.l.b16 %v16
  %v305 = vunpack.c.h.b16 %v16
  %v306 = vunpack.c.l.b16 %v17
  %v307 = vunpack.c.h.b16 %v17
  %v308 = vpack.c.b16 %v300, %v300
  %v309 = vpack.c.b16 %v301, %v301
  %v310 = vpack.c.b16 %v302, %v302
  %v311 = vpack.c.b16 %v303, %v303
  %v312 = vpack.c.b16 %v304, %v304
  %v313 = vpack.c.b16 %v305, %v305
  %v314 = vpack.c.b16 %v306, %v306
  %v315 = vpack.c.b16 %v307, %v307
  %v580 = vunpack.c.l.b16 %v18
  %v581 = vunpack.c.h.b16 %v18
  %v582 = vunpack.c.l.b16 %v19
  %v583 = vunpack.c.h.b16 %v19
  %v584 = vunpack.c.l.b16 %v20
  %v585 = vunpack.c.h.b16 %v20
  %v586 = vunpack.c.l.b16 %v21
  %v587 = vunpack.c.h.b16 %v21
  %v588 = vunpack.c.l.b16 %v22
  %v589 = vunpack.c.h.b16 %v22
  %v590 = vunpack.c.l.b16 %v23
  %v591 = vunpack.c.h.b16 %v23
  %v592 = vunpack.c.l.b16 %v24
  %v593 = vunpack.c.h.b16 %v24
  %v594 = vunpack.c.l.b16 %v25
  %v595 = vunpack.c.h.b16 %v25
  %v596 = vunpack.c.l.b16 %v26
  %v597 = vunpack.c.h.b16 %v26
  %v598 = vunpack.c.l.b16 %v27
  %v599 = vunpack.c.h.b16 %v27
  %v600 = vunpack.c.l.b16 %v28
  %v601 = vunpack.c.h.b16 %v28
  %v602 = vunpack.c.l.b16 %v29
  %v603 = vunpack.c.h.b16 %v29
  %v604 = vunpack.c.l.b16 %v30
  %v605 = vunpack.c.h.b16 %v30
  %v606 = vunpack.c.l.b16 %v31
  %v607 = vunpack.c.h.b16 %v31
  %v608 = vunpack.c.l.b16 %v32
  %v609 = vunpack.c.h.b16 %v32
  %v610 = vunpack.c.l.b16 %v33
  %v611 = vunpack.c.h.b16 %v33
  %v612 = vunpack.c.l.b16 %v34
  %v613 = vunpack.c.h.b16 %v34
  %v614 = vunpack.c.l.b16 %v35
  %v615 = vunpack.c.h.b16 %v35
  %v616 = vunpack.c.l.b16 %v36
  %v617 = vunpack.c.h.b16 %v36
  %v618 = vunpack.c.l.b16 %v37
  %v619 = vunpack.c.h.b16 %v37
  %v620 = vunpack.c.l.b16 %v38
  %v621 = vunpack.c.h.b16 %v38
  %v622 = vunpack.c.l.b16 %v39
  %v623 = vunpack.c.h.b16 %v39
  %v624 = vunpack.c.l.b16 %v40
  %v625 = vunpack.c.h.b16 %v40
  %v626 = vunpack.c.l.b16 %v41
  %v627 = vunpack.c.h.b16 %v41
  %v628 = vunpack.c.l.b16 %v42
  %v629 = vunpack.c.h.b16 %v42
  %v630 = vunpack.c.l.b16 %v43
  %v631 = vunpack.c.h.b16 %v43
  %v632 = vunpack.c.l.b16 %v44
  %v633 = vunpack.c.h.b16 %v44
  %v634 = vunpack.c.l.b16 %v45
  %v635 = vunpack.c.h.b16 %v45
  %v636 = vunpack.c.l.b16 %v46
  %v637 = vunpack.c.h.b16 %v46
  %v638 = vunpack.c.l.b16 %v47
  %v639 = vunpack.c.h.b16 %v47
  %v640 = vunpack.c.l.b16 %v48
  %v641 = vunpack.c.h.b16 %v48
  %v642 = vunpack.c.l.b16 %v49
  %v643 = vunpack.c.h.b16 %v49
  %v644 = vunpack.c.l.b16 %v50
  %v645 = vunpack.c.h.b16 %v50
  %v646 = vunpack.c.l.b16 %v51
  %v647 = vunpack.c.h.b16 %v51
  %v648 = vunpack.c.l.b16 %v52
  %v649 = vunpack.c.h.b16 %v52
  %v650 = vunpack.c.l.b16 %v53
  %v651 = vunpack.c.h.b16 %v53
  %v652 = vunpack.c.l.b16 %v54
  %v653 = vunpack.c.h.b16 %v54
  %v654 = vunpack.c.l.b16 %v55
  %v655 = vunpack.c.h.b16 %v55
  %v656 = vunpack.c.l.b16 %v56
  %v657 = vunpack.c.h.b16 %v56
  %v658 = vunpack.c.l.b16 %v57
  %v659 = vunpack.c.h.b16 %v57
  %v660 = vunpack.c.l.b16 %v58
  %v661 = vunpack.c.h.b16 %v58
  %v662 = vunpack.c.l.b16 %v59
  %v663 = vunpack.c.h.b16 %v59
  %v664 = vunpack.c.l.b16 %v60
  %v665 = vunpack.c.h.b16 %v60
  %v666 = vunpack.c.l.b16 %v61
  %v667 = vunpack.c.h.b16 %v61
  %v668 = vunpack.c.l.b16 %v62
  %v669 = vunpack.c.h.b16 %v62
  %v670 = vunpack.c.l.b16 %v63
  %v671 = vunpack.c.h.b16 %v63
  %v672 = vunpack.c.l.b16 %v64
  %v673 = vunpack.c.h.b16 %v64
  %v674 = vunpack.c.l.b16 %v65
  %v675 = vunpack.c.h.b16 %v65
  %v676 = vunpack.c.l.b16 %v66
  %v677 = vunpack.c.h.b16 %v66
  %v678 = vunpack.c.l.b16 %v67
  %v679 = vunpack.c.h.b16 %v67
  %v680 = vunpack.c.l.b16 %v68
  %v681 = vunpack.c.h.b16 %v68
  %v682 = vunpack.c.l.b16 %v69
  %v683 = vunpack.c.h.b16 %v69
  %v684 = vunpack.c.l.b16 %v70
  %v685 = vunpack.c.h.b16 %v70
  %v686 = vunpack.c.l.b16 %v71
  %v687 = vunpack.c.h.b16 %v71
  %v688 = vunpack.c.l.b16 %v72
  %v689 = vunpack.c.h.b16 %v72
  %v690 = vunpack.c.l.b16 %v73
  %v691 = vunpack.c.h.b16 %v73
  %v692 = vunpack.c.l.b16 %v74
  %v693 = vunpack.c.h.b16 %v74
  %v694 = vunpack.c.l.b16 %v75
  %v695 = vunpack.c.h.b16 %v75
  %v696 = vunpack.c.l.b16 %v76
  %v697 = vunpack.c.h.b16 %v76
  %v698 = vunpack.c.l.b16 %v77
  %v699 = vunpack.c.h.b16 %v77
  %v700 = vunpack.c.l.b16 %v78
  %v701 = vunpack.c.h.b16 %v78
  %v702 = vunpack.c.l.b16 %v79
  %v703 = vunpack.c.h.b16 %v79
  %v704 = vunpack.c.l.b16 %v80
  %v705 = vunpack.c.h.b16 %v80
  %v706 = vunpack.c.l.b16 %v81
  %v707 = vunpack.c.h.b16 %v81
  %v708 = vunpack.c.l.b16 %v82
  %v709 = vunpack.c.h.b16 %v82
  %v710 = vunpack.c.l.b16 %v83
  %v711 = vunpack.c.h.b16 %v83
  %v712 = vunpack.c.l.b16 %v84
  %v713 = vunpack.c.h.b16 %v84
  %v714 = vunpack.c.l.b16 %v85
  %v715 = vunpack.c.h.b16 %v85
  %v716 = vunpack.c.l.b16 %v86
  %v717 = vunpack.c.h.b16 %v86
  %v718 = vunpack.c.l.b16 %v87
  %v719 = vunpack.c.h.b16 %v87
  %v720 = vunpack.c.l.b16 %v88
  %v721 = vunpack.c.h.b16 %v88
  %v722 = vunpack.c.l.b16 %v89
  %v723 = vunpack.c.h.b16 %v89
  %v724 = vunpack.c.l.b16 %v90
  %v725 = vunpack.c.h.b16 %v90
  %v726 = vunpack.c.l.b16 %v91
  %v727 = vunpack.c.h.b16 %v91
  %v728 = vunpack.c.l.b16 %v92
  %v729 = vunpack.c.h.b16 %v92
  %v730 = vunpack.c.l.b16 %v93
  %v731 = vunpack.c.h.b16 %v93
  %v732 = vunpack.c.l.b16 %v94
  %v733 = vunpack.c.h.b16 %v94
  %v734 = vunpack.c.l.b16 %v95
  %v735 = vunpack.c.h.b16 %v95
  %v736 = vunpack.c.l.b16 %v96
  %v737 = vunpack.c.h.b16 %v96
  %v738 = vunpack.c.l.b16 %v97
  %v739 = vunpack.c.h.b16 %v97
  %v740 = vunpack.c.l.b16 %v98
  %v741 = vunpack.c.h.b16 %v98
  %v742 = vunpack.c.l.b16 %v99
  %v743 = vunpack.c.h.b16 %v99
  %v744 = vunpack.c.l.b16 %v100
  %v745 = vunpack.c.h.b16 %v100
  %v746 = vunpack.c.l.b16 %v101
  %v747 = vunpack.c.h.b16 %v101
  %v748 = vunpack.c.l.b16 %v102
  %v749 = vunpack.c.h.b16 %v102
  %v750 = vunpack.c.l.b16 %v103
  %v751 = vunpack.c.h.b16 %v103
  %v752 = vunpack.c.l.b16 %v104
  %v753 = vunpack.c.h.b16 %v104
  %v754 = vunpack.c.l.b16 %v105
  %v755 = vunpack.c.h.b16 %v105
  %v756 = vunpack.c.l.b16 %v106
  %v757 = vunpack.c.h.b16 %v106
  %v758 = vunpack.c.l.b16 %v107
  %v759 = vunpack.c.h.b16 %v107
  %v760 = vunpack.c.l.b16 %v108
  %v761 = vunpack.c.h.b16 %v108
  %v762 = vunpack.c.l.b16 %v109
  %v763 = vunpack.c.h.b16 %v109
  %v764 = vunpack.c.l.b16 %v110
  %v765 = vunpack.c.h.b16 %v110
  %v766 = vunpack.c.l.b16 %v111
  %v767 = vunpack.c.h.b16 %v111
  %v768 = vunpack.c.l.b16 %v112
  %v769 = vunpack.c.h.b16 %v112
  %v770 = vunpack.c.l.b16 %v113
  %v771 = vunpack.c.h.b16 %v113
  %v772 = vunpack.c.l.b16 %v114
  %v773 = vunpack.c.h.b16 %v114
  %v774 = vunpack.c.l.b16 %v115
  %v775 = vunpack.c.h.b16 %v115
  %v776 = vunpack.c.l.b16 %v116
  %v777 = vunpack.c.h.b16 %v116
  %v778 = vunpack.c.l.b16 %v117
  %v779 = vunpack.c.h.b16 %v117
  %v780 = vunpack.c.l.b16 %v118
  %v781 = vunpack.c.h.b16 %v118
  %v782 = vunpack.c.l.b16 %v119
  %v783 = vunpack.c.h.b16 %v119
  %v784 = vunpack.c.l.b16 %v120
  %v785 = vunpack.c.h.b16 %v120
  %v786 = vunpack.c.l.b16 %v121
  %v787 = vunpack.c.h.b16 %v121
  %v788 = vunpack.c.l.b16 %v122
  %v789 = vunpack.c.h.b16 %v122
  %v790 = vunpack.c.l.b16 %v123
  %v791 = vunpack.c.h.b16 %v123
  %v792 = vunpack.c.l.b16 %v124
  %v793 = vunpack.c.h.b16 %v124
  %v794 = vunpack.c.l.b16 %v125
  %v795 = vunpack.c.h.b16 %v125
  %v796 = vunpack.c.l.b16 %v126
  %v797 = vunpack.c.h.b16 %v126
  %v798 = vunpack.c.l.b16 %v127
  %v799 = vunpack.c.h.b16 %v127
  %v800 = vunpack.c.l.b16 %v128
  %v801 = vunpack.c.h.b16 %v128
  %v802 = vunpack.c.l.b16 %v129
  %v803 = vunpack.c.h.b16 %v129
  %v804 = vunpack.c.l.b16 %v130
  %v805 = vunpack.c.h.b16 %v130
  %v806 = vunpack.c.l.b16 %v131
  %v807 = vunpack.c.h.b16 %v131
  %v808 = vunpack.c.l.b16 %v132
  %v809 = vunpack.c.h.b16 %v132
  %v810 = vunpack.c.l.b16 %v133
  %v811 = vunpack.c.h.b16 %v133
  %v812 = vunpack.c.l.b16 %v134
  %v813 = vunpack.c.h.b16 %v134
  %v814 = vunpack.c.l.b16 %v135
  %v815 = vunpack.c.h.b16 %v135
  %v816 = vunpack.c.l.b16 %v136
  %v817 = vunpack.c.h.b16 %v136
  %v818 = vunpack.c.l.b16 %v137
  %v819 = vunpack.c.h.b16 %v137
  %v820 = vunpack.c.l.b16 %v138
  %v821 = vunpack.c.h.b16 %v138
  %v822 = vunpack.c.l.b16 %v139
  %v823 = vunpack.c.h.b16 %v139
  %v824 = vunpack.c.l.b16 %v140
  %v825 = vunpack.c.h.b16 %v140
  %v826 = vunpack.c.l.b16 %v141
  %v827 = vunpack.c.h.b16 %v141
  %v828 = vunpack.c.l.b16 %v142
  %v829 = vunpack.c.h.b16 %v142
  %v830 = vunpack.c.l.b16 %v143
  %v831 = vunpack.c.h.b16 %v143
  %v832 = vunpack.c.l.b16 %v144
  %v833 = vunpack.c.h.b16 %v144
  %v834 = vunpack.c.l.b16 %v145
  %v835 = vunpack.c.h.b16 %v145
  %v836 = vunpack.c.l.b16 %v146
  %v837 = vunpack.c.h.b16 %v146
  %v838 = vunpack.c.l.b16 %v147
  %v839 = vunpack.c.h.b16 %v147
  %v840 = vunpack.c.l.b16 %v148
  %v841 = vunpack.c.h.b16 %v148
  %v842 = vunpack.c.l.b16 %v149
  %v843 = vunpack.c.h.b16 %v149
  %v844 = vunpack.c.l.b16 %v150
  %v845 = vunpack.c.h.b16 %v150
  %v846 = vunpack.c.l.b16 %v151
  %v847 = vunpack.c.h.b16 %v151
  %v848 = vunpack.c.l.b16 %v152
  %v849 = vunpack.c.h.b16 %v152
  %v850 = vunpack.c.l.b16 %v153
  %v851 = vunpack.c.h.b16 %v153
  %v852 = vunpack.c.l.b16 %v154
  %v853 = vunpack.c.h.b16 %v154
  %v854 = vunpack.c.l.b16 %v155
  %v855 = vunpack.c.h.b16 %v155
  %v856 = vunpack.c.l.b16 %v156
  %v857 = vunpack.c.h.b16 %v156
  %v858 = vunpack.c.l.b16 %v157
  %v859 = vunpack.c.h.b16 %v157
  %v860 = vunpack.c.l.b16 %v158
  %v861 = vunpack.c.h.b16 %v158
  %v862 = vunpack.c.l.b16 %v159
  %v863 = vunpack.c.h.b16 %v159
  %v864 = vunpack.c.l.b16 %v160
  %v865 = vunpack.c.h.b16 %v160
  %v866 = vunpack.c.l.b16 %v161
  %v867 = vunpack.c.h.b16 %v161
  %v868 = vunpack.c.l.b16 %v162
  %v869 = vunpack.c.h.b16 %v162
  %v870 = vunpack.c.l.b16 %v163
  %v871 = vunpack.c.h.b16 %v163
  %v872 = vunpack.c.l.b16 %v164
  %v873 = vunpack.c.h.b16 %v164
  %v874 = vunpack.c.l.b16 %v165
  %v875 = vunpack.c.h.b16 %v165
  %v876 = vunpack.c.l.b16 %v166
  %v877 = vunpack.c.h.b16 %v166
  %v878 = vunpack.c.l.b16 %v167
  %v879 = vunpack.c.h.b16 %v167
  %v880 = vunpack.c.l.b16 %v168
  %v881 = vunpack.c.h.b16 %v168
  %v882 = vunpack.c.l.b16 %v169
  %v883 = vunpack.c.h.b16 %v169
  %v884 = vunpack.c.l.b16 %v170
  %v885 = vunpack.c.h.b16 %v170
  %v886 = vunpack.c.l.b16 %v171
  %v887 = vunpack.c.h.b16 %v171
  %v888 = vunpack.c.l.b16 %v172
  %v889 = vunpack.c.h.b16 %v172
  %v890 = vunpack.c.l.b16 %v173
  %v891 = vunpack.c.h.b16 %v173
  %v892 = vunpack.c.l.b16 %v174
  %v893 = vunpack.c.h.b16 %v174
  %v894 = vunpack.c.l.b16 %v175
  %v895 = vunpack.c.h.b16 %v175
  %v896 = vunpack.c.l.b16 %v176
  %v897 = vunpack.c.h.b16 %v176
  %v898 = vunpack.c.l.b16 %v177
  %v899 = vunpack.c.h.b16 %v177
  %v900 = vunpack.c.l.b16 %v178
  %v901 = vunpack.c.h.b16 %v178
  %v902 = vunpack.c.l.b16 %v179
  %v903 = vunpack.c.h.b16 %v179
  %v904 = vunpack.c.l.b16 %v180
  %v905 = vunpack.c.h.b16 %v180
  %v906 = vunpack.c.l.b16 %v181
  %v907 = vunpack.c.h.b16 %v181
  %v908 = vunpack.c.l.b16 %v182
  %v909 = vunpack.c.h.b16 %v182
  %v910 = vunpack.c.l.b16 %v183
  %v911 = vunpack.c.h.b16 %v183
  %v912 = vunpack.c.l.b16 %v184
  %v913 = vunpack.c.h.b16 %v184
  %v914 = vunpack.c.l.b16 %v185
  %v915 = vunpack.c.h.b16 %v185
  %v916 = vunpack.c.l.b16 %v186
  %v917 = vunpack.c.h.b16 %v186
  %v918 = vunpack.c.l.b16 %v187
  %v919 = vunpack.c.h.b16 %v187
  %v920 = vunpack.c.l.b16 %v188
  %v921 = vunpack.c.h.b16 %v188
  %v922 = vunpack.c.l.b16 %v189
  %v923 = vunpack.c.h.b16 %v189
  %v924 = vunpack.c.l.b16 %v190
  %v925 = vunpack.c.h.b16 %v190
  %v926 = vunpack.c.l.b16 %v191
  %v927 = vunpack.c.h.b16 %v191
  %v928 = vunpack.c.l.b16 %v192
  %v929 = vunpack.c.h.b16 %v192
  %v930 = vunpack.c.l.b16 %v193
  %v931 = vunpack.c.h.b16 %v193
  %v932 = vunpack.c.l.b16 %v194
  %v933 = vunpack.c.h.b16 %v194
  %v934 = vunpack.c.l.b16 %v195
  %v935 = vunpack.c.h.b16 %v195
  %v936 = vunpack.c.l.b16 %v196
  %v937 = vunpack.c.h.b16 %v196
  %v938 = vunpack.c.l.b16 %v197
  %v939 = vunpack.c.h.b16 %v197
  %v940 = vunpack.c.l.b16 %v198
  %v941 = vunpack.c.h.b16 %v198
  %v942 = vunpack.c.l.b16 %v199
  %v943 = vunpack.c.h.b16 %v199
  %v944 = vunpack.c.l.b16 %v200
  %v945 = vunpack.c.h.b16 %v200
  %v946 = vunpack.c.l.b16 %v201
  %v947 = vunpack.c.h.b16 %v201
  %v948 = vunpack.c.l.b16 %v202
  %v949 = vunpack.c.h.b16 %v202
  %v950 = vunpack.c.l.b16 %v203
  %v951 = vunpack.c.h.b16 %v203
  %v952 = vunpack.c.l.b16 %v204
  %v953 = vunpack.c.h.b16 %v204
  %v954 = vunpack.c.l.b16 %v205
  %v955 = vunpack.c.h.b16 %v205
  %v956 = vunpack.c.l.b16 %v206
  %v957 = vunpack.c.h.b16 %v206
  %v958 = vunpack.c.l.b16 %v207
  %v959 = vunpack.c.h.b16 %v207
  %v960 = vunpack.c.l.b16 %v208
  %v961 = vunpack.c.h.b16 %v208
  %v962 = vunpack.c.l.b16 %v209
  %v963 = vunpack.c.h.b16 %v209
  %v964 = vunpack.c.l.b16 %v210
  %v965 = vunpack.c.h.b16 %v210
  %v966 = vunpack.c.l.b16 %v211
  %v967 = vunpack.c.h.b16 %v211
  %v968 = vunpack.c.l.b16 %v212
  %v969 = vunpack.c.h.b16 %v212
  %v970 = vunpack.c.l.b16 %v213
  %v971 = vunpack.c.h.b16 %v213
  %v972 = vunpack.c.l.b16 %v214
  %v973 = vunpack.c.h.b16 %v214
  %v974 = vunpack.c.l.b16 %v215
  %v975 = vunpack.c.h.b16 %v215
  %v976 = vunpack.c.l.b16 %v216
  %v977 = vunpack.c.h.b16 %v216
  %v978 = vunpack.c.l.b16 %v217
  %v979 = vunpack.c.h.b16 %v217
  %v980 = vunpack.c.l.b16 %v218
  %v981 = vunpack.c.h.b16 %v218
  %v982 = vunpack.c.l.b16 %v219
  %v983 = vunpack.c.h.b16 %v219
  %v984 = vunpack.c.l.b16 %v220
  %v985 = vunpack.c.h.b16 %v220
  %v986 = vunpack.c.l.b16 %v221
  %v987 = vunpack.c.h.b16 %v221
  %v988 = vunpack.c.l.b16 %v222
  %v989 = vunpack.c.h.b16 %v222
  %v990 = vunpack.c.l.b16 %v223
  %v991 = vunpack.c.h.b16 %v223
  %v992 = vunpack.c.l.b16 %v224
  %v993 = vunpack.c.h.b16 %v224
  %v994 = vunpack.c.l.b16 %v225
  %v995 = vunpack.c.h.b16 %v225
  %v996 = vunpack.c.l.b16 %v226
  %v997 = vunpack.c.h.b16 %v226
  %v998 = vunpack.c.l.b16 %v227
  %v999 = vunpack.c.h.b16 %v227
  %v1000 = vunpack.c.l.b16 %v228
  %v1001 = vunpack.c.h.b16 %v228
  %v1002 = vunpack.c.l.b16 %v229
  %v1003 = vunpack.c.h.b16 %v229
  %v1004 = vunpack.c.l.b16 %v230
  %v1005 = vunpack.c.h.b16 %v230
  %v1006 = vunpack.c.l.b16 %v231
  %v1007 = vunpack.c.h.b16 %v231
  %v1008 = vunpack.c.l.b16 %v232
  %v1009 = vunpack.c.h.b16 %v232
  %v1010 = vunpack.c.l.b16 %v233
  %v1011 = vunpack.c.h.b16 %v233
  %v1012 = vunpack.c.l.b16 %v234
  %v1013 = vunpack.c.h.b16 %v234
  %v1014 = vunpack.c.l.b16 %v235
  %v1015 = vunpack.c.h.b16 %v235
  %v1016 = vunpack.c.l.b16 %v236
  %v1017 = vunpack.c.h.b16 %v236
  %v1018 = vunpack.c.l.b16 %v237
  %v1019 = vunpack.c.h.b16 %v237
  %v1020 = vunpack.c.l.b16 %v238
  %v1021 = vunpack.c.h.b16 %v238
  %v1022 = vunpack.c.l.b16 %v239
  %v1023 = vunpack.c.h.b16 %v239
  %v1024 = vunpack.c.l.b16 %v240
  %v1025 = vunpack.c.h.b16 %v240
  %v1026 = vunpack.c.l.b16 %v241
  %v1027 = vunpack.c.h.b16 %v241
  %v1028 = vunpack.c.l.b16 %v242
  %v1029 = vunpack.c.h.b16 %v242
  %v1030 = vunpack.c.l.b16 %v243
  %v1031 = vunpack.c.h.b16 %v243
  %v1032 = vunpack.c.l.b16 %v244
  %v1033 = vunpack.c.h.b16 %v244
  %v1034 = vunpack.c.l.b16 %v245
  %v1035 = vunpack.c.h.b16 %v245
  %v1036 = vunpack.c.l.b16 %v246
  %v1037 = vunpack.c.h.b16 %v246
  %v1038 = vunpack.c.l.b16 %v247
  %v1039 = vunpack.c.h.b16 %v247
  %v1040 = vunpack.c.l.b16 %v248
  %v1041 = vunpack.c.h.b16 %v248
  %v1042 = vunpack.c.l.b16 %v249
  %v1043 = vunpack.c.h.b16 %v249
  %v1044 = vunpack.c.l.b16 %v250
  %v1045 = vunpack.c.h.b16 %v250
  %v1046 = vunpack.c.l.b16 %v251
  %v1047 = vunpack.c.h.b16 %v251
  %v1048 = vunpack.c.l.b16 %v252
  %v1049 = vunpack.c.h.b16 %v252
  %v1050 = vunpack.c.l.b16 %v253
  %v1051 = vunpack.c.h.b16 %v253
  %v1052 = vunpack.c.l.b16 %v254
  %v1053 = vunpack.c.h.b16 %v254
  %v1054 = vunpack.c.l.b16 %v255
  %v1055 = vunpack.c.h.b16 %v255
  %v1056 = vunpack.c.l.b16 %v256
  %v1057 = vunpack.c.h.b16 %v256
  %v1058 = vunpack.c.l.b16 %v257
  %v1059 = vunpack.c.h.b16 %v257
  %v1060 = vunpack.c.l.b16 %v258
  %v1061 = vunpack.c.h.b16 %v258
  %v1062 = vunpack.c.l.b16 %v259
  %v1063 = vunpack.c.h.b16 %v259
  %v1064 = vunpack.c.l.b16 %v260
  %v1065 = vunpack.c.h.b16 %v260
  %v1066 = vunpack.c.l.b16 %v261
  %v1067 = vunpack.c.h.b16 %v261
  %v1068 = vunpack.c.l.b16 %v262
  %v1069 = vunpack.c.h.b16 %v262
  %v1070 = vunpack.c.l.b16 %v263
  %v1071 = vunpack.c.h.b16 %v263
  %v1072 = vunpack.c.l.b16 %v264
  %v1073 = vunpack.c.h.b16 %v264
  %v1074 = vunpack.c.l.b16 %v265
  %v1075 = vunpack.c.h.b16 %v265
  %v1076 = vunpack.c.l.b16 %v266
  %v1077 = vunpack.c.h.b16 %v266
  %v1078 = vunpack.c.l.b16 %v267
  %v1079 = vunpack.c.h.b16 %v267
  %v1080 = vunpack.c.l.b16 %v268
  %v1081 = vunpack.c.h.b16 %v268
  %v1082 = vunpack.c.l.b16 %v269
  %v1083 = vunpack.c.h.b16 %v269
  %v1084 = vunpack.c.l.b16 %v270
  %v1085 = vunpack.c.h.b16 %v270
  %v1086 = vunpack.c.l.b16 %v271
  %v1087 = vunpack.c.h.b16 %v271
  %v1088 = vunpack.c.l.b16 %v272
  %v1089 = vunpack.c.h.b16 %v272
  %v1090 = vunpack.c.l.b16 %v273
  %v1091 = vunpack.c.h.b16 %v273
  %v1092 = vpack.c.b16 %v584, %v580
  %v1093 = vpack.c.b16 %v585, %v581
  %v1094 = vpack.c.b16 %v586, %v582
  %v1095 = vpack.c.b16 %v587, %v583
  %v1096 = vpack.c.b16 %v592, %v588
  %v1097 = vpack.c.b16 %v593, %v589
  %v1098 = vpack.c.b16 %v594, %v590
  %v1099 = vpack.c.b16 %v595, %v591
  %v1100 = vpack.c.b16 %v600, %v596
  %v1101 = vpack.c.b16 %v601, %v597
  %v1102 = vpack.c.b16 %v602, %v598
  %v1103 = vpack.c.b16 %v603, %v599
  %v1104 = vpack.c.b16 %v608, %v604
  %v1105 = vpack.c.b16 %v609, %v605
  %v1106 = vpack.c.b16 %v610, %v606
  %v1107 = vpack.c.b16 %v611, %v607
  %v1108 = vpack.c.b16 %v616, %v612
  %v1109 = vpack.c.b16 %v617, %v613
  %v1110 = vpack.c.b16 %v618, %v614
  %v1111 = vpack.c.b16 %v619, %v615
  %v1112 = vpack.c.b16 %v624, %v620
  %v1113 = vpack.c.b16 %v625, %v621
  %v1114 = vpack.c.b16 %v626, %v622
  %v1115 = vpack.c.b16 %v627, %v623
  %v1116 = vpack.c.b16 %v632, %v628
  %v1117 = vpack.c.b16 %v633, %v629
  %v1118 = vpack.c.b16 %v634, %v630
  %v1119 = vpack.c.b16 %v635, %v631
  %v1120 = vpack.c.b16 %v640, %v636
  %v1121 = vpack.c.b16 %v641, %v637
  %v1122 = vpack.c.b16 %v642, %v638
  %v1123 = vpack.c.b16 %v643, %v639
  %v1124 = vpack.c.b16 %v648, %v644
  %v1125 = vpack.c.b16 %v649, %v645
  %v1126 = vpack.c.b16 %v650, %v646
  %v1127 = vpack.c.b16 %v651, %v647
  %v1128 = vpack.c.b16 %v656, %v652
  %v1129 = vpack.c.b16 %v657, %v653
  %v1130 = vpack.c.b16 %v658, %v654
  %v1131 = vpack.c.b16 %v659, %v655
  %v1132 = vpack.c.b16 %v664, %v660
  %v1133 = vpack.c.b16 %v665, %v661
  %v1134 = vpack.c.b16 %v666, %v662
  %v1135 = vpack.c.b16 %v667, %v663
  %v1136 = vpack.c.b16 %v672, %v668
  %v1137 = vpack.c.b16 %v673, %v669
  %v1138 = vpack.c.b16 %v674, %v670
  %v1139 = vpack.c.b16 %v675, %v671
  %v1140 = vpack.c.b16 %v680, %v676
  %v1141 = vpack.c.b16 %v681, %v677
  %v1142 = vpack.c.b16 %v682, %v678
  %v1143 = vpack.c.b16 %v683, %v679
  %v1144 = vpack.c.b16 %v688, %v684
  %v1145 = vpack.c.b16 %v689, %v685
  %v1146 = vpack.c.b16 %v690, %v686
  %v1147 = vpack.c.b16 %v691, %v687
  %v1148 = vpack.c.b16 %v696, %v692
  %v1149 = vpack.c.b16 %v697, %v693
  %v1150 = vpack.c.b16 %v698, %v694
  %v1151 = vpack.c.b16 %v699, %v695
  %v1152 = vpack.c.b16 %v704, %v700
  %v1153 = vpack.c.b16 %v705, %v701
  %v1154 = vpack.c.b16 %v706, %v702
  %v1155 = vpack.c.b16 %v707, %v703
  %v1156 = vpack.c.b16 %v712, %v708
  %v1157 = vpack.c.b16 %v713, %v709
  %v1158 = vpack.c.b16 %v714, %v710
  %v1159 = vpack.c.b16 %v715, %v711
  %v1160 = vpack.c.b16 %v720, %v716
  %v1161 = vpack.c.b16 %v721, %v717
  %v1162 = vpack.c.b16 %v722, %v718
  %v1163 = vpack.c.b16 %v723, %v719
  %v1164 = vpack.c.b16 %v728, %v724
  %v1165 = vpack.c.b16 %v729, %v725
  %v1166 = vpack.c.b16 %v730, %v726
  %v1167 = vpack.c.b16 %v731, %v727
  %v1168 = vpack.c.b16 %v736, %v732
  %v1169 = vpack.c.b16 %v737, %v733
  %v1170 = vpack.c.b16 %v738, %v734
  %v1171 = vpack.c.b16 %v739, %v735
  %v1172 = vpack.c.b16 %v744, %v740
  %v1173 = vpack.c.b16 %v745, %v741
  %v1174 = vpack.c.b16 %v746, %v742
  %v1175 = vpack.c.b16 %v747, %v743
  %v1176 = vpack.c.b16 %v752, %v748
  %v1177 = vpack.c.b16 %v753, %v749
  %v1178 = vpack.c.b16 %v754, %v750
  %v1179 = vpack.c.b16 %v755, %v751
  %v1180 = vpack.c.b16 %v760, %v756
  %v1181 = vpack.c.b16 %v761, %v757
  %v1182 = vpack.c.b16 %v762, %v758
  %v1183 = vpack.c.b16 %v763, %v759
  %v1184 = vpack.c.b16 %v768, %v764
  %v1185 = vpack.c.b16 %v769, %v765
  %v1186 = vpack.c.b16 %v770, %v766
  %v1187 = vpack.c.b16 %v771, %v767
  %v1188 = vpack.c.b16 %v776, %v772
  %v1189 = vpack.c.b16 %v777, %v773
  %v1190 = vpack.c.b16 %v778, %v774
  %v1191 = vpack.c.b16 %v779, %v775
  %v1192 = vpack.c.b16 %v784, %v780
  %v1193 = vpack.c.b16 %v785, %v781
  %v1194 = vpack.c.b16 %v786, %v782
  %v1195 = vpack.c.b16 %v787, %v783
  %v1196 = vpack.c.b16 %v792, %v788
  %v1197 = vpack.c.b16 %v793, %v789
  %v1198 = vpack.c.b16 %v794, %v790
  %v1199 = vpack.c.b16 %v795, %v791
  %v1200 = vpack.c.b16 %v800, %v796
  %v1201 = vpack.c.b16 %v801, %v797
  %v1202 = vpack.c.b16 %v802, %v798
  %v1203 = vpack.c.b16 %v803, %v799
  %v1204 = vpack.c.b16 %v808, %v804
  %v1205 = vpack.c.b16 %v809, %v805
  %v1206 = vpack.c.b16 %v810, %v806
  %v1207 = vpack.c.b16 %v811, %v807
  %v1208 = vpack.c.b16 %v816, %v812
  %v1209 = vpack.c.b16 %v817, %v813
  %v1210 = vpack.c.b16 %v818, %v814
  %v1211 = vpack.c.b16 %v819, %v815
  %v1212 = vpack.c.b16 %v824, %v820
  %v1213 = vpack.c.b16 %v825, %v821
  %v1214 = vpack.c.b16 %v826, %v822
  %v1215 = vpack.c.b16 %v827, %v823
  %v1216 = vpack.c.b16 %v832, %v828
  %v1217 = vpack.c.b16 %v833, %v829
  %v1218 = vpack.c.b16 %v834, %v830
  %v1219 = vpack.c.b16 %v835, %v831
  %v1220 = vpack.c.b16 %v840, %v836
  %v1221 = vpack.c.b16 %v841, %v837
  %v1222 = vpack.c.b16 %v842, %v838
  %v1223 = vpack.c.b16 %v843, %v839
  %v1224 = vpack.c.b16 %v848, %v844
  %v1225 = vpack.c.b16 %v849, %v845
  %v1226 = vpack.c.b16 %v850, %v846
  %v1227 = vpack.c.b16 %v851, %v847
  %v1228 = vpack.c.b16 %v856, %v852
  %v1229 = vpack.c.b16 %v857, %v853
  %v1230 = vpack.c.b16 %v858, %v854
  %v1231 = vpack.c.b16 %v859, %v855
  %v1232 = vpack.c.b16 %v864, %v860
  %v1233 = vpack.c.b16 %v865, %v861
  %v1234 = vpack.c.b16 %v866, %v862
  %v1235 = vpack.c.b16 %v867, %v863
  %v1236 = vpack.c.b16 %v872, %v868
  %v1237 = vpack.c.b16 %v873, %v869
  %v1238 = vpack.c.b16 %v874, %v870
  %v1239 = vpack.c.b16 %v875, %v871
  %v1240 = vpack.c.b16 %v880, %v876
  %v1241 = vpack.c.b16 %v881, %v877
  %v1242 = vpack.c.b16 %v882, %v878
  %v1243 = vpack.c.b16 %v883, %v879
  %v1244 = vpack.c.b16 %v888, %v884
  %v1245 = vpack.c.b16 %v889, %v885
  %v1246 = vpack.c.b16 %v890, %v886
  %v1247 = vpack.c.b16 %v891, %v887
  %v1248 = vpack.c.b16 %v896, %v892
  %v1249 = vpack.c.b16 %v897, %v893
  %v1250 = vpack.c.b16 %v898, %v894
  %v1251 = vpack.c.b16 %v899, %v895
  %v1252 = vpack.c.b16 %v904, %v900
  %v1253 = vpack.c.b16 %v905, %v901
  %v1254 = vpack.c.b16 %v906, %v902
  %v1255 = vpack.c.b16 %v907, %v903
  %v1256 = vpack.c.b16 %v912, %v908
  %v1257 = vpack.c.b16 %v913, %v909
  %v1258 = vpack.c.b16 %v914, %v910
  %v1259 = vpack.c.b16 %v915, %v911
  %v1260 = vpack.c.b16 %v920, %v916
  %v1261 = vpack.c.b16 %v921, %v917
  %v1262 = vpack.c.b16 %v922, %v918
  %v1263 = vpack.c.b16 %v923, %v919
  %v1264 = vpack.c.b16 %v928, %v924
  %v1265 = vpack.c.b16 %v929, %v925
  %v1266 = vpack.c.b16 %v930, %v926
  %v1267 = vpack.c.b16 %v931, %v927
  %v1268 = vpack.c.b16 %v936, %v932
  %v1269 = vpack.c.b16 %v937, %v933
  %v1270 = vpack.c.b16 %v938, %v934
  %v1271 = vpack.c.b16 %v939, %v935
  %v1272 = vpack.c.b16 %v944, %v940
  %v1273 = vpack.c.b16 %v945, %v941
  %v1274 = vpack.c.b16 %v946, %v942
  %v1275 = vpack.c.b16 %v947, %v943
  %v1276 = vpack.c.b16 %v952, %v948
  %v1277 = vpack.c.b16 %v953, %v949
  %v1278 = vpack.c.b16 %v954, %v950
  %v1279 = vpack.c.b16 %v955, %v951
  %v1280 = vpack.c.b16 %v960, %v956
  %v1281 = vpack.c.b16 %v961, %v957
  %v1282 = vpack.c.b16 %v962, %v958
  %v1283 = vpack.c.b16 %v963, %v959
  %v1284 = vpack.c.b16 %v968, %v964
  %v1285 = vpack.c.b16 %v969, %v965
  %v1286 = vpack.c.b16 %v970, %v966
  %v1287 = vpack.c.b16 %v971, %v967
  %v1288 = vpack.c.b16 %v976, %v972
  %v1289 = vpack.c.b16 %v977, %v973
  %v1290 = vpack.c.b16 %v978, %v974
  %v1291 = vpack.c.b16 %v979, %v975
  %v1292 = vpack.c.b16 %v984, %v980
  %v1293 = vpack.c.b16 %v985, %v981
  %v1294 = vpack.c.b16 %v986, %v982
  %v1295 = vpack.c.b16 %v987, %v983
  %v1296 = vpack.c.b16 %v992, %v988
  %v1297 = vpack.c.b16 %v993, %v989
  %v1298 = vpack.c.b16 %v994, %v990
  %v1299 = vpack.c.b16 %v995, %v991
  %v1300 = vpack.c.b16 %v1000, %v996
  %v1301 = vpack.c.b16 %v1001, %v997
  %v1302 = vpack.c.b16 %v1002, %v998
  %v1303 = vpack.c.b16 %v1003, %v999
  %v1304 = vpack.c.b16 %v1008, %v1004
  %v1305 = vpack.c.b16 %v1009, %v1005
  %v1306 = vpack.c.b16 %v1010, %v1006
  %v1307 = vpack.c.b16 %v1011, %v1007
  %v1308 = vpack.c.b16 %v1016, %v1012
  %v1309 = vpack.c.b16 %v1017, %v1013
  %v1310 = vpack.c.b16 %v1018, %v1014
  %v1311 = vpack.c.b16 %v1019, %v1015
  %v1312 = vpack.c.b16 %v1024, %v1020
  %v1313 = vpack.c.b16 %v1025, %v1021
  %v1314 = vpack.c.b16 %v1026, %v1022
  %v1315 = vpack.c.b16 %v1027, %v1023
  %v1316 = vpack.c.b16 %v1032, %v1028
  %v1317 = vpack.c.b16 %v1033, %v1029
  %v1318 = vpack.c.b16 %v1034, %v1030
  %v1319 = vpack.c.b16 %v1035, %v1031
  %v1320 = vpack.c.b16 %v1040, %v1036
  %v1321 = vpack.c.b16 %v1041, %v1037
  %v1322 = vpack.c.b16 %v1042, %v1038
  %v1323 = vpack.c.b16 %v1043, %v1039
  %v1324 = vpack.c.b16 %v1048, %v1044
  %v1325 = vpack.c.b16 %v1049, %v1045
  %v1326 = vpack.c.b16 %v1050, %v1046
  %v1327 = vpack.c.b16 %v1051, %v1047
  %v1328 = vpack.c.b16 %v1056, %v1052
  %v1329 = vpack.c.b16 %v1057, %v1053
  %v1330 = vpack.c.b16 %v1058, %v1054
  %v1331 = vpack.c.b16 %v1059, %v1055
  %v1332 = vpack.c.b16 %v1064, %v1060
  %v1333 = vpack.c.b16 %v1065, %v1061
  %v1334 = vpack.c.b16 %v1066, %v1062
  %v1335 = vpack.c.b16 %v1067, %v1063
  %v1336 = vpack.c.b16 %v1072, %v1068
  %v1337 = vpack.c.b16 %v1073, %v1069
  %v1338 = vpack.c.b16 %v1074, %v1070
  %v1339 = vpack.c.b16 %v1075, %v1071
  %v1340 = vpack.c.b16 %v1080, %v1076
  %v1341 = vpack.c.b16 %v1081, %v1077
  %v1342 = vpack.c.b16 %v1082, %v1078
  %v1343 = vpack.c.b16 %v1083, %v1079
  %v1344 = vpack.c.b16 %v1088, %v1084
  %v1345 = vpack.c.b16 %v1089, %v1085
  %v1346 = vpack.c.b16 %v1090, %v1086
  %v1347 = vpack.c.b16 %v1091, %v1087
  %1604 = vmatprep.subr.bf16.mxu0 %v1093
  %1605 = vmatpush1.bf16.msra.mxu0 %v1092
  %1606 = vmatprep.subr.bf16.mxu0 %v1097
  %1607 = vmatpush1.bf16.msra.mxu0 %v1096
  %1608 = vmatprep.subr.bf16.mxu0 %v1101
  %1609 = vmatpush1.bf16.msra.mxu0 %v1100
  %1610 = vmatprep.subr.bf16.mxu0 %v1105
  %1611 = vmatpush1.bf16.msra.mxu0 %v1104
  %1612 = vmatprep.subr.bf16.mxu0 %v1109
  %1613 = vmatpush1.bf16.msra.mxu0 %v1108
  %1614 = vmatprep.subr.bf16.mxu0 %v1113
  %1615 = vmatpush1.bf16.msra.mxu0 %v1112
  %1616 = vmatprep.subr.bf16.mxu0 %v1117
  %1617 = vmatpush1.bf16.msra.mxu0 %v1116
  %1618 = vmatprep.subr.bf16.mxu0 %v1121
  %1619 = vmatpush1.bf16.msra.mxu0 %v1120
  %1620 = vmatprep.subr.bf16.mxu0 %v1125
  %1621 = vmatpush1.bf16.msra.mxu0 %v1124
  %1622 = vmatprep.subr.bf16.mxu0 %v1129
  %1623 = vmatpush1.bf16.msra.mxu0 %v1128
  %1624 = vmatprep.subr.bf16.mxu0 %v1133
  %1625 = vmatpush1.bf16.msra.mxu0 %v1132
  %1626 = vmatprep.subr.bf16.mxu0 %v1137
  %1627 = vmatpush1.bf16.msra.mxu0 %v1136
  %1628 = vmatprep.subr.bf16.mxu0 %v1141
  %1629 = vmatpush1.bf16.msra.mxu0 %v1140
  %1630 = vmatprep.subr.bf16.mxu0 %v1145
  %1631 = vmatpush1.bf16.msra.mxu0 %v1144
  %1632 = vmatprep.subr.bf16.mxu0 %v1149
  %1633 = vmatpush1.bf16.msra.mxu0 %v1148
  %1634 = vmatprep.subr.bf16.mxu0 %v1153
  %1635 = vmatpush1.bf16.msra.mxu0 %v1152
  %1636 = vmatprep.mubr.bf16.mxu0 %v309
  %1637 = vmatmul.mubr.bf16.gmra.mrb[0].mxu0 %v308
  %v1638 = vpop.f32.mrb[0].mxu0
  %v1639 = vadd.f32 %v279, %v1638
  %v1640 = vpop.f32.mrb[0].mxu0
  %v1641 = vadd.f32 %v283, %v1640
  %v1642 = vpop.f32.mrb[0].mxu0
  %v1643 = vpop.f32.mrb[0].mxu0
  %1644 = vdwg.mxu0
  %1645 = vmatprep.subr.bf16.mxu0 %v1157
  %1646 = vmatpush1.bf16.msra.mxu0 %v1156
  %1647 = vmatprep.subr.bf16.mxu0 %v1161
  %1648 = vmatpush1.bf16.msra.mxu0 %v1160
  %1649 = vmatprep.subr.bf16.mxu0 %v1165
  %1650 = vmatpush1.bf16.msra.mxu0 %v1164
  %1651 = vmatprep.subr.bf16.mxu0 %v1169
  %1652 = vmatpush1.bf16.msra.mxu0 %v1168
  %1653 = vmatprep.subr.bf16.mxu0 %v1173
  %1654 = vmatpush1.bf16.msra.mxu0 %v1172
  %1655 = vmatprep.subr.bf16.mxu0 %v1177
  %1656 = vmatpush1.bf16.msra.mxu0 %v1176
  %1657 = vmatprep.subr.bf16.mxu0 %v1181
  %1658 = vmatpush1.bf16.msra.mxu0 %v1180
  %1659 = vmatprep.subr.bf16.mxu0 %v1185
  %1660 = vmatpush1.bf16.msra.mxu0 %v1184
  %1661 = vmatprep.subr.bf16.mxu0 %v1189
  %1662 = vmatpush1.bf16.msra.mxu0 %v1188
  %1663 = vmatprep.subr.bf16.mxu0 %v1193
  %1664 = vmatpush1.bf16.msra.mxu0 %v1192
  %1665 = vmatprep.subr.bf16.mxu0 %v1197
  %1666 = vmatpush1.bf16.msra.mxu0 %v1196
  %1667 = vmatprep.subr.bf16.mxu0 %v1201
  %1668 = vmatpush1.bf16.msra.mxu0 %v1200
  %1669 = vmatprep.subr.bf16.mxu0 %v1205
  %1670 = vmatpush1.bf16.msra.mxu0 %v1204
  %1671 = vmatprep.subr.bf16.mxu0 %v1209
  %1672 = vmatpush1.bf16.msra.mxu0 %v1208
  %1673 = vmatprep.subr.bf16.mxu0 %v1213
  %1674 = vmatpush1.bf16.msra.mxu0 %v1212
  %1675 = vmatprep.subr.bf16.mxu0 %v1217
  %1676 = vmatpush1.bf16.msra.mxu0 %v1216
  %1677 = vmatprep.mubr.bf16.mxu0 %v311
  %1678 = vmatmul.mubr.bf16.gmra.mrb[0].mxu0 %v310
  %v1679 = vpop.f32.mrb[0].mxu0
  %v1680 = vadd.f32 %v1639, %v1679
  %v1681 = vpop.f32.mrb[0].mxu0
  %v1682 = vadd.f32 %v1641, %v1681
  %v1683 = vpop.f32.mrb[0].mxu0
  %v1684 = vpop.f32.mrb[0].mxu0
  %1685 = vdwg.mxu0
  %1686 = vmatprep.subr.bf16.mxu0 %v1221
  %1687 = vmatpush1.bf16.msra.mxu0 %v1220
  %1688 = vmatprep.subr.bf16.mxu0 %v1225
  %1689 = vmatpush1.bf16.msra.mxu0 %v1224
  %1690 = vmatprep.subr.bf16.mxu0 %v1229
  %1691 = vmatpush1.bf16.msra.mxu0 %v1228
  %1692 = vmatprep.subr.bf16.mxu0 %v1233
  %1693 = vmatpush1.bf16.msra.mxu0 %v1232
  %1694 = vmatprep.subr.bf16.mxu0 %v1237
  %1695 = vmatpush1.bf16.msra.mxu0 %v1236
  %1696 = vmatprep.subr.bf16.mxu0 %v1241
  %1697 = vmatpush1.bf16.msra.mxu0 %v1240
  %1698 = vmatprep.subr.bf16.mxu0 %v1245
  %1699 = vmatpush1.bf16.msra.mxu0 %v1244
  %1700 = vmatprep.subr.bf16.mxu0 %v1249
  %1701 = vmatpush1.bf16.msra.mxu0 %v1248
  %1702 = vmatprep.subr.bf16.mxu0 %v1253
  %1703 = vmatpush1.bf16.msra.mxu0 %v1252
  %1704 = vmatprep.subr.bf16.mxu0 %v1257
  %1705 = vmatpush1.bf16.msra.mxu0 %v1256
  %1706 = vmatprep.subr.bf16.mxu0 %v1261
  %1707 = vmatpush1.bf16.msra.mxu0 %v1260
  %1708 = vmatprep.subr.bf16.mxu0 %v1265
  %1709 = vmatpush1.bf16.msra.mxu0 %v1264
  %1710 = vmatprep.subr.bf16.mxu0 %v1269
  %1711 = vmatpush1.bf16.msra.mxu0 %v1268
  %1712 = vmatprep.subr.bf16.mxu0 %v1273
  %1713 = vmatpush1.bf16.msra.mxu0 %v1272
  %1714 = vmatprep.subr.bf16.mxu0 %v1277
  %1715 = vmatpush1.bf16.msra.mxu0 %v1276
  %1716 = vmatprep.subr.bf16.mxu0 %v1281
  %1717 = vmatpush1.bf16.msra.mxu0 %v1280
  %1718 = vmatprep.mubr.bf16.mxu0 %v313
  %1719 = vmatmul.mubr.bf16.gmra.mrb[0].mxu0 %v312
  %v1720 = vpop.f32.mrb[0].mxu0
  %v1721 = vadd.f32 %v1680, %v1720
  %v1722 = vpop.f32.mrb[0].mxu0
  %v1723 = vadd.f32 %v1682, %v1722
  %v1724 = vpop.f32.mrb[0].mxu0
  %v1725 = vpop.f32.mrb[0].mxu0
  %1726 = vdwg.mxu0
  %1727 = vmatprep.subr.bf16.mxu0 %v1285
  %1728 = vmatpush1.bf16.msra.mxu0 %v1284
  %1729 = vmatprep.subr.bf16.mxu0 %v1289
  %1730 = vmatpush1.bf16.msra.mxu0 %v1288
  %1731 = vmatprep.subr.bf16.mxu0 %v1293
  %1732 = vmatpush1.bf16.msra.mxu0 %v1292
  %1733 = vmatprep.subr.bf16.mxu0 %v1297
  %1734 = vmatpush1.bf16.msra.mxu0 %v1296
  %1735 = vmatprep.subr.bf16.mxu0 %v1301
  %1736 = vmatpush1.bf16.msra.mxu0 %v1300
  %1737 = vmatprep.subr.bf16.mxu0 %v1305
  %1738 = vmatpush1.bf16.msra.mxu0 %v1304
  %1739 = vmatprep.subr.bf16.mxu0 %v1309
  %1740 = vmatpush1.bf16.msra.mxu0 %v1308
  %1741 = vmatprep.subr.bf16.mxu0 %v1313
  %1742 = vmatpush1.bf16.msra.mxu0 %v1312
  %1743 = vmatprep.subr.bf16.mxu0 %v1317
  %1744 = vmatpush1.bf16.msra.mxu0 %v1316
  %1745 = vmatprep.subr.bf16.mxu0 %v1321
  %1746 = vmatpush1.bf16.msra.mxu0 %v1320
  %1747 = vmatprep.subr.bf16.mxu0 %v1325
  %1748 = vmatpush1.bf16.msra.mxu0 %v1324
  %1749 = vmatprep.subr.bf16.mxu0 %v1329
  %1750 = vmatpush1.bf16.msra.mxu0 %v1328
  %1751 = vmatprep.subr.bf16.mxu0 %v1333
  %1752 = vmatpush1.bf16.msra.mxu0 %v1332
  %1753 = vmatprep.subr.bf16.mxu0 %v1337
  %1754 = vmatpush1.bf16.msra.mxu0 %v1336
  %1755 = vmatprep.subr.bf16.mxu0 %v1341
  %1756 = vmatpush1.bf16.msra.mxu0 %v1340
  %1757 = vmatprep.subr.bf16.mxu0 %v1345
  %1758 = vmatpush1.bf16.msra.mxu0 %v1344
  %1759 = vmatprep.mubr.bf16.mxu0 %v315
  %1760 = vmatmul.mubr.bf16.gmra.mrb[0].mxu0 %v314
  %v1761 = vpop.f32.mrb[0].mxu0
  %v1762 = vadd.f32 %v1721, %v1761
  %v1763 = vpop.f32.mrb[0].mxu0
  %v1764 = vadd.f32 %v1723, %v1763
  %v1765 = vpop.f32.mrb[0].mxu0
  %v1766 = vpop.f32.mrb[0].mxu0
  %1767 = vdwg.mxu0
  %1768 = vmatprep.subr.bf16.mxu0 %v1095
  %1769 = vmatpush1.bf16.msra.mxu0 %v1094
  %1770 = vmatprep.subr.bf16.mxu0 %v1099
  %1771 = vmatpush1.bf16.msra.mxu0 %v1098
  %1772 = vmatprep.subr.bf16.mxu0 %v1103
  %1773 = vmatpush1.bf16.msra.mxu0 %v1102
  %1774 = vmatprep.subr.bf16.mxu0 %v1107
  %1775 = vmatpush1.bf16.msra.mxu0 %v1106
  %1776 = vmatprep.subr.bf16.mxu0 %v1111
  %1777 = vmatpush1.bf16.msra.mxu0 %v1110
  %1778 = vmatprep.subr.bf16.mxu0 %v1115
  %1779 = vmatpush1.bf16.msra.mxu0 %v1114
  %1780 = vmatprep.subr.bf16.mxu0 %v1119
  %1781 = vmatpush1.bf16.msra.mxu0 %v1118
  %1782 = vmatprep.subr.bf16.mxu0 %v1123
  %1783 = vmatpush1.bf16.msra.mxu0 %v1122
  %1784 = vmatprep.subr.bf16.mxu0 %v1127
  %1785 = vmatpush1.bf16.msra.mxu0 %v1126
  %1786 = vmatprep.subr.bf16.mxu0 %v1131
  %1787 = vmatpush1.bf16.msra.mxu0 %v1130
  %1788 = vmatprep.subr.bf16.mxu0 %v1135
  %1789 = vmatpush1.bf16.msra.mxu0 %v1134
  %1790 = vmatprep.subr.bf16.mxu0 %v1139
  %1791 = vmatpush1.bf16.msra.mxu0 %v1138
  %1792 = vmatprep.subr.bf16.mxu0 %v1143
  %1793 = vmatpush1.bf16.msra.mxu0 %v1142
  %1794 = vmatprep.subr.bf16.mxu0 %v1147
  %1795 = vmatpush1.bf16.msra.mxu0 %v1146
  %1796 = vmatprep.subr.bf16.mxu0 %v1151
  %1797 = vmatpush1.bf16.msra.mxu0 %v1150
  %1798 = vmatprep.subr.bf16.mxu0 %v1155
  %1799 = vmatpush1.bf16.msra.mxu0 %v1154
  %1800 = vmatprep.mubr.bf16.mxu0 %v309
  %1801 = vmatmul.mubr.bf16.gmra.mrb[0].mxu0 %v308
  %v1802 = vpop.f32.mrb[0].mxu0
  %v1803 = vadd.f32 %v287, %v1802
  %v1804 = vpop.f32.mrb[0].mxu0
  %v1805 = vadd.f32 %v291, %v1804
  %v1806 = vpop.f32.mrb[0].mxu0
  %v1807 = vpop.f32.mrb[0].mxu0
  %1808 = vdwg.mxu0
  %1809 = vmatprep.subr.bf16.mxu0 %v1159
  %1810 = vmatpush1.bf16.msra.mxu0 %v1158
  %1811 = vmatprep.subr.bf16.mxu0 %v1163
  %1812 = vmatpush1.bf16.msra.mxu0 %v1162
  %1813 = vmatprep.subr.bf16.mxu0 %v1167
  %1814 = vmatpush1.bf16.msra.mxu0 %v1166
  %1815 = vmatprep.subr.bf16.mxu0 %v1171
  %1816 = vmatpush1.bf16.msra.mxu0 %v1170
  %1817 = vmatprep.subr.bf16.mxu0 %v1175
  %1818 = vmatpush1.bf16.msra.mxu0 %v1174
  %1819 = vmatprep.subr.bf16.mxu0 %v1179
  %1820 = vmatpush1.bf16.msra.mxu0 %v1178
  %1821 = vmatprep.subr.bf16.mxu0 %v1183
  %1822 = vmatpush1.bf16.msra.mxu0 %v1182
  %1823 = vmatprep.subr.bf16.mxu0 %v1187
  %1824 = vmatpush1.bf16.msra.mxu0 %v1186
  %1825 = vmatprep.subr.bf16.mxu0 %v1191
  %1826 = vmatpush1.bf16.msra.mxu0 %v1190
  %1827 = vmatprep.subr.bf16.mxu0 %v1195
  %1828 = vmatpush1.bf16.msra.mxu0 %v1194
  %1829 = vmatprep.subr.bf16.mxu0 %v1199
  %1830 = vmatpush1.bf16.msra.mxu0 %v1198
  %1831 = vmatprep.subr.bf16.mxu0 %v1203
  %1832 = vmatpush1.bf16.msra.mxu0 %v1202
  %1833 = vmatprep.subr.bf16.mxu0 %v1207
  %1834 = vmatpush1.bf16.msra.mxu0 %v1206
  %1835 = vmatprep.subr.bf16.mxu0 %v1211
  %1836 = vmatpush1.bf16.msra.mxu0 %v1210
  %1837 = vmatprep.subr.bf16.mxu0 %v1215
  %1838 = vmatpush1.bf16.msra.mxu0 %v1214
  %1839 = vmatprep.subr.bf16.mxu0 %v1219
  %1840 = vmatpush1.bf16.msra.mxu0 %v1218
  %1841 = vmatprep.mubr.bf16.mxu0 %v311
  %1842 = vmatmul.mubr.bf16.gmra.mrb[0].mxu0 %v310
  %v1843 = vpop.f32.mrb[0].mxu0
  %v1844 = vadd.f32 %v1803, %v1843
  %v1845 = vpop.f32.mrb[0].mxu0
  %v1846 = vadd.f32 %v1805, %v1845
  %v1847 = vpop.f32.mrb[0].mxu0
  %v1848 = vpop.f32.mrb[0].mxu0
  %1849 = vdwg.mxu0
  %1850 = vmatprep.subr.bf16.mxu0 %v1223
  %1851 = vmatpush1.bf16.msra.mxu0 %v1222
  %1852 = vmatprep.subr.bf16.mxu0 %v1227
  %1853 = vmatpush1.bf16.msra.mxu0 %v1226
  %1854 = vmatprep.subr.bf16.mxu0 %v1231
  %1855 = vmatpush1.bf16.msra.mxu0 %v1230
  %1856 = vmatprep.subr.bf16.mxu0 %v1235
  %1857 = vmatpush1.bf16.msra.mxu0 %v1234
  %1858 = vmatprep.subr.bf16.mxu0 %v1239
  %1859 = vmatpush1.bf16.msra.mxu0 %v1238
  %1860 = vmatprep.subr.bf16.mxu0 %v1243
  %1861 = vmatpush1.bf16.msra.mxu0 %v1242
  %1862 = vmatprep.subr.bf16.mxu0 %v1247
  %1863 = vmatpush1.bf16.msra.mxu0 %v1246
  %1864 = vmatprep.subr.bf16.mxu0 %v1251
  %1865 = vmatpush1.bf16.msra.mxu0 %v1250
  %1866 = vmatprep.subr.bf16.mxu0 %v1255
  %1867 = vmatpush1.bf16.msra.mxu0 %v1254
  %1868 = vmatprep.subr.bf16.mxu0 %v1259
  %1869 = vmatpush1.bf16.msra.mxu0 %v1258
  %1870 = vmatprep.subr.bf16.mxu0 %v1263
  %1871 = vmatpush1.bf16.msra.mxu0 %v1262
  %1872 = vmatprep.subr.bf16.mxu0 %v1267
  %1873 = vmatpush1.bf16.msra.mxu0 %v1266
  %1874 = vmatprep.subr.bf16.mxu0 %v1271
  %1875 = vmatpush1.bf16.msra.mxu0 %v1270
  %1876 = vmatprep.subr.bf16.mxu0 %v1275
  %1877 = vmatpush1.bf16.msra.mxu0 %v1274
  %1878 = vmatprep.subr.bf16.mxu0 %v1279
  %1879 = vmatpush1.bf16.msra.mxu0 %v1278
  %1880 = vmatprep.subr.bf16.mxu0 %v1283
  %1881 = vmatpush1.bf16.msra.mxu0 %v1282
  %1882 = vmatprep.mubr.bf16.mxu0 %v313
  %1883 = vmatmul.mubr.bf16.gmra.mrb[0].mxu0 %v312
  %v1884 = vpop.f32.mrb[0].mxu0
  %v1885 = vadd.f32 %v1844, %v1884
  %v1886 = vpop.f32.mrb[0].mxu0
  %v1887 = vadd.f32 %v1846, %v1886
  %v1888 = vpop.f32.mrb[0].mxu0
  %v1889 = vpop.f32.mrb[0].mxu0
  %1890 = vdwg.mxu0
  %1891 = vmatprep.subr.bf16.mxu0 %v1287
  %1892 = vmatpush1.bf16.msra.mxu0 %v1286
  %1893 = vmatprep.subr.bf16.mxu0 %v1291
  %1894 = vmatpush1.bf16.msra.mxu0 %v1290
  %1895 = vmatprep.subr.bf16.mxu0 %v1295
  %1896 = vmatpush1.bf16.msra.mxu0 %v1294
  %1897 = vmatprep.subr.bf16.mxu0 %v1299
  %1898 = vmatpush1.bf16.msra.mxu0 %v1298
  %1899 = vmatprep.subr.bf16.mxu0 %v1303
  %1900 = vmatpush1.bf16.msra.mxu0 %v1302
  %1901 = vmatprep.subr.bf16.mxu0 %v1307
  %1902 = vmatpush1.bf16.msra.mxu0 %v1306
  %1903 = vmatprep.subr.bf16.mxu0 %v1311
  %1904 = vmatpush1.bf16.msra.mxu0 %v1310
  %1905 = vmatprep.subr.bf16.mxu0 %v1315
  %1906 = vmatpush1.bf16.msra.mxu0 %v1314
  %1907 = vmatprep.subr.bf16.mxu0 %v1319
  %1908 = vmatpush1.bf16.msra.mxu0 %v1318
  %1909 = vmatprep.subr.bf16.mxu0 %v1323
  %1910 = vmatpush1.bf16.msra.mxu0 %v1322
  %1911 = vmatprep.subr.bf16.mxu0 %v1327
  %1912 = vmatpush1.bf16.msra.mxu0 %v1326
  %1913 = vmatprep.subr.bf16.mxu0 %v1331
  %1914 = vmatpush1.bf16.msra.mxu0 %v1330
  %1915 = vmatprep.subr.bf16.mxu0 %v1335
  %1916 = vmatpush1.bf16.msra.mxu0 %v1334
  %1917 = vmatprep.subr.bf16.mxu0 %v1339
  %1918 = vmatpush1.bf16.msra.mxu0 %v1338
  %1919 = vmatprep.subr.bf16.mxu0 %v1343
  %1920 = vmatpush1.bf16.msra.mxu0 %v1342
  %1921 = vmatprep.subr.bf16.mxu0 %v1347
  %1922 = vmatpush1.bf16.msra.mxu0 %v1346
  %1923 = vmatprep.mubr.bf16.mxu0 %v315
  %1924 = vmatmul.mubr.bf16.gmra.mrb[0].mxu0 %v314
  %v1925 = vpop.f32.mrb[0].mxu0
  %v1926 = vadd.f32 %v1885, %v1925
  %v1927 = vpop.f32.mrb[0].mxu0
  %v1928 = vadd.f32 %v1887, %v1927
  %v1929 = vpop.f32.mrb[0].mxu0
  %v1930 = vpop.f32.mrb[0].mxu0
  %1931 = vdwg.mxu0
  %1932 = vst [vmem:[%s3] sm:$0xff] %v1762
  %1933 = vst [vmem:[%s3 + $0x8] sm:$0xff] %v1764
  %1934 = vst [vmem:[%s3 + $0x10] sm:$0xff] %v1926
  %1935 = vst [vmem:[%s3 + $0x18] sm:$0xff] %v1928
  // Predicated region
  $region14: #{instance_segmentation_heads.2} parent=0 // pred_check
    _
  $region15: #{instance_segmentation_heads.2} parent=0 // pred_check_branch
    %1937 = sbr.rel (0) target = $region17
  $region16: #{instance_segmentation_heads.2} parent=0 // pred_region
    _
  $region17: #{instance_segmentation_heads.2} parent=0 // pred_fallthru
    _
  // Predicated region
  $region18: #{instance_segmentation_heads.2} parent=0 // pred_check
    _
  $region19: #{instance_segmentation_heads.2} parent=0 // pred_check_branch
    %1939 = sbr.rel (0) target = $region21
  $region20: #{instance_segmentation_heads.2} parent=0 // pred_region
    _
  $region21: #{instance_segmentation_heads.2} parent=0 // pred_fallthru
    _

// kernel: instance_segmentation_heads.3
$region0: #{instance_segmentation_heads.3}
  #allocation0 [shape = 'u32[]', space=smem, size = 0x4, offset = 0x4, fixed_abs, tag = 'smem constant byte address 0x4 - core index']
  #allocation1 [shape = 'u32[144,128]{1,0:T(1,128)}', space=vmem, size = 0x12000, scoped, tag = 'internal scratch']
  %s0 = inlined_call_operand.vmem [shape: bf16[2048,256], index: 0, kind: input, shape index: {}]
  %s1 = inlined_call_operand.vmem [shape: bf16[256,1024], index: 1, kind: input, shape index: {}]
  %s2 = inlined_call_operand.vmem [shape: f32[1,1024], index: 2, kind: input, shape index: {}]
  %s3 = inlined_call_operand.vmem [shape: bf16[256,128], index: 3, kind: input, shape index: {}]
  %s4 = inlined_call_operand.vmem [shape: f32[1,128], index: 4, kind: input, shape index: {}]
  %s5 = inlined_call_operand.vmem [shape: f32[2048,512], index: 5, kind: output, shape index: {}]
  %s6 = sld [smem:[#allocation0]]
  $region53: #{instance_segmentation_heads.3} parent=0
    _
  %s8 = ssub.s32 1, %s6
  %s9 = scalar_select 0, %s8, %s6
  loop: start=0, step=1, limit=6
  $region2: #{instance_segmentation_heads.3} parent=0 // loop_pre_header
    _
  $region3: #{instance_segmentation_heads.3} parent=0 // loop_header
    %s11 = sphi 0, %s15
    %p12 = scmp.ge.s32.totalorder %s11, 6
    %s21 = sphi 0, %s23
    %s24 = sphi 0, %s21
    %s25 = sphi 0, %s24
    %s41 = sphi 0, %s25
    %s45 = sphi 0, %s45
    %s47 = sphi 0, %s45
    %s48 = sphi 0, %s47
    %s62 = sphi 0, %s48
    %s66 = sphi 0, %s66
    %s68 = sphi 0, %s66
    %s69 = sphi 0, %s68
    %s83 = sphi 0, %s69
    %s87 = sphi 0, %s87
    %s89 = sphi 0, %s87
    %s90 = sphi 0, %s89
    %s104 = sphi 0, %s90
    %s108 = sphi 0, %s108
    %s110 = sphi 0, %s108
    %s111 = sphi 0, %s110
    %s125 = sphi 0, %s111
    %s131 = sphi 0, %s133
    %s134 = sphi 0, %s131
    %s135 = sphi 0, %s134
    %s151 = sphi 0, %s135
  $region4: #{instance_segmentation_heads.3} parent=0 // loop_header_branch
    %14 = sbr.rel (%p12) target = $region8
  $region5: #{instance_segmentation_heads.3} parent=0 // loop_body
    %s16 = ssub.s32 %s11, 1
    %s17 = ssub.s32 %s11, 2
    %s18 = sadd.s32 %s11, 1
    %s19 = ssub.s32 %s11, %s18
    %p20 = scmp.eq.s32.totalorder %s19, 0
    %s22 = sadd.s32 %s21, 1
    %s23 = scalar_select %p20, %s21, %s22
    %p26 = pneg %p20
    %p27 = scmp.eq.s32.totalorder %s11, 3
    %p28 = por %p26, %p27
    %p29 = scmp.ne.s32.totalorder %s21, %s24
    %p30 = scmp.eq.s32.totalorder %s11, 0
    %p31 = por %p29, %p30
    %p32 = scmp.ne.s32.totalorder %s21, %s24
    %p33 = scmp.eq.s32.totalorder %s16, 3
    %p34 = por %p32, %p33
    %p35 = scmp.ne.s32.totalorder %s24, %s25
    %p36 = scmp.eq.s32.totalorder %s16, 0
    %p37 = por %p35, %p36
    %p38 = scmp.ne.s32.totalorder %s24, %s25
    %p39 = scmp.eq.s32.totalorder %s17, 3
    %p40 = por %p38, %p39
    %p42 = scmp.ne.s32.totalorder %s25, %s41
    %p43 = scmp.eq.s32.totalorder %s17, 0
    %p44 = por %p42, %p43
    %s46 = sadd.s32 %s45, 1
    %p49 = scmp.eq.s32.totalorder %s11, 3
    %p50 = scmp.ne.s32.totalorder %s45, %s47
    %p51 = scmp.eq.s32.totalorder %s11, 0
    %p52 = por %p50, %p51
    %p53 = scmp.ne.s32.totalorder %s45, %s47
    %p54 = scmp.eq.s32.totalorder %s16, 3
    %p55 = por %p53, %p54
    %p56 = scmp.ne.s32.totalorder %s47, %s48
    %p57 = scmp.eq.s32.totalorder %s16, 0
    %p58 = por %p56, %p57
    %p59 = scmp.ne.s32.totalorder %s47, %s48
    %p60 = scmp.eq.s32.totalorder %s17, 3
    %p61 = por %p59, %p60
    %p63 = scmp.ne.s32.totalorder %s48, %s62
    %p64 = scmp.eq.s32.totalorder %s17, 0
    %p65 = por %p63, %p64
    %s67 = sadd.s32 %s66, 1
    %p70 = scmp.eq.s32.totalorder %s11, 3
    %p71 = scmp.ne.s32.totalorder %s66, %s68
    %p72 = scmp.eq.s32.totalorder %s11, 0
    %p73 = por %p71, %p72
    %p74 = scmp.ne.s32.totalorder %s66, %s68
    %p75 = scmp.eq.s32.totalorder %s16, 3
    %p76 = por %p74, %p75
    %p77 = scmp.ne.s32.totalorder %s68, %s69
    %p78 = scmp.eq.s32.totalorder %s16, 0
    %p79 = por %p77, %p78
    %p80 = scmp.ne.s32.totalorder %s68, %s69
    %p81 = scmp.eq.s32.totalorder %s17, 3
    %p82 = por %p80, %p81
    %p84 = scmp.ne.s32.totalorder %s69, %s83
    %p85 = scmp.eq.s32.totalorder %s17, 0
    %p86 = por %p84, %p85
    %s88 = sadd.s32 %s87, 1
    %p91 = scmp.eq.s32.totalorder %s11, 3
    %p92 = scmp.ne.s32.totalorder %s87, %s89
    %p93 = scmp.eq.s32.totalorder %s11, 0
    %p94 = por %p92, %p93
    %p95 = scmp.ne.s32.totalorder %s87, %s89
    %p96 = scmp.eq.s32.totalorder %s16, 3
    %p97 = por %p95, %p96
    %p98 = scmp.ne.s32.totalorder %s89, %s90
    %p99 = scmp.eq.s32.totalorder %s16, 0
    %p100 = por %p98, %p99
    %p101 = scmp.ne.s32.totalorder %s89, %s90
    %p102 = scmp.eq.s32.totalorder %s17, 3
    %p103 = por %p101, %p102
    %p105 = scmp.ne.s32.totalorder %s90, %s104
    %p106 = scmp.eq.s32.totalorder %s17, 0
    %p107 = por %p105, %p106
    %s109 = sadd.s32 %s108, 1
    %p112 = scmp.eq.s32.totalorder %s11, 3
    %p113 = scmp.ne.s32.totalorder %s108, %s110
    %p114 = scmp.eq.s32.totalorder %s11, 0
    %p115 = por %p113, %p114
    %p116 = scmp.ne.s32.totalorder %s108, %s110
    %p117 = scmp.eq.s32.totalorder %s16, 3
    %p118 = por %p116, %p117
    %p119 = scmp.ne.s32.totalorder %s110, %s111
    %p120 = scmp.eq.s32.totalorder %s16, 0
    %p121 = por %p119, %p120
    %p122 = scmp.ne.s32.totalorder %s110, %s111
    %p123 = scmp.eq.s32.totalorder %s17, 3
    %p124 = por %p122, %p123
    %p126 = scmp.ne.s32.totalorder %s111, %s125
    %p127 = scmp.eq.s32.totalorder %s17, 0
    %p128 = por %p126, %p127
    %s129 = ssub.s32 %s11, %s18
    %p130 = scmp.eq.s32.totalorder %s129, 0
    %s132 = sadd.s32 %s131, 1
    %s133 = scalar_select %p130, %s131, %s132
    %p136 = pneg %p130
    %p137 = scmp.eq.s32.totalorder %s11, 3
    %p138 = por %p136, %p137
    %p139 = scmp.ne.s32.totalorder %s131, %s134
    %p140 = scmp.eq.s32.totalorder %s11, 0
    %p141 = por %p139, %p140
    %p142 = scmp.ne.s32.totalorder %s131, %s134
    %p143 = scmp.eq.s32.totalorder %s16, 3
    %p144 = por %p142, %p143
    %p145 = scmp.ne.s32.totalorder %s134, %s135
    %p146 = scmp.eq.s32.totalorder %s16, 0
    %p147 = por %p145, %p146
    %p148 = scmp.ne.s32.totalorder %s134, %s135
    %p149 = scmp.eq.s32.totalorder %s17, 3
    %p150 = por %p148, %p149
    %p152 = scmp.ne.s32.totalorder %s135, %s151
    %p153 = scmp.eq.s32.totalorder %s17, 0
    %p154 = por %p152, %p153
    %p155 = scmp.le.s32.totalorder 1, %s11
    %p156 = scmp.lt.s32.totalorder %s11, 5
    %p157 = pnand %p155, %p156
    %p158 = pneg %p157
    // Predicated region
    $region9: #{instance_segmentation_heads.3} parent=5 // pred_check
      _
    $region10: #{instance_segmentation_heads.3} parent=5 // pred_check_branch
      %160 = sbr.rel (%p157) target = $region12
    $region11: #{instance_segmentation_heads.3} parent=5 // pred_region
      %s161 = ssub.s32 %s11, 1
      // Predicated region
      $region13: #{instance_segmentation_heads.3} parent=11 // pred_check
        %p162 = pneg %p58
      $region14: #{instance_segmentation_heads.3} parent=11 // pred_check_branch
        %164 = sbr.rel (%p162) target = $region16
      $region15: #{instance_segmentation_heads.3} parent=11 // pred_region
        _
      $region16: #{instance_segmentation_heads.3} parent=11 // pred_fallthru
        _
      // Predicated region
      $region17: #{instance_segmentation_heads.3} parent=11 // pred_check
        %p165 = pneg %p79
      $region18: #{instance_segmentation_heads.3} parent=11 // pred_check_branch
        %167 = sbr.rel (%p165) target = $region20
      $region19: #{instance_segmentation_heads.3} parent=11 // pred_region
        _
      $region20: #{instance_segmentation_heads.3} parent=11 // pred_fallthru
        _
      // Predicated region
      $region21: #{instance_segmentation_heads.3} parent=11 // pred_check
        %p168 = pneg %p100
      $region22: #{instance_segmentation_heads.3} parent=11 // pred_check_branch
        %170 = sbr.rel (%p168) target = $region24
      $region23: #{instance_segmentation_heads.3} parent=11 // pred_region
        _
      $region24: #{instance_segmentation_heads.3} parent=11 // pred_fallthru
        _
      // Predicated region
      $region25: #{instance_segmentation_heads.3} parent=11 // pred_check
        %p171 = pneg %p121
      $region26: #{instance_segmentation_heads.3} parent=11 // pred_check_branch
        %173 = sbr.rel (%p171) target = $region28
      $region27: #{instance_segmentation_heads.3} parent=11 // pred_region
        _
      $region28: #{instance_segmentation_heads.3} parent=11 // pred_fallthru
        _
    $region12: #{instance_segmentation_heads.3} parent=5 // pred_fallthru
      _
    %p174 = scmp.lt.s32.totalorder %s11, 4
    // Predicated region
    $region29: #{instance_segmentation_heads.3} parent=5 // pred_check
      %p175 = pneg %p174
    $region30: #{instance_segmentation_heads.3} parent=5 // pred_check_branch
      %177 = sbr.rel (%p175) target = $region32
    $region31: #{instance_segmentation_heads.3} parent=5 // pred_region
      // Predicated region
      $region33: #{instance_segmentation_heads.3} parent=31 // pred_check
        %p178 = pneg %p31
      $region34: #{instance_segmentation_heads.3} parent=31 // pred_check_branch
        %180 = sbr.rel (%p178) target = $region36
      $region35: #{instance_segmentation_heads.3} parent=31 // pred_region
        %s181 = smul.u32 64, %s11
        %p182 = scmp.lt.s32.totalorder %s181, 255
        %s183 = scalar_select %p182, %s181, 255
        %s184 = smul.addr %s183, 2
        %s185 = smul.addr %s184, 4
        %s186 = scalar_lea.vmem %s0, %s185
        %s187 = smul.u32 64, %s11
      $region36: #{instance_segmentation_heads.3} parent=31 // pred_fallthru
        _
    $region32: #{instance_segmentation_heads.3} parent=5 // pred_fallthru
      _
    %p188 = scmp.le.s32.totalorder 1, %s11
    %p189 = scmp.lt.s32.totalorder %s11, 5
    %p190 = pnand %p188, %p189
    %p191 = pneg %p190
    // Predicated region
    $region37: #{instance_segmentation_heads.3} parent=5 // pred_check
      _
    $region38: #{instance_segmentation_heads.3} parent=5 // pred_check_branch
      %193 = sbr.rel (%p190) target = $region40
    $region39: #{instance_segmentation_heads.3} parent=5 // pred_region
      %s194 = ssub.s32 %s11, 1
      %s195 = smul.u32 64, %s16
      %p196 = scmp.lt.s32.totalorder %s195, 255
      %s197 = scalar_select %p196, %s195, 255
      %s198 = smul.addr %s197, 2
      %s199 = smul.addr %s198, 4
      %s200 = scalar_lea.vmem %s0, %s199
      %p201 = pneg %p37
      %p202 = pneg %p34
      %p203 = pneg %p58
      %p204 = pneg %p55
      %p205 = pneg %p79
      %p206 = pneg %p76
      %p207 = pneg %p100
      %p208 = pneg %p97
      %p209 = pneg %p121
      %p210 = pneg %p118
      %p211 = pneg %p147
      %p212 = pneg %p144
      %s213 = smul.u32 64, %s16
      %p214 = scmp.lt.s32.totalorder %s213, 255
      %s215 = scalar_select %p214, %s213, 255
      %s216 = smul.addr %s215, 4
      %s217 = smul.addr %s216, 8
      %s218 = scalar_lea.vmem %s5, %s217
      %s219 = smul.u32 64, %s16
      %p220 = scmp.lt.s32.totalorder %s219, 255
      %s221 = scalar_select %p220, %s219, 255
      %s222 = smul.addr %s221, 2
      %s223 = smul.addr %s222, 4
      %s224 = scalar_lea.vmem %s0, %s223
      %s225 = smul.u32 64, %s16
      %s226 = smul.u32 64, %s16
      %p227 = scmp.lt.s32.totalorder %s226, 255
      %s228 = scalar_select %p227, %s226, 255
      %s229 = smul.addr %s228, 4
      %s230 = smul.addr %s229, 8
      %s231 = scalar_lea.vmem %s5, %s230
      %s232 = smul.u32 64, %s16
      %v234 = vld [vmem:[%s224] sm:$0xff]
      %v235 = vld [vmem:[%s224 + $0x8] sm:$0xff]
      %v236 = vld [vmem:[%s224 + $0x10] sm:$0xff]
      %v237 = vld [vmem:[%s224 + $0x18] sm:$0xff]
      %v238 = vld [vmem:[%s224 + $0x20] sm:$0xff]
      %v239 = vld [vmem:[%s224 + $0x28] sm:$0xff]
      %v240 = vld [vmem:[%s224 + $0x30] sm:$0xff]
      %v241 = vld [vmem:[%s224 + $0x38] sm:$0xff]
      %v242 = vld [vmem:[%s224 + $0x40] sm:$0xff]
      %v243 = vld [vmem:[%s224 + $0x48] sm:$0xff]
      %v244 = vld [vmem:[%s224 + $0x50] sm:$0xff]
      %v245 = vld [vmem:[%s224 + $0x58] sm:$0xff]
      %v246 = vld [vmem:[%s224 + $0x60] sm:$0xff]
      %v247 = vld [vmem:[%s224 + $0x68] sm:$0xff]
      %v248 = vld [vmem:[%s224 + $0x70] sm:$0xff]
      %v249 = vld [vmem:[%s224 + $0x78] sm:$0xff]
      %v250 = vld [vmem:[%s224 + $0x80] sm:$0xff]
      %v251 = vld [vmem:[%s224 + $0x88] sm:$0xff]
      %v252 = vld [vmem:[%s224 + $0x90] sm:$0xff]
      %v253 = vld [vmem:[%s224 + $0x98] sm:$0xff]
      %v254 = vld [vmem:[%s224 + $0xa0] sm:$0xff]
      %v255 = vld [vmem:[%s224 + $0xa8] sm:$0xff]
      %v256 = vld [vmem:[%s224 + $0xb0] sm:$0xff]
      %v257 = vld [vmem:[%s224 + $0xb8] sm:$0xff]
      %v258 = vld [vmem:[%s224 + $0xc0] sm:$0xff]
      %v259 = vld [vmem:[%s224 + $0xc8] sm:$0xff]
      %v260 = vld [vmem:[%s224 + $0xd0] sm:$0xff]
      %v261 = vld [vmem:[%s224 + $0xd8] sm:$0xff]
      %v262 = vld [vmem:[%s224 + $0xe0] sm:$0xff]
      %v263 = vld [vmem:[%s224 + $0xe8] sm:$0xff]
      %v264 = vld [vmem:[%s224 + $0xf0] sm:$0xff]
      %v265 = vld [vmem:[%s224 + $0xf8] sm:$0xff]
      %v266 = vld [vmem:[%s224 + $0x100] sm:$0xff]
      %v267 = vld [vmem:[%s224 + $0x108] sm:$0xff]
      %v268 = vld [vmem:[%s224 + $0x110] sm:$0xff]
      %v269 = vld [vmem:[%s224 + $0x118] sm:$0xff]
      %v270 = vld [vmem:[%s224 + $0x120] sm:$0xff]
      %v271 = vld [vmem:[%s224 + $0x128] sm:$0xff]
      %v272 = vld [vmem:[%s224 + $0x130] sm:$0xff]
      %v273 = vld [vmem:[%s224 + $0x138] sm:$0xff]
      %v274 = vld [vmem:[%s224 + $0x140] sm:$0xff]
      %v275 = vld [vmem:[%s224 + $0x148] sm:$0xff]
      %v276 = vld [vmem:[%s224 + $0x150] sm:$0xff]
      %v277 = vld [vmem:[%s224 + $0x158] sm:$0xff]
      %v278 = vld [vmem:[%s224 + $0x160] sm:$0xff]
      %v279 = vld [vmem:[%s224 + $0x168] sm:$0xff]
      %v280 = vld [vmem:[%s224 + $0x170] sm:$0xff]
      %v281 = vld [vmem:[%s224 + $0x178] sm:$0xff]
      %v282 = vld [vmem:[%s224 + $0x180] sm:$0xff]
      %v283 = vld [vmem:[%s224 + $0x188] sm:$0xff]
      %v284 = vld [vmem:[%s224 + $0x190] sm:$0xff]
      %v285 = vld [vmem:[%s224 + $0x198] sm:$0xff]
      %v286 = vld [vmem:[%s224 + $0x1a0] sm:$0xff]
      %v287 = vld [vmem:[%s224 + $0x1a8] sm:$0xff]
      %v288 = vld [vmem:[%s224 + $0x1b0] sm:$0xff]
      %v289 = vld [vmem:[%s224 + $0x1b8] sm:$0xff]
      %v290 = vld [vmem:[%s224 + $0x1c0] sm:$0xff]
      %v291 = vld [vmem:[%s224 + $0x1c8] sm:$0xff]
      %v292 = vld [vmem:[%s224 + $0x1d0] sm:$0xff]
      %v293 = vld [vmem:[%s224 + $0x1d8] sm:$0xff]
      %v294 = vld [vmem:[%s224 + $0x1e0] sm:$0xff]
      %v295 = vld [vmem:[%s224 + $0x1e8] sm:$0xff]
      %v296 = vld [vmem:[%s224 + $0x1f0] sm:$0xff]
      %v297 = vld [vmem:[%s224 + $0x1f8] sm:$0xff]
      %v298 = vld [vmem:[%s1] sm:$0xff]
      %v299 = vld [vmem:[%s1 + $0x8] sm:$0xff]
      %v300 = vld [vmem:[%s1 + $0x10] sm:$0xff]
      %v301 = vld [vmem:[%s1 + $0x18] sm:$0xff]
      %v302 = vld [vmem:[%s1 + $0x20] sm:$0xff]
      %v303 = vld [vmem:[%s1 + $0x28] sm:$0xff]
      %v304 = vld [vmem:[%s1 + $0x30] sm:$0xff]
      %v305 = vld [vmem:[%s1 + $0x38] sm:$0xff]
      %v306 = vld [vmem:[%s1 + $0x40] sm:$0xff]
      %v307 = vld [vmem:[%s1 + $0x48] sm:$0xff]
      %v308 = vld [vmem:[%s1 + $0x50] sm:$0xff]
      %v309 = vld [vmem:[%s1 + $0x58] sm:$0xff]
      %v310 = vld [vmem:[%s1 + $0x60] sm:$0xff]
      %v311 = vld [vmem:[%s1 + $0x68] sm:$0xff]
      %v312 = vld [vmem:[%s1 + $0x70] sm:$0xff]
      %v313 = vld [vmem:[%s1 + $0x78] sm:$0xff]
      %v314 = vld [vmem:[%s1 + $0x80] sm:$0xff]
      %v315 = vld [vmem:[%s1 + $0x88] sm:$0xff]
      %v316 = vld [vmem:[%s1 + $0x90] sm:$0xff]
      %v317 = vld [vmem:[%s1 + $0x98] sm:$0xff]
      %v318 = vld [vmem:[%s1 + $0xa0] sm:$0xff]
      %v319 = vld [vmem:[%s1 + $0xa8] sm:$0xff]
      %v320 = vld [vmem:[%s1 + $0xb0] sm:$0xff]
      %v321 = vld [vmem:[%s1 + $0xb8] sm:$0xff]
      %v322 = vld [vmem:[%s1 + $0xc0] sm:$0xff]
      %v323 = vld [vmem:[%s1 + $0xc8] sm:$0xff]
      %v324 = vld [vmem:[%s1 + $0xd0] sm:$0xff]
      %v325 = vld [vmem:[%s1 + $0xd8] sm:$0xff]
      %v326 = vld [vmem:[%s1 + $0xe0] sm:$0xff]
      %v327 = vld [vmem:[%s1 + $0xe8] sm:$0xff]
      %v328 = vld [vmem:[%s1 + $0xf0] sm:$0xff]
      %v329 = vld [vmem:[%s1 + $0xf8] sm:$0xff]
      %v330 = vld [vmem:[%s1 + $0x100] sm:$0xff]
      %v331 = vld [vmem:[%s1 + $0x108] sm:$0xff]
      %v332 = vld [vmem:[%s1 + $0x110] sm:$0xff]
      %v333 = vld [vmem:[%s1 + $0x118] sm:$0xff]
      %v334 = vld [vmem:[%s1 + $0x120] sm:$0xff]
      %v335 = vld [vmem:[%s1 + $0x128] sm:$0xff]
      %v336 = vld [vmem:[%s1 + $0x130] sm:$0xff]
      %v337 = vld [vmem:[%s1 + $0x138] sm:$0xff]
      %v338 = vld [vmem:[%s1 + $0x140] sm:$0xff]
      %v339 = vld [vmem:[%s1 + $0x148] sm:$0xff]
      %v340 = vld [vmem:[%s1 + $0x150] sm:$0xff]
      %v341 = vld [vmem:[%s1 + $0x158] sm:$0xff]
      %v342 = vld [vmem:[%s1 + $0x160] sm:$0xff]
      %v343 = vld [vmem:[%s1 + $0x168] sm:$0xff]
      %v344 = vld [vmem:[%s1 + $0x170] sm:$0xff]
      %v345 = vld [vmem:[%s1 + $0x178] sm:$0xff]
      %v346 = vld [vmem:[%s1 + $0x180] sm:$0xff]
      %v347 = vld [vmem:[%s1 + $0x188] sm:$0xff]
      %v348 = vld [vmem:[%s1 + $0x190] sm:$0xff]
      %v349 = vld [vmem:[%s1 + $0x198] sm:$0xff]
      %v350 = vld [vmem:[%s1 + $0x1a0] sm:$0xff]
      %v351 = vld [vmem:[%s1 + $0x1a8] sm:$0xff]
      %v352 = vld [vmem:[%s1 + $0x1b0] sm:$0xff]
      %v353 = vld [vmem:[%s1 + $0x1b8] sm:$0xff]
      %v354 = vld [vmem:[%s1 + $0x1c0] sm:$0xff]
      %v355 = vld [vmem:[%s1 + $0x1c8] sm:$0xff]
      %v356 = vld [vmem:[%s1 + $0x1d0] sm:$0xff]
      %v357 = vld [vmem:[%s1 + $0x1d8] sm:$0xff]
      %v358 = vld [vmem:[%s1 + $0x1e0] sm:$0xff]
      %v359 = vld [vmem:[%s1 + $0x1e8] sm:$0xff]
      %v360 = vld [vmem:[%s1 + $0x1f0] sm:$0xff]
      %v361 = vld [vmem:[%s1 + $0x1f8] sm:$0xff]
      %v362 = vld [vmem:[%s1 + $0x200] sm:$0xff]
      %v363 = vld [vmem:[%s1 + $0x208] sm:$0xff]
      %v364 = vld [vmem:[%s1 + $0x210] sm:$0xff]
      %v365 = vld [vmem:[%s1 + $0x218] sm:$0xff]
      %v366 = vld [vmem:[%s1 + $0x220] sm:$0xff]
      %v367 = vld [vmem:[%s1 + $0x228] sm:$0xff]
      %v368 = vld [vmem:[%s1 + $0x230] sm:$0xff]
      %v369 = vld [vmem:[%s1 + $0x238] sm:$0xff]
      %v370 = vld [vmem:[%s1 + $0x240] sm:$0xff]
      %v371 = vld [vmem:[%s1 + $0x248] sm:$0xff]
      %v372 = vld [vmem:[%s1 + $0x250] sm:$0xff]
      %v373 = vld [vmem:[%s1 + $0x258] sm:$0xff]
      %v374 = vld [vmem:[%s1 + $0x260] sm:$0xff]
      %v375 = vld [vmem:[%s1 + $0x268] sm:$0xff]
      %v376 = vld [vmem:[%s1 + $0x270] sm:$0xff]
      %v377 = vld [vmem:[%s1 + $0x278] sm:$0xff]
      %v378 = vld [vmem:[%s1 + $0x280] sm:$0xff]
      %v379 = vld [vmem:[%s1 + $0x288] sm:$0xff]
      %v380 = vld [vmem:[%s1 + $0x290] sm:$0xff]
      %v381 = vld [vmem:[%s1 + $0x298] sm:$0xff]
      %v382 = vld [vmem:[%s1 + $0x2a0] sm:$0xff]
      %v383 = vld [vmem:[%s1 + $0x2a8] sm:$0xff]
      %v384 = vld [vmem:[%s1 + $0x2b0] sm:$0xff]
      %v385 = vld [vmem:[%s1 + $0x2b8] sm:$0xff]
      %v386 = vld [vmem:[%s1 + $0x2c0] sm:$0xff]
      %v387 = vld [vmem:[%s1 + $0x2c8] sm:$0xff]
      %v388 = vld [vmem:[%s1 + $0x2d0] sm:$0xff]
      %v389 = vld [vmem:[%s1 + $0x2d8] sm:$0xff]
      %v390 = vld [vmem:[%s1 + $0x2e0] sm:$0xff]
      %v391 = vld [vmem:[%s1 + $0x2e8] sm:$0xff]
      %v392 = vld [vmem:[%s1 + $0x2f0] sm:$0xff]
      %v393 = vld [vmem:[%s1 + $0x2f8] sm:$0xff]
      %v394 = vld [vmem:[%s1 + $0x300] sm:$0xff]
      %v395 = vld [vmem:[%s1 + $0x308] sm:$0xff]
      %v396 = vld [vmem:[%s1 + $0x310] sm:$0xff]
      %v397 = vld [vmem:[%s1 + $0x318] sm:$0xff]
      %v398 = vld [vmem:[%s1 + $0x320] sm:$0xff]
      %v399 = vld [vmem:[%s1 + $0x328] sm:$0xff]
      %v400 = vld [vmem:[%s1 + $0x330] sm:$0xff]
      %v401 = vld [vmem:[%s1 + $0x338] sm:$0xff]
      %v402 = vld [vmem:[%s1 + $0x340] sm:$0xff]
      %v403 = vld [vmem:[%s1 + $0x348] sm:$0xff]
      %v404 = vld [vmem:[%s1 + $0x350] sm:$0xff]
      %v405 = vld [vmem:[%s1 + $0x358] sm:$0xff]
      %v406 = vld [vmem:[%s1 + $0x360] sm:$0xff]
      %v407 = vld [vmem:[%s1 + $0x368] sm:$0xff]
      %v408 = vld [vmem:[%s1 + $0x370] sm:$0xff]
      %v409 = vld [vmem:[%s1 + $0x378] sm:$0xff]
      %v410 = vld [vmem:[%s1 + $0x380] sm:$0xff]
      %v411 = vld [vmem:[%s1 + $0x388] sm:$0xff]
      %v412 = vld [vmem:[%s1 + $0x390] sm:$0xff]
      %v413 = vld [vmem:[%s1 + $0x398] sm:$0xff]
      %v414 = vld [vmem:[%s1 + $0x3a0] sm:$0xff]
      %v415 = vld [vmem:[%s1 + $0x3a8] sm:$0xff]
      %v416 = vld [vmem:[%s1 + $0x3b0] sm:$0xff]
      %v417 = vld [vmem:[%s1 + $0x3b8] sm:$0xff]
      %v418 = vld [vmem:[%s1 + $0x3c0] sm:$0xff]
      %v419 = vld [vmem:[%s1 + $0x3c8] sm:$0xff]
      %v420 = vld [vmem:[%s1 + $0x3d0] sm:$0xff]
      %v421 = vld [vmem:[%s1 + $0x3d8] sm:$0xff]
      %v422 = vld [vmem:[%s1 + $0x3e0] sm:$0xff]
      %v423 = vld [vmem:[%s1 + $0x3e8] sm:$0xff]
      %v424 = vld [vmem:[%s1 + $0x3f0] sm:$0xff]
      %v425 = vld [vmem:[%s1 + $0x3f8] sm:$0xff]
      %v426 = vld [vmem:[%s2] sm:$0xff]
      %v428 = vlaneseq
      %v429 = vshrl.u32 %v428, 7
      %v430 = vsub.s32 0, %v429
      %v431 = vrot.slane %v426, %v430
      %v432 = vlaneseq
      %v433 = vshrl.u32 %v432, 7
      %v434 = vsub.s32 1, %v433
      %v435 = vrot.slane %v426, %v434
      %v436 = vlaneseq
      %v437 = vshrl.u32 %v436, 7
      %v438 = vsub.s32 2, %v437
      %v439 = vrot.slane %v426, %v438
      %v440 = vlaneseq
      %v441 = vshrl.u32 %v440, 7
      %v442 = vsub.s32 3, %v441
      %v443 = vrot.slane %v426, %v442
      %v444 = vlaneseq
      %v445 = vshrl.u32 %v444, 7
      %v446 = vsub.s32 4, %v445
      %v447 = vrot.slane %v426, %v446
      %v448 = vlaneseq
      %v449 = vshrl.u32 %v448, 7
      %v450 = vsub.s32 5, %v449
      %v451 = vrot.slane %v426, %v450
      %v452 = vlaneseq
      %v453 = vshrl.u32 %v452, 7
      %v454 = vsub.s32 6, %v453
      %v455 = vrot.slane %v426, %v454
      %v456 = vlaneseq
      %v457 = vshrl.u32 %v456, 7
      %v458 = vsub.s32 7, %v457
      %v459 = vrot.slane %v426, %v458
      %v532 = vunpack.c.l.b16 %v234
      %v533 = vunpack.c.h.b16 %v234
      %v534 = vunpack.c.l.b16 %v235
      %v535 = vunpack.c.h.b16 %v235
      %v536 = vunpack.c.l.b16 %v236
      %v537 = vunpack.c.h.b16 %v236
      %v538 = vunpack.c.l.b16 %v237
      %v539 = vunpack.c.h.b16 %v237
      %v540 = vunpack.c.l.b16 %v238
      %v541 = vunpack.c.h.b16 %v238
      %v542 = vunpack.c.l.b16 %v239
      %v543 = vunpack.c.h.b16 %v239
      %v544 = vunpack.c.l.b16 %v240
      %v545 = vunpack.c.h.b16 %v240
      %v546 = vunpack.c.l.b16 %v241
      %v547 = vunpack.c.h.b16 %v241
      %v548 = vunpack.c.l.b16 %v242
      %v549 = vunpack.c.h.b16 %v242
      %v550 = vunpack.c.l.b16 %v243
      %v551 = vunpack.c.h.b16 %v243
      %v552 = vunpack.c.l.b16 %v244
      %v553 = vunpack.c.h.b16 %v244
      %v554 = vunpack.c.l.b16 %v245
      %v555 = vunpack.c.h.b16 %v245
      %v556 = vunpack.c.l.b16 %v246
      %v557 = vunpack.c.h.b16 %v246
      %v558 = vunpack.c.l.b16 %v247
      %v559 = vunpack.c.h.b16 %v247
      %v560 = vunpack.c.l.b16 %v248
      %v561 = vunpack.c.h.b16 %v248
      %v562 = vunpack.c.l.b16 %v249
      %v563 = vunpack.c.h.b16 %v249
      %v564 = vunpack.c.l.b16 %v250
      %v565 = vunpack.c.h.b16 %v250
      %v566 = vunpack.c.l.b16 %v251
      %v567 = vunpack.c.h.b16 %v251
      %v568 = vunpack.c.l.b16 %v252
      %v569 = vunpack.c.h.b16 %v252
      %v570 = vunpack.c.l.b16 %v253
      %v571 = vunpack.c.h.b16 %v253
      %v572 = vunpack.c.l.b16 %v254
      %v573 = vunpack.c.h.b16 %v254
      %v574 = vunpack.c.l.b16 %v255
      %v575 = vunpack.c.h.b16 %v255
      %v576 = vunpack.c.l.b16 %v256
      %v577 = vunpack.c.h.b16 %v256
      %v578 = vunpack.c.l.b16 %v257
      %v579 = vunpack.c.h.b16 %v257
      %v580 = vunpack.c.l.b16 %v258
      %v581 = vunpack.c.h.b16 %v258
      %v582 = vunpack.c.l.b16 %v259
      %v583 = vunpack.c.h.b16 %v259
      %v584 = vunpack.c.l.b16 %v260
      %v585 = vunpack.c.h.b16 %v260
      %v586 = vunpack.c.l.b16 %v261
      %v587 = vunpack.c.h.b16 %v261
      %v588 = vunpack.c.l.b16 %v262
      %v589 = vunpack.c.h.b16 %v262
      %v590 = vunpack.c.l.b16 %v263
      %v591 = vunpack.c.h.b16 %v263
      %v592 = vunpack.c.l.b16 %v264
      %v593 = vunpack.c.h.b16 %v264
      %v594 = vunpack.c.l.b16 %v265
      %v595 = vunpack.c.h.b16 %v265
      %v596 = vunpack.c.l.b16 %v266
      %v597 = vunpack.c.h.b16 %v266
      %v598 = vunpack.c.l.b16 %v267
      %v599 = vunpack.c.h.b16 %v267
      %v600 = vunpack.c.l.b16 %v268
      %v601 = vunpack.c.h.b16 %v268
      %v602 = vunpack.c.l.b16 %v269
      %v603 = vunpack.c.h.b16 %v269
      %v604 = vunpack.c.l.b16 %v270
      %v605 = vunpack.c.h.b16 %v270
      %v606 = vunpack.c.l.b16 %v271
      %v607 = vunpack.c.h.b16 %v271
      %v608 = vunpack.c.l.b16 %v272
      %v609 = vunpack.c.h.b16 %v272
      %v610 = vunpack.c.l.b16 %v273
      %v611 = vunpack.c.h.b16 %v273
      %v612 = vunpack.c.l.b16 %v274
      %v613 = vunpack.c.h.b16 %v274
      %v614 = vunpack.c.l.b16 %v275
      %v615 = vunpack.c.h.b16 %v275
      %v616 = vunpack.c.l.b16 %v276
      %v617 = vunpack.c.h.b16 %v276
      %v618 = vunpack.c.l.b16 %v277
      %v619 = vunpack.c.h.b16 %v277
      %v620 = vunpack.c.l.b16 %v278
      %v621 = vunpack.c.h.b16 %v278
      %v622 = vunpack.c.l.b16 %v279
      %v623 = vunpack.c.h.b16 %v279
      %v624 = vunpack.c.l.b16 %v280
      %v625 = vunpack.c.h.b16 %v280
      %v626 = vunpack.c.l.b16 %v281
      %v627 = vunpack.c.h.b16 %v281
      %v628 = vunpack.c.l.b16 %v282
      %v629 = vunpack.c.h.b16 %v282
      %v630 = vunpack.c.l.b16 %v283
      %v631 = vunpack.c.h.b16 %v283
      %v632 = vunpack.c.l.b16 %v284
      %v633 = vunpack.c.h.b16 %v284
      %v634 = vunpack.c.l.b16 %v285
      %v635 = vunpack.c.h.b16 %v285
      %v636 = vunpack.c.l.b16 %v286
      %v637 = vunpack.c.h.b16 %v286
      %v638 = vunpack.c.l.b16 %v287
      %v639 = vunpack.c.h.b16 %v287
      %v640 = vunpack.c.l.b16 %v288
      %v641 = vunpack.c.h.b16 %v288
      %v642 = vunpack.c.l.b16 %v289
      %v643 = vunpack.c.h.b16 %v289
      %v644 = vunpack.c.l.b16 %v290
      %v645 = vunpack.c.h.b16 %v290
      %v646 = vunpack.c.l.b16 %v291
      %v647 = vunpack.c.h.b16 %v291
      %v648 = vunpack.c.l.b16 %v292
      %v649 = vunpack.c.h.b16 %v292
      %v650 = vunpack.c.l.b16 %v293
      %v651 = vunpack.c.h.b16 %v293
      %v652 = vunpack.c.l.b16 %v294
      %v653 = vunpack.c.h.b16 %v294
      %v654 = vunpack.c.l.b16 %v295
      %v655 = vunpack.c.h.b16 %v295
      %v656 = vunpack.c.l.b16 %v296
      %v657 = vunpack.c.h.b16 %v296
      %v658 = vunpack.c.l.b16 %v297
      %v659 = vunpack.c.h.b16 %v297
      %v660 = vpack.c.b16 %v534, %v532
      %v661 = vpack.c.b16 %v535, %v533
      %v662 = vpack.c.b16 %v538, %v536
      %v663 = vpack.c.b16 %v539, %v537
      %v664 = vpack.c.b16 %v542, %v540
      %v665 = vpack.c.b16 %v543, %v541
      %v666 = vpack.c.b16 %v546, %v544
      %v667 = vpack.c.b16 %v547, %v545
      %v668 = vpack.c.b16 %v550, %v548
      %v669 = vpack.c.b16 %v551, %v549
      %v670 = vpack.c.b16 %v554, %v552
      %v671 = vpack.c.b16 %v555, %v553
      %v672 = vpack.c.b16 %v558, %v556
      %v673 = vpack.c.b16 %v559, %v557
      %v674 = vpack.c.b16 %v562, %v560
      %v675 = vpack.c.b16 %v563, %v561
      %v676 = vpack.c.b16 %v566, %v564
      %v677 = vpack.c.b16 %v567, %v565
      %v678 = vpack.c.b16 %v570, %v568
      %v679 = vpack.c.b16 %v571, %v569
      %v680 = vpack.c.b16 %v574, %v572
      %v681 = vpack.c.b16 %v575, %v573
      %v682 = vpack.c.b16 %v578, %v576
      %v683 = vpack.c.b16 %v579, %v577
      %v684 = vpack.c.b16 %v582, %v580
      %v685 = vpack.c.b16 %v583, %v581
      %v686 = vpack.c.b16 %v586, %v584
      %v687 = vpack.c.b16 %v587, %v585
      %v688 = vpack.c.b16 %v590, %v588
      %v689 = vpack.c.b16 %v591, %v589
      %v690 = vpack.c.b16 %v594, %v592
      %v691 = vpack.c.b16 %v595, %v593
      %v692 = vpack.c.b16 %v598, %v596
      %v693 = vpack.c.b16 %v599, %v597
      %v694 = vpack.c.b16 %v602, %v600
      %v695 = vpack.c.b16 %v603, %v601
      %v696 = vpack.c.b16 %v606, %v604
      %v697 = vpack.c.b16 %v607, %v605
      %v698 = vpack.c.b16 %v610, %v608
      %v699 = vpack.c.b16 %v611, %v609
      %v700 = vpack.c.b16 %v614, %v612
      %v701 = vpack.c.b16 %v615, %v613
      %v702 = vpack.c.b16 %v618, %v616
      %v703 = vpack.c.b16 %v619, %v617
      %v704 = vpack.c.b16 %v622, %v620
      %v705 = vpack.c.b16 %v623, %v621
      %v706 = vpack.c.b16 %v626, %v624
      %v707 = vpack.c.b16 %v627, %v625
      %v708 = vpack.c.b16 %v630, %v628
      %v709 = vpack.c.b16 %v631, %v629
      %v710 = vpack.c.b16 %v634, %v632
      %v711 = vpack.c.b16 %v635, %v633
      %v712 = vpack.c.b16 %v638, %v636
      %v713 = vpack.c.b16 %v639, %v637
      %v714 = vpack.c.b16 %v642, %v640
      %v715 = vpack.c.b16 %v643, %v641
      %v716 = vpack.c.b16 %v646, %v644
      %v717 = vpack.c.b16 %v647, %v645
      %v718 = vpack.c.b16 %v650, %v648
      %v719 = vpack.c.b16 %v651, %v649
      %v720 = vpack.c.b16 %v654, %v652
      %v721 = vpack.c.b16 %v655, %v653
      %v722 = vpack.c.b16 %v658, %v656
      %v723 = vpack.c.b16 %v659, %v657
      %v916 = vunpack.c.l.b16 %v298
      %v917 = vunpack.c.h.b16 %v298
      %v918 = vunpack.c.l.b16 %v299
      %v919 = vunpack.c.h.b16 %v299
      %v920 = vunpack.c.l.b16 %v300
      %v921 = vunpack.c.h.b16 %v300
      %v922 = vunpack.c.l.b16 %v301
      %v923 = vunpack.c.h.b16 %v301
      %v924 = vunpack.c.l.b16 %v302
      %v925 = vunpack.c.h.b16 %v302
      %v926 = vunpack.c.l.b16 %v303
      %v927 = vunpack.c.h.b16 %v303
      %v928 = vunpack.c.l.b16 %v304
      %v929 = vunpack.c.h.b16 %v304
      %v930 = vunpack.c.l.b16 %v305
      %v931 = vunpack.c.h.b16 %v305
      %v932 = vunpack.c.l.b16 %v306
      %v933 = vunpack.c.h.b16 %v306
      %v934 = vunpack.c.l.b16 %v307
      %v935 = vunpack.c.h.b16 %v307
      %v936 = vunpack.c.l.b16 %v308
      %v937 = vunpack.c.h.b16 %v308
      %v938 = vunpack.c.l.b16 %v309
      %v939 = vunpack.c.h.b16 %v309
      %v940 = vunpack.c.l.b16 %v310
      %v941 = vunpack.c.h.b16 %v310
      %v942 = vunpack.c.l.b16 %v311
      %v943 = vunpack.c.h.b16 %v311
      %v944 = vunpack.c.l.b16 %v312
      %v945 = vunpack.c.h.b16 %v312
      %v946 = vunpack.c.l.b16 %v313
      %v947 = vunpack.c.h.b16 %v313
      %v948 = vunpack.c.l.b16 %v314
      %v949 = vunpack.c.h.b16 %v314
      %v950 = vunpack.c.l.b16 %v315
      %v951 = vunpack.c.h.b16 %v315
      %v952 = vunpack.c.l.b16 %v316
      %v953 = vunpack.c.h.b16 %v316
      %v954 = vunpack.c.l.b16 %v317
      %v955 = vunpack.c.h.b16 %v317
      %v956 = vunpack.c.l.b16 %v318
      %v957 = vunpack.c.h.b16 %v318
      %v958 = vunpack.c.l.b16 %v319
      %v959 = vunpack.c.h.b16 %v319
      %v960 = vunpack.c.l.b16 %v320
      %v961 = vunpack.c.h.b16 %v320
      %v962 = vunpack.c.l.b16 %v321
      %v963 = vunpack.c.h.b16 %v321
      %v964 = vunpack.c.l.b16 %v322
      %v965 = vunpack.c.h.b16 %v322
      %v966 = vunpack.c.l.b16 %v323
      %v967 = vunpack.c.h.b16 %v323
      %v968 = vunpack.c.l.b16 %v324
      %v969 = vunpack.c.h.b16 %v324
      %v970 = vunpack.c.l.b16 %v325
      %v971 = vunpack.c.h.b16 %v325
      %v972 = vunpack.c.l.b16 %v326
      %v973 = vunpack.c.h.b16 %v326
      %v974 = vunpack.c.l.b16 %v327
      %v975 = vunpack.c.h.b16 %v327
      %v976 = vunpack.c.l.b16 %v328
      %v977 = vunpack.c.h.b16 %v328
      %v978 = vunpack.c.l.b16 %v329
      %v979 = vunpack.c.h.b16 %v329
      %v980 = vunpack.c.l.b16 %v330
      %v981 = vunpack.c.h.b16 %v330
      %v982 = vunpack.c.l.b16 %v331
      %v983 = vunpack.c.h.b16 %v331
      %v984 = vunpack.c.l.b16 %v332
      %v985 = vunpack.c.h.b16 %v332
      %v986 = vunpack.c.l.b16 %v333
      %v987 = vunpack.c.h.b16 %v333
      %v988 = vunpack.c.l.b16 %v334
      %v989 = vunpack.c.h.b16 %v334
      %v990 = vunpack.c.l.b16 %v335
      %v991 = vunpack.c.h.b16 %v335
      %v992 = vunpack.c.l.b16 %v336
      %v993 = vunpack.c.h.b16 %v336
      %v994 = vunpack.c.l.b16 %v337
      %v995 = vunpack.c.h.b16 %v337
      %v996 = vunpack.c.l.b16 %v338
      %v997 = vunpack.c.h.b16 %v338
      %v998 = vunpack.c.l.b16 %v339
      %v999 = vunpack.c.h.b16 %v339
      %v1000 = vunpack.c.l.b16 %v340
      %v1001 = vunpack.c.h.b16 %v340
      %v1002 = vunpack.c.l.b16 %v341
      %v1003 = vunpack.c.h.b16 %v341
      %v1004 = vunpack.c.l.b16 %v342
      %v1005 = vunpack.c.h.b16 %v342
      %v1006 = vunpack.c.l.b16 %v343
      %v1007 = vunpack.c.h.b16 %v343
      %v1008 = vunpack.c.l.b16 %v344
      %v1009 = vunpack.c.h.b16 %v344
      %v1010 = vunpack.c.l.b16 %v345
      %v1011 = vunpack.c.h.b16 %v345
      %v1012 = vunpack.c.l.b16 %v346
      %v1013 = vunpack.c.h.b16 %v346
      %v1014 = vunpack.c.l.b16 %v347
      %v1015 = vunpack.c.h.b16 %v347
      %v1016 = vunpack.c.l.b16 %v348
      %v1017 = vunpack.c.h.b16 %v348
      %v1018 = vunpack.c.l.b16 %v349
      %v1019 = vunpack.c.h.b16 %v349
      %v1020 = vunpack.c.l.b16 %v350
      %v1021 = vunpack.c.h.b16 %v350
      %v1022 = vunpack.c.l.b16 %v351
      %v1023 = vunpack.c.h.b16 %v351
      %v1024 = vunpack.c.l.b16 %v352
      %v1025 = vunpack.c.h.b16 %v352
      %v1026 = vunpack.c.l.b16 %v353
      %v1027 = vunpack.c.h.b16 %v353
      %v1028 = vunpack.c.l.b16 %v354
      %v1029 = vunpack.c.h.b16 %v354
      %v1030 = vunpack.c.l.b16 %v355
      %v1031 = vunpack.c.h.b16 %v355
      %v1032 = vunpack.c.l.b16 %v356
      %v1033 = vunpack.c.h.b16 %v356
      %v1034 = vunpack.c.l.b16 %v357
      %v1035 = vunpack.c.h.b16 %v357
      %v1036 = vunpack.c.l.b16 %v358
      %v1037 = vunpack.c.h.b16 %v358
      %v1038 = vunpack.c.l.b16 %v359
      %v1039 = vunpack.c.h.b16 %v359
      %v1040 = vunpack.c.l.b16 %v360
      %v1041 = vunpack.c.h.b16 %v360
      %v1042 = vunpack.c.l.b16 %v361
      %v1043 = vunpack.c.h.b16 %v361
      %v1044 = vunpack.c.l.b16 %v362
      %v1045 = vunpack.c.h.b16 %v362
      %v1046 = vunpack.c.l.b16 %v363
      %v1047 = vunpack.c.h.b16 %v363
      %v1048 = vunpack.c.l.b16 %v364
      %v1049 = vunpack.c.h.b16 %v364
      %v1050 = vunpack.c.l.b16 %v365
      %v1051 = vunpack.c.h.b16 %v365
      %v1052 = vunpack.c.l.b16 %v366
      %v1053 = vunpack.c.h.b16 %v366
      %v1054 = vunpack.c.l.b16 %v367
      %v1055 = vunpack.c.h.b16 %v367
      %v1056 = vunpack.c.l.b16 %v368
      %v1057 = vunpack.c.h.b16 %v368
      %v1058 = vunpack.c.l.b16 %v369
      %v1059 = vunpack.c.h.b16 %v369
      %v1060 = vunpack.c.l.b16 %v370
      %v1061 = vunpack.c.h.b16 %v370
      %v1062 = vunpack.c.l.b16 %v371
      %v1063 = vunpack.c.h.b16 %v371
      %v1064 = vunpack.c.l.b16 %v372
      %v1065 = vunpack.c.h.b16 %v372
      %v1066 = vunpack.c.l.b16 %v373
      %v1067 = vunpack.c.h.b16 %v373
      %v1068 = vunpack.c.l.b16 %v374
      %v1069 = vunpack.c.h.b16 %v374
      %v1070 = vunpack.c.l.b16 %v375
      %v1071 = vunpack.c.h.b16 %v375
      %v1072 = vunpack.c.l.b16 %v376
      %v1073 = vunpack.c.h.b16 %v376
      %v1074 = vunpack.c.l.b16 %v377
      %v1075 = vunpack.c.h.b16 %v377
      %v1076 = vunpack.c.l.b16 %v378
      %v1077 = vunpack.c.h.b16 %v378
      %v1078 = vunpack.c.l.b16 %v379
      %v1079 = vunpack.c.h.b16 %v379
      %v1080 = vunpack.c.l.b16 %v380
      %v1081 = vunpack.c.h.b16 %v380
      %v1082 = vunpack.c.l.b16 %v381
      %v1083 = vunpack.c.h.b16 %v381
      %v1084 = vunpack.c.l.b16 %v382
      %v1085 = vunpack.c.h.b16 %v382
      %v1086 = vunpack.c.l.b16 %v383
      %v1087 = vunpack.c.h.b16 %v383
      %v1088 = vunpack.c.l.b16 %v384
      %v1089 = vunpack.c.h.b16 %v384
      %v1090 = vunpack.c.l.b16 %v385
      %v1091 = vunpack.c.h.b16 %v385
      %v1092 = vunpack.c.l.b16 %v386
      %v1093 = vunpack.c.h.b16 %v386
      %v1094 = vunpack.c.l.b16 %v387
      %v1095 = vunpack.c.h.b16 %v387
      %v1096 = vunpack.c.l.b16 %v388
      %v1097 = vunpack.c.h.b16 %v388
      %v1098 = vunpack.c.l.b16 %v389
      %v1099 = vunpack.c.h.b16 %v389
      %v1100 = vunpack.c.l.b16 %v390
      %v1101 = vunpack.c.h.b16 %v390
      %v1102 = vunpack.c.l.b16 %v391
      %v1103 = vunpack.c.h.b16 %v391
      %v1104 = vunpack.c.l.b16 %v392
      %v1105 = vunpack.c.h.b16 %v392
      %v1106 = vunpack.c.l.b16 %v393
      %v1107 = vunpack.c.h.b16 %v393
      %v1108 = vunpack.c.l.b16 %v394
      %v1109 = vunpack.c.h.b16 %v394
      %v1110 = vunpack.c.l.b16 %v395
      %v1111 = vunpack.c.h.b16 %v395
      %v1112 = vunpack.c.l.b16 %v396
      %v1113 = vunpack.c.h.b16 %v396
      %v1114 = vunpack.c.l.b16 %v397
      %v1115 = vunpack.c.h.b16 %v397
      %v1116 = vunpack.c.l.b16 %v398
      %v1117 = vunpack.c.h.b16 %v398
      %v1118 = vunpack.c.l.b16 %v399
      %v1119 = vunpack.c.h.b16 %v399
      %v1120 = vunpack.c.l.b16 %v400
      %v1121 = vunpack.c.h.b16 %v400
      %v1122 = vunpack.c.l.b16 %v401
      %v1123 = vunpack.c.h.b16 %v401
      %v1124 = vunpack.c.l.b16 %v402
      %v1125 = vunpack.c.h.b16 %v402
      %v1126 = vunpack.c.l.b16 %v403
      %v1127 = vunpack.c.h.b16 %v403
      %v1128 = vunpack.c.l.b16 %v404
      %v1129 = vunpack.c.h.b16 %v404
      %v1130 = vunpack.c.l.b16 %v405
      %v1131 = vunpack.c.h.b16 %v405
      %v1132 = vunpack.c.l.b16 %v406
      %v1133 = vunpack.c.h.b16 %v406
      %v1134 = vunpack.c.l.b16 %v407
      %v1135 = vunpack.c.h.b16 %v407
      %v1136 = vunpack.c.l.b16 %v408
      %v1137 = vunpack.c.h.b16 %v408
      %v1138 = vunpack.c.l.b16 %v409
      %v1139 = vunpack.c.h.b16 %v409
      %v1140 = vunpack.c.l.b16 %v410
      %v1141 = vunpack.c.h.b16 %v410
      %v1142 = vunpack.c.l.b16 %v411
      %v1143 = vunpack.c.h.b16 %v411
      %v1144 = vunpack.c.l.b16 %v412
      %v1145 = vunpack.c.h.b16 %v412
      %v1146 = vunpack.c.l.b16 %v413
      %v1147 = vunpack.c.h.b16 %v413
      %v1148 = vunpack.c.l.b16 %v414
      %v1149 = vunpack.c.h.b16 %v414
      %v1150 = vunpack.c.l.b16 %v415
      %v1151 = vunpack.c.h.b16 %v415
      %v1152 = vunpack.c.l.b16 %v416
      %v1153 = vunpack.c.h.b16 %v416
      %v1154 = vunpack.c.l.b16 %v417
      %v1155 = vunpack.c.h.b16 %v417
      %v1156 = vunpack.c.l.b16 %v418
      %v1157 = vunpack.c.h.b16 %v418
      %v1158 = vunpack.c.l.b16 %v419
      %v1159 = vunpack.c.h.b16 %v419
      %v1160 = vunpack.c.l.b16 %v420
      %v1161 = vunpack.c.h.b16 %v420
      %v1162 = vunpack.c.l.b16 %v421
      %v1163 = vunpack.c.h.b16 %v421
      %v1164 = vunpack.c.l.b16 %v422
      %v1165 = vunpack.c.h.b16 %v422
      %v1166 = vunpack.c.l.b16 %v423
      %v1167 = vunpack.c.h.b16 %v423
      %v1168 = vunpack.c.l.b16 %v424
      %v1169 = vunpack.c.h.b16 %v424
      %v1170 = vunpack.c.l.b16 %v425
      %v1171 = vunpack.c.h.b16 %v425
      %v1172 = vpack.c.b16 %v924, %v916
      %v1173 = vpack.c.b16 %v925, %v917
      %v1174 = vpack.c.b16 %v926, %v918
      %v1175 = vpack.c.b16 %v927, %v919
      %v1176 = vpack.c.b16 %v928, %v920
      %v1177 = vpack.c.b16 %v929, %v921
      %v1178 = vpack.c.b16 %v930, %v922
      %v1179 = vpack.c.b16 %v931, %v923
      %v1180 = vpack.c.b16 %v940, %v932
      %v1181 = vpack.c.b16 %v941, %v933
      %v1182 = vpack.c.b16 %v942, %v934
      %v1183 = vpack.c.b16 %v943, %v935
      %v1184 = vpack.c.b16 %v944, %v936
      %v1185 = vpack.c.b16 %v945, %v937
      %v1186 = vpack.c.b16 %v946, %v938
      %v1187 = vpack.c.b16 %v947, %v939
      %v1188 = vpack.c.b16 %v956, %v948
      %v1189 = vpack.c.b16 %v957, %v949
      %v1190 = vpack.c.b16 %v958, %v950
      %v1191 = vpack.c.b16 %v959, %v951
      %v1192 = vpack.c.b16 %v960, %v952
      %v1193 = vpack.c.b16 %v961, %v953
      %v1194 = vpack.c.b16 %v962, %v954
      %v1195 = vpack.c.b16 %v963, %v955
      %v1196 = vpack.c.b16 %v972, %v964
      %v1197 = vpack.c.b16 %v973, %v965
      %v1198 = vpack.c.b16 %v974, %v966
      %v1199 = vpack.c.b16 %v975, %v967
      %v1200 = vpack.c.b16 %v976, %v968
      %v1201 = vpack.c.b16 %v977, %v969
      %v1202 = vpack.c.b16 %v978, %v970
      %v1203 = vpack.c.b16 %v979, %v971
      %v1204 = vpack.c.b16 %v988, %v980
      %v1205 = vpack.c.b16 %v989, %v981
      %v1206 = vpack.c.b16 %v990, %v982
      %v1207 = vpack.c.b16 %v991, %v983
      %v1208 = vpack.c.b16 %v992, %v984
      %v1209 = vpack.c.b16 %v993, %v985
      %v1210 = vpack.c.b16 %v994, %v986
      %v1211 = vpack.c.b16 %v995, %v987
      %v1212 = vpack.c.b16 %v1004, %v996
      %v1213 = vpack.c.b16 %v1005, %v997
      %v1214 = vpack.c.b16 %v1006, %v998
      %v1215 = vpack.c.b16 %v1007, %v999
      %v1216 = vpack.c.b16 %v1008, %v1000
      %v1217 = vpack.c.b16 %v1009, %v1001
      %v1218 = vpack.c.b16 %v1010, %v1002
      %v1219 = vpack.c.b16 %v1011, %v1003
      %v1220 = vpack.c.b16 %v1020, %v1012
      %v1221 = vpack.c.b16 %v1021, %v1013
      %v1222 = vpack.c.b16 %v1022, %v1014
      %v1223 = vpack.c.b16 %v1023, %v1015
      %v1224 = vpack.c.b16 %v1024, %v1016
      %v1225 = vpack.c.b16 %v1025, %v1017
      %v1226 = vpack.c.b16 %v1026, %v1018
      %v1227 = vpack.c.b16 %v1027, %v1019
      %v1228 = vpack.c.b16 %v1036, %v1028
      %v1229 = vpack.c.b16 %v1037, %v1029
      %v1230 = vpack.c.b16 %v1038, %v1030
      %v1231 = vpack.c.b16 %v1039, %v1031
      %v1232 = vpack.c.b16 %v1040, %v1032
      %v1233 = vpack.c.b16 %v1041, %v1033
      %v1234 = vpack.c.b16 %v1042, %v1034
      %v1235 = vpack.c.b16 %v1043, %v1035
      %v1236 = vpack.c.b16 %v1052, %v1044
      %v1237 = vpack.c.b16 %v1053, %v1045
      %v1238 = vpack.c.b16 %v1054, %v1046
      %v1239 = vpack.c.b16 %v1055, %v1047
      %v1240 = vpack.c.b16 %v1056, %v1048
      %v1241 = vpack.c.b16 %v1057, %v1049
      %v1242 = vpack.c.b16 %v1058, %v1050
      %v1243 = vpack.c.b16 %v1059, %v1051
      %v1244 = vpack.c.b16 %v1068, %v1060
      %v1245 = vpack.c.b16 %v1069, %v1061
      %v1246 = vpack.c.b16 %v1070, %v1062
      %v1247 = vpack.c.b16 %v1071, %v1063
      %v1248 = vpack.c.b16 %v1072, %v1064
      %v1249 = vpack.c.b16 %v1073, %v1065
      %v1250 = vpack.c.b16 %v1074, %v1066
      %v1251 = vpack.c.b16 %v1075, %v1067
      %v1252 = vpack.c.b16 %v1084, %v1076
      %v1253 = vpack.c.b16 %v1085, %v1077
      %v1254 = vpack.c.b16 %v1086, %v1078
      %v1255 = vpack.c.b16 %v1087, %v1079
      %v1256 = vpack.c.b16 %v1088, %v1080
      %v1257 = vpack.c.b16 %v1089, %v1081
      %v1258 = vpack.c.b16 %v1090, %v1082
      %v1259 = vpack.c.b16 %v1091, %v1083
      %v1260 = vpack.c.b16 %v1100, %v1092
      %v1261 = vpack.c.b16 %v1101, %v1093
      %v1262 = vpack.c.b16 %v1102, %v1094
      %v1263 = vpack.c.b16 %v1103, %v1095
      %v1264 = vpack.c.b16 %v1104, %v1096
      %v1265 = vpack.c.b16 %v1105, %v1097
      %v1266 = vpack.c.b16 %v1106, %v1098
      %v1267 = vpack.c.b16 %v1107, %v1099
      %v1268 = vpack.c.b16 %v1116, %v1108
      %v1269 = vpack.c.b16 %v1117, %v1109
      %v1270 = vpack.c.b16 %v1118, %v1110
      %v1271 = vpack.c.b16 %v1119, %v1111
      %v1272 = vpack.c.b16 %v1120, %v1112
      %v1273 = vpack.c.b16 %v1121, %v1113
      %v1274 = vpack.c.b16 %v1122, %v1114
      %v1275 = vpack.c.b16 %v1123, %v1115
      %v1276 = vpack.c.b16 %v1132, %v1124
      %v1277 = vpack.c.b16 %v1133, %v1125
      %v1278 = vpack.c.b16 %v1134, %v1126
      %v1279 = vpack.c.b16 %v1135, %v1127
      %v1280 = vpack.c.b16 %v1136, %v1128
      %v1281 = vpack.c.b16 %v1137, %v1129
      %v1282 = vpack.c.b16 %v1138, %v1130
      %v1283 = vpack.c.b16 %v1139, %v1131
      %v1284 = vpack.c.b16 %v1148, %v1140
      %v1285 = vpack.c.b16 %v1149, %v1141
      %v1286 = vpack.c.b16 %v1150, %v1142
      %v1287 = vpack.c.b16 %v1151, %v1143
      %v1288 = vpack.c.b16 %v1152, %v1144
      %v1289 = vpack.c.b16 %v1153, %v1145
      %v1290 = vpack.c.b16 %v1154, %v1146
      %v1291 = vpack.c.b16 %v1155, %v1147
      %v1292 = vpack.c.b16 %v1164, %v1156
      %v1293 = vpack.c.b16 %v1165, %v1157
      %v1294 = vpack.c.b16 %v1166, %v1158
      %v1295 = vpack.c.b16 %v1167, %v1159
      %v1296 = vpack.c.b16 %v1168, %v1160
      %v1297 = vpack.c.b16 %v1169, %v1161
      %v1298 = vpack.c.b16 %v1170, %v1162
      %v1299 = vpack.c.b16 %v1171, %v1163
      %1428 = vmatprep.subr.bf16.mxu0 %v1173
      %1429 = vmatpush1.bf16.msra.mxu0 %v1172
      %1430 = vmatprep.subr.bf16.mxu0 %v1181
      %1431 = vmatpush1.bf16.msra.mxu0 %v1180
      %1432 = vmatprep.subr.bf16.mxu0 %v1189
      %1433 = vmatpush1.bf16.msra.mxu0 %v1188
      %1434 = vmatprep.subr.bf16.mxu0 %v1197
      %1435 = vmatpush1.bf16.msra.mxu0 %v1196
      %1436 = vmatprep.subr.bf16.mxu0 %v1205
      %1437 = vmatpush1.bf16.msra.mxu0 %v1204
      %1438 = vmatprep.subr.bf16.mxu0 %v1213
      %1439 = vmatpush1.bf16.msra.mxu0 %v1212
      %1440 = vmatprep.subr.bf16.mxu0 %v1221
      %1441 = vmatpush1.bf16.msra.mxu0 %v1220
      %1442 = vmatprep.subr.bf16.mxu0 %v1229
      %1443 = vmatpush1.bf16.msra.mxu0 %v1228
      %1444 = vmatprep.subr.bf16.mxu0 %v1237
      %1445 = vmatpush1.bf16.msra.mxu0 %v1236
      %1446 = vmatprep.subr.bf16.mxu0 %v1245
      %1447 = vmatpush1.bf16.msra.mxu0 %v1244
      %1448 = vmatprep.subr.bf16.mxu0 %v1253
      %1449 = vmatpush1.bf16.msra.mxu0 %v1252
      %1450 = vmatprep.subr.bf16.mxu0 %v1261
      %1451 = vmatpush1.bf16.msra.mxu0 %v1260
      %1452 = vmatprep.subr.bf16.mxu0 %v1269
      %1453 = vmatpush1.bf16.msra.mxu0 %v1268
      %1454 = vmatprep.subr.bf16.mxu0 %v1277
      %1455 = vmatpush1.bf16.msra.mxu0 %v1276
      %1456 = vmatprep.subr.bf16.mxu0 %v1285
      %1457 = vmatpush1.bf16.msra.mxu0 %v1284
      %1458 = vmatprep.subr.bf16.mxu0 %v1293
      %1459 = vmatpush1.bf16.msra.mxu0 %v1292
      %1460 = vmatprep.mubr.bf16.mxu0 %v661
      %1461 = vmatmul.mubr.bf16.gmra.mrb[0].mxu0 %v660
      %v1462 = vpop.f32.mrb[0].mxu0
      %v1463 = vadd.f32 %v431, %v1462
      %v1464 = vpop.f32.mrb[0].mxu0
      %v1465 = vadd.f32 %v435, %v1464
      %v1466 = vpop.f32.mrb[0].mxu0
      %v1467 = vadd.f32 %v431, %v1466
      %v1468 = vpop.f32.mrb[0].mxu0
      %v1469 = vadd.f32 %v435, %v1468
      %1470 = vmatprep.mubr.bf16.mxu0 %v663
      %1471 = vmatmul.mubr.bf16.gmra.mrb[0].mxu0 %v662
      %v1472 = vpop.f32.mrb[0].mxu0
      %v1473 = vadd.f32 %v431, %v1472
      %v1474 = vpop.f32.mrb[0].mxu0
      %v1475 = vadd.f32 %v435, %v1474
      %v1476 = vpop.f32.mrb[0].mxu0
      %v1477 = vadd.f32 %v431, %v1476
      %v1478 = vpop.f32.mrb[0].mxu0
      %v1479 = vadd.f32 %v435, %v1478
      %1480 = vmatprep.mubr.bf16.mxu0 %v665
      %1481 = vmatmul.mubr.bf16.gmra.mrb[0].mxu0 %v664
      %v1482 = vpop.f32.mrb[0].mxu0
      %v1483 = vadd.f32 %v431, %v1482
      %v1484 = vpop.f32.mrb[0].mxu0
      %v1485 = vadd.f32 %v435, %v1484
      %v1486 = vpop.f32.mrb[0].mxu0
      %v1487 = vadd.f32 %v431, %v1486
      %v1488 = vpop.f32.mrb[0].mxu0
      %v1489 = vadd.f32 %v435, %v1488
      %1490 = vmatprep.mubr.bf16.mxu0 %v667
      %1491 = vmatmul.mubr.bf16.gmra.mrb[0].mxu0 %v666
      %v1492 = vpop.f32.mrb[0].mxu0
      %v1493 = vadd.f32 %v431, %v1492
      %v1494 = vpop.f32.mrb[0].mxu0
      %v1495 = vadd.f32 %v435, %v1494
      %v1496 = vpop.f32.mrb[0].mxu0
      %v1497 = vadd.f32 %v431, %v1496
      %v1498 = vpop.f32.mrb[0].mxu0
      %v1499 = vadd.f32 %v435, %v1498
      %1500 = vmatprep.mubr.bf16.mxu0 %v669
      %1501 = vmatmul.mubr.bf16.gmra.mrb[0].mxu0 %v668
      %v1502 = vpop.f32.mrb[0].mxu0
      %v1503 = vadd.f32 %v431, %v1502
      %v1504 = vpop.f32.mrb[0].mxu0
      %v1505 = vadd.f32 %v435, %v1504
      %v1506 = vpop.f32.mrb[0].mxu0
      %v1507 = vadd.f32 %v431, %v1506
      %v1508 = vpop.f32.mrb[0].mxu0
      %v1509 = vadd.f32 %v435, %v1508
      %1510 = vmatprep.mubr.bf16.mxu0 %v671
      %1511 = vmatmul.mubr.bf16.gmra.mrb[0].mxu0 %v670
      %v1512 = vpop.f32.mrb[0].mxu0
      %v1513 = vadd.f32 %v431, %v1512
      %v1514 = vpop.f32.mrb[0].mxu0
      %v1515 = vadd.f32 %v435, %v1514
      %v1516 = vpop.f32.mrb[0].mxu0
      %v1517 = vadd.f32 %v431, %v1516
      %v1518 = vpop.f32.mrb[0].mxu0
      %v1519 = vadd.f32 %v435, %v1518
      %1520 = vmatprep.mubr.bf16.mxu0 %v673
      %1521 = vmatmul.mubr.bf16.gmra.mrb[0].mxu0 %v672
      %v1522 = vpop.f32.mrb[0].mxu0
      %v1523 = vadd.f32 %v431, %v1522
      %v1524 = vpop.f32.mrb[0].mxu0
      %v1525 = vadd.f32 %v435, %v1524
      %v1526 = vpop.f32.mrb[0].mxu0
      %v1527 = vadd.f32 %v431, %v1526
      %v1528 = vpop.f32.mrb[0].mxu0
      %v1529 = vadd.f32 %v435, %v1528
      %1530 = vmatprep.mubr.bf16.mxu0 %v675
      %1531 = vmatmul.mubr.bf16.gmra.mrb[0].mxu0 %v674
      %v1532 = vpop.f32.mrb[0].mxu0
      %v1533 = vadd.f32 %v431, %v1532
      %v1534 = vpop.f32.mrb[0].mxu0
      %v1535 = vadd.f32 %v435, %v1534
      %v1536 = vpop.f32.mrb[0].mxu0
      %v1537 = vadd.f32 %v431, %v1536
      %v1538 = vpop.f32.mrb[0].mxu0
      %v1539 = vadd.f32 %v435, %v1538
      %1540 = vmatprep.mubr.bf16.mxu0 %v677
      %1541 = vmatmul.mubr.bf16.gmra.mrb[0].mxu0 %v676
      %v1542 = vpop.f32.mrb[0].mxu0
      %v1543 = vadd.f32 %v431, %v1542
      %v1544 = vpop.f32.mrb[0].mxu0
      %v1545 = vadd.f32 %v435, %v1544
      %v1546 = vpop.f32.mrb[0].mxu0
      %v1547 = vadd.f32 %v431, %v1546
      %v1548 = vpop.f32.mrb[0].mxu0
      %v1549 = vadd.f32 %v435, %v1548
      %1550 = vmatprep.mubr.bf16.mxu0 %v679
      %1551 = vmatmul.mubr.bf16.gmra.mrb[0].mxu0 %v678
      %v1552 = vpop.f32.mrb[0].mxu0
      %v1553 = vadd.f32 %v431, %v1552
      %v1554 = vpop.f32.mrb[0].mxu0
      %v1555 = vadd.f32 %v435, %v1554
      %v1556 = vpop.f32.mrb[0].mxu0
      %v1557 = vadd.f32 %v431, %v1556
      %v1558 = vpop.f32.mrb[0].mxu0
      %v1559 = vadd.f32 %v435, %v1558
      %1560 = vmatprep.mubr.bf16.mxu0 %v681
      %1561 = vmatmul.mubr.bf16.gmra.mrb[0].mxu0 %v680
      %v1562 = vpop.f32.mrb[0].mxu0
      %v1563 = vadd.f32 %v431, %v1562
      %v1564 = vpop.f32.mrb[0].mxu0
      %v1565 = vadd.f32 %v435, %v1564
      %v1566 = vpop.f32.mrb[0].mxu0
      %v1567 = vadd.f32 %v431, %v1566
      %v1568 = vpop.f32.mrb[0].mxu0
      %v1569 = vadd.f32 %v435, %v1568
      %1570 = vmatprep.mubr.bf16.mxu0 %v683
      %1571 = vmatmul.mubr.bf16.gmra.mrb[0].mxu0 %v682
      %v1572 = vpop.f32.mrb[0].mxu0
      %v1573 = vadd.f32 %v431, %v1572
      %v1574 = vpop.f32.mrb[0].mxu0
      %v1575 = vadd.f32 %v435, %v1574
      %v1576 = vpop.f32.mrb[0].mxu0
      %v1577 = vadd.f32 %v431, %v1576
      %v1578 = vpop.f32.mrb[0].mxu0
      %v1579 = vadd.f32 %v435, %v1578
      %1580 = vmatprep.mubr.bf16.mxu0 %v685
      %1581 = vmatmul.mubr.bf16.gmra.mrb[0].mxu0 %v684
      %v1582 = vpop.f32.mrb[0].mxu0
      %v1583 = vadd.f32 %v431, %v1582
      %v1584 = vpop.f32.mrb[0].mxu0
      %v1585 = vadd.f32 %v435, %v1584
      %v1586 = vpop.f32.mrb[0].mxu0
      %v1587 = vadd.f32 %v431, %v1586
      %v1588 = vpop.f32.mrb[0].mxu0
      %v1589 = vadd.f32 %v435, %v1588
      %1590 = vmatprep.mubr.bf16.mxu0 %v687
      %1591 = vmatmul.mubr.bf16.gmra.mrb[0].mxu0 %v686
      %v1592 = vpop.f32.mrb[0].mxu0
      %v1593 = vadd.f32 %v431, %v1592
      %v1594 = vpop.f32.mrb[0].mxu0
      %v1595 = vadd.f32 %v435, %v1594
      %v1596 = vpop.f32.mrb[0].mxu0
      %v1597 = vadd.f32 %v431, %v1596
      %v1598 = vpop.f32.mrb[0].mxu0
      %v1599 = vadd.f32 %v435, %v1598
      %1600 = vmatprep.mubr.bf16.mxu0 %v689
      %1601 = vmatmul.mubr.bf16.gmra.mrb[0].mxu0 %v688
      %v1602 = vpop.f32.mrb[0].mxu0
      %v1603 = vadd.f32 %v431, %v1602
      %v1604 = vpop.f32.mrb[0].mxu0
      %v1605 = vadd.f32 %v435, %v1604
      %v1606 = vpop.f32.mrb[0].mxu0
      %v1607 = vadd.f32 %v431, %v1606
      %v1608 = vpop.f32.mrb[0].mxu0
      %v1609 = vadd.f32 %v435, %v1608
      %1610 = vmatprep.mubr.bf16.mxu0 %v691
      %1611 = vmatmul.mubr.bf16.gmra.mrb[0].mxu0 %v690
      %v1612 = vpop.f32.mrb[0].mxu0
      %v1613 = vadd.f32 %v431, %v1612
      %v1614 = vpop.f32.mrb[0].mxu0
      %v1615 = vadd.f32 %v435, %v1614
      %v1616 = vpop.f32.mrb[0].mxu0
      %v1617 = vadd.f32 %v431, %v1616
      %v1618 = vpop.f32.mrb[0].mxu0
      %v1619 = vadd.f32 %v435, %v1618
      %1620 = vmatprep.mubr.bf16.mxu0 %v693
      %1621 = vmatmul.mubr.bf16.gmra.mrb[0].mxu0 %v692
      %v1622 = vpop.f32.mrb[0].mxu0
      %v1623 = vadd.f32 %v431, %v1622
      %v1624 = vpop.f32.mrb[0].mxu0
      %v1625 = vadd.f32 %v435, %v1624
      %v1626 = vpop.f32.mrb[0].mxu0
      %v1627 = vadd.f32 %v431, %v1626
      %v1628 = vpop.f32.mrb[0].mxu0
      %v1629 = vadd.f32 %v435, %v1628
      %1630 = vmatprep.mubr.bf16.mxu0 %v695
      %1631 = vmatmul.mubr.bf16.gmra.mrb[0].mxu0 %v694
      %v1632 = vpop.f32.mrb[0].mxu0
      %v1633 = vadd.f32 %v431, %v1632
      %v1634 = vpop.f32.mrb[0].mxu0
      %v1635 = vadd.f32 %v435, %v1634
      %v1636 = vpop.f32.mrb[0].mxu0
      %v1637 = vadd.f32 %v431, %v1636
      %v1638 = vpop.f32.mrb[0].mxu0
      %v1639 = vadd.f32 %v435, %v1638
      %1640 = vmatprep.mubr.bf16.mxu0 %v697
      %1641 = vmatmul.mubr.bf16.gmra.mrb[0].mxu0 %v696
      %v1642 = vpop.f32.mrb[0].mxu0
      %v1643 = vadd.f32 %v431, %v1642
      %v1644 = vpop.f32.mrb[0].mxu0
      %v1645 = vadd.f32 %v435, %v1644
      %v1646 = vpop.f32.mrb[0].mxu0
      %v1647 = vadd.f32 %v431, %v1646
      %v1648 = vpop.f32.mrb[0].mxu0
      %v1649 = vadd.f32 %v435, %v1648
      %1650 = vmatprep.mubr.bf16.mxu0 %v699
      %1651 = vmatmul.mubr.bf16.gmra.mrb[0].mxu0 %v698
      %v1652 = vpop.f32.mrb[0].mxu0
      %v1653 = vadd.f32 %v431, %v1652
      %v1654 = vpop.f32.mrb[0].mxu0
      %v1655 = vadd.f32 %v435, %v1654
      %v1656 = vpop.f32.mrb[0].mxu0
      %v1657 = vadd.f32 %v431, %v1656
      %v1658 = vpop.f32.mrb[0].mxu0
      %v1659 = vadd.f32 %v435, %v1658
      %1660 = vmatprep.mubr.bf16.mxu0 %v701
      %1661 = vmatmul.mubr.bf16.gmra.mrb[0].mxu0 %v700
      %v1662 = vpop.f32.mrb[0].mxu0
      %v1663 = vadd.f32 %v431, %v1662
      %v1664 = vpop.f32.mrb[0].mxu0
      %v1665 = vadd.f32 %v435, %v1664
      %v1666 = vpop.f32.mrb[0].mxu0
      %v1667 = vadd.f32 %v431, %v1666
      %v1668 = vpop.f32.mrb[0].mxu0
      %v1669 = vadd.f32 %v435, %v1668
      %1670 = vmatprep.mubr.bf16.mxu0 %v703
      %1671 = vmatmul.mubr.bf16.gmra.mrb[0].mxu0 %v702
      %v1672 = vpop.f32.mrb[0].mxu0
      %v1673 = vadd.f32 %v431, %v1672
      %v1674 = vpop.f32.mrb[0].mxu0
      %v1675 = vadd.f32 %v435, %v1674
      %v1676 = vpop.f32.mrb[0].mxu0
      %v1677 = vadd.f32 %v431, %v1676
      %v1678 = vpop.f32.mrb[0].mxu0
      %v1679 = vadd.f32 %v435, %v1678
      %1680 = vmatprep.mubr.bf16.mxu0 %v705
      %1681 = vmatmul.mubr.bf16.gmra.mrb[0].mxu0 %v704
      %v1682 = vpop.f32.mrb[0].mxu0
      %v1683 = vadd.f32 %v431, %v1682
      %v1684 = vpop.f32.mrb[0].mxu0
      %v1685 = vadd.f32 %v435, %v1684
      %v1686 = vpop.f32.mrb[0].mxu0
      %v1687 = vadd.f32 %v431, %v1686
      %v1688 = vpop.f32.mrb[0].mxu0
      %v1689 = vadd.f32 %v435, %v1688
      %1690 = vmatprep.mubr.bf16.mxu0 %v707
      %1691 = vmatmul.mubr.bf16.gmra.mrb[0].mxu0 %v706
      %v1692 = vpop.f32.mrb[0].mxu0
      %v1693 = vadd.f32 %v431, %v1692
      %v1694 = vpop.f32.mrb[0].mxu0
      %v1695 = vadd.f32 %v435, %v1694
      %v1696 = vpop.f32.mrb[0].mxu0
      %v1697 = vadd.f32 %v431, %v1696
      %v1698 = vpop.f32.mrb[0].mxu0
      %v1699 = vadd.f32 %v435, %v1698
      %1700 = vmatprep.mubr.bf16.mxu0 %v709
      %1701 = vmatmul.mubr.bf16.gmra.mrb[0].mxu0 %v708
      %v1702 = vpop.f32.mrb[0].mxu0
      %v1703 = vadd.f32 %v431, %v1702
      %v1704 = vpop.f32.mrb[0].mxu0
      %v1705 = vadd.f32 %v435, %v1704
      %v1706 = vpop.f32.mrb[0].mxu0
      %v1707 = vadd.f32 %v431, %v1706
      %v1708 = vpop.f32.mrb[0].mxu0
      %v1709 = vadd.f32 %v435, %v1708
      %1710 = vmatprep.mubr.bf16.mxu0 %v711
      %1711 = vmatmul.mubr.bf16.gmra.mrb[0].mxu0 %v710
      %v1712 = vpop.f32.mrb[0].mxu0
      %v1713 = vadd.f32 %v431, %v1712
      %v1714 = vpop.f32.mrb[0].mxu0
      %v1715 = vadd.f32 %v435, %v1714
      %v1716 = vpop.f32.mrb[0].mxu0
      %v1717 = vadd.f32 %v431, %v1716
      %v1718 = vpop.f32.mrb[0].mxu0
      %v1719 = vadd.f32 %v435, %v1718
      %1720 = vmatprep.mubr.bf16.mxu0 %v713
      %1721 = vmatmul.mubr.bf16.gmra.mrb[0].mxu0 %v712
      %v1722 = vpop.f32.mrb[0].mxu0
      %v1723 = vadd.f32 %v431, %v1722
      %v1724 = vpop.f32.mrb[0].mxu0
      %v1725 = vadd.f32 %v435, %v1724
      %v1726 = vpop.f32.mrb[0].mxu0
      %v1727 = vadd.f32 %v431, %v1726
      %v1728 = vpop.f32.mrb[0].mxu0
      %v1729 = vadd.f32 %v435, %v1728
      %1730 = vmatprep.mubr.bf16.mxu0 %v715
      %1731 = vmatmul.mubr.bf16.gmra.mrb[0].mxu0 %v714
      %v1732 = vpop.f32.mrb[0].mxu0
      %v1733 = vadd.f32 %v431, %v1732
      %v1734 = vpop.f32.mrb[0].mxu0
      %v1735 = vadd.f32 %v435, %v1734
      %v1736 = vpop.f32.mrb[0].mxu0
      %v1737 = vadd.f32 %v431, %v1736
      %v1738 = vpop.f32.mrb[0].mxu0
      %v1739 = vadd.f32 %v435, %v1738
      %1740 = vmatprep.mubr.bf16.mxu0 %v717
      %1741 = vmatmul.mubr.bf16.gmra.mrb[0].mxu0 %v716
      %v1742 = vpop.f32.mrb[0].mxu0
      %v1743 = vadd.f32 %v431, %v1742
      %v1744 = vpop.f32.mrb[0].mxu0
      %v1745 = vadd.f32 %v435, %v1744
      %v1746 = vpop.f32.mrb[0].mxu0
      %v1747 = vadd.f32 %v431, %v1746
      %v1748 = vpop.f32.mrb[0].mxu0
      %v1749 = vadd.f32 %v435, %v1748
      %1750 = vmatprep.mubr.bf16.mxu0 %v719
      %1751 = vmatmul.mubr.bf16.gmra.mrb[0].mxu0 %v718
      %v1752 = vpop.f32.mrb[0].mxu0
      %v1753 = vadd.f32 %v431, %v1752
      %v1754 = vpop.f32.mrb[0].mxu0
      %v1755 = vadd.f32 %v435, %v1754
      %v1756 = vpop.f32.mrb[0].mxu0
      %v1757 = vadd.f32 %v431, %v1756
      %v1758 = vpop.f32.mrb[0].mxu0
      %v1759 = vadd.f32 %v435, %v1758
      %1760 = vmatprep.mubr.bf16.mxu0 %v721
      %1761 = vmatmul.mubr.bf16.gmra.mrb[0].mxu0 %v720
      %v1762 = vpop.f32.mrb[0].mxu0
      %v1763 = vadd.f32 %v431, %v1762
      %v1764 = vpop.f32.mrb[0].mxu0
      %v1765 = vadd.f32 %v435, %v1764
      %v1766 = vpop.f32.mrb[0].mxu0
      %v1767 = vadd.f32 %v431, %v1766
      %v1768 = vpop.f32.mrb[0].mxu0
      %v1769 = vadd.f32 %v435, %v1768
      %1770 = vmatprep.mubr.bf16.mxu0 %v723
      %1771 = vmatmul.mubr.bf16.gmra.mrb[0].mxu0 %v722
      %v1772 = vpop.f32.mrb[0].mxu0
      %v1773 = vadd.f32 %v431, %v1772
      %v1774 = vpop.f32.mrb[0].mxu0
      %v1775 = vadd.f32 %v435, %v1774
      %v1776 = vpop.f32.mrb[0].mxu0
      %v1777 = vadd.f32 %v431, %v1776
      %v1778 = vpop.f32.mrb[0].mxu0
      %v1779 = vadd.f32 %v435, %v1778
      %1780 = vdwg.mxu0
      %1781 = vmatprep.subr.bf16.mxu0 %v1175
      %1782 = vmatpush1.bf16.msra.mxu0 %v1174
      %1783 = vmatprep.subr.bf16.mxu0 %v1183
      %1784 = vmatpush1.bf16.msra.mxu0 %v1182
      %1785 = vmatprep.subr.bf16.mxu0 %v1191
      %1786 = vmatpush1.bf16.msra.mxu0 %v1190
      %1787 = vmatprep.subr.bf16.mxu0 %v1199
      %1788 = vmatpush1.bf16.msra.mxu0 %v1198
      %1789 = vmatprep.subr.bf16.mxu0 %v1207
      %1790 = vmatpush1.bf16.msra.mxu0 %v1206
      %1791 = vmatprep.subr.bf16.mxu0 %v1215
      %1792 = vmatpush1.bf16.msra.mxu0 %v1214
      %1793 = vmatprep.subr.bf16.mxu0 %v1223
      %1794 = vmatpush1.bf16.msra.mxu0 %v1222
      %1795 = vmatprep.subr.bf16.mxu0 %v1231
      %1796 = vmatpush1.bf16.msra.mxu0 %v1230
      %1797 = vmatprep.subr.bf16.mxu0 %v1239
      %1798 = vmatpush1.bf16.msra.mxu0 %v1238
      %1799 = vmatprep.subr.bf16.mxu0 %v1247
      %1800 = vmatpush1.bf16.msra.mxu0 %v1246
      %1801 = vmatprep.subr.bf16.mxu0 %v1255
      %1802 = vmatpush1.bf16.msra.mxu0 %v1254
      %1803 = vmatprep.subr.bf16.mxu0 %v1263
      %1804 = vmatpush1.bf16.msra.mxu0 %v1262
      %1805 = vmatprep.subr.bf16.mxu0 %v1271
      %1806 = vmatpush1.bf16.msra.mxu0 %v1270
      %1807 = vmatprep.subr.bf16.mxu0 %v1279
      %1808 = vmatpush1.bf16.msra.mxu0 %v1278
      %1809 = vmatprep.subr.bf16.mxu0 %v1287
      %1810 = vmatpush1.bf16.msra.mxu0 %v1286
      %1811 = vmatprep.subr.bf16.mxu0 %v1295
      %1812 = vmatpush1.bf16.msra.mxu0 %v1294
      %1813 = vmatprep.mubr.bf16.mxu0 %v661
      %1814 = vmatmul.mubr.bf16.gmra.mrb[0].mxu0 %v660
      %v1815 = vpop.f32.mrb[0].mxu0
      %v1816 = vadd.f32 %v439, %v1815
      %v1817 = vpop.f32.mrb[0].mxu0
      %v1818 = vadd.f32 %v443, %v1817
      %v1819 = vpop.f32.mrb[0].mxu0
      %v1820 = vadd.f32 %v439, %v1819
      %v1821 = vpop.f32.mrb[0].mxu0
      %v1822 = vadd.f32 %v443, %v1821
      %1823 = vmatprep.mubr.bf16.mxu0 %v663
      %1824 = vmatmul.mubr.bf16.gmra.mrb[0].mxu0 %v662
      %v1825 = vpop.f32.mrb[0].mxu0
      %v1826 = vadd.f32 %v439, %v1825
      %v1827 = vpop.f32.mrb[0].mxu0
      %v1828 = vadd.f32 %v443, %v1827
      %v1829 = vpop.f32.mrb[0].mxu0
      %v1830 = vadd.f32 %v439, %v1829
      %v1831 = vpop.f32.mrb[0].mxu0
      %v1832 = vadd.f32 %v443, %v1831
      %1833 = vmatprep.mubr.bf16.mxu0 %v665
      %1834 = vmatmul.mubr.bf16.gmra.mrb[0].mxu0 %v664
      %v1835 = vpop.f32.mrb[0].mxu0
      %v1836 = vadd.f32 %v439, %v1835
      %v1837 = vpop.f32.mrb[0].mxu0
      %v1838 = vadd.f32 %v443, %v1837
      %v1839 = vpop.f32.mrb[0].mxu0
      %v1840 = vadd.f32 %v439, %v1839
      %v1841 = vpop.f32.mrb[0].mxu0
      %v1842 = vadd.f32 %v443, %v1841
      %1843 = vmatprep.mubr.bf16.mxu0 %v667
      %1844 = vmatmul.mubr.bf16.gmra.mrb[0].mxu0 %v666
      %v1845 = vpop.f32.mrb[0].mxu0
      %v1846 = vadd.f32 %v439, %v1845
      %v1847 = vpop.f32.mrb[0].mxu0
      %v1848 = vadd.f32 %v443, %v1847
      %v1849 = vpop.f32.mrb[0].mxu0
      %v1850 = vadd.f32 %v439, %v1849
      %v1851 = vpop.f32.mrb[0].mxu0
      %v1852 = vadd.f32 %v443, %v1851
      %1853 = vmatprep.mubr.bf16.mxu0 %v669
      %1854 = vmatmul.mubr.bf16.gmra.mrb[0].mxu0 %v668
      %v1855 = vpop.f32.mrb[0].mxu0
      %v1856 = vadd.f32 %v439, %v1855
      %v1857 = vpop.f32.mrb[0].mxu0
      %v1858 = vadd.f32 %v443, %v1857
      %v1859 = vpop.f32.mrb[0].mxu0
      %v1860 = vadd.f32 %v439, %v1859
      %v1861 = vpop.f32.mrb[0].mxu0
      %v1862 = vadd.f32 %v443, %v1861
      %1863 = vmatprep.mubr.bf16.mxu0 %v671
      %1864 = vmatmul.mubr.bf16.gmra.mrb[0].mxu0 %v670
      %v1865 = vpop.f32.mrb[0].mxu0
      %v1866 = vadd.f32 %v439, %v1865
      %v1867 = vpop.f32.mrb[0].mxu0
      %v1868 = vadd.f32 %v443, %v1867
      %v1869 = vpop.f32.mrb[0].mxu0
      %v1870 = vadd.f32 %v439, %v1869
      %v1871 = vpop.f32.mrb[0].mxu0
      %v1872 = vadd.f32 %v443, %v1871
      %1873 = vmatprep.mubr.bf16.mxu0 %v673
      %1874 = vmatmul.mubr.bf16.gmra.mrb[0].mxu0 %v672
      %v1875 = vpop.f32.mrb[0].mxu0
      %v1876 = vadd.f32 %v439, %v1875
      %v1877 = vpop.f32.mrb[0].mxu0
      %v1878 = vadd.f32 %v443, %v1877
      %v1879 = vpop.f32.mrb[0].mxu0
      %v1880 = vadd.f32 %v439, %v1879
      %v1881 = vpop.f32.mrb[0].mxu0
      %v1882 = vadd.f32 %v443, %v1881
      %1883 = vmatprep.mubr.bf16.mxu0 %v675
      %1884 = vmatmul.mubr.bf16.gmra.mrb[0].mxu0 %v674
      %v1885 = vpop.f32.mrb[0].mxu0
      %v1886 = vadd.f32 %v439, %v1885
      %v1887 = vpop.f32.mrb[0].mxu0
      %v1888 = vadd.f32 %v443, %v1887
      %v1889 = vpop.f32.mrb[0].mxu0
      %v1890 = vadd.f32 %v439, %v1889
      %v1891 = vpop.f32.mrb[0].mxu0
      %v1892 = vadd.f32 %v443, %v1891
      %1893 = vmatprep.mubr.bf16.mxu0 %v677
      %1894 = vmatmul.mubr.bf16.gmra.mrb[0].mxu0 %v676
      %v1895 = vpop.f32.mrb[0].mxu0
      %v1896 = vadd.f32 %v439, %v1895
      %v1897 = vpop.f32.mrb[0].mxu0
      %v1898 = vadd.f32 %v443, %v1897
      %v1899 = vpop.f32.mrb[0].mxu0
      %v1900 = vadd.f32 %v439, %v1899
      %v1901 = vpop.f32.mrb[0].mxu0
      %v1902 = vadd.f32 %v443, %v1901
      %1903 = vmatprep.mubr.bf16.mxu0 %v679
      %1904 = vmatmul.mubr.bf16.gmra.mrb[0].mxu0 %v678
      %v1905 = vpop.f32.mrb[0].mxu0
      %v1906 = vadd.f32 %v439, %v1905
      %v1907 = vpop.f32.mrb[0].mxu0
      %v1908 = vadd.f32 %v443, %v1907
      %v1909 = vpop.f32.mrb[0].mxu0
      %v1910 = vadd.f32 %v439, %v1909
      %v1911 = vpop.f32.mrb[0].mxu0
      %v1912 = vadd.f32 %v443, %v1911
      %1913 = vmatprep.mubr.bf16.mxu0 %v681
      %1914 = vmatmul.mubr.bf16.gmra.mrb[0].mxu0 %v680
      %v1915 = vpop.f32.mrb[0].mxu0
      %v1916 = vadd.f32 %v439, %v1915
      %v1917 = vpop.f32.mrb[0].mxu0
      %v1918 = vadd.f32 %v443, %v1917
      %v1919 = vpop.f32.mrb[0].mxu0
      %v1920 = vadd.f32 %v439, %v1919
      %v1921 = vpop.f32.mrb[0].mxu0
      %v1922 = vadd.f32 %v443, %v1921
      %1923 = vmatprep.mubr.bf16.mxu0 %v683
      %1924 = vmatmul.mubr.bf16.gmra.mrb[0].mxu0 %v682
      %v1925 = vpop.f32.mrb[0].mxu0
      %v1926 = vadd.f32 %v439, %v1925
      %v1927 = vpop.f32.mrb[0].mxu0
      %v1928 = vadd.f32 %v443, %v1927
      %v1929 = vpop.f32.mrb[0].mxu0
      %v1930 = vadd.f32 %v439, %v1929
      %v1931 = vpop.f32.mrb[0].mxu0
      %v1932 = vadd.f32 %v443, %v1931
      %1933 = vmatprep.mubr.bf16.mxu0 %v685
      %1934 = vmatmul.mubr.bf16.gmra.mrb[0].mxu0 %v684
      %v1935 = vpop.f32.mrb[0].mxu0
      %v1936 = vadd.f32 %v439, %v1935
      %v1937 = vpop.f32.mrb[0].mxu0
      %v1938 = vadd.f32 %v443, %v1937
      %v1939 = vpop.f32.mrb[0].mxu0
      %v1940 = vadd.f32 %v439, %v1939
      %v1941 = vpop.f32.mrb[0].mxu0
      %v1942 = vadd.f32 %v443, %v1941
      %1943 = vmatprep.mubr.bf16.mxu0 %v687
      %1944 = vmatmul.mubr.bf16.gmra.mrb[0].mxu0 %v686
      %v1945 = vpop.f32.mrb[0].mxu0
      %v1946 = vadd.f32 %v439, %v1945
      %v1947 = vpop.f32.mrb[0].mxu0
      %v1948 = vadd.f32 %v443, %v1947
      %v1949 = vpop.f32.mrb[0].mxu0
      %v1950 = vadd.f32 %v439, %v1949
      %v1951 = vpop.f32.mrb[0].mxu0
      %v1952 = vadd.f32 %v443, %v1951
      %1953 = vmatprep.mubr.bf16.mxu0 %v689
      %1954 = vmatmul.mubr.bf16.gmra.mrb[0].mxu0 %v688
      %v1955 = vpop.f32.mrb[0].mxu0
      %v1956 = vadd.f32 %v439, %v1955
      %v1957 = vpop.f32.mrb[0].mxu0
      %v1958 = vadd.f32 %v443, %v1957
      %v1959 = vpop.f32.mrb[0].mxu0
      %v1960 = vadd.f32 %v439, %v1959
      %v1961 = vpop.f32.mrb[0].mxu0
      %v1962 = vadd.f32 %v443, %v1961
      %1963 = vmatprep.mubr.bf16.mxu0 %v691
      %1964 = vmatmul.mubr.bf16.gmra.mrb[0].mxu0 %v690
      %v1965 = vpop.f32.mrb[0].mxu0
      %v1966 = vadd.f32 %v439, %v1965
      %v1967 = vpop.f32.mrb[0].mxu0
      %v1968 = vadd.f32 %v443, %v1967
      %v1969 = vpop.f32.mrb[0].mxu0
      %v1970 = vadd.f32 %v439, %v1969
      %v1971 = vpop.f32.mrb[0].mxu0
      %v1972 = vadd.f32 %v443, %v1971
      %1973 = vmatprep.mubr.bf16.mxu0 %v693
      %1974 = vmatmul.mubr.bf16.gmra.mrb[0].mxu0 %v692
      %v1975 = vpop.f32.mrb[0].mxu0
      %v1976 = vadd.f32 %v439, %v1975
      %v1977 = vpop.f32.mrb[0].mxu0
      %v1978 = vadd.f32 %v443, %v1977
      %v1979 = vpop.f32.mrb[0].mxu0
      %v1980 = vadd.f32 %v439, %v1979
      %v1981 = vpop.f32.mrb[0].mxu0
      %v1982 = vadd.f32 %v443, %v1981
      %1983 = vmatprep.mubr.bf16.mxu0 %v695
      %1984 = vmatmul.mubr.bf16.gmra.mrb[0].mxu0 %v694
      %v1985 = vpop.f32.mrb[0].mxu0
      %v1986 = vadd.f32 %v439, %v1985
      %v1987 = vpop.f32.mrb[0].mxu0
      %v1988 = vadd.f32 %v443, %v1987
      %v1989 = vpop.f32.mrb[0].mxu0
      %v1990 = vadd.f32 %v439, %v1989
      %v1991 = vpop.f32.mrb[0].mxu0
      %v1992 = vadd.f32 %v443, %v1991
      %1993 = vmatprep.mubr.bf16.mxu0 %v697
      %1994 = vmatmul.mubr.bf16.gmra.mrb[0].mxu0 %v696
      %v1995 = vpop.f32.mrb[0].mxu0
      %v1996 = vadd.f32 %v439, %v1995
      %v1997 = vpop.f32.mrb[0].mxu0
      %v1998 = vadd.f32 %v443, %v1997
      %v1999 = vpop.f32.mrb[0].mxu0
      %v2000 = vadd.f32 %v439, %v1999
      %v2001 = vpop.f32.mrb[0].mxu0
      %v2002 = vadd.f32 %v443, %v2001
      %2003 = vmatprep.mubr.bf16.mxu0 %v699
      %2004 = vmatmul.mubr.bf16.gmra.mrb[0].mxu0 %v698
      %v2005 = vpop.f32.mrb[0].mxu0
      %v2006 = vadd.f32 %v439, %v2005
      %v2007 = vpop.f32.mrb[0].mxu0
      %v2008 = vadd.f32 %v443, %v2007
      %v2009 = vpop.f32.mrb[0].mxu0
      %v2010 = vadd.f32 %v439, %v2009
      %v2011 = vpop.f32.mrb[0].mxu0
      %v2012 = vadd.f32 %v443, %v2011
      %2013 = vmatprep.mubr.bf16.mxu0 %v701
      %2014 = vmatmul.mubr.bf16.gmra.mrb[0].mxu0 %v700
      %v2015 = vpop.f32.mrb[0].mxu0
      %v2016 = vadd.f32 %v439, %v2015
      %v2017 = vpop.f32.mrb[0].mxu0
      %v2018 = vadd.f32 %v443, %v2017
      %v2019 = vpop.f32.mrb[0].mxu0
      %v2020 = vadd.f32 %v439, %v2019
      %v2021 = vpop.f32.mrb[0].mxu0
      %v2022 = vadd.f32 %v443, %v2021
      %2023 = vmatprep.mubr.bf16.mxu0 %v703
      %2024 = vmatmul.mubr.bf16.gmra.mrb[0].mxu0 %v702
      %v2025 = vpop.f32.mrb[0].mxu0
      %v2026 = vadd.f32 %v439, %v2025
      %v2027 = vpop.f32.mrb[0].mxu0
      %v2028 = vadd.f32 %v443, %v2027
      %v2029 = vpop.f32.mrb[0].mxu0
      %v2030 = vadd.f32 %v439, %v2029
      %v2031 = vpop.f32.mrb[0].mxu0
      %v2032 = vadd.f32 %v443, %v2031
      %2033 = vmatprep.mubr.bf16.mxu0 %v705
      %2034 = vmatmul.mubr.bf16.gmra.mrb[0].mxu0 %v704
      %v2035 = vpop.f32.mrb[0].mxu0
      %v2036 = vadd.f32 %v439, %v2035
      %v2037 = vpop.f32.mrb[0].mxu0
      %v2038 = vadd.f32 %v443, %v2037
      %v2039 = vpop.f32.mrb[0].mxu0
      %v2040 = vadd.f32 %v439, %v2039
      %v2041 = vpop.f32.mrb[0].mxu0
      %v2042 = vadd.f32 %v443, %v2041
      %2043 = vmatprep.mubr.bf16.mxu0 %v707
      %2044 = vmatmul.mubr.bf16.gmra.mrb[0].mxu0 %v706
      %v2045 = vpop.f32.mrb[0].mxu0
      %v2046 = vadd.f32 %v439, %v2045
      %v2047 = vpop.f32.mrb[0].mxu0
      %v2048 = vadd.f32 %v443, %v2047
      %v2049 = vpop.f32.mrb[0].mxu0
      %v2050 = vadd.f32 %v439, %v2049
      %v2051 = vpop.f32.mrb[0].mxu0
      %v2052 = vadd.f32 %v443, %v2051
      %2053 = vmatprep.mubr.bf16.mxu0 %v709
      %2054 = vmatmul.mubr.bf16.gmra.mrb[0].mxu0 %v708
      %v2055 = vpop.f32.mrb[0].mxu0
      %v2056 = vadd.f32 %v439, %v2055
      %v2057 = vpop.f32.mrb[0].mxu0
      %v2058 = vadd.f32 %v443, %v2057
      %v2059 = vpop.f32.mrb[0].mxu0
      %v2060 = vadd.f32 %v439, %v2059
      %v2061 = vpop.f32.mrb[0].mxu0
      %v2062 = vadd.f32 %v443, %v2061
      %2063 = vmatprep.mubr.bf16.mxu0 %v711
      %2064 = vmatmul.mubr.bf16.gmra.mrb[0].mxu0 %v710
      %v2065 = vpop.f32.mrb[0].mxu0
      %v2066 = vadd.f32 %v439, %v2065
      %v2067 = vpop.f32.mrb[0].mxu0
      %v2068 = vadd.f32 %v443, %v2067
      %v2069 = vpop.f32.mrb[0].mxu0
      %v2070 = vadd.f32 %v439, %v2069
      %v2071 = vpop.f32.mrb[0].mxu0
      %v2072 = vadd.f32 %v443, %v2071
      %2073 = vmatprep.mubr.bf16.mxu0 %v713
      %2074 = vmatmul.mubr.bf16.gmra.mrb[0].mxu0 %v712
      %v2075 = vpop.f32.mrb[0].mxu0
      %v2076 = vadd.f32 %v439, %v2075
      %v2077 = vpop.f32.mrb[0].mxu0
      %v2078 = vadd.f32 %v443, %v2077
      %v2079 = vpop.f32.mrb[0].mxu0
      %v2080 = vadd.f32 %v439, %v2079
      %v2081 = vpop.f32.mrb[0].mxu0
      %v2082 = vadd.f32 %v443, %v2081
      %2083 = vmatprep.mubr.bf16.mxu0 %v715
      %2084 = vmatmul.mubr.bf16.gmra.mrb[0].mxu0 %v714
      %v2085 = vpop.f32.mrb[0].mxu0
      %v2086 = vadd.f32 %v439, %v2085
      %v2087 = vpop.f32.mrb[0].mxu0
      %v2088 = vadd.f32 %v443, %v2087
      %v2089 = vpop.f32.mrb[0].mxu0
      %v2090 = vadd.f32 %v439, %v2089
      %v2091 = vpop.f32.mrb[0].mxu0
      %v2092 = vadd.f32 %v443, %v2091
      %2093 = vmatprep.mubr.bf16.mxu0 %v717
      %2094 = vmatmul.mubr.bf16.gmra.mrb[0].mxu0 %v716
      %v2095 = vpop.f32.mrb[0].mxu0
      %v2096 = vadd.f32 %v439, %v2095
      %v2097 = vpop.f32.mrb[0].mxu0
      %v2098 = vadd.f32 %v443, %v2097
      %v2099 = vpop.f32.mrb[0].mxu0
      %v2100 = vadd.f32 %v439, %v2099
      %v2101 = vpop.f32.mrb[0].mxu0
      %v2102 = vadd.f32 %v443, %v2101
      %2103 = vmatprep.mubr.bf16.mxu0 %v719
      %2104 = vmatmul.mubr.bf16.gmra.mrb[0].mxu0 %v718
      %v2105 = vpop.f32.mrb[0].mxu0
      %v2106 = vadd.f32 %v439, %v2105
      %v2107 = vpop.f32.mrb[0].mxu0
      %v2108 = vadd.f32 %v443, %v2107
      %v2109 = vpop.f32.mrb[0].mxu0
      %v2110 = vadd.f32 %v439, %v2109
      %v2111 = vpop.f32.mrb[0].mxu0
      %v2112 = vadd.f32 %v443, %v2111
      %2113 = vmatprep.mubr.bf16.mxu0 %v721
      %2114 = vmatmul.mubr.bf16.gmra.mrb[0].mxu0 %v720
      %v2115 = vpop.f32.mrb[0].mxu0
      %v2116 = vadd.f32 %v439, %v2115
      %v2117 = vpop.f32.mrb[0].mxu0
      %v2118 = vadd.f32 %v443, %v2117
      %v2119 = vpop.f32.mrb[0].mxu0
      %v2120 = vadd.f32 %v439, %v2119
      %v2121 = vpop.f32.mrb[0].mxu0
      %v2122 = vadd.f32 %v443, %v2121
      %2123 = vmatprep.mubr.bf16.mxu0 %v723
      %2124 = vmatmul.mubr.bf16.gmra.mrb[0].mxu0 %v722
      %v2125 = vpop.f32.mrb[0].mxu0
      %v2126 = vadd.f32 %v439, %v2125
      %v2127 = vpop.f32.mrb[0].mxu0
      %v2128 = vadd.f32 %v443, %v2127
      %v2129 = vpop.f32.mrb[0].mxu0
      %v2130 = vadd.f32 %v439, %v2129
      %v2131 = vpop.f32.mrb[0].mxu0
      %v2132 = vadd.f32 %v443, %v2131
      %2133 = vdwg.mxu0
      %2134 = vmatprep.subr.bf16.mxu0 %v1177
      %2135 = vmatpush1.bf16.msra.mxu0 %v1176
      %2136 = vmatprep.subr.bf16.mxu0 %v1185
      %2137 = vmatpush1.bf16.msra.mxu0 %v1184
      %2138 = vmatprep.subr.bf16.mxu0 %v1193
      %2139 = vmatpush1.bf16.msra.mxu0 %v1192
      %2140 = vmatprep.subr.bf16.mxu0 %v1201
      %2141 = vmatpush1.bf16.msra.mxu0 %v1200
      %2142 = vmatprep.subr.bf16.mxu0 %v1209
      %2143 = vmatpush1.bf16.msra.mxu0 %v1208
      %2144 = vmatprep.subr.bf16.mxu0 %v1217
      %2145 = vmatpush1.bf16.msra.mxu0 %v1216
      %2146 = vmatprep.subr.bf16.mxu0 %v1225
      %2147 = vmatpush1.bf16.msra.mxu0 %v1224
      %2148 = vmatprep.subr.bf16.mxu0 %v1233
      %2149 = vmatpush1.bf16.msra.mxu0 %v1232
      %2150 = vmatprep.subr.bf16.mxu0 %v1241
      %2151 = vmatpush1.bf16.msra.mxu0 %v1240
      %2152 = vmatprep.subr.bf16.mxu0 %v1249
      %2153 = vmatpush1.bf16.msra.mxu0 %v1248
      %2154 = vmatprep.subr.bf16.mxu0 %v1257
      %2155 = vmatpush1.bf16.msra.mxu0 %v1256
      %2156 = vmatprep.subr.bf16.mxu0 %v1265
      %2157 = vmatpush1.bf16.msra.mxu0 %v1264
      %2158 = vmatprep.subr.bf16.mxu0 %v1273
      %2159 = vmatpush1.bf16.msra.mxu0 %v1272
      %2160 = vmatprep.subr.bf16.mxu0 %v1281
      %2161 = vmatpush1.bf16.msra.mxu0 %v1280
      %2162 = vmatprep.subr.bf16.mxu0 %v1289
      %2163 = vmatpush1.bf16.msra.mxu0 %v1288
      %2164 = vmatprep.subr.bf16.mxu0 %v1297
      %2165 = vmatpush1.bf16.msra.mxu0 %v1296
      %2166 = vmatprep.mubr.bf16.mxu0 %v661
      %2167 = vmatmul.mubr.bf16.gmra.mrb[0].mxu0 %v660
      %v2168 = vpop.f32.mrb[0].mxu0
      %v2169 = vadd.f32 %v447, %v2168
      %v2170 = vpop.f32.mrb[0].mxu0
      %v2171 = vadd.f32 %v451, %v2170
      %v2172 = vpop.f32.mrb[0].mxu0
      %v2173 = vadd.f32 %v447, %v2172
      %v2174 = vpop.f32.mrb[0].mxu0
      %v2175 = vadd.f32 %v451, %v2174
      %2176 = vmatprep.mubr.bf16.mxu0 %v663
      %2177 = vmatmul.mubr.bf16.gmra.mrb[0].mxu0 %v662
      %v2178 = vpop.f32.mrb[0].mxu0
      %v2179 = vadd.f32 %v447, %v2178
      %v2180 = vpop.f32.mrb[0].mxu0
      %v2181 = vadd.f32 %v451, %v2180
      %v2182 = vpop.f32.mrb[0].mxu0
      %v2183 = vadd.f32 %v447, %v2182
      %v2184 = vpop.f32.mrb[0].mxu0
      %v2185 = vadd.f32 %v451, %v2184
      %2186 = vmatprep.mubr.bf16.mxu0 %v665
      %2187 = vmatmul.mubr.bf16.gmra.mrb[0].mxu0 %v664
      %v2188 = vpop.f32.mrb[0].mxu0
      %v2189 = vadd.f32 %v447, %v2188
      %v2190 = vpop.f32.mrb[0].mxu0
      %v2191 = vadd.f32 %v451, %v2190
      %v2192 = vpop.f32.mrb[0].mxu0
      %v2193 = vadd.f32 %v447, %v2192
      %v2194 = vpop.f32.mrb[0].mxu0
      %v2195 = vadd.f32 %v451, %v2194
      %2196 = vmatprep.mubr.bf16.mxu0 %v667
      %2197 = vmatmul.mubr.bf16.gmra.mrb[0].mxu0 %v666
      %v2198 = vpop.f32.mrb[0].mxu0
      %v2199 = vadd.f32 %v447, %v2198
      %v2200 = vpop.f32.mrb[0].mxu0
      %v2201 = vadd.f32 %v451, %v2200
      %v2202 = vpop.f32.mrb[0].mxu0
      %v2203 = vadd.f32 %v447, %v2202
      %v2204 = vpop.f32.mrb[0].mxu0
      %v2205 = vadd.f32 %v451, %v2204
      %2206 = vmatprep.mubr.bf16.mxu0 %v669
      %2207 = vmatmul.mubr.bf16.gmra.mrb[0].mxu0 %v668
      %v2208 = vpop.f32.mrb[0].mxu0
      %v2209 = vadd.f32 %v447, %v2208
      %v2210 = vpop.f32.mrb[0].mxu0
      %v2211 = vadd.f32 %v451, %v2210
      %v2212 = vpop.f32.mrb[0].mxu0
      %v2213 = vadd.f32 %v447, %v2212
      %v2214 = vpop.f32.mrb[0].mxu0
      %v2215 = vadd.f32 %v451, %v2214
      %2216 = vmatprep.mubr.bf16.mxu0 %v671
      %2217 = vmatmul.mubr.bf16.gmra.mrb[0].mxu0 %v670
      %v2218 = vpop.f32.mrb[0].mxu0
      %v2219 = vadd.f32 %v447, %v2218
      %v2220 = vpop.f32.mrb[0].mxu0
      %v2221 = vadd.f32 %v451, %v2220
      %v2222 = vpop.f32.mrb[0].mxu0
      %v2223 = vadd.f32 %v447, %v2222
      %v2224 = vpop.f32.mrb[0].mxu0
      %v2225 = vadd.f32 %v451, %v2224
      %2226 = vmatprep.mubr.bf16.mxu0 %v673
      %2227 = vmatmul.mubr.bf16.gmra.mrb[0].mxu0 %v672
      %v2228 = vpop.f32.mrb[0].mxu0
      %v2229 = vadd.f32 %v447, %v2228
      %v2230 = vpop.f32.mrb[0].mxu0
      %v2231 = vadd.f32 %v451, %v2230
      %v2232 = vpop.f32.mrb[0].mxu0
      %v2233 = vadd.f32 %v447, %v2232
      %v2234 = vpop.f32.mrb[0].mxu0
      %v2235 = vadd.f32 %v451, %v2234
      %2236 = vmatprep.mubr.bf16.mxu0 %v675
      %2237 = vmatmul.mubr.bf16.gmra.mrb[0].mxu0 %v674
      %v2238 = vpop.f32.mrb[0].mxu0
      %v2239 = vadd.f32 %v447, %v2238
      %v2240 = vpop.f32.mrb[0].mxu0
      %v2241 = vadd.f32 %v451, %v2240
      %v2242 = vpop.f32.mrb[0].mxu0
      %v2243 = vadd.f32 %v447, %v2242
      %v2244 = vpop.f32.mrb[0].mxu0
      %v2245 = vadd.f32 %v451, %v2244
      %2246 = vmatprep.mubr.bf16.mxu0 %v677
      %2247 = vmatmul.mubr.bf16.gmra.mrb[0].mxu0 %v676
      %v2248 = vpop.f32.mrb[0].mxu0
      %v2249 = vadd.f32 %v447, %v2248
      %v2250 = vpop.f32.mrb[0].mxu0
      %v2251 = vadd.f32 %v451, %v2250
      %v2252 = vpop.f32.mrb[0].mxu0
      %v2253 = vadd.f32 %v447, %v2252
      %v2254 = vpop.f32.mrb[0].mxu0
      %v2255 = vadd.f32 %v451, %v2254
      %2256 = vmatprep.mubr.bf16.mxu0 %v679
      %2257 = vmatmul.mubr.bf16.gmra.mrb[0].mxu0 %v678
      %v2258 = vpop.f32.mrb[0].mxu0
      %v2259 = vadd.f32 %v447, %v2258
      %v2260 = vpop.f32.mrb[0].mxu0
      %v2261 = vadd.f32 %v451, %v2260
      %v2262 = vpop.f32.mrb[0].mxu0
      %v2263 = vadd.f32 %v447, %v2262
      %v2264 = vpop.f32.mrb[0].mxu0
      %v2265 = vadd.f32 %v451, %v2264
      %2266 = vmatprep.mubr.bf16.mxu0 %v681
      %2267 = vmatmul.mubr.bf16.gmra.mrb[0].mxu0 %v680
      %v2268 = vpop.f32.mrb[0].mxu0
      %v2269 = vadd.f32 %v447, %v2268
      %v2270 = vpop.f32.mrb[0].mxu0
      %v2271 = vadd.f32 %v451, %v2270
      %v2272 = vpop.f32.mrb[0].mxu0
      %v2273 = vadd.f32 %v447, %v2272
      %v2274 = vpop.f32.mrb[0].mxu0
      %v2275 = vadd.f32 %v451, %v2274
      %2276 = vmatprep.mubr.bf16.mxu0 %v683
      %2277 = vmatmul.mubr.bf16.gmra.mrb[0].mxu0 %v682
      %v2278 = vpop.f32.mrb[0].mxu0
      %v2279 = vadd.f32 %v447, %v2278
      %v2280 = vpop.f32.mrb[0].mxu0
      %v2281 = vadd.f32 %v451, %v2280
      %v2282 = vpop.f32.mrb[0].mxu0
      %v2283 = vadd.f32 %v447, %v2282
      %v2284 = vpop.f32.mrb[0].mxu0
      %v2285 = vadd.f32 %v451, %v2284
      %2286 = vmatprep.mubr.bf16.mxu0 %v685
      %2287 = vmatmul.mubr.bf16.gmra.mrb[0].mxu0 %v684
      %v2288 = vpop.f32.mrb[0].mxu0
      %v2289 = vadd.f32 %v447, %v2288
      %v2290 = vpop.f32.mrb[0].mxu0
      %v2291 = vadd.f32 %v451, %v2290
      %v2292 = vpop.f32.mrb[0].mxu0
      %v2293 = vadd.f32 %v447, %v2292
      %v2294 = vpop.f32.mrb[0].mxu0
      %v2295 = vadd.f32 %v451, %v2294
      %2296 = vmatprep.mubr.bf16.mxu0 %v687
      %2297 = vmatmul.mubr.bf16.gmra.mrb[0].mxu0 %v686
      %v2298 = vpop.f32.mrb[0].mxu0
      %v2299 = vadd.f32 %v447, %v2298
      %v2300 = vpop.f32.mrb[0].mxu0
      %v2301 = vadd.f32 %v451, %v2300
      %v2302 = vpop.f32.mrb[0].mxu0
      %v2303 = vadd.f32 %v447, %v2302
      %v2304 = vpop.f32.mrb[0].mxu0
      %v2305 = vadd.f32 %v451, %v2304
      %2306 = vmatprep.mubr.bf16.mxu0 %v689
      %2307 = vmatmul.mubr.bf16.gmra.mrb[0].mxu0 %v688
      %v2308 = vpop.f32.mrb[0].mxu0
      %v2309 = vadd.f32 %v447, %v2308
      %v2310 = vpop.f32.mrb[0].mxu0
      %v2311 = vadd.f32 %v451, %v2310
      %v2312 = vpop.f32.mrb[0].mxu0
      %v2313 = vadd.f32 %v447, %v2312
      %v2314 = vpop.f32.mrb[0].mxu0
      %v2315 = vadd.f32 %v451, %v2314
      %2316 = vmatprep.mubr.bf16.mxu0 %v691
      %2317 = vmatmul.mubr.bf16.gmra.mrb[0].mxu0 %v690
      %v2318 = vpop.f32.mrb[0].mxu0
      %v2319 = vadd.f32 %v447, %v2318
      %v2320 = vpop.f32.mrb[0].mxu0
      %v2321 = vadd.f32 %v451, %v2320
      %v2322 = vpop.f32.mrb[0].mxu0
      %v2323 = vadd.f32 %v447, %v2322
      %v2324 = vpop.f32.mrb[0].mxu0
      %v2325 = vadd.f32 %v451, %v2324
      %2326 = vmatprep.mubr.bf16.mxu0 %v693
      %2327 = vmatmul.mubr.bf16.gmra.mrb[0].mxu0 %v692
      %v2328 = vpop.f32.mrb[0].mxu0
      %v2329 = vadd.f32 %v447, %v2328
      %v2330 = vpop.f32.mrb[0].mxu0
      %v2331 = vadd.f32 %v451, %v2330
      %v2332 = vpop.f32.mrb[0].mxu0
      %v2333 = vadd.f32 %v447, %v2332
      %v2334 = vpop.f32.mrb[0].mxu0
      %v2335 = vadd.f32 %v451, %v2334
      %2336 = vmatprep.mubr.bf16.mxu0 %v695
      %2337 = vmatmul.mubr.bf16.gmra.mrb[0].mxu0 %v694
      %v2338 = vpop.f32.mrb[0].mxu0
      %v2339 = vadd.f32 %v447, %v2338
      %v2340 = vpop.f32.mrb[0].mxu0
      %v2341 = vadd.f32 %v451, %v2340
      %v2342 = vpop.f32.mrb[0].mxu0
      %v2343 = vadd.f32 %v447, %v2342
      %v2344 = vpop.f32.mrb[0].mxu0
      %v2345 = vadd.f32 %v451, %v2344
      %2346 = vmatprep.mubr.bf16.mxu0 %v697
      %2347 = vmatmul.mubr.bf16.gmra.mrb[0].mxu0 %v696
      %v2348 = vpop.f32.mrb[0].mxu0
      %v2349 = vadd.f32 %v447, %v2348
      %v2350 = vpop.f32.mrb[0].mxu0
      %v2351 = vadd.f32 %v451, %v2350
      %v2352 = vpop.f32.mrb[0].mxu0
      %v2353 = vadd.f32 %v447, %v2352
      %v2354 = vpop.f32.mrb[0].mxu0
      %v2355 = vadd.f32 %v451, %v2354
      %2356 = vmatprep.mubr.bf16.mxu0 %v699
      %2357 = vmatmul.mubr.bf16.gmra.mrb[0].mxu0 %v698
      %v2358 = vpop.f32.mrb[0].mxu0
      %v2359 = vadd.f32 %v447, %v2358
      %v2360 = vpop.f32.mrb[0].mxu0
      %v2361 = vadd.f32 %v451, %v2360
      %v2362 = vpop.f32.mrb[0].mxu0
      %v2363 = vadd.f32 %v447, %v2362
      %v2364 = vpop.f32.mrb[0].mxu0
      %v2365 = vadd.f32 %v451, %v2364
      %2366 = vmatprep.mubr.bf16.mxu0 %v701
      %2367 = vmatmul.mubr.bf16.gmra.mrb[0].mxu0 %v700
      %v2368 = vpop.f32.mrb[0].mxu0
      %v2369 = vadd.f32 %v447, %v2368
      %v2370 = vpop.f32.mrb[0].mxu0
      %v2371 = vadd.f32 %v451, %v2370
      %v2372 = vpop.f32.mrb[0].mxu0
      %v2373 = vadd.f32 %v447, %v2372
      %v2374 = vpop.f32.mrb[0].mxu0
      %v2375 = vadd.f32 %v451, %v2374
      %2376 = vmatprep.mubr.bf16.mxu0 %v703
      %2377 = vmatmul.mubr.bf16.gmra.mrb[0].mxu0 %v702
      %v2378 = vpop.f32.mrb[0].mxu0
      %v2379 = vadd.f32 %v447, %v2378
      %v2380 = vpop.f32.mrb[0].mxu0
      %v2381 = vadd.f32 %v451, %v2380
      %v2382 = vpop.f32.mrb[0].mxu0
      %v2383 = vadd.f32 %v447, %v2382
      %v2384 = vpop.f32.mrb[0].mxu0
      %v2385 = vadd.f32 %v451, %v2384
      %2386 = vmatprep.mubr.bf16.mxu0 %v705
      %2387 = vmatmul.mubr.bf16.gmra.mrb[0].mxu0 %v704
      %v2388 = vpop.f32.mrb[0].mxu0
      %v2389 = vadd.f32 %v447, %v2388
      %v2390 = vpop.f32.mrb[0].mxu0
      %v2391 = vadd.f32 %v451, %v2390
      %v2392 = vpop.f32.mrb[0].mxu0
      %v2393 = vadd.f32 %v447, %v2392
      %v2394 = vpop.f32.mrb[0].mxu0
      %v2395 = vadd.f32 %v451, %v2394
      %2396 = vmatprep.mubr.bf16.mxu0 %v707
      %2397 = vmatmul.mubr.bf16.gmra.mrb[0].mxu0 %v706
      %v2398 = vpop.f32.mrb[0].mxu0
      %v2399 = vadd.f32 %v447, %v2398
      %v2400 = vpop.f32.mrb[0].mxu0
      %v2401 = vadd.f32 %v451, %v2400
      %v2402 = vpop.f32.mrb[0].mxu0
      %v2403 = vadd.f32 %v447, %v2402
      %v2404 = vpop.f32.mrb[0].mxu0
      %v2405 = vadd.f32 %v451, %v2404
      %2406 = vmatprep.mubr.bf16.mxu0 %v709
      %2407 = vmatmul.mubr.bf16.gmra.mrb[0].mxu0 %v708
      %v2408 = vpop.f32.mrb[0].mxu0
      %v2409 = vadd.f32 %v447, %v2408
      %v2410 = vpop.f32.mrb[0].mxu0
      %v2411 = vadd.f32 %v451, %v2410
      %v2412 = vpop.f32.mrb[0].mxu0
      %v2413 = vadd.f32 %v447, %v2412
      %v2414 = vpop.f32.mrb[0].mxu0
      %v2415 = vadd.f32 %v451, %v2414
      %2416 = vmatprep.mubr.bf16.mxu0 %v711
      %2417 = vmatmul.mubr.bf16.gmra.mrb[0].mxu0 %v710
      %v2418 = vpop.f32.mrb[0].mxu0
      %v2419 = vadd.f32 %v447, %v2418
      %v2420 = vpop.f32.mrb[0].mxu0
      %v2421 = vadd.f32 %v451, %v2420
      %v2422 = vpop.f32.mrb[0].mxu0
      %v2423 = vadd.f32 %v447, %v2422
      %v2424 = vpop.f32.mrb[0].mxu0
      %v2425 = vadd.f32 %v451, %v2424
      %2426 = vmatprep.mubr.bf16.mxu0 %v713
      %2427 = vmatmul.mubr.bf16.gmra.mrb[0].mxu0 %v712
      %v2428 = vpop.f32.mrb[0].mxu0
      %v2429 = vadd.f32 %v447, %v2428
      %v2430 = vpop.f32.mrb[0].mxu0
      %v2431 = vadd.f32 %v451, %v2430
      %v2432 = vpop.f32.mrb[0].mxu0
      %v2433 = vadd.f32 %v447, %v2432
      %v2434 = vpop.f32.mrb[0].mxu0
      %v2435 = vadd.f32 %v451, %v2434
      %2436 = vmatprep.mubr.bf16.mxu0 %v715
      %2437 = vmatmul.mubr.bf16.gmra.mrb[0].mxu0 %v714
      %v2438 = vpop.f32.mrb[0].mxu0
      %v2439 = vadd.f32 %v447, %v2438
      %v2440 = vpop.f32.mrb[0].mxu0
      %v2441 = vadd.f32 %v451, %v2440
      %v2442 = vpop.f32.mrb[0].mxu0
      %v2443 = vadd.f32 %v447, %v2442
      %v2444 = vpop.f32.mrb[0].mxu0
      %v2445 = vadd.f32 %v451, %v2444
      %2446 = vmatprep.mubr.bf16.mxu0 %v717
      %2447 = vmatmul.mubr.bf16.gmra.mrb[0].mxu0 %v716
      %v2448 = vpop.f32.mrb[0].mxu0
      %v2449 = vadd.f32 %v447, %v2448
      %v2450 = vpop.f32.mrb[0].mxu0
      %v2451 = vadd.f32 %v451, %v2450
      %v2452 = vpop.f32.mrb[0].mxu0
      %v2453 = vadd.f32 %v447, %v2452
      %v2454 = vpop.f32.mrb[0].mxu0
      %v2455 = vadd.f32 %v451, %v2454
      %2456 = vmatprep.mubr.bf16.mxu0 %v719
      %2457 = vmatmul.mubr.bf16.gmra.mrb[0].mxu0 %v718
      %v2458 = vpop.f32.mrb[0].mxu0
      %v2459 = vadd.f32 %v447, %v2458
      %v2460 = vpop.f32.mrb[0].mxu0
      %v2461 = vadd.f32 %v451, %v2460
      %v2462 = vpop.f32.mrb[0].mxu0
      %v2463 = vadd.f32 %v447, %v2462
      %v2464 = vpop.f32.mrb[0].mxu0
      %v2465 = vadd.f32 %v451, %v2464
      %2466 = vmatprep.mubr.bf16.mxu0 %v721
      %2467 = vmatmul.mubr.bf16.gmra.mrb[0].mxu0 %v720
      %v2468 = vpop.f32.mrb[0].mxu0
      %v2469 = vadd.f32 %v447, %v2468
      %v2470 = vpop.f32.mrb[0].mxu0
      %v2471 = vadd.f32 %v451, %v2470
      %v2472 = vpop.f32.mrb[0].mxu0
      %v2473 = vadd.f32 %v447, %v2472
      %v2474 = vpop.f32.mrb[0].mxu0
      %v2475 = vadd.f32 %v451, %v2474
      %2476 = vmatprep.mubr.bf16.mxu0 %v723
      %2477 = vmatmul.mubr.bf16.gmra.mrb[0].mxu0 %v722
      %v2478 = vpop.f32.mrb[0].mxu0
      %v2479 = vadd.f32 %v447, %v2478
      %v2480 = vpop.f32.mrb[0].mxu0
      %v2481 = vadd.f32 %v451, %v2480
      %v2482 = vpop.f32.mrb[0].mxu0
      %v2483 = vadd.f32 %v447, %v2482
      %v2484 = vpop.f32.mrb[0].mxu0
      %v2485 = vadd.f32 %v451, %v2484
      %2486 = vdwg.mxu0
      %2487 = vmatprep.subr.bf16.mxu0 %v1179
      %2488 = vmatpush1.bf16.msra.mxu0 %v1178
      %2489 = vmatprep.subr.bf16.mxu0 %v1187
      %2490 = vmatpush1.bf16.msra.mxu0 %v1186
      %2491 = vmatprep.subr.bf16.mxu0 %v1195
      %2492 = vmatpush1.bf16.msra.mxu0 %v1194
      %2493 = vmatprep.subr.bf16.mxu0 %v1203
      %2494 = vmatpush1.bf16.msra.mxu0 %v1202
      %2495 = vmatprep.subr.bf16.mxu0 %v1211
      %2496 = vmatpush1.bf16.msra.mxu0 %v1210
      %2497 = vmatprep.subr.bf16.mxu0 %v1219
      %2498 = vmatpush1.bf16.msra.mxu0 %v1218
      %2499 = vmatprep.subr.bf16.mxu0 %v1227
      %2500 = vmatpush1.bf16.msra.mxu0 %v1226
      %2501 = vmatprep.subr.bf16.mxu0 %v1235
      %2502 = vmatpush1.bf16.msra.mxu0 %v1234
      %2503 = vmatprep.subr.bf16.mxu0 %v1243
      %2504 = vmatpush1.bf16.msra.mxu0 %v1242
      %2505 = vmatprep.subr.bf16.mxu0 %v1251
      %2506 = vmatpush1.bf16.msra.mxu0 %v1250
      %2507 = vmatprep.subr.bf16.mxu0 %v1259
      %2508 = vmatpush1.bf16.msra.mxu0 %v1258
      %2509 = vmatprep.subr.bf16.mxu0 %v1267
      %2510 = vmatpush1.bf16.msra.mxu0 %v1266
      %2511 = vmatprep.subr.bf16.mxu0 %v1275
      %2512 = vmatpush1.bf16.msra.mxu0 %v1274
      %2513 = vmatprep.subr.bf16.mxu0 %v1283
      %2514 = vmatpush1.bf16.msra.mxu0 %v1282
      %2515 = vmatprep.subr.bf16.mxu0 %v1291
      %2516 = vmatpush1.bf16.msra.mxu0 %v1290
      %2517 = vmatprep.subr.bf16.mxu0 %v1299
      %2518 = vmatpush1.bf16.msra.mxu0 %v1298
      %2519 = vmatprep.mubr.bf16.mxu0 %v661
      %2520 = vmatmul.mubr.bf16.gmra.mrb[0].mxu0 %v660
      %v2521 = vpop.f32.mrb[0].mxu0
      %v2522 = vadd.f32 %v455, %v2521
      %v2523 = vpop.f32.mrb[0].mxu0
      %v2524 = vadd.f32 %v459, %v2523
      %v2525 = vpop.f32.mrb[0].mxu0
      %v2526 = vadd.f32 %v455, %v2525
      %v2527 = vpop.f32.mrb[0].mxu0
      %v2528 = vadd.f32 %v459, %v2527
      %2529 = vmatprep.mubr.bf16.mxu0 %v663
      %2530 = vmatmul.mubr.bf16.gmra.mrb[0].mxu0 %v662
      %v2531 = vpop.f32.mrb[0].mxu0
      %v2532 = vadd.f32 %v455, %v2531
      %v2533 = vpop.f32.mrb[0].mxu0
      %v2534 = vadd.f32 %v459, %v2533
      %v2535 = vpop.f32.mrb[0].mxu0
      %v2536 = vadd.f32 %v455, %v2535
      %v2537 = vpop.f32.mrb[0].mxu0
      %v2538 = vadd.f32 %v459, %v2537
      %2539 = vmatprep.mubr.bf16.mxu0 %v665
      %2540 = vmatmul.mubr.bf16.gmra.mrb[0].mxu0 %v664
      %v2541 = vpop.f32.mrb[0].mxu0
      %v2542 = vadd.f32 %v455, %v2541
      %v2543 = vpop.f32.mrb[0].mxu0
      %v2544 = vadd.f32 %v459, %v2543
      %v2545 = vpop.f32.mrb[0].mxu0
      %v2546 = vadd.f32 %v455, %v2545
      %v2547 = vpop.f32.mrb[0].mxu0
      %v2548 = vadd.f32 %v459, %v2547
      %2549 = vmatprep.mubr.bf16.mxu0 %v667
      %2550 = vmatmul.mubr.bf16.gmra.mrb[0].mxu0 %v666
      %v2551 = vpop.f32.mrb[0].mxu0
      %v2552 = vadd.f32 %v455, %v2551
      %v2553 = vpop.f32.mrb[0].mxu0
      %v2554 = vadd.f32 %v459, %v2553
      %v2555 = vpop.f32.mrb[0].mxu0
      %v2556 = vadd.f32 %v455, %v2555
      %v2557 = vpop.f32.mrb[0].mxu0
      %v2558 = vadd.f32 %v459, %v2557
      %2559 = vmatprep.mubr.bf16.mxu0 %v669
      %2560 = vmatmul.mubr.bf16.gmra.mrb[0].mxu0 %v668
      %v2561 = vpop.f32.mrb[0].mxu0
      %v2562 = vadd.f32 %v455, %v2561
      %v2563 = vpop.f32.mrb[0].mxu0
      %v2564 = vadd.f32 %v459, %v2563
      %v2565 = vpop.f32.mrb[0].mxu0
      %v2566 = vadd.f32 %v455, %v2565
      %v2567 = vpop.f32.mrb[0].mxu0
      %v2568 = vadd.f32 %v459, %v2567
      %2569 = vmatprep.mubr.bf16.mxu0 %v671
      %2570 = vmatmul.mubr.bf16.gmra.mrb[0].mxu0 %v670
      %v2571 = vpop.f32.mrb[0].mxu0
      %v2572 = vadd.f32 %v455, %v2571
      %v2573 = vpop.f32.mrb[0].mxu0
      %v2574 = vadd.f32 %v459, %v2573
      %v2575 = vpop.f32.mrb[0].mxu0
      %v2576 = vadd.f32 %v455, %v2575
      %v2577 = vpop.f32.mrb[0].mxu0
      %v2578 = vadd.f32 %v459, %v2577
      %2579 = vmatprep.mubr.bf16.mxu0 %v673
      %2580 = vmatmul.mubr.bf16.gmra.mrb[0].mxu0 %v672
      %v2581 = vpop.f32.mrb[0].mxu0
      %v2582 = vadd.f32 %v455, %v2581
      %v2583 = vpop.f32.mrb[0].mxu0
      %v2584 = vadd.f32 %v459, %v2583
      %v2585 = vpop.f32.mrb[0].mxu0
      %v2586 = vadd.f32 %v455, %v2585
      %v2587 = vpop.f32.mrb[0].mxu0
      %v2588 = vadd.f32 %v459, %v2587
      %2589 = vmatprep.mubr.bf16.mxu0 %v675
      %2590 = vmatmul.mubr.bf16.gmra.mrb[0].mxu0 %v674
      %v2591 = vpop.f32.mrb[0].mxu0
      %v2592 = vadd.f32 %v455, %v2591
      %v2593 = vpop.f32.mrb[0].mxu0
      %v2594 = vadd.f32 %v459, %v2593
      %v2595 = vpop.f32.mrb[0].mxu0
      %v2596 = vadd.f32 %v455, %v2595
      %v2597 = vpop.f32.mrb[0].mxu0
      %v2598 = vadd.f32 %v459, %v2597
      %2599 = vmatprep.mubr.bf16.mxu0 %v677
      %2600 = vmatmul.mubr.bf16.gmra.mrb[0].mxu0 %v676
      %v2601 = vpop.f32.mrb[0].mxu0
      %v2602 = vadd.f32 %v455, %v2601
      %v2603 = vpop.f32.mrb[0].mxu0
      %v2604 = vadd.f32 %v459, %v2603
      %v2605 = vpop.f32.mrb[0].mxu0
      %v2606 = vadd.f32 %v455, %v2605
      %v2607 = vpop.f32.mrb[0].mxu0
      %v2608 = vadd.f32 %v459, %v2607
      %2609 = vmatprep.mubr.bf16.mxu0 %v679
      %2610 = vmatmul.mubr.bf16.gmra.mrb[0].mxu0 %v678
      %v2611 = vpop.f32.mrb[0].mxu0
      %v2612 = vadd.f32 %v455, %v2611
      %v2613 = vpop.f32.mrb[0].mxu0
      %v2614 = vadd.f32 %v459, %v2613
      %v2615 = vpop.f32.mrb[0].mxu0
      %v2616 = vadd.f32 %v455, %v2615
      %v2617 = vpop.f32.mrb[0].mxu0
      %v2618 = vadd.f32 %v459, %v2617
      %2619 = vmatprep.mubr.bf16.mxu0 %v681
      %2620 = vmatmul.mubr.bf16.gmra.mrb[0].mxu0 %v680
      %v2621 = vpop.f32.mrb[0].mxu0
      %v2622 = vadd.f32 %v455, %v2621
      %v2623 = vpop.f32.mrb[0].mxu0
      %v2624 = vadd.f32 %v459, %v2623
      %v2625 = vpop.f32.mrb[0].mxu0
      %v2626 = vadd.f32 %v455, %v2625
      %v2627 = vpop.f32.mrb[0].mxu0
      %v2628 = vadd.f32 %v459, %v2627
      %2629 = vmatprep.mubr.bf16.mxu0 %v683
      %2630 = vmatmul.mubr.bf16.gmra.mrb[0].mxu0 %v682
      %v2631 = vpop.f32.mrb[0].mxu0
      %v2632 = vadd.f32 %v455, %v2631
      %v2633 = vpop.f32.mrb[0].mxu0
      %v2634 = vadd.f32 %v459, %v2633
      %v2635 = vpop.f32.mrb[0].mxu0
      %v2636 = vadd.f32 %v455, %v2635
      %v2637 = vpop.f32.mrb[0].mxu0
      %v2638 = vadd.f32 %v459, %v2637
      %2639 = vmatprep.mubr.bf16.mxu0 %v685
      %2640 = vmatmul.mubr.bf16.gmra.mrb[0].mxu0 %v684
      %v2641 = vpop.f32.mrb[0].mxu0
      %v2642 = vadd.f32 %v455, %v2641
      %v2643 = vpop.f32.mrb[0].mxu0
      %v2644 = vadd.f32 %v459, %v2643
      %v2645 = vpop.f32.mrb[0].mxu0
      %v2646 = vadd.f32 %v455, %v2645
      %v2647 = vpop.f32.mrb[0].mxu0
      %v2648 = vadd.f32 %v459, %v2647
      %2649 = vmatprep.mubr.bf16.mxu0 %v687
      %2650 = vmatmul.mubr.bf16.gmra.mrb[0].mxu0 %v686
      %v2651 = vpop.f32.mrb[0].mxu0
      %v2652 = vadd.f32 %v455, %v2651
      %v2653 = vpop.f32.mrb[0].mxu0
      %v2654 = vadd.f32 %v459, %v2653
      %v2655 = vpop.f32.mrb[0].mxu0
      %v2656 = vadd.f32 %v455, %v2655
      %v2657 = vpop.f32.mrb[0].mxu0
      %v2658 = vadd.f32 %v459, %v2657
      %2659 = vmatprep.mubr.bf16.mxu0 %v689
      %2660 = vmatmul.mubr.bf16.gmra.mrb[0].mxu0 %v688
      %v2661 = vpop.f32.mrb[0].mxu0
      %v2662 = vadd.f32 %v455, %v2661
      %v2663 = vpop.f32.mrb[0].mxu0
      %v2664 = vadd.f32 %v459, %v2663
      %v2665 = vpop.f32.mrb[0].mxu0
      %v2666 = vadd.f32 %v455, %v2665
      %v2667 = vpop.f32.mrb[0].mxu0
      %v2668 = vadd.f32 %v459, %v2667
      %2669 = vmatprep.mubr.bf16.mxu0 %v691
      %2670 = vmatmul.mubr.bf16.gmra.mrb[0].mxu0 %v690
      %v2671 = vpop.f32.mrb[0].mxu0
      %v2672 = vadd.f32 %v455, %v2671
      %v2673 = vpop.f32.mrb[0].mxu0
      %v2674 = vadd.f32 %v459, %v2673
      %v2675 = vpop.f32.mrb[0].mxu0
      %v2676 = vadd.f32 %v455, %v2675
      %v2677 = vpop.f32.mrb[0].mxu0
      %v2678 = vadd.f32 %v459, %v2677
      %2679 = vmatprep.mubr.bf16.mxu0 %v693
      %2680 = vmatmul.mubr.bf16.gmra.mrb[0].mxu0 %v692
      %v2681 = vpop.f32.mrb[0].mxu0
      %v2682 = vadd.f32 %v455, %v2681
      %v2683 = vpop.f32.mrb[0].mxu0
      %v2684 = vadd.f32 %v459, %v2683
      %v2685 = vpop.f32.mrb[0].mxu0
      %v2686 = vadd.f32 %v455, %v2685
      %v2687 = vpop.f32.mrb[0].mxu0
      %v2688 = vadd.f32 %v459, %v2687
      %2689 = vmatprep.mubr.bf16.mxu0 %v695
      %2690 = vmatmul.mubr.bf16.gmra.mrb[0].mxu0 %v694
      %v2691 = vpop.f32.mrb[0].mxu0
      %v2692 = vadd.f32 %v455, %v2691
      %v2693 = vpop.f32.mrb[0].mxu0
      %v2694 = vadd.f32 %v459, %v2693
      %v2695 = vpop.f32.mrb[0].mxu0
      %v2696 = vadd.f32 %v455, %v2695
      %v2697 = vpop.f32.mrb[0].mxu0
      %v2698 = vadd.f32 %v459, %v2697
      %2699 = vmatprep.mubr.bf16.mxu0 %v697
      %2700 = vmatmul.mubr.bf16.gmra.mrb[0].mxu0 %v696
      %v2701 = vpop.f32.mrb[0].mxu0
      %v2702 = vadd.f32 %v455, %v2701
      %v2703 = vpop.f32.mrb[0].mxu0
      %v2704 = vadd.f32 %v459, %v2703
      %v2705 = vpop.f32.mrb[0].mxu0
      %v2706 = vadd.f32 %v455, %v2705
      %v2707 = vpop.f32.mrb[0].mxu0
      %v2708 = vadd.f32 %v459, %v2707
      %2709 = vmatprep.mubr.bf16.mxu0 %v699
      %2710 = vmatmul.mubr.bf16.gmra.mrb[0].mxu0 %v698
      %v2711 = vpop.f32.mrb[0].mxu0
      %v2712 = vadd.f32 %v455, %v2711
      %v2713 = vpop.f32.mrb[0].mxu0
      %v2714 = vadd.f32 %v459, %v2713
      %v2715 = vpop.f32.mrb[0].mxu0
      %v2716 = vadd.f32 %v455, %v2715
      %v2717 = vpop.f32.mrb[0].mxu0
      %v2718 = vadd.f32 %v459, %v2717
      %2719 = vmatprep.mubr.bf16.mxu0 %v701
      %2720 = vmatmul.mubr.bf16.gmra.mrb[0].mxu0 %v700
      %v2721 = vpop.f32.mrb[0].mxu0
      %v2722 = vadd.f32 %v455, %v2721
      %v2723 = vpop.f32.mrb[0].mxu0
      %v2724 = vadd.f32 %v459, %v2723
      %v2725 = vpop.f32.mrb[0].mxu0
      %v2726 = vadd.f32 %v455, %v2725
      %v2727 = vpop.f32.mrb[0].mxu0
      %v2728 = vadd.f32 %v459, %v2727
      %2729 = vmatprep.mubr.bf16.mxu0 %v703
      %2730 = vmatmul.mubr.bf16.gmra.mrb[0].mxu0 %v702
      %v2731 = vpop.f32.mrb[0].mxu0
      %v2732 = vadd.f32 %v455, %v2731
      %v2733 = vpop.f32.mrb[0].mxu0
      %v2734 = vadd.f32 %v459, %v2733
      %v2735 = vpop.f32.mrb[0].mxu0
      %v2736 = vadd.f32 %v455, %v2735
      %v2737 = vpop.f32.mrb[0].mxu0
      %v2738 = vadd.f32 %v459, %v2737
      %2739 = vmatprep.mubr.bf16.mxu0 %v705
      %2740 = vmatmul.mubr.bf16.gmra.mrb[0].mxu0 %v704
      %v2741 = vpop.f32.mrb[0].mxu0
      %v2742 = vadd.f32 %v455, %v2741
      %v2743 = vpop.f32.mrb[0].mxu0
      %v2744 = vadd.f32 %v459, %v2743
      %v2745 = vpop.f32.mrb[0].mxu0
      %v2746 = vadd.f32 %v455, %v2745
      %v2747 = vpop.f32.mrb[0].mxu0
      %v2748 = vadd.f32 %v459, %v2747
      %2749 = vmatprep.mubr.bf16.mxu0 %v707
      %2750 = vmatmul.mubr.bf16.gmra.mrb[0].mxu0 %v706
      %v2751 = vpop.f32.mrb[0].mxu0
      %v2752 = vadd.f32 %v455, %v2751
      %v2753 = vpop.f32.mrb[0].mxu0
      %v2754 = vadd.f32 %v459, %v2753
      %v2755 = vpop.f32.mrb[0].mxu0
      %v2756 = vadd.f32 %v455, %v2755
      %v2757 = vpop.f32.mrb[0].mxu0
      %v2758 = vadd.f32 %v459, %v2757
      %2759 = vmatprep.mubr.bf16.mxu0 %v709
      %2760 = vmatmul.mubr.bf16.gmra.mrb[0].mxu0 %v708
      %v2761 = vpop.f32.mrb[0].mxu0
      %v2762 = vadd.f32 %v455, %v2761
      %v2763 = vpop.f32.mrb[0].mxu0
      %v2764 = vadd.f32 %v459, %v2763
      %v2765 = vpop.f32.mrb[0].mxu0
      %v2766 = vadd.f32 %v455, %v2765
      %v2767 = vpop.f32.mrb[0].mxu0
      %v2768 = vadd.f32 %v459, %v2767
      %2769 = vmatprep.mubr.bf16.mxu0 %v711
      %2770 = vmatmul.mubr.bf16.gmra.mrb[0].mxu0 %v710
      %v2771 = vpop.f32.mrb[0].mxu0
      %v2772 = vadd.f32 %v455, %v2771
      %v2773 = vpop.f32.mrb[0].mxu0
      %v2774 = vadd.f32 %v459, %v2773
      %v2775 = vpop.f32.mrb[0].mxu0
      %v2776 = vadd.f32 %v455, %v2775
      %v2777 = vpop.f32.mrb[0].mxu0
      %v2778 = vadd.f32 %v459, %v2777
      %2779 = vmatprep.mubr.bf16.mxu0 %v713
      %2780 = vmatmul.mubr.bf16.gmra.mrb[0].mxu0 %v712
      %v2781 = vpop.f32.mrb[0].mxu0
      %v2782 = vadd.f32 %v455, %v2781
      %v2783 = vpop.f32.mrb[0].mxu0
      %v2784 = vadd.f32 %v459, %v2783
      %v2785 = vpop.f32.mrb[0].mxu0
      %v2786 = vadd.f32 %v455, %v2785
      %v2787 = vpop.f32.mrb[0].mxu0
      %v2788 = vadd.f32 %v459, %v2787
      %2789 = vmatprep.mubr.bf16.mxu0 %v715
      %2790 = vmatmul.mubr.bf16.gmra.mrb[0].mxu0 %v714
      %v2791 = vpop.f32.mrb[0].mxu0
      %v2792 = vadd.f32 %v455, %v2791
      %v2793 = vpop.f32.mrb[0].mxu0
      %v2794 = vadd.f32 %v459, %v2793
      %v2795 = vpop.f32.mrb[0].mxu0
      %v2796 = vadd.f32 %v455, %v2795
      %v2797 = vpop.f32.mrb[0].mxu0
      %v2798 = vadd.f32 %v459, %v2797
      %2799 = vmatprep.mubr.bf16.mxu0 %v717
      %2800 = vmatmul.mubr.bf16.gmra.mrb[0].mxu0 %v716
      %v2801 = vpop.f32.mrb[0].mxu0
      %v2802 = vadd.f32 %v455, %v2801
      %v2803 = vpop.f32.mrb[0].mxu0
      %v2804 = vadd.f32 %v459, %v2803
      %v2805 = vpop.f32.mrb[0].mxu0
      %v2806 = vadd.f32 %v455, %v2805
      %v2807 = vpop.f32.mrb[0].mxu0
      %v2808 = vadd.f32 %v459, %v2807
      %2809 = vmatprep.mubr.bf16.mxu0 %v719
      %2810 = vmatmul.mubr.bf16.gmra.mrb[0].mxu0 %v718
      %v2811 = vpop.f32.mrb[0].mxu0
      %v2812 = vadd.f32 %v455, %v2811
      %v2813 = vpop.f32.mrb[0].mxu0
      %v2814 = vadd.f32 %v459, %v2813
      %v2815 = vpop.f32.mrb[0].mxu0
      %v2816 = vadd.f32 %v455, %v2815
      %v2817 = vpop.f32.mrb[0].mxu0
      %v2818 = vadd.f32 %v459, %v2817
      %2819 = vmatprep.mubr.bf16.mxu0 %v721
      %2820 = vmatmul.mubr.bf16.gmra.mrb[0].mxu0 %v720
      %v2821 = vpop.f32.mrb[0].mxu0
      %v2822 = vadd.f32 %v455, %v2821
      %v2823 = vpop.f32.mrb[0].mxu0
      %v2824 = vadd.f32 %v459, %v2823
      %v2825 = vpop.f32.mrb[0].mxu0
      %v2826 = vadd.f32 %v455, %v2825
      %v2827 = vpop.f32.mrb[0].mxu0
      %v2828 = vadd.f32 %v459, %v2827
      %2829 = vmatprep.mubr.bf16.mxu0 %v723
      %2830 = vmatmul.mubr.bf16.gmra.mrb[0].mxu0 %v722
      %v2831 = vpop.f32.mrb[0].mxu0
      %v2832 = vadd.f32 %v455, %v2831
      %v2833 = vpop.f32.mrb[0].mxu0
      %v2834 = vadd.f32 %v459, %v2833
      %v2835 = vpop.f32.mrb[0].mxu0
      %v2836 = vadd.f32 %v455, %v2835
      %v2837 = vpop.f32.mrb[0].mxu0
      %v2838 = vadd.f32 %v459, %v2837
      %2839 = vdwg.mxu0
      %v2840 = vmax.f32 %v1463, 0.0
      %v2841 = vmax.f32 %v1465, 0.0
      %v2842 = vmax.f32 %v1816, 0.0
      %v2843 = vmax.f32 %v1818, 0.0
      %v2844 = vmax.f32 %v2169, 0.0
      %v2845 = vmax.f32 %v2171, 0.0
      %v2846 = vmax.f32 %v2522, 0.0
      %v2847 = vmax.f32 %v2524, 0.0
      %v2848 = vmax.f32 %v1467, 0.0
      %v2849 = vmax.f32 %v1469, 0.0
      %v2850 = vmax.f32 %v1820, 0.0
      %v2851 = vmax.f32 %v1822, 0.0
      %v2852 = vmax.f32 %v2173, 0.0
      %v2853 = vmax.f32 %v2175, 0.0
      %v2854 = vmax.f32 %v2526, 0.0
      %v2855 = vmax.f32 %v2528, 0.0
      %v2856 = vmax.f32 %v1473, 0.0
      %v2857 = vmax.f32 %v1475, 0.0
      %v2858 = vmax.f32 %v1826, 0.0
      %v2859 = vmax.f32 %v1828, 0.0
      %v2860 = vmax.f32 %v2179, 0.0
      %v2861 = vmax.f32 %v2181, 0.0
      %v2862 = vmax.f32 %v2532, 0.0
      %v2863 = vmax.f32 %v2534, 0.0
      %v2864 = vmax.f32 %v1477, 0.0
      %v2865 = vmax.f32 %v1479, 0.0
      %v2866 = vmax.f32 %v1830, 0.0
      %v2867 = vmax.f32 %v1832, 0.0
      %v2868 = vmax.f32 %v2183, 0.0
      %v2869 = vmax.f32 %v2185, 0.0
      %v2870 = vmax.f32 %v2536, 0.0
      %v2871 = vmax.f32 %v2538, 0.0
      %v2872 = vmax.f32 %v1483, 0.0
      %v2873 = vmax.f32 %v1485, 0.0
      %v2874 = vmax.f32 %v1836, 0.0
      %v2875 = vmax.f32 %v1838, 0.0
      %v2876 = vmax.f32 %v2189, 0.0
      %v2877 = vmax.f32 %v2191, 0.0
      %v2878 = vmax.f32 %v2542, 0.0
      %v2879 = vmax.f32 %v2544, 0.0
      %v2880 = vmax.f32 %v1487, 0.0
      %v2881 = vmax.f32 %v1489, 0.0
      %v2882 = vmax.f32 %v1840, 0.0
      %v2883 = vmax.f32 %v1842, 0.0
      %v2884 = vmax.f32 %v2193, 0.0
      %v2885 = vmax.f32 %v2195, 0.0
      %v2886 = vmax.f32 %v2546, 0.0
      %v2887 = vmax.f32 %v2548, 0.0
      %v2888 = vmax.f32 %v1493, 0.0
      %v2889 = vmax.f32 %v1495, 0.0
      %v2890 = vmax.f32 %v1846, 0.0
      %v2891 = vmax.f32 %v1848, 0.0
      %v2892 = vmax.f32 %v2199, 0.0
      %v2893 = vmax.f32 %v2201, 0.0
      %v2894 = vmax.f32 %v2552, 0.0
      %v2895 = vmax.f32 %v2554, 0.0
      %v2896 = vmax.f32 %v1497, 0.0
      %v2897 = vmax.f32 %v1499, 0.0
      %v2898 = vmax.f32 %v1850, 0.0
      %v2899 = vmax.f32 %v1852, 0.0
      %v2900 = vmax.f32 %v2203, 0.0
      %v2901 = vmax.f32 %v2205, 0.0
      %v2902 = vmax.f32 %v2556, 0.0
      %v2903 = vmax.f32 %v2558, 0.0
      %v2904 = vmax.f32 %v1503, 0.0
      %v2905 = vmax.f32 %v1505, 0.0
      %v2906 = vmax.f32 %v1856, 0.0
      %v2907 = vmax.f32 %v1858, 0.0
      %v2908 = vmax.f32 %v2209, 0.0
      %v2909 = vmax.f32 %v2211, 0.0
      %v2910 = vmax.f32 %v2562, 0.0
      %v2911 = vmax.f32 %v2564, 0.0
      %v2912 = vmax.f32 %v1507, 0.0
      %v2913 = vmax.f32 %v1509, 0.0
      %v2914 = vmax.f32 %v1860, 0.0
      %v2915 = vmax.f32 %v1862, 0.0
      %v2916 = vmax.f32 %v2213, 0.0
      %v2917 = vmax.f32 %v2215, 0.0
      %v2918 = vmax.f32 %v2566, 0.0
      %v2919 = vmax.f32 %v2568, 0.0
      %v2920 = vmax.f32 %v1513, 0.0
      %v2921 = vmax.f32 %v1515, 0.0
      %v2922 = vmax.f32 %v1866, 0.0
      %v2923 = vmax.f32 %v1868, 0.0
      %v2924 = vmax.f32 %v2219, 0.0
      %v2925 = vmax.f32 %v2221, 0.0
      %v2926 = vmax.f32 %v2572, 0.0
      %v2927 = vmax.f32 %v2574, 0.0
      %v2928 = vmax.f32 %v1517, 0.0
      %v2929 = vmax.f32 %v1519, 0.0
      %v2930 = vmax.f32 %v1870, 0.0
      %v2931 = vmax.f32 %v1872, 0.0
      %v2932 = vmax.f32 %v2223, 0.0
      %v2933 = vmax.f32 %v2225, 0.0
      %v2934 = vmax.f32 %v2576, 0.0
      %v2935 = vmax.f32 %v2578, 0.0
      %v2936 = vmax.f32 %v1523, 0.0
      %v2937 = vmax.f32 %v1525, 0.0
      %v2938 = vmax.f32 %v1876, 0.0
      %v2939 = vmax.f32 %v1878, 0.0
      %v2940 = vmax.f32 %v2229, 0.0
      %v2941 = vmax.f32 %v2231, 0.0
      %v2942 = vmax.f32 %v2582, 0.0
      %v2943 = vmax.f32 %v2584, 0.0
      %v2944 = vmax.f32 %v1527, 0.0
      %v2945 = vmax.f32 %v1529, 0.0
      %v2946 = vmax.f32 %v1880, 0.0
      %v2947 = vmax.f32 %v1882, 0.0
      %v2948 = vmax.f32 %v2233, 0.0
      %v2949 = vmax.f32 %v2235, 0.0
      %v2950 = vmax.f32 %v2586, 0.0
      %v2951 = vmax.f32 %v2588, 0.0
      %v2952 = vmax.f32 %v1533, 0.0
      %v2953 = vmax.f32 %v1535, 0.0
      %v2954 = vmax.f32 %v1886, 0.0
      %v2955 = vmax.f32 %v1888, 0.0
      %v2956 = vmax.f32 %v2239, 0.0
      %v2957 = vmax.f32 %v2241, 0.0
      %v2958 = vmax.f32 %v2592, 0.0
      %v2959 = vmax.f32 %v2594, 0.0
      %v2960 = vmax.f32 %v1537, 0.0
      %v2961 = vmax.f32 %v1539, 0.0
      %v2962 = vmax.f32 %v1890, 0.0
      %v2963 = vmax.f32 %v1892, 0.0
      %v2964 = vmax.f32 %v2243, 0.0
      %v2965 = vmax.f32 %v2245, 0.0
      %v2966 = vmax.f32 %v2596, 0.0
      %v2967 = vmax.f32 %v2598, 0.0
      %v2968 = vmax.f32 %v1543, 0.0
      %v2969 = vmax.f32 %v1545, 0.0
      %v2970 = vmax.f32 %v1896, 0.0
      %v2971 = vmax.f32 %v1898, 0.0
      %v2972 = vmax.f32 %v2249, 0.0
      %v2973 = vmax.f32 %v2251, 0.0
      %v2974 = vmax.f32 %v2602, 0.0
      %v2975 = vmax.f32 %v2604, 0.0
      %v2976 = vmax.f32 %v1547, 0.0
      %v2977 = vmax.f32 %v1549, 0.0
      %v2978 = vmax.f32 %v1900, 0.0
      %v2979 = vmax.f32 %v1902, 0.0
      %v2980 = vmax.f32 %v2253, 0.0
      %v2981 = vmax.f32 %v2255, 0.0
      %v2982 = vmax.f32 %v2606, 0.0
      %v2983 = vmax.f32 %v2608, 0.0
      %v2984 = vmax.f32 %v1553, 0.0
      %v2985 = vmax.f32 %v1555, 0.0
      %v2986 = vmax.f32 %v1906, 0.0
      %v2987 = vmax.f32 %v1908, 0.0
      %v2988 = vmax.f32 %v2259, 0.0
      %v2989 = vmax.f32 %v2261, 0.0
      %v2990 = vmax.f32 %v2612, 0.0
      %v2991 = vmax.f32 %v2614, 0.0
      %v2992 = vmax.f32 %v1557, 0.0
      %v2993 = vmax.f32 %v1559, 0.0
      %v2994 = vmax.f32 %v1910, 0.0
      %v2995 = vmax.f32 %v1912, 0.0
      %v2996 = vmax.f32 %v2263, 0.0
      %v2997 = vmax.f32 %v2265, 0.0
      %v2998 = vmax.f32 %v2616, 0.0
      %v2999 = vmax.f32 %v2618, 0.0
      %v3000 = vmax.f32 %v1563, 0.0
      %v3001 = vmax.f32 %v1565, 0.0
      %v3002 = vmax.f32 %v1916, 0.0
      %v3003 = vmax.f32 %v1918, 0.0
      %v3004 = vmax.f32 %v2269, 0.0
      %v3005 = vmax.f32 %v2271, 0.0
      %v3006 = vmax.f32 %v2622, 0.0
      %v3007 = vmax.f32 %v2624, 0.0
      %v3008 = vmax.f32 %v1567, 0.0
      %v3009 = vmax.f32 %v1569, 0.0
      %v3010 = vmax.f32 %v1920, 0.0
      %v3011 = vmax.f32 %v1922, 0.0
      %v3012 = vmax.f32 %v2273, 0.0
      %v3013 = vmax.f32 %v2275, 0.0
      %v3014 = vmax.f32 %v2626, 0.0
      %v3015 = vmax.f32 %v2628, 0.0
      %v3016 = vmax.f32 %v1573, 0.0
      %v3017 = vmax.f32 %v1575, 0.0
      %v3018 = vmax.f32 %v1926, 0.0
      %v3019 = vmax.f32 %v1928, 0.0
      %v3020 = vmax.f32 %v2279, 0.0
      %v3021 = vmax.f32 %v2281, 0.0
      %v3022 = vmax.f32 %v2632, 0.0
      %v3023 = vmax.f32 %v2634, 0.0
      %v3024 = vmax.f32 %v1577, 0.0
      %v3025 = vmax.f32 %v1579, 0.0
      %v3026 = vmax.f32 %v1930, 0.0
      %v3027 = vmax.f32 %v1932, 0.0
      %v3028 = vmax.f32 %v2283, 0.0
      %v3029 = vmax.f32 %v2285, 0.0
      %v3030 = vmax.f32 %v2636, 0.0
      %v3031 = vmax.f32 %v2638, 0.0
      %v3032 = vmax.f32 %v1583, 0.0
      %v3033 = vmax.f32 %v1585, 0.0
      %v3034 = vmax.f32 %v1936, 0.0
      %v3035 = vmax.f32 %v1938, 0.0
      %v3036 = vmax.f32 %v2289, 0.0
      %v3037 = vmax.f32 %v2291, 0.0
      %v3038 = vmax.f32 %v2642, 0.0
      %v3039 = vmax.f32 %v2644, 0.0
      %v3040 = vmax.f32 %v1587, 0.0
      %v3041 = vmax.f32 %v1589, 0.0
      %v3042 = vmax.f32 %v1940, 0.0
      %v3043 = vmax.f32 %v1942, 0.0
      %v3044 = vmax.f32 %v2293, 0.0
      %v3045 = vmax.f32 %v2295, 0.0
      %v3046 = vmax.f32 %v2646, 0.0
      %v3047 = vmax.f32 %v2648, 0.0
      %v3048 = vmax.f32 %v1593, 0.0
      %v3049 = vmax.f32 %v1595, 0.0
      %v3050 = vmax.f32 %v1946, 0.0
      %v3051 = vmax.f32 %v1948, 0.0
      %v3052 = vmax.f32 %v2299, 0.0
      %v3053 = vmax.f32 %v2301, 0.0
      %v3054 = vmax.f32 %v2652, 0.0
      %v3055 = vmax.f32 %v2654, 0.0
      %v3056 = vmax.f32 %v1597, 0.0
      %v3057 = vmax.f32 %v1599, 0.0
      %v3058 = vmax.f32 %v1950, 0.0
      %v3059 = vmax.f32 %v1952, 0.0
      %v3060 = vmax.f32 %v2303, 0.0
      %v3061 = vmax.f32 %v2305, 0.0
      %v3062 = vmax.f32 %v2656, 0.0
      %v3063 = vmax.f32 %v2658, 0.0
      %v3064 = vmax.f32 %v1603, 0.0
      %v3065 = vmax.f32 %v1605, 0.0
      %v3066 = vmax.f32 %v1956, 0.0
      %v3067 = vmax.f32 %v1958, 0.0
      %v3068 = vmax.f32 %v2309, 0.0
      %v3069 = vmax.f32 %v2311, 0.0
      %v3070 = vmax.f32 %v2662, 0.0
      %v3071 = vmax.f32 %v2664, 0.0
      %v3072 = vmax.f32 %v1607, 0.0
      %v3073 = vmax.f32 %v1609, 0.0
      %v3074 = vmax.f32 %v1960, 0.0
      %v3075 = vmax.f32 %v1962, 0.0
      %v3076 = vmax.f32 %v2313, 0.0
      %v3077 = vmax.f32 %v2315, 0.0
      %v3078 = vmax.f32 %v2666, 0.0
      %v3079 = vmax.f32 %v2668, 0.0
      %v3080 = vmax.f32 %v1613, 0.0
      %v3081 = vmax.f32 %v1615, 0.0
      %v3082 = vmax.f32 %v1966, 0.0
      %v3083 = vmax.f32 %v1968, 0.0
      %v3084 = vmax.f32 %v2319, 0.0
      %v3085 = vmax.f32 %v2321, 0.0
      %v3086 = vmax.f32 %v2672, 0.0
      %v3087 = vmax.f32 %v2674, 0.0
      %v3088 = vmax.f32 %v1617, 0.0
      %v3089 = vmax.f32 %v1619, 0.0
      %v3090 = vmax.f32 %v1970, 0.0
      %v3091 = vmax.f32 %v1972, 0.0
      %v3092 = vmax.f32 %v2323, 0.0
      %v3093 = vmax.f32 %v2325, 0.0
      %v3094 = vmax.f32 %v2676, 0.0
      %v3095 = vmax.f32 %v2678, 0.0
      %v3096 = vmax.f32 %v1623, 0.0
      %v3097 = vmax.f32 %v1625, 0.0
      %v3098 = vmax.f32 %v1976, 0.0
      %v3099 = vmax.f32 %v1978, 0.0
      %v3100 = vmax.f32 %v2329, 0.0
      %v3101 = vmax.f32 %v2331, 0.0
      %v3102 = vmax.f32 %v2682, 0.0
      %v3103 = vmax.f32 %v2684, 0.0
      %v3104 = vmax.f32 %v1627, 0.0
      %v3105 = vmax.f32 %v1629, 0.0
      %v3106 = vmax.f32 %v1980, 0.0
      %v3107 = vmax.f32 %v1982, 0.0
      %v3108 = vmax.f32 %v2333, 0.0
      %v3109 = vmax.f32 %v2335, 0.0
      %v3110 = vmax.f32 %v2686, 0.0
      %v3111 = vmax.f32 %v2688, 0.0
      %v3112 = vmax.f32 %v1633, 0.0
      %v3113 = vmax.f32 %v1635, 0.0
      %v3114 = vmax.f32 %v1986, 0.0
      %v3115 = vmax.f32 %v1988, 0.0
      %v3116 = vmax.f32 %v2339, 0.0
      %v3117 = vmax.f32 %v2341, 0.0
      %v3118 = vmax.f32 %v2692, 0.0
      %v3119 = vmax.f32 %v2694, 0.0
      %v3120 = vmax.f32 %v1637, 0.0
      %v3121 = vmax.f32 %v1639, 0.0
      %v3122 = vmax.f32 %v1990, 0.0
      %v3123 = vmax.f32 %v1992, 0.0
      %v3124 = vmax.f32 %v2343, 0.0
      %v3125 = vmax.f32 %v2345, 0.0
      %v3126 = vmax.f32 %v2696, 0.0
      %v3127 = vmax.f32 %v2698, 0.0
      %v3128 = vmax.f32 %v1643, 0.0
      %v3129 = vmax.f32 %v1645, 0.0
      %v3130 = vmax.f32 %v1996, 0.0
      %v3131 = vmax.f32 %v1998, 0.0
      %v3132 = vmax.f32 %v2349, 0.0
      %v3133 = vmax.f32 %v2351, 0.0
      %v3134 = vmax.f32 %v2702, 0.0
      %v3135 = vmax.f32 %v2704, 0.0
      %v3136 = vmax.f32 %v1647, 0.0
      %v3137 = vmax.f32 %v1649, 0.0
      %v3138 = vmax.f32 %v2000, 0.0
      %v3139 = vmax.f32 %v2002, 0.0
      %v3140 = vmax.f32 %v2353, 0.0
      %v3141 = vmax.f32 %v2355, 0.0
      %v3142 = vmax.f32 %v2706, 0.0
      %v3143 = vmax.f32 %v2708, 0.0
      %v3144 = vmax.f32 %v1653, 0.0
      %v3145 = vmax.f32 %v1655, 0.0
      %v3146 = vmax.f32 %v2006, 0.0
      %v3147 = vmax.f32 %v2008, 0.0
      %v3148 = vmax.f32 %v2359, 0.0
      %v3149 = vmax.f32 %v2361, 0.0
      %v3150 = vmax.f32 %v2712, 0.0
      %v3151 = vmax.f32 %v2714, 0.0
      %v3152 = vmax.f32 %v1657, 0.0
      %v3153 = vmax.f32 %v1659, 0.0
      %v3154 = vmax.f32 %v2010, 0.0
      %v3155 = vmax.f32 %v2012, 0.0
      %v3156 = vmax.f32 %v2363, 0.0
      %v3157 = vmax.f32 %v2365, 0.0
      %v3158 = vmax.f32 %v2716, 0.0
      %v3159 = vmax.f32 %v2718, 0.0
      %v3160 = vmax.f32 %v1663, 0.0
      %v3161 = vmax.f32 %v1665, 0.0
      %v3162 = vmax.f32 %v2016, 0.0
      %v3163 = vmax.f32 %v2018, 0.0
      %v3164 = vmax.f32 %v2369, 0.0
      %v3165 = vmax.f32 %v2371, 0.0
      %v3166 = vmax.f32 %v2722, 0.0
      %v3167 = vmax.f32 %v2724, 0.0
      %v3168 = vmax.f32 %v1667, 0.0
      %v3169 = vmax.f32 %v1669, 0.0
      %v3170 = vmax.f32 %v2020, 0.0
      %v3171 = vmax.f32 %v2022, 0.0
      %v3172 = vmax.f32 %v2373, 0.0
      %v3173 = vmax.f32 %v2375, 0.0
      %v3174 = vmax.f32 %v2726, 0.0
      %v3175 = vmax.f32 %v2728, 0.0
      %v3176 = vmax.f32 %v1673, 0.0
      %v3177 = vmax.f32 %v1675, 0.0
      %v3178 = vmax.f32 %v2026, 0.0
      %v3179 = vmax.f32 %v2028, 0.0
      %v3180 = vmax.f32 %v2379, 0.0
      %v3181 = vmax.f32 %v2381, 0.0
      %v3182 = vmax.f32 %v2732, 0.0
      %v3183 = vmax.f32 %v2734, 0.0
      %v3184 = vmax.f32 %v1677, 0.0
      %v3185 = vmax.f32 %v1679, 0.0
      %v3186 = vmax.f32 %v2030, 0.0
      %v3187 = vmax.f32 %v2032, 0.0
      %v3188 = vmax.f32 %v2383, 0.0
      %v3189 = vmax.f32 %v2385, 0.0
      %v3190 = vmax.f32 %v2736, 0.0
      %v3191 = vmax.f32 %v2738, 0.0
      %v3192 = vmax.f32 %v1683, 0.0
      %v3193 = vmax.f32 %v1685, 0.0
      %v3194 = vmax.f32 %v2036, 0.0
      %v3195 = vmax.f32 %v2038, 0.0
      %v3196 = vmax.f32 %v2389, 0.0
      %v3197 = vmax.f32 %v2391, 0.0
      %v3198 = vmax.f32 %v2742, 0.0
      %v3199 = vmax.f32 %v2744, 0.0
      %v3200 = vmax.f32 %v1687, 0.0
      %v3201 = vmax.f32 %v1689, 0.0
      %v3202 = vmax.f32 %v2040, 0.0
      %v3203 = vmax.f32 %v2042, 0.0
      %v3204 = vmax.f32 %v2393, 0.0
      %v3205 = vmax.f32 %v2395, 0.0
      %v3206 = vmax.f32 %v2746, 0.0
      %v3207 = vmax.f32 %v2748, 0.0
      %v3208 = vmax.f32 %v1693, 0.0
      %v3209 = vmax.f32 %v1695, 0.0
      %v3210 = vmax.f32 %v2046, 0.0
      %v3211 = vmax.f32 %v2048, 0.0
      %v3212 = vmax.f32 %v2399, 0.0
      %v3213 = vmax.f32 %v2401, 0.0
      %v3214 = vmax.f32 %v2752, 0.0
      %v3215 = vmax.f32 %v2754, 0.0
      %v3216 = vmax.f32 %v1697, 0.0
      %v3217 = vmax.f32 %v1699, 0.0
      %v3218 = vmax.f32 %v2050, 0.0
      %v3219 = vmax.f32 %v2052, 0.0
      %v3220 = vmax.f32 %v2403, 0.0
      %v3221 = vmax.f32 %v2405, 0.0
      %v3222 = vmax.f32 %v2756, 0.0
      %v3223 = vmax.f32 %v2758, 0.0
      %v3224 = vmax.f32 %v1703, 0.0
      %v3225 = vmax.f32 %v1705, 0.0
      %v3226 = vmax.f32 %v2056, 0.0
      %v3227 = vmax.f32 %v2058, 0.0
      %v3228 = vmax.f32 %v2409, 0.0
      %v3229 = vmax.f32 %v2411, 0.0
      %v3230 = vmax.f32 %v2762, 0.0
      %v3231 = vmax.f32 %v2764, 0.0
      %v3232 = vmax.f32 %v1707, 0.0
      %v3233 = vmax.f32 %v1709, 0.0
      %v3234 = vmax.f32 %v2060, 0.0
      %v3235 = vmax.f32 %v2062, 0.0
      %v3236 = vmax.f32 %v2413, 0.0
      %v3237 = vmax.f32 %v2415, 0.0
      %v3238 = vmax.f32 %v2766, 0.0
      %v3239 = vmax.f32 %v2768, 0.0
      %v3240 = vmax.f32 %v1713, 0.0
      %v3241 = vmax.f32 %v1715, 0.0
      %v3242 = vmax.f32 %v2066, 0.0
      %v3243 = vmax.f32 %v2068, 0.0
      %v3244 = vmax.f32 %v2419, 0.0
      %v3245 = vmax.f32 %v2421, 0.0
      %v3246 = vmax.f32 %v2772, 0.0
      %v3247 = vmax.f32 %v2774, 0.0
      %v3248 = vmax.f32 %v1717, 0.0
      %v3249 = vmax.f32 %v1719, 0.0
      %v3250 = vmax.f32 %v2070, 0.0
      %v3251 = vmax.f32 %v2072, 0.0
      %v3252 = vmax.f32 %v2423, 0.0
      %v3253 = vmax.f32 %v2425, 0.0
      %v3254 = vmax.f32 %v2776, 0.0
      %v3255 = vmax.f32 %v2778, 0.0
      %v3256 = vmax.f32 %v1723, 0.0
      %v3257 = vmax.f32 %v1725, 0.0
      %v3258 = vmax.f32 %v2076, 0.0
      %v3259 = vmax.f32 %v2078, 0.0
      %v3260 = vmax.f32 %v2429, 0.0
      %v3261 = vmax.f32 %v2431, 0.0
      %v3262 = vmax.f32 %v2782, 0.0
      %v3263 = vmax.f32 %v2784, 0.0
      %v3264 = vmax.f32 %v1727, 0.0
      %v3265 = vmax.f32 %v1729, 0.0
      %v3266 = vmax.f32 %v2080, 0.0
      %v3267 = vmax.f32 %v2082, 0.0
      %v3268 = vmax.f32 %v2433, 0.0
      %v3269 = vmax.f32 %v2435, 0.0
      %v3270 = vmax.f32 %v2786, 0.0
      %v3271 = vmax.f32 %v2788, 0.0
      %v3272 = vmax.f32 %v1733, 0.0
      %v3273 = vmax.f32 %v1735, 0.0
      %v3274 = vmax.f32 %v2086, 0.0
      %v3275 = vmax.f32 %v2088, 0.0
      %v3276 = vmax.f32 %v2439, 0.0
      %v3277 = vmax.f32 %v2441, 0.0
      %v3278 = vmax.f32 %v2792, 0.0
      %v3279 = vmax.f32 %v2794, 0.0
      %v3280 = vmax.f32 %v1737, 0.0
      %v3281 = vmax.f32 %v1739, 0.0
      %v3282 = vmax.f32 %v2090, 0.0
      %v3283 = vmax.f32 %v2092, 0.0
      %v3284 = vmax.f32 %v2443, 0.0
      %v3285 = vmax.f32 %v2445, 0.0
      %v3286 = vmax.f32 %v2796, 0.0
      %v3287 = vmax.f32 %v2798, 0.0
      %v3288 = vmax.f32 %v1743, 0.0
      %v3289 = vmax.f32 %v1745, 0.0
      %v3290 = vmax.f32 %v2096, 0.0
      %v3291 = vmax.f32 %v2098, 0.0
      %v3292 = vmax.f32 %v2449, 0.0
      %v3293 = vmax.f32 %v2451, 0.0
      %v3294 = vmax.f32 %v2802, 0.0
      %v3295 = vmax.f32 %v2804, 0.0
      %v3296 = vmax.f32 %v1747, 0.0
      %v3297 = vmax.f32 %v1749, 0.0
      %v3298 = vmax.f32 %v2100, 0.0
      %v3299 = vmax.f32 %v2102, 0.0
      %v3300 = vmax.f32 %v2453, 0.0
      %v3301 = vmax.f32 %v2455, 0.0
      %v3302 = vmax.f32 %v2806, 0.0
      %v3303 = vmax.f32 %v2808, 0.0
      %v3304 = vmax.f32 %v1753, 0.0
      %v3305 = vmax.f32 %v1755, 0.0
      %v3306 = vmax.f32 %v2106, 0.0
      %v3307 = vmax.f32 %v2108, 0.0
      %v3308 = vmax.f32 %v2459, 0.0
      %v3309 = vmax.f32 %v2461, 0.0
      %v3310 = vmax.f32 %v2812, 0.0
      %v3311 = vmax.f32 %v2814, 0.0
      %v3312 = vmax.f32 %v1757, 0.0
      %v3313 = vmax.f32 %v1759, 0.0
      %v3314 = vmax.f32 %v2110, 0.0
      %v3315 = vmax.f32 %v2112, 0.0
      %v3316 = vmax.f32 %v2463, 0.0
      %v3317 = vmax.f32 %v2465, 0.0
      %v3318 = vmax.f32 %v2816, 0.0
      %v3319 = vmax.f32 %v2818, 0.0
      %v3320 = vmax.f32 %v1763, 0.0
      %v3321 = vmax.f32 %v1765, 0.0
      %v3322 = vmax.f32 %v2116, 0.0
      %v3323 = vmax.f32 %v2118, 0.0
      %v3324 = vmax.f32 %v2469, 0.0
      %v3325 = vmax.f32 %v2471, 0.0
      %v3326 = vmax.f32 %v2822, 0.0
      %v3327 = vmax.f32 %v2824, 0.0
      %v3328 = vmax.f32 %v1767, 0.0
      %v3329 = vmax.f32 %v1769, 0.0
      %v3330 = vmax.f32 %v2120, 0.0
      %v3331 = vmax.f32 %v2122, 0.0
      %v3332 = vmax.f32 %v2473, 0.0
      %v3333 = vmax.f32 %v2475, 0.0
      %v3334 = vmax.f32 %v2826, 0.0
      %v3335 = vmax.f32 %v2828, 0.0
      %v3336 = vmax.f32 %v1773, 0.0
      %v3337 = vmax.f32 %v1775, 0.0
      %v3338 = vmax.f32 %v2126, 0.0
      %v3339 = vmax.f32 %v2128, 0.0
      %v3340 = vmax.f32 %v2479, 0.0
      %v3341 = vmax.f32 %v2481, 0.0
      %v3342 = vmax.f32 %v2832, 0.0
      %v3343 = vmax.f32 %v2834, 0.0
      %v3344 = vmax.f32 %v1777, 0.0
      %v3345 = vmax.f32 %v1779, 0.0
      %v3346 = vmax.f32 %v2130, 0.0
      %v3347 = vmax.f32 %v2132, 0.0
      %v3348 = vmax.f32 %v2483, 0.0
      %v3349 = vmax.f32 %v2485, 0.0
      %v3350 = vmax.f32 %v2836, 0.0
      %v3351 = vmax.f32 %v2838, 0.0
      %v3352 = vpack.c.bf16 %v2848, %v2840
      %v3353 = vpack.c.bf16 %v2849, %v2841
      %v3354 = vpack.c.bf16 %v2850, %v2842
      %v3355 = vpack.c.bf16 %v2851, %v2843
      %v3356 = vpack.c.bf16 %v2852, %v2844
      %v3357 = vpack.c.bf16 %v2853, %v2845
      %v3358 = vpack.c.bf16 %v2854, %v2846
      %v3359 = vpack.c.bf16 %v2855, %v2847
      %v3360 = vpack.c.bf16 %v2864, %v2856
      %v3361 = vpack.c.bf16 %v2865, %v2857
      %v3362 = vpack.c.bf16 %v2866, %v2858
      %v3363 = vpack.c.bf16 %v2867, %v2859
      %v3364 = vpack.c.bf16 %v2868, %v2860
      %v3365 = vpack.c.bf16 %v2869, %v2861
      %v3366 = vpack.c.bf16 %v2870, %v2862
      %v3367 = vpack.c.bf16 %v2871, %v2863
      %v3368 = vpack.c.bf16 %v2880, %v2872
      %v3369 = vpack.c.bf16 %v2881, %v2873
      %v3370 = vpack.c.bf16 %v2882, %v2874
      %v3371 = vpack.c.bf16 %v2883, %v2875
      %v3372 = vpack.c.bf16 %v2884, %v2876
      %v3373 = vpack.c.bf16 %v2885, %v2877
      %v3374 = vpack.c.bf16 %v2886, %v2878
      %v3375 = vpack.c.bf16 %v2887, %v2879
      %v3376 = vpack.c.bf16 %v2896, %v2888
      %v3377 = vpack.c.bf16 %v2897, %v2889
      %v3378 = vpack.c.bf16 %v2898, %v2890
      %v3379 = vpack.c.bf16 %v2899, %v2891
      %v3380 = vpack.c.bf16 %v2900, %v2892
      %v3381 = vpack.c.bf16 %v2901, %v2893
      %v3382 = vpack.c.bf16 %v2902, %v2894
      %v3383 = vpack.c.bf16 %v2903, %v2895
      %v3384 = vpack.c.bf16 %v2912, %v2904
      %v3385 = vpack.c.bf16 %v2913, %v2905
      %v3386 = vpack.c.bf16 %v2914, %v2906
      %v3387 = vpack.c.bf16 %v2915, %v2907
      %v3388 = vpack.c.bf16 %v2916, %v2908
      %v3389 = vpack.c.bf16 %v2917, %v2909
      %v3390 = vpack.c.bf16 %v2918, %v2910
      %v3391 = vpack.c.bf16 %v2919, %v2911
      %v3392 = vpack.c.bf16 %v2928, %v2920
      %v3393 = vpack.c.bf16 %v2929, %v2921
      %v3394 = vpack.c.bf16 %v2930, %v2922
      %v3395 = vpack.c.bf16 %v2931, %v2923
      %v3396 = vpack.c.bf16 %v2932, %v2924
      %v3397 = vpack.c.bf16 %v2933, %v2925
      %v3398 = vpack.c.bf16 %v2934, %v2926
      %v3399 = vpack.c.bf16 %v2935, %v2927
      %v3400 = vpack.c.bf16 %v2944, %v2936
      %v3401 = vpack.c.bf16 %v2945, %v2937
      %v3402 = vpack.c.bf16 %v2946, %v2938
      %v3403 = vpack.c.bf16 %v2947, %v2939
      %v3404 = vpack.c.bf16 %v2948, %v2940
      %v3405 = vpack.c.bf16 %v2949, %v2941
      %v3406 = vpack.c.bf16 %v2950, %v2942
      %v3407 = vpack.c.bf16 %v2951, %v2943
      %v3408 = vpack.c.bf16 %v2960, %v2952
      %v3409 = vpack.c.bf16 %v2961, %v2953
      %v3410 = vpack.c.bf16 %v2962, %v2954
      %v3411 = vpack.c.bf16 %v2963, %v2955
      %v3412 = vpack.c.bf16 %v2964, %v2956
      %v3413 = vpack.c.bf16 %v2965, %v2957
      %v3414 = vpack.c.bf16 %v2966, %v2958
      %v3415 = vpack.c.bf16 %v2967, %v2959
      %v3416 = vpack.c.bf16 %v2976, %v2968
      %v3417 = vpack.c.bf16 %v2977, %v2969
      %v3418 = vpack.c.bf16 %v2978, %v2970
      %v3419 = vpack.c.bf16 %v2979, %v2971
      %v3420 = vpack.c.bf16 %v2980, %v2972
      %v3421 = vpack.c.bf16 %v2981, %v2973
      %v3422 = vpack.c.bf16 %v2982, %v2974
      %v3423 = vpack.c.bf16 %v2983, %v2975
      %v3424 = vpack.c.bf16 %v2992, %v2984
      %v3425 = vpack.c.bf16 %v2993, %v2985
      %v3426 = vpack.c.bf16 %v2994, %v2986
      %v3427 = vpack.c.bf16 %v2995, %v2987
      %v3428 = vpack.c.bf16 %v2996, %v2988
      %v3429 = vpack.c.bf16 %v2997, %v2989
      %v3430 = vpack.c.bf16 %v2998, %v2990
      %v3431 = vpack.c.bf16 %v2999, %v2991
      %v3432 = vpack.c.bf16 %v3008, %v3000
      %v3433 = vpack.c.bf16 %v3009, %v3001
      %v3434 = vpack.c.bf16 %v3010, %v3002
      %v3435 = vpack.c.bf16 %v3011, %v3003
      %v3436 = vpack.c.bf16 %v3012, %v3004
      %v3437 = vpack.c.bf16 %v3013, %v3005
      %v3438 = vpack.c.bf16 %v3014, %v3006
      %v3439 = vpack.c.bf16 %v3015, %v3007
      %v3440 = vpack.c.bf16 %v3024, %v3016
      %v3441 = vpack.c.bf16 %v3025, %v3017
      %v3442 = vpack.c.bf16 %v3026, %v3018
      %v3443 = vpack.c.bf16 %v3027, %v3019
      %v3444 = vpack.c.bf16 %v3028, %v3020
      %v3445 = vpack.c.bf16 %v3029, %v3021
      %v3446 = vpack.c.bf16 %v3030, %v3022
      %v3447 = vpack.c.bf16 %v3031, %v3023
      %v3448 = vpack.c.bf16 %v3040, %v3032
      %v3449 = vpack.c.bf16 %v3041, %v3033
      %v3450 = vpack.c.bf16 %v3042, %v3034
      %v3451 = vpack.c.bf16 %v3043, %v3035
      %v3452 = vpack.c.bf16 %v3044, %v3036
      %v3453 = vpack.c.bf16 %v3045, %v3037
      %v3454 = vpack.c.bf16 %v3046, %v3038
      %v3455 = vpack.c.bf16 %v3047, %v3039
      %v3456 = vpack.c.bf16 %v3056, %v3048
      %v3457 = vpack.c.bf16 %v3057, %v3049
      %v3458 = vpack.c.bf16 %v3058, %v3050
      %v3459 = vpack.c.bf16 %v3059, %v3051
      %v3460 = vpack.c.bf16 %v3060, %v3052
      %v3461 = vpack.c.bf16 %v3061, %v3053
      %v3462 = vpack.c.bf16 %v3062, %v3054
      %v3463 = vpack.c.bf16 %v3063, %v3055
      %v3464 = vpack.c.bf16 %v3072, %v3064
      %v3465 = vpack.c.bf16 %v3073, %v3065
      %v3466 = vpack.c.bf16 %v3074, %v3066
      %v3467 = vpack.c.bf16 %v3075, %v3067
      %v3468 = vpack.c.bf16 %v3076, %v3068
      %v3469 = vpack.c.bf16 %v3077, %v3069
      %v3470 = vpack.c.bf16 %v3078, %v3070
      %v3471 = vpack.c.bf16 %v3079, %v3071
      %v3472 = vpack.c.bf16 %v3088, %v3080
      %v3473 = vpack.c.bf16 %v3089, %v3081
      %v3474 = vpack.c.bf16 %v3090, %v3082
      %v3475 = vpack.c.bf16 %v3091, %v3083
      %v3476 = vpack.c.bf16 %v3092, %v3084
      %v3477 = vpack.c.bf16 %v3093, %v3085
      %v3478 = vpack.c.bf16 %v3094, %v3086
      %v3479 = vpack.c.bf16 %v3095, %v3087
      %v3480 = vpack.c.bf16 %v3104, %v3096
      %v3481 = vpack.c.bf16 %v3105, %v3097
      %v3482 = vpack.c.bf16 %v3106, %v3098
      %v3483 = vpack.c.bf16 %v3107, %v3099
      %v3484 = vpack.c.bf16 %v3108, %v3100
      %v3485 = vpack.c.bf16 %v3109, %v3101
      %v3486 = vpack.c.bf16 %v3110, %v3102
      %v3487 = vpack.c.bf16 %v3111, %v3103
      %v3488 = vpack.c.bf16 %v3120, %v3112
      %v3489 = vpack.c.bf16 %v3121, %v3113
      %v3490 = vpack.c.bf16 %v3122, %v3114
      %v3491 = vpack.c.bf16 %v3123, %v3115
      %v3492 = vpack.c.bf16 %v3124, %v3116
      %v3493 = vpack.c.bf16 %v3125, %v3117
      %v3494 = vpack.c.bf16 %v3126, %v3118
      %v3495 = vpack.c.bf16 %v3127, %v3119
      %v3496 = vpack.c.bf16 %v3136, %v3128
      %v3497 = vpack.c.bf16 %v3137, %v3129
      %v3498 = vpack.c.bf16 %v3138, %v3130
      %v3499 = vpack.c.bf16 %v3139, %v3131
      %v3500 = vpack.c.bf16 %v3140, %v3132
      %v3501 = vpack.c.bf16 %v3141, %v3133
      %v3502 = vpack.c.bf16 %v3142, %v3134
      %v3503 = vpack.c.bf16 %v3143, %v3135
      %v3504 = vpack.c.bf16 %v3152, %v3144
      %v3505 = vpack.c.bf16 %v3153, %v3145
      %v3506 = vpack.c.bf16 %v3154, %v3146
      %v3507 = vpack.c.bf16 %v3155, %v3147
      %v3508 = vpack.c.bf16 %v3156, %v3148
      %v3509 = vpack.c.bf16 %v3157, %v3149
      %v3510 = vpack.c.bf16 %v3158, %v3150
      %v3511 = vpack.c.bf16 %v3159, %v3151
      %v3512 = vpack.c.bf16 %v3168, %v3160
      %v3513 = vpack.c.bf16 %v3169, %v3161
      %v3514 = vpack.c.bf16 %v3170, %v3162
      %v3515 = vpack.c.bf16 %v3171, %v3163
      %v3516 = vpack.c.bf16 %v3172, %v3164
      %v3517 = vpack.c.bf16 %v3173, %v3165
      %v3518 = vpack.c.bf16 %v3174, %v3166
      %v3519 = vpack.c.bf16 %v3175, %v3167
      %v3520 = vpack.c.bf16 %v3184, %v3176
      %v3521 = vpack.c.bf16 %v3185, %v3177
      %v3522 = vpack.c.bf16 %v3186, %v3178
      %v3523 = vpack.c.bf16 %v3187, %v3179
      %v3524 = vpack.c.bf16 %v3188, %v3180
      %v3525 = vpack.c.bf16 %v3189, %v3181
      %v3526 = vpack.c.bf16 %v3190, %v3182
      %v3527 = vpack.c.bf16 %v3191, %v3183
      %v3528 = vpack.c.bf16 %v3200, %v3192
      %v3529 = vpack.c.bf16 %v3201, %v3193
      %v3530 = vpack.c.bf16 %v3202, %v3194
      %v3531 = vpack.c.bf16 %v3203, %v3195
      %v3532 = vpack.c.bf16 %v3204, %v3196
      %v3533 = vpack.c.bf16 %v3205, %v3197
      %v3534 = vpack.c.bf16 %v3206, %v3198
      %v3535 = vpack.c.bf16 %v3207, %v3199
      %v3536 = vpack.c.bf16 %v3216, %v3208
      %v3537 = vpack.c.bf16 %v3217, %v3209
      %v3538 = vpack.c.bf16 %v3218, %v3210
      %v3539 = vpack.c.bf16 %v3219, %v3211
      %v3540 = vpack.c.bf16 %v3220, %v3212
      %v3541 = vpack.c.bf16 %v3221, %v3213
      %v3542 = vpack.c.bf16 %v3222, %v3214
      %v3543 = vpack.c.bf16 %v3223, %v3215
      %v3544 = vpack.c.bf16 %v3232, %v3224
      %v3545 = vpack.c.bf16 %v3233, %v3225
      %v3546 = vpack.c.bf16 %v3234, %v3226
      %v3547 = vpack.c.bf16 %v3235, %v3227
      %v3548 = vpack.c.bf16 %v3236, %v3228
      %v3549 = vpack.c.bf16 %v3237, %v3229
      %v3550 = vpack.c.bf16 %v3238, %v3230
      %v3551 = vpack.c.bf16 %v3239, %v3231
      %v3552 = vpack.c.bf16 %v3248, %v3240
      %v3553 = vpack.c.bf16 %v3249, %v3241
      %v3554 = vpack.c.bf16 %v3250, %v3242
      %v3555 = vpack.c.bf16 %v3251, %v3243
      %v3556 = vpack.c.bf16 %v3252, %v3244
      %v3557 = vpack.c.bf16 %v3253, %v3245
      %v3558 = vpack.c.bf16 %v3254, %v3246
      %v3559 = vpack.c.bf16 %v3255, %v3247
      %v3560 = vpack.c.bf16 %v3264, %v3256
      %v3561 = vpack.c.bf16 %v3265, %v3257
      %v3562 = vpack.c.bf16 %v3266, %v3258
      %v3563 = vpack.c.bf16 %v3267, %v3259
      %v3564 = vpack.c.bf16 %v3268, %v3260
      %v3565 = vpack.c.bf16 %v3269, %v3261
      %v3566 = vpack.c.bf16 %v3270, %v3262
      %v3567 = vpack.c.bf16 %v3271, %v3263
      %v3568 = vpack.c.bf16 %v3280, %v3272
      %v3569 = vpack.c.bf16 %v3281, %v3273
      %v3570 = vpack.c.bf16 %v3282, %v3274
      %v3571 = vpack.c.bf16 %v3283, %v3275
      %v3572 = vpack.c.bf16 %v3284, %v3276
      %v3573 = vpack.c.bf16 %v3285, %v3277
      %v3574 = vpack.c.bf16 %v3286, %v3278
      %v3575 = vpack.c.bf16 %v3287, %v3279
      %v3576 = vpack.c.bf16 %v3296, %v3288
      %v3577 = vpack.c.bf16 %v3297, %v3289
      %v3578 = vpack.c.bf16 %v3298, %v3290
      %v3579 = vpack.c.bf16 %v3299, %v3291
      %v3580 = vpack.c.bf16 %v3300, %v3292
      %v3581 = vpack.c.bf16 %v3301, %v3293
      %v3582 = vpack.c.bf16 %v3302, %v3294
      %v3583 = vpack.c.bf16 %v3303, %v3295
      %v3584 = vpack.c.bf16 %v3312, %v3304
      %v3585 = vpack.c.bf16 %v3313, %v3305
      %v3586 = vpack.c.bf16 %v3314, %v3306
      %v3587 = vpack.c.bf16 %v3315, %v3307
      %v3588 = vpack.c.bf16 %v3316, %v3308
      %v3589 = vpack.c.bf16 %v3317, %v3309
      %v3590 = vpack.c.bf16 %v3318, %v3310
      %v3591 = vpack.c.bf16 %v3319, %v3311
      %v3592 = vpack.c.bf16 %v3328, %v3320
      %v3593 = vpack.c.bf16 %v3329, %v3321
      %v3594 = vpack.c.bf16 %v3330, %v3322
      %v3595 = vpack.c.bf16 %v3331, %v3323
      %v3596 = vpack.c.bf16 %v3332, %v3324
      %v3597 = vpack.c.bf16 %v3333, %v3325
      %v3598 = vpack.c.bf16 %v3334, %v3326
      %v3599 = vpack.c.bf16 %v3335, %v3327
      %v3600 = vpack.c.bf16 %v3344, %v3336
      %v3601 = vpack.c.bf16 %v3345, %v3337
      %v3602 = vpack.c.bf16 %v3346, %v3338
      %v3603 = vpack.c.bf16 %v3347, %v3339
      %v3604 = vpack.c.bf16 %v3348, %v3340
      %v3605 = vpack.c.bf16 %v3349, %v3341
      %v3606 = vpack.c.bf16 %v3350, %v3342
      %v3607 = vpack.c.bf16 %v3351, %v3343
      %v3608 = vld [vmem:[%s3] sm:$0xf]
      %v3609 = vld [vmem:[%s3 + $0x4] sm:$0xf]
      %v3610 = vld [vmem:[%s3 + $0x8] sm:$0xf]
      %v3611 = vld [vmem:[%s3 + $0xc] sm:$0xf]
      %v3612 = vld [vmem:[%s3 + $0x10] sm:$0xf]
      %v3613 = vld [vmem:[%s3 + $0x14] sm:$0xf]
      %v3614 = vld [vmem:[%s3 + $0x18] sm:$0xf]
      %v3615 = vld [vmem:[%s3 + $0x1c] sm:$0xf]
      %v3616 = vld [vmem:[%s3 + $0x20] sm:$0xf]
      %v3617 = vld [vmem:[%s3 + $0x24] sm:$0xf]
      %v3618 = vld [vmem:[%s3 + $0x28] sm:$0xf]
      %v3619 = vld [vmem:[%s3 + $0x2c] sm:$0xf]
      %v3620 = vld [vmem:[%s3 + $0x30] sm:$0xf]
      %v3621 = vld [vmem:[%s3 + $0x34] sm:$0xf]
      %v3622 = vld [vmem:[%s3 + $0x38] sm:$0xf]
      %v3623 = vld [vmem:[%s3 + $0x3c] sm:$0xf]
      %v3624 = vld [vmem:[%s3 + $0x40] sm:$0xf]
      %v3625 = vld [vmem:[%s3 + $0x44] sm:$0xf]
      %v3626 = vld [vmem:[%s3 + $0x48] sm:$0xf]
      %v3627 = vld [vmem:[%s3 + $0x4c] sm:$0xf]
      %v3628 = vld [vmem:[%s3 + $0x50] sm:$0xf]
      %v3629 = vld [vmem:[%s3 + $0x54] sm:$0xf]
      %v3630 = vld [vmem:[%s3 + $0x58] sm:$0xf]
      %v3631 = vld [vmem:[%s3 + $0x5c] sm:$0xf]
      %v3632 = vld [vmem:[%s3 + $0x60] sm:$0xf]
      %v3633 = vld [vmem:[%s3 + $0x64] sm:$0xf]
      %v3634 = vld [vmem:[%s3 + $0x68] sm:$0xf]
      %v3635 = vld [vmem:[%s3 + $0x6c] sm:$0xf]
      %v3636 = vld [vmem:[%s3 + $0x70] sm:$0xf]
      %v3637 = vld [vmem:[%s3 + $0x74] sm:$0xf]
      %v3638 = vld [vmem:[%s3 + $0x78] sm:$0xf]
      %v3639 = vld [vmem:[%s3 + $0x7c] sm:$0xf]
      %v3640 = vld [vmem:[%s4] sm:$0x1]
      %v3642 = vlaneseq
      %v3643 = vshrl.u32 %v3642, 7
      %v3644 = vsub.s32 0, %v3643
      %v3645 = vrot.slane %v3640, %v3644
      %v3679 = vunpack.c.l.b16 %v3608
      %v3680 = vunpack.c.l.b16 %v3609
      %v3681 = vunpack.c.l.b16 %v3610
      %v3682 = vunpack.c.l.b16 %v3611
      %v3683 = vunpack.c.l.b16 %v3612
      %v3684 = vunpack.c.l.b16 %v3613
      %v3685 = vunpack.c.l.b16 %v3614
      %v3686 = vunpack.c.l.b16 %v3615
      %v3687 = vunpack.c.l.b16 %v3616
      %v3688 = vunpack.c.l.b16 %v3617
      %v3689 = vunpack.c.l.b16 %v3618
      %v3690 = vunpack.c.l.b16 %v3619
      %v3691 = vunpack.c.l.b16 %v3620
      %v3692 = vunpack.c.l.b16 %v3621
      %v3693 = vunpack.c.l.b16 %v3622
      %v3694 = vunpack.c.l.b16 %v3623
      %v3695 = vunpack.c.l.b16 %v3624
      %v3696 = vunpack.c.l.b16 %v3625
      %v3697 = vunpack.c.l.b16 %v3626
      %v3698 = vunpack.c.l.b16 %v3627
      %v3699 = vunpack.c.l.b16 %v3628
      %v3700 = vunpack.c.l.b16 %v3629
      %v3701 = vunpack.c.l.b16 %v3630
      %v3702 = vunpack.c.l.b16 %v3631
      %v3703 = vunpack.c.l.b16 %v3632
      %v3704 = vunpack.c.l.b16 %v3633
      %v3705 = vunpack.c.l.b16 %v3634
      %v3706 = vunpack.c.l.b16 %v3635
      %v3707 = vunpack.c.l.b16 %v3636
      %v3708 = vunpack.c.l.b16 %v3637
      %v3709 = vunpack.c.l.b16 %v3638
      %v3710 = vunpack.c.l.b16 %v3639
      %v3711 = vpack.c.b16 %v3680, %v3679
      %v3712 = vpack.c.b16 %v3682, %v3681
      %v3713 = vpack.c.b16 %v3684, %v3683
      %v3714 = vpack.c.b16 %v3686, %v3685
      %v3715 = vpack.c.b16 %v3688, %v3687
      %v3716 = vpack.c.b16 %v3690, %v3689
      %v3717 = vpack.c.b16 %v3692, %v3691
      %v3718 = vpack.c.b16 %v3694, %v3693
      %v3719 = vpack.c.b16 %v3696, %v3695
      %v3720 = vpack.c.b16 %v3698, %v3697
      %v3721 = vpack.c.b16 %v3700, %v3699
      %v3722 = vpack.c.b16 %v3702, %v3701
      %v3723 = vpack.c.b16 %v3704, %v3703
      %v3724 = vpack.c.b16 %v3706, %v3705
      %v3725 = vpack.c.b16 %v3708, %v3707
      %v3726 = vpack.c.b16 %v3710, %v3709
      %3743 = vmatprep.subr.bf16.mxu0 0
      %3744 = vmatpush1.bf16.msra.mxu0 %v3711
      %3745 = vmatprep.subr.bf16.mxu0 0
      %3746 = vmatpush1.bf16.msra.mxu0 %v3712
      %3747 = vmatprep.subr.bf16.mxu0 0
      %3748 = vmatpush1.bf16.msra.mxu0 %v3713
      %3749 = vmatprep.subr.bf16.mxu0 0
      %3750 = vmatpush1.bf16.msra.mxu0 %v3714
      %3751 = vmatprep.subr.bf16.mxu0 0
      %3752 = vmatpush1.bf16.msra.mxu0 %v3715
      %3753 = vmatprep.subr.bf16.mxu0 0
      %3754 = vmatpush1.bf16.msra.mxu0 %v3716
      %3755 = vmatprep.subr.bf16.mxu0 0
      %3756 = vmatpush1.bf16.msra.mxu0 %v3717
      %3757 = vmatprep.subr.bf16.mxu0 0
      %3758 = vmatpush1.bf16.msra.mxu0 %v3718
      %3759 = vmatprep.subr.bf16.mxu0 0
      %3760 = vmatpush1.bf16.msra.mxu0 %v3719
      %3761 = vmatprep.subr.bf16.mxu0 0
      %3762 = vmatpush1.bf16.msra.mxu0 %v3720
      %3763 = vmatprep.subr.bf16.mxu0 0
      %3764 = vmatpush1.bf16.msra.mxu0 %v3721
      %3765 = vmatprep.subr.bf16.mxu0 0
      %3766 = vmatpush1.bf16.msra.mxu0 %v3722
      %3767 = vmatprep.subr.bf16.mxu0 0
      %3768 = vmatpush1.bf16.msra.mxu0 %v3723
      %3769 = vmatprep.subr.bf16.mxu0 0
      %3770 = vmatpush1.bf16.msra.mxu0 %v3724
      %3771 = vmatprep.subr.bf16.mxu0 0
      %3772 = vmatpush1.bf16.msra.mxu0 %v3725
      %3773 = vmatprep.subr.bf16.mxu0 0
      %3774 = vmatpush1.bf16.msra.mxu0 %v3726
      %3775 = vmatprep.mubr.bf16.mxu0 %v3353
      %3776 = vmatmul.mubr.bf16.gmra.mrb[0].mxu0 %v3352
      %v3777 = vpop.f32.mrb[0].mxu0
      %v3778 = vadd.f32 %v3645, %v3777
      %v3779 = vpop.f32.mrb[0].mxu0
      %v3780 = vpop.f32.mrb[0].mxu0
      %v3781 = vadd.f32 %v3645, %v3780
      %v3782 = vpop.f32.mrb[0].mxu0
      %3783 = vmatprep.mubr.bf16.mxu0 %v3361
      %3784 = vmatmul.mubr.bf16.gmra.mrb[0].mxu0 %v3360
      %v3785 = vpop.f32.mrb[0].mxu0
      %v3786 = vadd.f32 %v3645, %v3785
      %v3787 = vpop.f32.mrb[0].mxu0
      %v3788 = vpop.f32.mrb[0].mxu0
      %v3789 = vadd.f32 %v3645, %v3788
      %v3790 = vpop.f32.mrb[0].mxu0
      %3791 = vmatprep.mubr.bf16.mxu0 %v3369
      %3792 = vmatmul.mubr.bf16.gmra.mrb[0].mxu0 %v3368
      %v3793 = vpop.f32.mrb[0].mxu0
      %v3794 = vadd.f32 %v3645, %v3793
      %v3795 = vpop.f32.mrb[0].mxu0
      %v3796 = vpop.f32.mrb[0].mxu0
      %v3797 = vadd.f32 %v3645, %v3796
      %v3798 = vpop.f32.mrb[0].mxu0
      %3799 = vmatprep.mubr.bf16.mxu0 %v3377
      %3800 = vmatmul.mubr.bf16.gmra.mrb[0].mxu0 %v3376
      %v3801 = vpop.f32.mrb[0].mxu0
      %v3802 = vadd.f32 %v3645, %v3801
      %v3803 = vpop.f32.mrb[0].mxu0
      %v3804 = vpop.f32.mrb[0].mxu0
      %v3805 = vadd.f32 %v3645, %v3804
      %v3806 = vpop.f32.mrb[0].mxu0
      %3807 = vmatprep.mubr.bf16.mxu0 %v3385
      %3808 = vmatmul.mubr.bf16.gmra.mrb[0].mxu0 %v3384
      %v3809 = vpop.f32.mrb[0].mxu0
      %v3810 = vadd.f32 %v3645, %v3809
      %v3811 = vpop.f32.mrb[0].mxu0
      %v3812 = vpop.f32.mrb[0].mxu0
      %v3813 = vadd.f32 %v3645, %v3812
      %v3814 = vpop.f32.mrb[0].mxu0
      %3815 = vmatprep.mubr.bf16.mxu0 %v3393
      %3816 = vmatmul.mubr.bf16.gmra.mrb[0].mxu0 %v3392
      %v3817 = vpop.f32.mrb[0].mxu0
      %v3818 = vadd.f32 %v3645, %v3817
      %v3819 = vpop.f32.mrb[0].mxu0
      %v3820 = vpop.f32.mrb[0].mxu0
      %v3821 = vadd.f32 %v3645, %v3820
      %v3822 = vpop.f32.mrb[0].mxu0
      %3823 = vmatprep.mubr.bf16.mxu0 %v3401
      %3824 = vmatmul.mubr.bf16.gmra.mrb[0].mxu0 %v3400
      %v3825 = vpop.f32.mrb[0].mxu0
      %v3826 = vadd.f32 %v3645, %v3825
      %v3827 = vpop.f32.mrb[0].mxu0
      %v3828 = vpop.f32.mrb[0].mxu0
      %v3829 = vadd.f32 %v3645, %v3828
      %v3830 = vpop.f32.mrb[0].mxu0
      %3831 = vmatprep.mubr.bf16.mxu0 %v3409
      %3832 = vmatmul.mubr.bf16.gmra.mrb[0].mxu0 %v3408
      %v3833 = vpop.f32.mrb[0].mxu0
      %v3834 = vadd.f32 %v3645, %v3833
      %v3835 = vpop.f32.mrb[0].mxu0
      %v3836 = vpop.f32.mrb[0].mxu0
      %v3837 = vadd.f32 %v3645, %v3836
      %v3838 = vpop.f32.mrb[0].mxu0
      %3839 = vmatprep.mubr.bf16.mxu0 %v3417
      %3840 = vmatmul.mubr.bf16.gmra.mrb[0].mxu0 %v3416
      %v3841 = vpop.f32.mrb[0].mxu0
      %v3842 = vadd.f32 %v3645, %v3841
      %v3843 = vpop.f32.mrb[0].mxu0
      %v3844 = vpop.f32.mrb[0].mxu0
      %v3845 = vadd.f32 %v3645, %v3844
      %v3846 = vpop.f32.mrb[0].mxu0
      %3847 = vmatprep.mubr.bf16.mxu0 %v3425
      %3848 = vmatmul.mubr.bf16.gmra.mrb[0].mxu0 %v3424
      %v3849 = vpop.f32.mrb[0].mxu0
      %v3850 = vadd.f32 %v3645, %v3849
      %v3851 = vpop.f32.mrb[0].mxu0
      %v3852 = vpop.f32.mrb[0].mxu0
      %v3853 = vadd.f32 %v3645, %v3852
      %v3854 = vpop.f32.mrb[0].mxu0
      %3855 = vmatprep.mubr.bf16.mxu0 %v3433
      %3856 = vmatmul.mubr.bf16.gmra.mrb[0].mxu0 %v3432
      %v3857 = vpop.f32.mrb[0].mxu0
      %v3858 = vadd.f32 %v3645, %v3857
      %v3859 = vpop.f32.mrb[0].mxu0
      %v3860 = vpop.f32.mrb[0].mxu0
      %v3861 = vadd.f32 %v3645, %v3860
      %v3862 = vpop.f32.mrb[0].mxu0
      %3863 = vmatprep.mubr.bf16.mxu0 %v3441
      %3864 = vmatmul.mubr.bf16.gmra.mrb[0].mxu0 %v3440
      %v3865 = vpop.f32.mrb[0].mxu0
      %v3866 = vadd.f32 %v3645, %v3865
      %v3867 = vpop.f32.mrb[0].mxu0
      %v3868 = vpop.f32.mrb[0].mxu0
      %v3869 = vadd.f32 %v3645, %v3868
      %v3870 = vpop.f32.mrb[0].mxu0
      %3871 = vmatprep.mubr.bf16.mxu0 %v3449
      %3872 = vmatmul.mubr.bf16.gmra.mrb[0].mxu0 %v3448
      %v3873 = vpop.f32.mrb[0].mxu0
      %v3874 = vadd.f32 %v3645, %v3873
      %v3875 = vpop.f32.mrb[0].mxu0
      %v3876 = vpop.f32.mrb[0].mxu0
      %v3877 = vadd.f32 %v3645, %v3876
      %v3878 = vpop.f32.mrb[0].mxu0
      %3879 = vmatprep.mubr.bf16.mxu0 %v3457
      %3880 = vmatmul.mubr.bf16.gmra.mrb[0].mxu0 %v3456
      %v3881 = vpop.f32.mrb[0].mxu0
      %v3882 = vadd.f32 %v3645, %v3881
      %v3883 = vpop.f32.mrb[0].mxu0
      %v3884 = vpop.f32.mrb[0].mxu0
      %v3885 = vadd.f32 %v3645, %v3884
      %v3886 = vpop.f32.mrb[0].mxu0
      %3887 = vmatprep.mubr.bf16.mxu0 %v3465
      %3888 = vmatmul.mubr.bf16.gmra.mrb[0].mxu0 %v3464
      %v3889 = vpop.f32.mrb[0].mxu0
      %v3890 = vadd.f32 %v3645, %v3889
      %v3891 = vpop.f32.mrb[0].mxu0
      %v3892 = vpop.f32.mrb[0].mxu0
      %v3893 = vadd.f32 %v3645, %v3892
      %v3894 = vpop.f32.mrb[0].mxu0
      %3895 = vmatprep.mubr.bf16.mxu0 %v3473
      %3896 = vmatmul.mubr.bf16.gmra.mrb[0].mxu0 %v3472
      %v3897 = vpop.f32.mrb[0].mxu0
      %v3898 = vadd.f32 %v3645, %v3897
      %v3899 = vpop.f32.mrb[0].mxu0
      %v3900 = vpop.f32.mrb[0].mxu0
      %v3901 = vadd.f32 %v3645, %v3900
      %v3902 = vpop.f32.mrb[0].mxu0
      %3903 = vmatprep.mubr.bf16.mxu0 %v3481
      %3904 = vmatmul.mubr.bf16.gmra.mrb[0].mxu0 %v3480
      %v3905 = vpop.f32.mrb[0].mxu0
      %v3906 = vadd.f32 %v3645, %v3905
      %v3907 = vpop.f32.mrb[0].mxu0
      %v3908 = vpop.f32.mrb[0].mxu0
      %v3909 = vadd.f32 %v3645, %v3908
      %v3910 = vpop.f32.mrb[0].mxu0
      %3911 = vmatprep.mubr.bf16.mxu0 %v3489
      %3912 = vmatmul.mubr.bf16.gmra.mrb[0].mxu0 %v3488
      %v3913 = vpop.f32.mrb[0].mxu0
      %v3914 = vadd.f32 %v3645, %v3913
      %v3915 = vpop.f32.mrb[0].mxu0
      %v3916 = vpop.f32.mrb[0].mxu0
      %v3917 = vadd.f32 %v3645, %v3916
      %v3918 = vpop.f32.mrb[0].mxu0
      %3919 = vmatprep.mubr.bf16.mxu0 %v3497
      %3920 = vmatmul.mubr.bf16.gmra.mrb[0].mxu0 %v3496
      %v3921 = vpop.f32.mrb[0].mxu0
      %v3922 = vadd.f32 %v3645, %v3921
      %v3923 = vpop.f32.mrb[0].mxu0
      %v3924 = vpop.f32.mrb[0].mxu0
      %v3925 = vadd.f32 %v3645, %v3924
      %v3926 = vpop.f32.mrb[0].mxu0
      %3927 = vmatprep.mubr.bf16.mxu0 %v3505
      %3928 = vmatmul.mubr.bf16.gmra.mrb[0].mxu0 %v3504
      %v3929 = vpop.f32.mrb[0].mxu0
      %v3930 = vadd.f32 %v3645, %v3929
      %v3931 = vpop.f32.mrb[0].mxu0
      %v3932 = vpop.f32.mrb[0].mxu0
      %v3933 = vadd.f32 %v3645, %v3932
      %v3934 = vpop.f32.mrb[0].mxu0
      %3935 = vmatprep.mubr.bf16.mxu0 %v3513
      %3936 = vmatmul.mubr.bf16.gmra.mrb[0].mxu0 %v3512
      %v3937 = vpop.f32.mrb[0].mxu0
      %v3938 = vadd.f32 %v3645, %v3937
      %v3939 = vpop.f32.mrb[0].mxu0
      %v3940 = vpop.f32.mrb[0].mxu0
      %v3941 = vadd.f32 %v3645, %v3940
      %v3942 = vpop.f32.mrb[0].mxu0
      %3943 = vmatprep.mubr.bf16.mxu0 %v3521
      %3944 = vmatmul.mubr.bf16.gmra.mrb[0].mxu0 %v3520
      %v3945 = vpop.f32.mrb[0].mxu0
      %v3946 = vadd.f32 %v3645, %v3945
      %v3947 = vpop.f32.mrb[0].mxu0
      %v3948 = vpop.f32.mrb[0].mxu0
      %v3949 = vadd.f32 %v3645, %v3948
      %v3950 = vpop.f32.mrb[0].mxu0
      %3951 = vmatprep.mubr.bf16.mxu0 %v3529
      %3952 = vmatmul.mubr.bf16.gmra.mrb[0].mxu0 %v3528
      %v3953 = vpop.f32.mrb[0].mxu0
      %v3954 = vadd.f32 %v3645, %v3953
      %v3955 = vpop.f32.mrb[0].mxu0
      %v3956 = vpop.f32.mrb[0].mxu0
      %v3957 = vadd.f32 %v3645, %v3956
      %v3958 = vpop.f32.mrb[0].mxu0
      %3959 = vmatprep.mubr.bf16.mxu0 %v3537
      %3960 = vmatmul.mubr.bf16.gmra.mrb[0].mxu0 %v3536
      %v3961 = vpop.f32.mrb[0].mxu0
      %v3962 = vadd.f32 %v3645, %v3961
      %v3963 = vpop.f32.mrb[0].mxu0
      %v3964 = vpop.f32.mrb[0].mxu0
      %v3965 = vadd.f32 %v3645, %v3964
      %v3966 = vpop.f32.mrb[0].mxu0
      %3967 = vmatprep.mubr.bf16.mxu0 %v3545
      %3968 = vmatmul.mubr.bf16.gmra.mrb[0].mxu0 %v3544
      %v3969 = vpop.f32.mrb[0].mxu0
      %v3970 = vadd.f32 %v3645, %v3969
      %v3971 = vpop.f32.mrb[0].mxu0
      %v3972 = vpop.f32.mrb[0].mxu0
      %v3973 = vadd.f32 %v3645, %v3972
      %v3974 = vpop.f32.mrb[0].mxu0
      %3975 = vmatprep.mubr.bf16.mxu0 %v3553
      %3976 = vmatmul.mubr.bf16.gmra.mrb[0].mxu0 %v3552
      %v3977 = vpop.f32.mrb[0].mxu0
      %v3978 = vadd.f32 %v3645, %v3977
      %v3979 = vpop.f32.mrb[0].mxu0
      %v3980 = vpop.f32.mrb[0].mxu0
      %v3981 = vadd.f32 %v3645, %v3980
      %v3982 = vpop.f32.mrb[0].mxu0
      %3983 = vmatprep.mubr.bf16.mxu0 %v3561
      %3984 = vmatmul.mubr.bf16.gmra.mrb[0].mxu0 %v3560
      %v3985 = vpop.f32.mrb[0].mxu0
      %v3986 = vadd.f32 %v3645, %v3985
      %v3987 = vpop.f32.mrb[0].mxu0
      %v3988 = vpop.f32.mrb[0].mxu0
      %v3989 = vadd.f32 %v3645, %v3988
      %v3990 = vpop.f32.mrb[0].mxu0
      %3991 = vmatprep.mubr.bf16.mxu0 %v3569
      %3992 = vmatmul.mubr.bf16.gmra.mrb[0].mxu0 %v3568
      %v3993 = vpop.f32.mrb[0].mxu0
      %v3994 = vadd.f32 %v3645, %v3993
      %v3995 = vpop.f32.mrb[0].mxu0
      %v3996 = vpop.f32.mrb[0].mxu0
      %v3997 = vadd.f32 %v3645, %v3996
      %v3998 = vpop.f32.mrb[0].mxu0
      %3999 = vmatprep.mubr.bf16.mxu0 %v3577
      %4000 = vmatmul.mubr.bf16.gmra.mrb[0].mxu0 %v3576
      %v4001 = vpop.f32.mrb[0].mxu0
      %v4002 = vadd.f32 %v3645, %v4001
      %v4003 = vpop.f32.mrb[0].mxu0
      %v4004 = vpop.f32.mrb[0].mxu0
      %v4005 = vadd.f32 %v3645, %v4004
      %v4006 = vpop.f32.mrb[0].mxu0
      %4007 = vmatprep.mubr.bf16.mxu0 %v3585
      %4008 = vmatmul.mubr.bf16.gmra.mrb[0].mxu0 %v3584
      %v4009 = vpop.f32.mrb[0].mxu0
      %v4010 = vadd.f32 %v3645, %v4009
      %v4011 = vpop.f32.mrb[0].mxu0
      %v4012 = vpop.f32.mrb[0].mxu0
      %v4013 = vadd.f32 %v3645, %v4012
      %v4014 = vpop.f32.mrb[0].mxu0
      %4015 = vmatprep.mubr.bf16.mxu0 %v3593
      %4016 = vmatmul.mubr.bf16.gmra.mrb[0].mxu0 %v3592
      %v4017 = vpop.f32.mrb[0].mxu0
      %v4018 = vadd.f32 %v3645, %v4017
      %v4019 = vpop.f32.mrb[0].mxu0
      %v4020 = vpop.f32.mrb[0].mxu0
      %v4021 = vadd.f32 %v3645, %v4020
      %v4022 = vpop.f32.mrb[0].mxu0
      %4023 = vmatprep.mubr.bf16.mxu0 %v3601
      %4024 = vmatmul.mubr.bf16.gmra.mrb[0].mxu0 %v3600
      %v4025 = vpop.f32.mrb[0].mxu0
      %v4026 = vadd.f32 %v3645, %v4025
      %v4027 = vpop.f32.mrb[0].mxu0
      %v4028 = vpop.f32.mrb[0].mxu0
      %v4029 = vadd.f32 %v3645, %v4028
      %v4030 = vpop.f32.mrb[0].mxu0
      %4031 = vdwg.mxu0
      %4032 = vmatprep.subr.bf16.mxu0 0
      %4033 = vmatpush1.bf16.msra.mxu0 %v3711
      %4034 = vmatprep.subr.bf16.mxu0 0
      %4035 = vmatpush1.bf16.msra.mxu0 %v3712
      %4036 = vmatprep.subr.bf16.mxu0 0
      %4037 = vmatpush1.bf16.msra.mxu0 %v3713
      %4038 = vmatprep.subr.bf16.mxu0 0
      %4039 = vmatpush1.bf16.msra.mxu0 %v3714
      %4040 = vmatprep.subr.bf16.mxu0 0
      %4041 = vmatpush1.bf16.msra.mxu0 %v3715
      %4042 = vmatprep.subr.bf16.mxu0 0
      %4043 = vmatpush1.bf16.msra.mxu0 %v3716
      %4044 = vmatprep.subr.bf16.mxu0 0
      %4045 = vmatpush1.bf16.msra.mxu0 %v3717
      %4046 = vmatprep.subr.bf16.mxu0 0
      %4047 = vmatpush1.bf16.msra.mxu0 %v3718
      %4048 = vmatprep.subr.bf16.mxu0 0
      %4049 = vmatpush1.bf16.msra.mxu0 %v3719
      %4050 = vmatprep.subr.bf16.mxu0 0
      %4051 = vmatpush1.bf16.msra.mxu0 %v3720
      %4052 = vmatprep.subr.bf16.mxu0 0
      %4053 = vmatpush1.bf16.msra.mxu0 %v3721
      %4054 = vmatprep.subr.bf16.mxu0 0
      %4055 = vmatpush1.bf16.msra.mxu0 %v3722
      %4056 = vmatprep.subr.bf16.mxu0 0
      %4057 = vmatpush1.bf16.msra.mxu0 %v3723
      %4058 = vmatprep.subr.bf16.mxu0 0
      %4059 = vmatpush1.bf16.msra.mxu0 %v3724
      %4060 = vmatprep.subr.bf16.mxu0 0
      %4061 = vmatpush1.bf16.msra.mxu0 %v3725
      %4062 = vmatprep.subr.bf16.mxu0 0
      %4063 = vmatpush1.bf16.msra.mxu0 %v3726
      %4064 = vmatprep.mubr.bf16.mxu0 %v3355
      %4065 = vmatmul.mubr.bf16.gmra.mrb[0].mxu0 %v3354
      %v4066 = vpop.f32.mrb[0].mxu0
      %v4067 = vadd.f32 %v3645, %v4066
      %v4068 = vpop.f32.mrb[0].mxu0
      %v4069 = vpop.f32.mrb[0].mxu0
      %v4070 = vadd.f32 %v3645, %v4069
      %v4071 = vpop.f32.mrb[0].mxu0
      %4072 = vmatprep.mubr.bf16.mxu0 %v3363
      %4073 = vmatmul.mubr.bf16.gmra.mrb[0].mxu0 %v3362
      %v4074 = vpop.f32.mrb[0].mxu0
      %v4075 = vadd.f32 %v3645, %v4074
      %v4076 = vpop.f32.mrb[0].mxu0
      %v4077 = vpop.f32.mrb[0].mxu0
      %v4078 = vadd.f32 %v3645, %v4077
      %v4079 = vpop.f32.mrb[0].mxu0
      %4080 = vmatprep.mubr.bf16.mxu0 %v3371
      %4081 = vmatmul.mubr.bf16.gmra.mrb[0].mxu0 %v3370
      %v4082 = vpop.f32.mrb[0].mxu0
      %v4083 = vadd.f32 %v3645, %v4082
      %v4084 = vpop.f32.mrb[0].mxu0
      %v4085 = vpop.f32.mrb[0].mxu0
      %v4086 = vadd.f32 %v3645, %v4085
      %v4087 = vpop.f32.mrb[0].mxu0
      %4088 = vmatprep.mubr.bf16.mxu0 %v3379
      %4089 = vmatmul.mubr.bf16.gmra.mrb[0].mxu0 %v3378
      %v4090 = vpop.f32.mrb[0].mxu0
      %v4091 = vadd.f32 %v3645, %v4090
      %v4092 = vpop.f32.mrb[0].mxu0
      %v4093 = vpop.f32.mrb[0].mxu0
      %v4094 = vadd.f32 %v3645, %v4093
      %v4095 = vpop.f32.mrb[0].mxu0
      %4096 = vmatprep.mubr.bf16.mxu0 %v3387
      %4097 = vmatmul.mubr.bf16.gmra.mrb[0].mxu0 %v3386
      %v4098 = vpop.f32.mrb[0].mxu0
      %v4099 = vadd.f32 %v3645, %v4098
      %v4100 = vpop.f32.mrb[0].mxu0
      %v4101 = vpop.f32.mrb[0].mxu0
      %v4102 = vadd.f32 %v3645, %v4101
      %v4103 = vpop.f32.mrb[0].mxu0
      %4104 = vmatprep.mubr.bf16.mxu0 %v3395
      %4105 = vmatmul.mubr.bf16.gmra.mrb[0].mxu0 %v3394
      %v4106 = vpop.f32.mrb[0].mxu0
      %v4107 = vadd.f32 %v3645, %v4106
      %v4108 = vpop.f32.mrb[0].mxu0
      %v4109 = vpop.f32.mrb[0].mxu0
      %v4110 = vadd.f32 %v3645, %v4109
      %v4111 = vpop.f32.mrb[0].mxu0
      %4112 = vmatprep.mubr.bf16.mxu0 %v3403
      %4113 = vmatmul.mubr.bf16.gmra.mrb[0].mxu0 %v3402
      %v4114 = vpop.f32.mrb[0].mxu0
      %v4115 = vadd.f32 %v3645, %v4114
      %v4116 = vpop.f32.mrb[0].mxu0
      %v4117 = vpop.f32.mrb[0].mxu0
      %v4118 = vadd.f32 %v3645, %v4117
      %v4119 = vpop.f32.mrb[0].mxu0
      %4120 = vmatprep.mubr.bf16.mxu0 %v3411
      %4121 = vmatmul.mubr.bf16.gmra.mrb[0].mxu0 %v3410
      %v4122 = vpop.f32.mrb[0].mxu0
      %v4123 = vadd.f32 %v3645, %v4122
      %v4124 = vpop.f32.mrb[0].mxu0
      %v4125 = vpop.f32.mrb[0].mxu0
      %v4126 = vadd.f32 %v3645, %v4125
      %v4127 = vpop.f32.mrb[0].mxu0
      %4128 = vmatprep.mubr.bf16.mxu0 %v3419
      %4129 = vmatmul.mubr.bf16.gmra.mrb[0].mxu0 %v3418
      %v4130 = vpop.f32.mrb[0].mxu0
      %v4131 = vadd.f32 %v3645, %v4130
      %v4132 = vpop.f32.mrb[0].mxu0
      %v4133 = vpop.f32.mrb[0].mxu0
      %v4134 = vadd.f32 %v3645, %v4133
      %v4135 = vpop.f32.mrb[0].mxu0
      %4136 = vmatprep.mubr.bf16.mxu0 %v3427
      %4137 = vmatmul.mubr.bf16.gmra.mrb[0].mxu0 %v3426
      %v4138 = vpop.f32.mrb[0].mxu0
      %v4139 = vadd.f32 %v3645, %v4138
      %v4140 = vpop.f32.mrb[0].mxu0
      %v4141 = vpop.f32.mrb[0].mxu0
      %v4142 = vadd.f32 %v3645, %v4141
      %v4143 = vpop.f32.mrb[0].mxu0
      %4144 = vmatprep.mubr.bf16.mxu0 %v3435
      %4145 = vmatmul.mubr.bf16.gmra.mrb[0].mxu0 %v3434
      %v4146 = vpop.f32.mrb[0].mxu0
      %v4147 = vadd.f32 %v3645, %v4146
      %v4148 = vpop.f32.mrb[0].mxu0
      %v4149 = vpop.f32.mrb[0].mxu0
      %v4150 = vadd.f32 %v3645, %v4149
      %v4151 = vpop.f32.mrb[0].mxu0
      %4152 = vmatprep.mubr.bf16.mxu0 %v3443
      %4153 = vmatmul.mubr.bf16.gmra.mrb[0].mxu0 %v3442
      %v4154 = vpop.f32.mrb[0].mxu0
      %v4155 = vadd.f32 %v3645, %v4154
      %v4156 = vpop.f32.mrb[0].mxu0
      %v4157 = vpop.f32.mrb[0].mxu0
      %v4158 = vadd.f32 %v3645, %v4157
      %v4159 = vpop.f32.mrb[0].mxu0
      %4160 = vmatprep.mubr.bf16.mxu0 %v3451
      %4161 = vmatmul.mubr.bf16.gmra.mrb[0].mxu0 %v3450
      %v4162 = vpop.f32.mrb[0].mxu0
      %v4163 = vadd.f32 %v3645, %v4162
      %v4164 = vpop.f32.mrb[0].mxu0
      %v4165 = vpop.f32.mrb[0].mxu0
      %v4166 = vadd.f32 %v3645, %v4165
      %v4167 = vpop.f32.mrb[0].mxu0
      %4168 = vmatprep.mubr.bf16.mxu0 %v3459
      %4169 = vmatmul.mubr.bf16.gmra.mrb[0].mxu0 %v3458
      %v4170 = vpop.f32.mrb[0].mxu0
      %v4171 = vadd.f32 %v3645, %v4170
      %v4172 = vpop.f32.mrb[0].mxu0
      %v4173 = vpop.f32.mrb[0].mxu0
      %v4174 = vadd.f32 %v3645, %v4173
      %v4175 = vpop.f32.mrb[0].mxu0
      %4176 = vmatprep.mubr.bf16.mxu0 %v3467
      %4177 = vmatmul.mubr.bf16.gmra.mrb[0].mxu0 %v3466
      %v4178 = vpop.f32.mrb[0].mxu0
      %v4179 = vadd.f32 %v3645, %v4178
      %v4180 = vpop.f32.mrb[0].mxu0
      %v4181 = vpop.f32.mrb[0].mxu0
      %v4182 = vadd.f32 %v3645, %v4181
      %v4183 = vpop.f32.mrb[0].mxu0
      %4184 = vmatprep.mubr.bf16.mxu0 %v3475
      %4185 = vmatmul.mubr.bf16.gmra.mrb[0].mxu0 %v3474
      %v4186 = vpop.f32.mrb[0].mxu0
      %v4187 = vadd.f32 %v3645, %v4186
      %v4188 = vpop.f32.mrb[0].mxu0
      %v4189 = vpop.f32.mrb[0].mxu0
      %v4190 = vadd.f32 %v3645, %v4189
      %v4191 = vpop.f32.mrb[0].mxu0
      %4192 = vmatprep.mubr.bf16.mxu0 %v3483
      %4193 = vmatmul.mubr.bf16.gmra.mrb[0].mxu0 %v3482
      %v4194 = vpop.f32.mrb[0].mxu0
      %v4195 = vadd.f32 %v3645, %v4194
      %v4196 = vpop.f32.mrb[0].mxu0
      %v4197 = vpop.f32.mrb[0].mxu0
      %v4198 = vadd.f32 %v3645, %v4197
      %v4199 = vpop.f32.mrb[0].mxu0
      %4200 = vmatprep.mubr.bf16.mxu0 %v3491
      %4201 = vmatmul.mubr.bf16.gmra.mrb[0].mxu0 %v3490
      %v4202 = vpop.f32.mrb[0].mxu0
      %v4203 = vadd.f32 %v3645, %v4202
      %v4204 = vpop.f32.mrb[0].mxu0
      %v4205 = vpop.f32.mrb[0].mxu0
      %v4206 = vadd.f32 %v3645, %v4205
      %v4207 = vpop.f32.mrb[0].mxu0
      %4208 = vmatprep.mubr.bf16.mxu0 %v3499
      %4209 = vmatmul.mubr.bf16.gmra.mrb[0].mxu0 %v3498
      %v4210 = vpop.f32.mrb[0].mxu0
      %v4211 = vadd.f32 %v3645, %v4210
      %v4212 = vpop.f32.mrb[0].mxu0
      %v4213 = vpop.f32.mrb[0].mxu0
      %v4214 = vadd.f32 %v3645, %v4213
      %v4215 = vpop.f32.mrb[0].mxu0
      %4216 = vmatprep.mubr.bf16.mxu0 %v3507
      %4217 = vmatmul.mubr.bf16.gmra.mrb[0].mxu0 %v3506
      %v4218 = vpop.f32.mrb[0].mxu0
      %v4219 = vadd.f32 %v3645, %v4218
      %v4220 = vpop.f32.mrb[0].mxu0
      %v4221 = vpop.f32.mrb[0].mxu0
      %v4222 = vadd.f32 %v3645, %v4221
      %v4223 = vpop.f32.mrb[0].mxu0
      %4224 = vmatprep.mubr.bf16.mxu0 %v3515
      %4225 = vmatmul.mubr.bf16.gmra.mrb[0].mxu0 %v3514
      %v4226 = vpop.f32.mrb[0].mxu0
      %v4227 = vadd.f32 %v3645, %v4226
      %v4228 = vpop.f32.mrb[0].mxu0
      %v4229 = vpop.f32.mrb[0].mxu0
      %v4230 = vadd.f32 %v3645, %v4229
      %v4231 = vpop.f32.mrb[0].mxu0
      %4232 = vmatprep.mubr.bf16.mxu0 %v3523
      %4233 = vmatmul.mubr.bf16.gmra.mrb[0].mxu0 %v3522
      %v4234 = vpop.f32.mrb[0].mxu0
      %v4235 = vadd.f32 %v3645, %v4234
      %v4236 = vpop.f32.mrb[0].mxu0
      %v4237 = vpop.f32.mrb[0].mxu0
      %v4238 = vadd.f32 %v3645, %v4237
      %v4239 = vpop.f32.mrb[0].mxu0
      %4240 = vmatprep.mubr.bf16.mxu0 %v3531
      %4241 = vmatmul.mubr.bf16.gmra.mrb[0].mxu0 %v3530
      %v4242 = vpop.f32.mrb[0].mxu0
      %v4243 = vadd.f32 %v3645, %v4242
      %v4244 = vpop.f32.mrb[0].mxu0
      %v4245 = vpop.f32.mrb[0].mxu0
      %v4246 = vadd.f32 %v3645, %v4245
      %v4247 = vpop.f32.mrb[0].mxu0
      %4248 = vmatprep.mubr.bf16.mxu0 %v3539
      %4249 = vmatmul.mubr.bf16.gmra.mrb[0].mxu0 %v3538
      %v4250 = vpop.f32.mrb[0].mxu0
      %v4251 = vadd.f32 %v3645, %v4250
      %v4252 = vpop.f32.mrb[0].mxu0
      %v4253 = vpop.f32.mrb[0].mxu0
      %v4254 = vadd.f32 %v3645, %v4253
      %v4255 = vpop.f32.mrb[0].mxu0
      %4256 = vmatprep.mubr.bf16.mxu0 %v3547
      %4257 = vmatmul.mubr.bf16.gmra.mrb[0].mxu0 %v3546
      %v4258 = vpop.f32.mrb[0].mxu0
      %v4259 = vadd.f32 %v3645, %v4258
      %v4260 = vpop.f32.mrb[0].mxu0
      %v4261 = vpop.f32.mrb[0].mxu0
      %v4262 = vadd.f32 %v3645, %v4261
      %v4263 = vpop.f32.mrb[0].mxu0
      %4264 = vmatprep.mubr.bf16.mxu0 %v3555
      %4265 = vmatmul.mubr.bf16.gmra.mrb[0].mxu0 %v3554
      %v4266 = vpop.f32.mrb[0].mxu0
      %v4267 = vadd.f32 %v3645, %v4266
      %v4268 = vpop.f32.mrb[0].mxu0
      %v4269 = vpop.f32.mrb[0].mxu0
      %v4270 = vadd.f32 %v3645, %v4269
      %v4271 = vpop.f32.mrb[0].mxu0
      %4272 = vmatprep.mubr.bf16.mxu0 %v3563
      %4273 = vmatmul.mubr.bf16.gmra.mrb[0].mxu0 %v3562
      %v4274 = vpop.f32.mrb[0].mxu0
      %v4275 = vadd.f32 %v3645, %v4274
      %v4276 = vpop.f32.mrb[0].mxu0
      %v4277 = vpop.f32.mrb[0].mxu0
      %v4278 = vadd.f32 %v3645, %v4277
      %v4279 = vpop.f32.mrb[0].mxu0
      %4280 = vmatprep.mubr.bf16.mxu0 %v3571
      %4281 = vmatmul.mubr.bf16.gmra.mrb[0].mxu0 %v3570
      %v4282 = vpop.f32.mrb[0].mxu0
      %v4283 = vadd.f32 %v3645, %v4282
      %v4284 = vpop.f32.mrb[0].mxu0
      %v4285 = vpop.f32.mrb[0].mxu0
      %v4286 = vadd.f32 %v3645, %v4285
      %v4287 = vpop.f32.mrb[0].mxu0
      %4288 = vmatprep.mubr.bf16.mxu0 %v3579
      %4289 = vmatmul.mubr.bf16.gmra.mrb[0].mxu0 %v3578
      %v4290 = vpop.f32.mrb[0].mxu0
      %v4291 = vadd.f32 %v3645, %v4290
      %v4292 = vpop.f32.mrb[0].mxu0
      %v4293 = vpop.f32.mrb[0].mxu0
      %v4294 = vadd.f32 %v3645, %v4293
      %v4295 = vpop.f32.mrb[0].mxu0
      %4296 = vmatprep.mubr.bf16.mxu0 %v3587
      %4297 = vmatmul.mubr.bf16.gmra.mrb[0].mxu0 %v3586
      %v4298 = vpop.f32.mrb[0].mxu0
      %v4299 = vadd.f32 %v3645, %v4298
      %v4300 = vpop.f32.mrb[0].mxu0
      %v4301 = vpop.f32.mrb[0].mxu0
      %v4302 = vadd.f32 %v3645, %v4301
      %v4303 = vpop.f32.mrb[0].mxu0
      %4304 = vmatprep.mubr.bf16.mxu0 %v3595
      %4305 = vmatmul.mubr.bf16.gmra.mrb[0].mxu0 %v3594
      %v4306 = vpop.f32.mrb[0].mxu0
      %v4307 = vadd.f32 %v3645, %v4306
      %v4308 = vpop.f32.mrb[0].mxu0
      %v4309 = vpop.f32.mrb[0].mxu0
      %v4310 = vadd.f32 %v3645, %v4309
      %v4311 = vpop.f32.mrb[0].mxu0
      %4312 = vmatprep.mubr.bf16.mxu0 %v3603
      %4313 = vmatmul.mubr.bf16.gmra.mrb[0].mxu0 %v3602
      %v4314 = vpop.f32.mrb[0].mxu0
      %v4315 = vadd.f32 %v3645, %v4314
      %v4316 = vpop.f32.mrb[0].mxu0
      %v4317 = vpop.f32.mrb[0].mxu0
      %v4318 = vadd.f32 %v3645, %v4317
      %v4319 = vpop.f32.mrb[0].mxu0
      %4320 = vdwg.mxu0
      %4321 = vmatprep.subr.bf16.mxu0 0
      %4322 = vmatpush1.bf16.msra.mxu0 %v3711
      %4323 = vmatprep.subr.bf16.mxu0 0
      %4324 = vmatpush1.bf16.msra.mxu0 %v3712
      %4325 = vmatprep.subr.bf16.mxu0 0
      %4326 = vmatpush1.bf16.msra.mxu0 %v3713
      %4327 = vmatprep.subr.bf16.mxu0 0
      %4328 = vmatpush1.bf16.msra.mxu0 %v3714
      %4329 = vmatprep.subr.bf16.mxu0 0
      %4330 = vmatpush1.bf16.msra.mxu0 %v3715
      %4331 = vmatprep.subr.bf16.mxu0 0
      %4332 = vmatpush1.bf16.msra.mxu0 %v3716
      %4333 = vmatprep.subr.bf16.mxu0 0
      %4334 = vmatpush1.bf16.msra.mxu0 %v3717
      %4335 = vmatprep.subr.bf16.mxu0 0
      %4336 = vmatpush1.bf16.msra.mxu0 %v3718
      %4337 = vmatprep.subr.bf16.mxu0 0
      %4338 = vmatpush1.bf16.msra.mxu0 %v3719
      %4339 = vmatprep.subr.bf16.mxu0 0
      %4340 = vmatpush1.bf16.msra.mxu0 %v3720
      %4341 = vmatprep.subr.bf16.mxu0 0
      %4342 = vmatpush1.bf16.msra.mxu0 %v3721
      %4343 = vmatprep.subr.bf16.mxu0 0
      %4344 = vmatpush1.bf16.msra.mxu0 %v3722
      %4345 = vmatprep.subr.bf16.mxu0 0
      %4346 = vmatpush1.bf16.msra.mxu0 %v3723
      %4347 = vmatprep.subr.bf16.mxu0 0
      %4348 = vmatpush1.bf16.msra.mxu0 %v3724
      %4349 = vmatprep.subr.bf16.mxu0 0
      %4350 = vmatpush1.bf16.msra.mxu0 %v3725
      %4351 = vmatprep.subr.bf16.mxu0 0
      %4352 = vmatpush1.bf16.msra.mxu0 %v3726
      %4353 = vmatprep.mubr.bf16.mxu0 %v3357
      %4354 = vmatmul.mubr.bf16.gmra.mrb[0].mxu0 %v3356
      %v4355 = vpop.f32.mrb[0].mxu0
      %v4356 = vadd.f32 %v3645, %v4355
      %v4357 = vpop.f32.mrb[0].mxu0
      %v4358 = vpop.f32.mrb[0].mxu0
      %v4359 = vadd.f32 %v3645, %v4358
      %v4360 = vpop.f32.mrb[0].mxu0
      %4361 = vmatprep.mubr.bf16.mxu0 %v3365
      %4362 = vmatmul.mubr.bf16.gmra.mrb[0].mxu0 %v3364
      %v4363 = vpop.f32.mrb[0].mxu0
      %v4364 = vadd.f32 %v3645, %v4363
      %v4365 = vpop.f32.mrb[0].mxu0
      %v4366 = vpop.f32.mrb[0].mxu0
      %v4367 = vadd.f32 %v3645, %v4366
      %v4368 = vpop.f32.mrb[0].mxu0
      %4369 = vmatprep.mubr.bf16.mxu0 %v3373
      %4370 = vmatmul.mubr.bf16.gmra.mrb[0].mxu0 %v3372
      %v4371 = vpop.f32.mrb[0].mxu0
      %v4372 = vadd.f32 %v3645, %v4371
      %v4373 = vpop.f32.mrb[0].mxu0
      %v4374 = vpop.f32.mrb[0].mxu0
      %v4375 = vadd.f32 %v3645, %v4374
      %v4376 = vpop.f32.mrb[0].mxu0
      %4377 = vmatprep.mubr.bf16.mxu0 %v3381
      %4378 = vmatmul.mubr.bf16.gmra.mrb[0].mxu0 %v3380
      %v4379 = vpop.f32.mrb[0].mxu0
      %v4380 = vadd.f32 %v3645, %v4379
      %v4381 = vpop.f32.mrb[0].mxu0
      %v4382 = vpop.f32.mrb[0].mxu0
      %v4383 = vadd.f32 %v3645, %v4382
      %v4384 = vpop.f32.mrb[0].mxu0
      %4385 = vmatprep.mubr.bf16.mxu0 %v3389
      %4386 = vmatmul.mubr.bf16.gmra.mrb[0].mxu0 %v3388
      %v4387 = vpop.f32.mrb[0].mxu0
      %v4388 = vadd.f32 %v3645, %v4387
      %v4389 = vpop.f32.mrb[0].mxu0
      %v4390 = vpop.f32.mrb[0].mxu0
      %v4391 = vadd.f32 %v3645, %v4390
      %v4392 = vpop.f32.mrb[0].mxu0
      %4393 = vmatprep.mubr.bf16.mxu0 %v3397
      %4394 = vmatmul.mubr.bf16.gmra.mrb[0].mxu0 %v3396
      %v4395 = vpop.f32.mrb[0].mxu0
      %v4396 = vadd.f32 %v3645, %v4395
      %v4397 = vpop.f32.mrb[0].mxu0
      %v4398 = vpop.f32.mrb[0].mxu0
      %v4399 = vadd.f32 %v3645, %v4398
      %v4400 = vpop.f32.mrb[0].mxu0
      %4401 = vmatprep.mubr.bf16.mxu0 %v3405
      %4402 = vmatmul.mubr.bf16.gmra.mrb[0].mxu0 %v3404
      %v4403 = vpop.f32.mrb[0].mxu0
      %v4404 = vadd.f32 %v3645, %v4403
      %v4405 = vpop.f32.mrb[0].mxu0
      %v4406 = vpop.f32.mrb[0].mxu0
      %v4407 = vadd.f32 %v3645, %v4406
      %v4408 = vpop.f32.mrb[0].mxu0
      %4409 = vmatprep.mubr.bf16.mxu0 %v3413
      %4410 = vmatmul.mubr.bf16.gmra.mrb[0].mxu0 %v3412
      %v4411 = vpop.f32.mrb[0].mxu0
      %v4412 = vadd.f32 %v3645, %v4411
      %v4413 = vpop.f32.mrb[0].mxu0
      %v4414 = vpop.f32.mrb[0].mxu0
      %v4415 = vadd.f32 %v3645, %v4414
      %v4416 = vpop.f32.mrb[0].mxu0
      %4417 = vmatprep.mubr.bf16.mxu0 %v3421
      %4418 = vmatmul.mubr.bf16.gmra.mrb[0].mxu0 %v3420
      %v4419 = vpop.f32.mrb[0].mxu0
      %v4420 = vadd.f32 %v3645, %v4419
      %v4421 = vpop.f32.mrb[0].mxu0
      %v4422 = vpop.f32.mrb[0].mxu0
      %v4423 = vadd.f32 %v3645, %v4422
      %v4424 = vpop.f32.mrb[0].mxu0
      %4425 = vmatprep.mubr.bf16.mxu0 %v3429
      %4426 = vmatmul.mubr.bf16.gmra.mrb[0].mxu0 %v3428
      %v4427 = vpop.f32.mrb[0].mxu0
      %v4428 = vadd.f32 %v3645, %v4427
      %v4429 = vpop.f32.mrb[0].mxu0
      %v4430 = vpop.f32.mrb[0].mxu0
      %v4431 = vadd.f32 %v3645, %v4430
      %v4432 = vpop.f32.mrb[0].mxu0
      %4433 = vmatprep.mubr.bf16.mxu0 %v3437
      %4434 = vmatmul.mubr.bf16.gmra.mrb[0].mxu0 %v3436
      %v4435 = vpop.f32.mrb[0].mxu0
      %v4436 = vadd.f32 %v3645, %v4435
      %v4437 = vpop.f32.mrb[0].mxu0
      %v4438 = vpop.f32.mrb[0].mxu0
      %v4439 = vadd.f32 %v3645, %v4438
      %v4440 = vpop.f32.mrb[0].mxu0
      %4441 = vmatprep.mubr.bf16.mxu0 %v3445
      %4442 = vmatmul.mubr.bf16.gmra.mrb[0].mxu0 %v3444
      %v4443 = vpop.f32.mrb[0].mxu0
      %v4444 = vadd.f32 %v3645, %v4443
      %v4445 = vpop.f32.mrb[0].mxu0
      %v4446 = vpop.f32.mrb[0].mxu0
      %v4447 = vadd.f32 %v3645, %v4446
      %v4448 = vpop.f32.mrb[0].mxu0
      %4449 = vmatprep.mubr.bf16.mxu0 %v3453
      %4450 = vmatmul.mubr.bf16.gmra.mrb[0].mxu0 %v3452
      %v4451 = vpop.f32.mrb[0].mxu0
      %v4452 = vadd.f32 %v3645, %v4451
      %v4453 = vpop.f32.mrb[0].mxu0
      %v4454 = vpop.f32.mrb[0].mxu0
      %v4455 = vadd.f32 %v3645, %v4454
      %v4456 = vpop.f32.mrb[0].mxu0
      %4457 = vmatprep.mubr.bf16.mxu0 %v3461
      %4458 = vmatmul.mubr.bf16.gmra.mrb[0].mxu0 %v3460
      %v4459 = vpop.f32.mrb[0].mxu0
      %v4460 = vadd.f32 %v3645, %v4459
      %v4461 = vpop.f32.mrb[0].mxu0
      %v4462 = vpop.f32.mrb[0].mxu0
      %v4463 = vadd.f32 %v3645, %v4462
      %v4464 = vpop.f32.mrb[0].mxu0
      %4465 = vmatprep.mubr.bf16.mxu0 %v3469
      %4466 = vmatmul.mubr.bf16.gmra.mrb[0].mxu0 %v3468
      %v4467 = vpop.f32.mrb[0].mxu0
      %v4468 = vadd.f32 %v3645, %v4467
      %v4469 = vpop.f32.mrb[0].mxu0
      %v4470 = vpop.f32.mrb[0].mxu0
      %v4471 = vadd.f32 %v3645, %v4470
      %v4472 = vpop.f32.mrb[0].mxu0
      %4473 = vmatprep.mubr.bf16.mxu0 %v3477
      %4474 = vmatmul.mubr.bf16.gmra.mrb[0].mxu0 %v3476
      %v4475 = vpop.f32.mrb[0].mxu0
      %v4476 = vadd.f32 %v3645, %v4475
      %v4477 = vpop.f32.mrb[0].mxu0
      %v4478 = vpop.f32.mrb[0].mxu0
      %v4479 = vadd.f32 %v3645, %v4478
      %v4480 = vpop.f32.mrb[0].mxu0
      %4481 = vmatprep.mubr.bf16.mxu0 %v3485
      %4482 = vmatmul.mubr.bf16.gmra.mrb[0].mxu0 %v3484
      %v4483 = vpop.f32.mrb[0].mxu0
      %v4484 = vadd.f32 %v3645, %v4483
      %v4485 = vpop.f32.mrb[0].mxu0
      %v4486 = vpop.f32.mrb[0].mxu0
      %v4487 = vadd.f32 %v3645, %v4486
      %v4488 = vpop.f32.mrb[0].mxu0
      %4489 = vmatprep.mubr.bf16.mxu0 %v3493
      %4490 = vmatmul.mubr.bf16.gmra.mrb[0].mxu0 %v3492
      %v4491 = vpop.f32.mrb[0].mxu0
      %v4492 = vadd.f32 %v3645, %v4491
      %v4493 = vpop.f32.mrb[0].mxu0
      %v4494 = vpop.f32.mrb[0].mxu0
      %v4495 = vadd.f32 %v3645, %v4494
      %v4496 = vpop.f32.mrb[0].mxu0
      %4497 = vmatprep.mubr.bf16.mxu0 %v3501
      %4498 = vmatmul.mubr.bf16.gmra.mrb[0].mxu0 %v3500
      %v4499 = vpop.f32.mrb[0].mxu0
      %v4500 = vadd.f32 %v3645, %v4499
      %v4501 = vpop.f32.mrb[0].mxu0
      %v4502 = vpop.f32.mrb[0].mxu0
      %v4503 = vadd.f32 %v3645, %v4502
      %v4504 = vpop.f32.mrb[0].mxu0
      %4505 = vmatprep.mubr.bf16.mxu0 %v3509
      %4506 = vmatmul.mubr.bf16.gmra.mrb[0].mxu0 %v3508
      %v4507 = vpop.f32.mrb[0].mxu0
      %v4508 = vadd.f32 %v3645, %v4507
      %v4509 = vpop.f32.mrb[0].mxu0
      %v4510 = vpop.f32.mrb[0].mxu0
      %v4511 = vadd.f32 %v3645, %v4510
      %v4512 = vpop.f32.mrb[0].mxu0
      %4513 = vmatprep.mubr.bf16.mxu0 %v3517
      %4514 = vmatmul.mubr.bf16.gmra.mrb[0].mxu0 %v3516
      %v4515 = vpop.f32.mrb[0].mxu0
      %v4516 = vadd.f32 %v3645, %v4515
      %v4517 = vpop.f32.mrb[0].mxu0
      %v4518 = vpop.f32.mrb[0].mxu0
      %v4519 = vadd.f32 %v3645, %v4518
      %v4520 = vpop.f32.mrb[0].mxu0
      %4521 = vmatprep.mubr.bf16.mxu0 %v3525
      %4522 = vmatmul.mubr.bf16.gmra.mrb[0].mxu0 %v3524
      %v4523 = vpop.f32.mrb[0].mxu0
      %v4524 = vadd.f32 %v3645, %v4523
      %v4525 = vpop.f32.mrb[0].mxu0
      %v4526 = vpop.f32.mrb[0].mxu0
      %v4527 = vadd.f32 %v3645, %v4526
      %v4528 = vpop.f32.mrb[0].mxu0
      %4529 = vmatprep.mubr.bf16.mxu0 %v3533
      %4530 = vmatmul.mubr.bf16.gmra.mrb[0].mxu0 %v3532
      %v4531 = vpop.f32.mrb[0].mxu0
      %v4532 = vadd.f32 %v3645, %v4531
      %v4533 = vpop.f32.mrb[0].mxu0
      %v4534 = vpop.f32.mrb[0].mxu0
      %v4535 = vadd.f32 %v3645, %v4534
      %v4536 = vpop.f32.mrb[0].mxu0
      %4537 = vmatprep.mubr.bf16.mxu0 %v3541
      %4538 = vmatmul.mubr.bf16.gmra.mrb[0].mxu0 %v3540
      %v4539 = vpop.f32.mrb[0].mxu0
      %v4540 = vadd.f32 %v3645, %v4539
      %v4541 = vpop.f32.mrb[0].mxu0
      %v4542 = vpop.f32.mrb[0].mxu0
      %v4543 = vadd.f32 %v3645, %v4542
      %v4544 = vpop.f32.mrb[0].mxu0
      %4545 = vmatprep.mubr.bf16.mxu0 %v3549
      %4546 = vmatmul.mubr.bf16.gmra.mrb[0].mxu0 %v3548
      %v4547 = vpop.f32.mrb[0].mxu0
      %v4548 = vadd.f32 %v3645, %v4547
      %v4549 = vpop.f32.mrb[0].mxu0
      %v4550 = vpop.f32.mrb[0].mxu0
      %v4551 = vadd.f32 %v3645, %v4550
      %v4552 = vpop.f32.mrb[0].mxu0
      %4553 = vmatprep.mubr.bf16.mxu0 %v3557
      %4554 = vmatmul.mubr.bf16.gmra.mrb[0].mxu0 %v3556
      %v4555 = vpop.f32.mrb[0].mxu0
      %v4556 = vadd.f32 %v3645, %v4555
      %v4557 = vpop.f32.mrb[0].mxu0
      %v4558 = vpop.f32.mrb[0].mxu0
      %v4559 = vadd.f32 %v3645, %v4558
      %v4560 = vpop.f32.mrb[0].mxu0
      %4561 = vmatprep.mubr.bf16.mxu0 %v3565
      %4562 = vmatmul.mubr.bf16.gmra.mrb[0].mxu0 %v3564
      %v4563 = vpop.f32.mrb[0].mxu0
      %v4564 = vadd.f32 %v3645, %v4563
      %v4565 = vpop.f32.mrb[0].mxu0
      %v4566 = vpop.f32.mrb[0].mxu0
      %v4567 = vadd.f32 %v3645, %v4566
      %v4568 = vpop.f32.mrb[0].mxu0
      %4569 = vmatprep.mubr.bf16.mxu0 %v3573
      %4570 = vmatmul.mubr.bf16.gmra.mrb[0].mxu0 %v3572
      %v4571 = vpop.f32.mrb[0].mxu0
      %v4572 = vadd.f32 %v3645, %v4571
      %v4573 = vpop.f32.mrb[0].mxu0
      %v4574 = vpop.f32.mrb[0].mxu0
      %v4575 = vadd.f32 %v3645, %v4574
      %v4576 = vpop.f32.mrb[0].mxu0
      %4577 = vmatprep.mubr.bf16.mxu0 %v3581
      %4578 = vmatmul.mubr.bf16.gmra.mrb[0].mxu0 %v3580
      %v4579 = vpop.f32.mrb[0].mxu0
      %v4580 = vadd.f32 %v3645, %v4579
      %v4581 = vpop.f32.mrb[0].mxu0
      %v4582 = vpop.f32.mrb[0].mxu0
      %v4583 = vadd.f32 %v3645, %v4582
      %v4584 = vpop.f32.mrb[0].mxu0
      %4585 = vmatprep.mubr.bf16.mxu0 %v3589
      %4586 = vmatmul.mubr.bf16.gmra.mrb[0].mxu0 %v3588
      %v4587 = vpop.f32.mrb[0].mxu0
      %v4588 = vadd.f32 %v3645, %v4587
      %v4589 = vpop.f32.mrb[0].mxu0
      %v4590 = vpop.f32.mrb[0].mxu0
      %v4591 = vadd.f32 %v3645, %v4590
      %v4592 = vpop.f32.mrb[0].mxu0
      %4593 = vmatprep.mubr.bf16.mxu0 %v3597
      %4594 = vmatmul.mubr.bf16.gmra.mrb[0].mxu0 %v3596
      %v4595 = vpop.f32.mrb[0].mxu0
      %v4596 = vadd.f32 %v3645, %v4595
      %v4597 = vpop.f32.mrb[0].mxu0
      %v4598 = vpop.f32.mrb[0].mxu0
      %v4599 = vadd.f32 %v3645, %v4598
      %v4600 = vpop.f32.mrb[0].mxu0
      %4601 = vmatprep.mubr.bf16.mxu0 %v3605
      %4602 = vmatmul.mubr.bf16.gmra.mrb[0].mxu0 %v3604
      %v4603 = vpop.f32.mrb[0].mxu0
      %v4604 = vadd.f32 %v3645, %v4603
      %v4605 = vpop.f32.mrb[0].mxu0
      %v4606 = vpop.f32.mrb[0].mxu0
      %v4607 = vadd.f32 %v3645, %v4606
      %v4608 = vpop.f32.mrb[0].mxu0
      %4609 = vdwg.mxu0
      %4610 = vmatprep.subr.bf16.mxu0 0
      %4611 = vmatpush1.bf16.msra.mxu0 %v3711
      %4612 = vmatprep.subr.bf16.mxu0 0
      %4613 = vmatpush1.bf16.msra.mxu0 %v3712
      %4614 = vmatprep.subr.bf16.mxu0 0
      %4615 = vmatpush1.bf16.msra.mxu0 %v3713
      %4616 = vmatprep.subr.bf16.mxu0 0
      %4617 = vmatpush1.bf16.msra.mxu0 %v3714
      %4618 = vmatprep.subr.bf16.mxu0 0
      %4619 = vmatpush1.bf16.msra.mxu0 %v3715
      %4620 = vmatprep.subr.bf16.mxu0 0
      %4621 = vmatpush1.bf16.msra.mxu0 %v3716
      %4622 = vmatprep.subr.bf16.mxu0 0
      %4623 = vmatpush1.bf16.msra.mxu0 %v3717
      %4624 = vmatprep.subr.bf16.mxu0 0
      %4625 = vmatpush1.bf16.msra.mxu0 %v3718
      %4626 = vmatprep.subr.bf16.mxu0 0
      %4627 = vmatpush1.bf16.msra.mxu0 %v3719
      %4628 = vmatprep.subr.bf16.mxu0 0
      %4629 = vmatpush1.bf16.msra.mxu0 %v3720
      %4630 = vmatprep.subr.bf16.mxu0 0
      %4631 = vmatpush1.bf16.msra.mxu0 %v3721
      %4632 = vmatprep.subr.bf16.mxu0 0
      %4633 = vmatpush1.bf16.msra.mxu0 %v3722
      %4634 = vmatprep.subr.bf16.mxu0 0
      %4635 = vmatpush1.bf16.msra.mxu0 %v3723
      %4636 = vmatprep.subr.bf16.mxu0 0
      %4637 = vmatpush1.bf16.msra.mxu0 %v3724
      %4638 = vmatprep.subr.bf16.mxu0 0
      %4639 = vmatpush1.bf16.msra.mxu0 %v3725
      %4640 = vmatprep.subr.bf16.mxu0 0
      %4641 = vmatpush1.bf16.msra.mxu0 %v3726
      %4642 = vmatprep.mubr.bf16.mxu0 %v3359
      %4643 = vmatmul.mubr.bf16.gmra.mrb[0].mxu0 %v3358
      %v4644 = vpop.f32.mrb[0].mxu0
      %v4645 = vadd.f32 %v3645, %v4644
      %v4646 = vpop.f32.mrb[0].mxu0
      %v4647 = vpop.f32.mrb[0].mxu0
      %v4648 = vadd.f32 %v3645, %v4647
      %v4649 = vpop.f32.mrb[0].mxu0
      %4650 = vmatprep.mubr.bf16.mxu0 %v3367
      %4651 = vmatmul.mubr.bf16.gmra.mrb[0].mxu0 %v3366
      %v4652 = vpop.f32.mrb[0].mxu0
      %v4653 = vadd.f32 %v3645, %v4652
      %v4654 = vpop.f32.mrb[0].mxu0
      %v4655 = vpop.f32.mrb[0].mxu0
      %v4656 = vadd.f32 %v3645, %v4655
      %v4657 = vpop.f32.mrb[0].mxu0
      %4658 = vmatprep.mubr.bf16.mxu0 %v3375
      %4659 = vmatmul.mubr.bf16.gmra.mrb[0].mxu0 %v3374
      %v4660 = vpop.f32.mrb[0].mxu0
      %v4661 = vadd.f32 %v3645, %v4660
      %v4662 = vpop.f32.mrb[0].mxu0
      %v4663 = vpop.f32.mrb[0].mxu0
      %v4664 = vadd.f32 %v3645, %v4663
      %v4665 = vpop.f32.mrb[0].mxu0
      %4666 = vmatprep.mubr.bf16.mxu0 %v3383
      %4667 = vmatmul.mubr.bf16.gmra.mrb[0].mxu0 %v3382
      %v4668 = vpop.f32.mrb[0].mxu0
      %v4669 = vadd.f32 %v3645, %v4668
      %v4670 = vpop.f32.mrb[0].mxu0
      %v4671 = vpop.f32.mrb[0].mxu0
      %v4672 = vadd.f32 %v3645, %v4671
      %v4673 = vpop.f32.mrb[0].mxu0
      %4674 = vmatprep.mubr.bf16.mxu0 %v3391
      %4675 = vmatmul.mubr.bf16.gmra.mrb[0].mxu0 %v3390
      %v4676 = vpop.f32.mrb[0].mxu0
      %v4677 = vadd.f32 %v3645, %v4676
      %v4678 = vpop.f32.mrb[0].mxu0
      %v4679 = vpop.f32.mrb[0].mxu0
      %v4680 = vadd.f32 %v3645, %v4679
      %v4681 = vpop.f32.mrb[0].mxu0
      %4682 = vmatprep.mubr.bf16.mxu0 %v3399
      %4683 = vmatmul.mubr.bf16.gmra.mrb[0].mxu0 %v3398
      %v4684 = vpop.f32.mrb[0].mxu0
      %v4685 = vadd.f32 %v3645, %v4684
      %v4686 = vpop.f32.mrb[0].mxu0
      %v4687 = vpop.f32.mrb[0].mxu0
      %v4688 = vadd.f32 %v3645, %v4687
      %v4689 = vpop.f32.mrb[0].mxu0
      %4690 = vmatprep.mubr.bf16.mxu0 %v3407
      %4691 = vmatmul.mubr.bf16.gmra.mrb[0].mxu0 %v3406
      %v4692 = vpop.f32.mrb[0].mxu0
      %v4693 = vadd.f32 %v3645, %v4692
      %v4694 = vpop.f32.mrb[0].mxu0
      %v4695 = vpop.f32.mrb[0].mxu0
      %v4696 = vadd.f32 %v3645, %v4695
      %v4697 = vpop.f32.mrb[0].mxu0
      %4698 = vmatprep.mubr.bf16.mxu0 %v3415
      %4699 = vmatmul.mubr.bf16.gmra.mrb[0].mxu0 %v3414
      %v4700 = vpop.f32.mrb[0].mxu0
      %v4701 = vadd.f32 %v3645, %v4700
      %v4702 = vpop.f32.mrb[0].mxu0
      %v4703 = vpop.f32.mrb[0].mxu0
      %v4704 = vadd.f32 %v3645, %v4703
      %v4705 = vpop.f32.mrb[0].mxu0
      %4706 = vmatprep.mubr.bf16.mxu0 %v3423
      %4707 = vmatmul.mubr.bf16.gmra.mrb[0].mxu0 %v3422
      %v4708 = vpop.f32.mrb[0].mxu0
      %v4709 = vadd.f32 %v3645, %v4708
      %v4710 = vpop.f32.mrb[0].mxu0
      %v4711 = vpop.f32.mrb[0].mxu0
      %v4712 = vadd.f32 %v3645, %v4711
      %v4713 = vpop.f32.mrb[0].mxu0
      %4714 = vmatprep.mubr.bf16.mxu0 %v3431
      %4715 = vmatmul.mubr.bf16.gmra.mrb[0].mxu0 %v3430
      %v4716 = vpop.f32.mrb[0].mxu0
      %v4717 = vadd.f32 %v3645, %v4716
      %v4718 = vpop.f32.mrb[0].mxu0
      %v4719 = vpop.f32.mrb[0].mxu0
      %v4720 = vadd.f32 %v3645, %v4719
      %v4721 = vpop.f32.mrb[0].mxu0
      %4722 = vmatprep.mubr.bf16.mxu0 %v3439
      %4723 = vmatmul.mubr.bf16.gmra.mrb[0].mxu0 %v3438
      %v4724 = vpop.f32.mrb[0].mxu0
      %v4725 = vadd.f32 %v3645, %v4724
      %v4726 = vpop.f32.mrb[0].mxu0
      %v4727 = vpop.f32.mrb[0].mxu0
      %v4728 = vadd.f32 %v3645, %v4727
      %v4729 = vpop.f32.mrb[0].mxu0
      %4730 = vmatprep.mubr.bf16.mxu0 %v3447
      %4731 = vmatmul.mubr.bf16.gmra.mrb[0].mxu0 %v3446
      %v4732 = vpop.f32.mrb[0].mxu0
      %v4733 = vadd.f32 %v3645, %v4732
      %v4734 = vpop.f32.mrb[0].mxu0
      %v4735 = vpop.f32.mrb[0].mxu0
      %v4736 = vadd.f32 %v3645, %v4735
      %v4737 = vpop.f32.mrb[0].mxu0
      %4738 = vmatprep.mubr.bf16.mxu0 %v3455
      %4739 = vmatmul.mubr.bf16.gmra.mrb[0].mxu0 %v3454
      %v4740 = vpop.f32.mrb[0].mxu0
      %v4741 = vadd.f32 %v3645, %v4740
      %v4742 = vpop.f32.mrb[0].mxu0
      %v4743 = vpop.f32.mrb[0].mxu0
      %v4744 = vadd.f32 %v3645, %v4743
      %v4745 = vpop.f32.mrb[0].mxu0
      %4746 = vmatprep.mubr.bf16.mxu0 %v3463
      %4747 = vmatmul.mubr.bf16.gmra.mrb[0].mxu0 %v3462
      %v4748 = vpop.f32.mrb[0].mxu0
      %v4749 = vadd.f32 %v3645, %v4748
      %v4750 = vpop.f32.mrb[0].mxu0
      %v4751 = vpop.f32.mrb[0].mxu0
      %v4752 = vadd.f32 %v3645, %v4751
      %v4753 = vpop.f32.mrb[0].mxu0
      %4754 = vmatprep.mubr.bf16.mxu0 %v3471
      %4755 = vmatmul.mubr.bf16.gmra.mrb[0].mxu0 %v3470
      %v4756 = vpop.f32.mrb[0].mxu0
      %v4757 = vadd.f32 %v3645, %v4756
      %v4758 = vpop.f32.mrb[0].mxu0
      %v4759 = vpop.f32.mrb[0].mxu0
      %v4760 = vadd.f32 %v3645, %v4759
      %v4761 = vpop.f32.mrb[0].mxu0
      %4762 = vmatprep.mubr.bf16.mxu0 %v3479
      %4763 = vmatmul.mubr.bf16.gmra.mrb[0].mxu0 %v3478
      %v4764 = vpop.f32.mrb[0].mxu0
      %v4765 = vadd.f32 %v3645, %v4764
      %v4766 = vpop.f32.mrb[0].mxu0
      %v4767 = vpop.f32.mrb[0].mxu0
      %v4768 = vadd.f32 %v3645, %v4767
      %v4769 = vpop.f32.mrb[0].mxu0
      %4770 = vmatprep.mubr.bf16.mxu0 %v3487
      %4771 = vmatmul.mubr.bf16.gmra.mrb[0].mxu0 %v3486
      %v4772 = vpop.f32.mrb[0].mxu0
      %v4773 = vadd.f32 %v3645, %v4772
      %v4774 = vpop.f32.mrb[0].mxu0
      %v4775 = vpop.f32.mrb[0].mxu0
      %v4776 = vadd.f32 %v3645, %v4775
      %v4777 = vpop.f32.mrb[0].mxu0
      %4778 = vmatprep.mubr.bf16.mxu0 %v3495
      %4779 = vmatmul.mubr.bf16.gmra.mrb[0].mxu0 %v3494
      %v4780 = vpop.f32.mrb[0].mxu0
      %v4781 = vadd.f32 %v3645, %v4780
      %v4782 = vpop.f32.mrb[0].mxu0
      %v4783 = vpop.f32.mrb[0].mxu0
      %v4784 = vadd.f32 %v3645, %v4783
      %v4785 = vpop.f32.mrb[0].mxu0
      %4786 = vmatprep.mubr.bf16.mxu0 %v3503
      %4787 = vmatmul.mubr.bf16.gmra.mrb[0].mxu0 %v3502
      %v4788 = vpop.f32.mrb[0].mxu0
      %v4789 = vadd.f32 %v3645, %v4788
      %v4790 = vpop.f32.mrb[0].mxu0
      %v4791 = vpop.f32.mrb[0].mxu0
      %v4792 = vadd.f32 %v3645, %v4791
      %v4793 = vpop.f32.mrb[0].mxu0
      %4794 = vmatprep.mubr.bf16.mxu0 %v3511
      %4795 = vmatmul.mubr.bf16.gmra.mrb[0].mxu0 %v3510
      %v4796 = vpop.f32.mrb[0].mxu0
      %v4797 = vadd.f32 %v3645, %v4796
      %v4798 = vpop.f32.mrb[0].mxu0
      %v4799 = vpop.f32.mrb[0].mxu0
      %v4800 = vadd.f32 %v3645, %v4799
      %v4801 = vpop.f32.mrb[0].mxu0
      %4802 = vmatprep.mubr.bf16.mxu0 %v3519
      %4803 = vmatmul.mubr.bf16.gmra.mrb[0].mxu0 %v3518
      %v4804 = vpop.f32.mrb[0].mxu0
      %v4805 = vadd.f32 %v3645, %v4804
      %v4806 = vpop.f32.mrb[0].mxu0
      %v4807 = vpop.f32.mrb[0].mxu0
      %v4808 = vadd.f32 %v3645, %v4807
      %v4809 = vpop.f32.mrb[0].mxu0
      %4810 = vmatprep.mubr.bf16.mxu0 %v3527
      %4811 = vmatmul.mubr.bf16.gmra.mrb[0].mxu0 %v3526
      %v4812 = vpop.f32.mrb[0].mxu0
      %v4813 = vadd.f32 %v3645, %v4812
      %v4814 = vpop.f32.mrb[0].mxu0
      %v4815 = vpop.f32.mrb[0].mxu0
      %v4816 = vadd.f32 %v3645, %v4815
      %v4817 = vpop.f32.mrb[0].mxu0
      %4818 = vmatprep.mubr.bf16.mxu0 %v3535
      %4819 = vmatmul.mubr.bf16.gmra.mrb[0].mxu0 %v3534
      %v4820 = vpop.f32.mrb[0].mxu0
      %v4821 = vadd.f32 %v3645, %v4820
      %v4822 = vpop.f32.mrb[0].mxu0
      %v4823 = vpop.f32.mrb[0].mxu0
      %v4824 = vadd.f32 %v3645, %v4823
      %v4825 = vpop.f32.mrb[0].mxu0
      %4826 = vmatprep.mubr.bf16.mxu0 %v3543
      %4827 = vmatmul.mubr.bf16.gmra.mrb[0].mxu0 %v3542
      %v4828 = vpop.f32.mrb[0].mxu0
      %v4829 = vadd.f32 %v3645, %v4828
      %v4830 = vpop.f32.mrb[0].mxu0
      %v4831 = vpop.f32.mrb[0].mxu0
      %v4832 = vadd.f32 %v3645, %v4831
      %v4833 = vpop.f32.mrb[0].mxu0
      %4834 = vmatprep.mubr.bf16.mxu0 %v3551
      %4835 = vmatmul.mubr.bf16.gmra.mrb[0].mxu0 %v3550
      %v4836 = vpop.f32.mrb[0].mxu0
      %v4837 = vadd.f32 %v3645, %v4836
      %v4838 = vpop.f32.mrb[0].mxu0
      %v4839 = vpop.f32.mrb[0].mxu0
      %v4840 = vadd.f32 %v3645, %v4839
      %v4841 = vpop.f32.mrb[0].mxu0
      %4842 = vmatprep.mubr.bf16.mxu0 %v3559
      %4843 = vmatmul.mubr.bf16.gmra.mrb[0].mxu0 %v3558
      %v4844 = vpop.f32.mrb[0].mxu0
      %v4845 = vadd.f32 %v3645, %v4844
      %v4846 = vpop.f32.mrb[0].mxu0
      %v4847 = vpop.f32.mrb[0].mxu0
      %v4848 = vadd.f32 %v3645, %v4847
      %v4849 = vpop.f32.mrb[0].mxu0
      %4850 = vmatprep.mubr.bf16.mxu0 %v3567
      %4851 = vmatmul.mubr.bf16.gmra.mrb[0].mxu0 %v3566
      %v4852 = vpop.f32.mrb[0].mxu0
      %v4853 = vadd.f32 %v3645, %v4852
      %v4854 = vpop.f32.mrb[0].mxu0
      %v4855 = vpop.f32.mrb[0].mxu0
      %v4856 = vadd.f32 %v3645, %v4855
      %v4857 = vpop.f32.mrb[0].mxu0
      %4858 = vmatprep.mubr.bf16.mxu0 %v3575
      %4859 = vmatmul.mubr.bf16.gmra.mrb[0].mxu0 %v3574
      %v4860 = vpop.f32.mrb[0].mxu0
      %v4861 = vadd.f32 %v3645, %v4860
      %v4862 = vpop.f32.mrb[0].mxu0
      %v4863 = vpop.f32.mrb[0].mxu0
      %v4864 = vadd.f32 %v3645, %v4863
      %v4865 = vpop.f32.mrb[0].mxu0
      %4866 = vmatprep.mubr.bf16.mxu0 %v3583
      %4867 = vmatmul.mubr.bf16.gmra.mrb[0].mxu0 %v3582
      %v4868 = vpop.f32.mrb[0].mxu0
      %v4869 = vadd.f32 %v3645, %v4868
      %v4870 = vpop.f32.mrb[0].mxu0
      %v4871 = vpop.f32.mrb[0].mxu0
      %v4872 = vadd.f32 %v3645, %v4871
      %v4873 = vpop.f32.mrb[0].mxu0
      %4874 = vmatprep.mubr.bf16.mxu0 %v3591
      %4875 = vmatmul.mubr.bf16.gmra.mrb[0].mxu0 %v3590
      %v4876 = vpop.f32.mrb[0].mxu0
      %v4877 = vadd.f32 %v3645, %v4876
      %v4878 = vpop.f32.mrb[0].mxu0
      %v4879 = vpop.f32.mrb[0].mxu0
      %v4880 = vadd.f32 %v3645, %v4879
      %v4881 = vpop.f32.mrb[0].mxu0
      %4882 = vmatprep.mubr.bf16.mxu0 %v3599
      %4883 = vmatmul.mubr.bf16.gmra.mrb[0].mxu0 %v3598
      %v4884 = vpop.f32.mrb[0].mxu0
      %v4885 = vadd.f32 %v3645, %v4884
      %v4886 = vpop.f32.mrb[0].mxu0
      %v4887 = vpop.f32.mrb[0].mxu0
      %v4888 = vadd.f32 %v3645, %v4887
      %v4889 = vpop.f32.mrb[0].mxu0
      %4890 = vmatprep.mubr.bf16.mxu0 %v3607
      %4891 = vmatmul.mubr.bf16.gmra.mrb[0].mxu0 %v3606
      %v4892 = vpop.f32.mrb[0].mxu0
      %v4893 = vadd.f32 %v3645, %v4892
      %v4894 = vpop.f32.mrb[0].mxu0
      %v4895 = vpop.f32.mrb[0].mxu0
      %v4896 = vadd.f32 %v3645, %v4895
      %v4897 = vpop.f32.mrb[0].mxu0
      %4898 = vdwg.mxu0
      %4899 = vst [vmem:[%s231] sm:$0xff] %v3778
      %4900 = vst [vmem:[%s231 + $0x8] sm:$0xff] %v4067
      %4901 = vst [vmem:[%s231 + $0x10] sm:$0xff] %v4356
      %4902 = vst [vmem:[%s231 + $0x18] sm:$0xff] %v4645
      %4903 = vst [vmem:[%s231 + $0x20] sm:$0xff] %v3781
      %4904 = vst [vmem:[%s231 + $0x28] sm:$0xff] %v4070
      %4905 = vst [vmem:[%s231 + $0x30] sm:$0xff] %v4359
      %4906 = vst [vmem:[%s231 + $0x38] sm:$0xff] %v4648
      %4907 = vst [vmem:[%s231 + $0x40] sm:$0xff] %v3786
      %4908 = vst [vmem:[%s231 + $0x48] sm:$0xff] %v4075
      %4909 = vst [vmem:[%s231 + $0x50] sm:$0xff] %v4364
      %4910 = vst [vmem:[%s231 + $0x58] sm:$0xff] %v4653
      %4911 = vst [vmem:[%s231 + $0x60] sm:$0xff] %v3789
      %4912 = vst [vmem:[%s231 + $0x68] sm:$0xff] %v4078
      %4913 = vst [vmem:[%s231 + $0x70] sm:$0xff] %v4367
      %4914 = vst [vmem:[%s231 + $0x78] sm:$0xff] %v4656
      %4915 = vst [vmem:[%s231 + $0x80] sm:$0xff] %v3794
      %4916 = vst [vmem:[%s231 + $0x88] sm:$0xff] %v4083
      %4917 = vst [vmem:[%s231 + $0x90] sm:$0xff] %v4372
      %4918 = vst [vmem:[%s231 + $0x98] sm:$0xff] %v4661
      %4919 = vst [vmem:[%s231 + $0xa0] sm:$0xff] %v3797
      %4920 = vst [vmem:[%s231 + $0xa8] sm:$0xff] %v4086
      %4921 = vst [vmem:[%s231 + $0xb0] sm:$0xff] %v4375
      %4922 = vst [vmem:[%s231 + $0xb8] sm:$0xff] %v4664
      %4923 = vst [vmem:[%s231 + $0xc0] sm:$0xff] %v3802
      %4924 = vst [vmem:[%s231 + $0xc8] sm:$0xff] %v4091
      %4925 = vst [vmem:[%s231 + $0xd0] sm:$0xff] %v4380
      %4926 = vst [vmem:[%s231 + $0xd8] sm:$0xff] %v4669
      %4927 = vst [vmem:[%s231 + $0xe0] sm:$0xff] %v3805
      %4928 = vst [vmem:[%s231 + $0xe8] sm:$0xff] %v4094
      %4929 = vst [vmem:[%s231 + $0xf0] sm:$0xff] %v4383
      %4930 = vst [vmem:[%s231 + $0xf8] sm:$0xff] %v4672
      %4931 = vst [vmem:[%s231 + $0x100] sm:$0xff] %v3810
      %4932 = vst [vmem:[%s231 + $0x108] sm:$0xff] %v4099
      %4933 = vst [vmem:[%s231 + $0x110] sm:$0xff] %v4388
      %4934 = vst [vmem:[%s231 + $0x118] sm:$0xff] %v4677
      %4935 = vst [vmem:[%s231 + $0x120] sm:$0xff] %v3813
      %4936 = vst [vmem:[%s231 + $0x128] sm:$0xff] %v4102
      %4937 = vst [vmem:[%s231 + $0x130] sm:$0xff] %v4391
      %4938 = vst [vmem:[%s231 + $0x138] sm:$0xff] %v4680
      %4939 = vst [vmem:[%s231 + $0x140] sm:$0xff] %v3818
      %4940 = vst [vmem:[%s231 + $0x148] sm:$0xff] %v4107
      %4941 = vst [vmem:[%s231 + $0x150] sm:$0xff] %v4396
      %4942 = vst [vmem:[%s231 + $0x158] sm:$0xff] %v4685
      %4943 = vst [vmem:[%s231 + $0x160] sm:$0xff] %v3821
      %4944 = vst [vmem:[%s231 + $0x168] sm:$0xff] %v4110
      %4945 = vst [vmem:[%s231 + $0x170] sm:$0xff] %v4399
      %4946 = vst [vmem:[%s231 + $0x178] sm:$0xff] %v4688
      %4947 = vst [vmem:[%s231 + $0x180] sm:$0xff] %v3826
      %4948 = vst [vmem:[%s231 + $0x188] sm:$0xff] %v4115
      %4949 = vst [vmem:[%s231 + $0x190] sm:$0xff] %v4404
      %4950 = vst [vmem:[%s231 + $0x198] sm:$0xff] %v4693
      %4951 = vst [vmem:[%s231 + $0x1a0] sm:$0xff] %v3829
      %4952 = vst [vmem:[%s231 + $0x1a8] sm:$0xff] %v4118
      %4953 = vst [vmem:[%s231 + $0x1b0] sm:$0xff] %v4407
      %4954 = vst [vmem:[%s231 + $0x1b8] sm:$0xff] %v4696
      %4955 = vst [vmem:[%s231 + $0x1c0] sm:$0xff] %v3834
      %4956 = vst [vmem:[%s231 + $0x1c8] sm:$0xff] %v4123
      %4957 = vst [vmem:[%s231 + $0x1d0] sm:$0xff] %v4412
      %4958 = vst [vmem:[%s231 + $0x1d8] sm:$0xff] %v4701
      %4959 = vst [vmem:[%s231 + $0x1e0] sm:$0xff] %v3837
      %4960 = vst [vmem:[%s231 + $0x1e8] sm:$0xff] %v4126
      %4961 = vst [vmem:[%s231 + $0x1f0] sm:$0xff] %v4415
      %4962 = vst [vmem:[%s231 + $0x1f8] sm:$0xff] %v4704
      %4963 = vst [vmem:[%s231 + $0x200] sm:$0xff] %v3842
      %4964 = vst [vmem:[%s231 + $0x208] sm:$0xff] %v4131
      %4965 = vst [vmem:[%s231 + $0x210] sm:$0xff] %v4420
      %4966 = vst [vmem:[%s231 + $0x218] sm:$0xff] %v4709
      %4967 = vst [vmem:[%s231 + $0x220] sm:$0xff] %v3845
      %4968 = vst [vmem:[%s231 + $0x228] sm:$0xff] %v4134
      %4969 = vst [vmem:[%s231 + $0x230] sm:$0xff] %v4423
      %4970 = vst [vmem:[%s231 + $0x238] sm:$0xff] %v4712
      %4971 = vst [vmem:[%s231 + $0x240] sm:$0xff] %v3850
      %4972 = vst [vmem:[%s231 + $0x248] sm:$0xff] %v4139
      %4973 = vst [vmem:[%s231 + $0x250] sm:$0xff] %v4428
      %4974 = vst [vmem:[%s231 + $0x258] sm:$0xff] %v4717
      %4975 = vst [vmem:[%s231 + $0x260] sm:$0xff] %v3853
      %4976 = vst [vmem:[%s231 + $0x268] sm:$0xff] %v4142
      %4977 = vst [vmem:[%s231 + $0x270] sm:$0xff] %v4431
      %4978 = vst [vmem:[%s231 + $0x278] sm:$0xff] %v4720
      %4979 = vst [vmem:[%s231 + $0x280] sm:$0xff] %v3858
      %4980 = vst [vmem:[%s231 + $0x288] sm:$0xff] %v4147
      %4981 = vst [vmem:[%s231 + $0x290] sm:$0xff] %v4436
      %4982 = vst [vmem:[%s231 + $0x298] sm:$0xff] %v4725
      %4983 = vst [vmem:[%s231 + $0x2a0] sm:$0xff] %v3861
      %4984 = vst [vmem:[%s231 + $0x2a8] sm:$0xff] %v4150
      %4985 = vst [vmem:[%s231 + $0x2b0] sm:$0xff] %v4439
      %4986 = vst [vmem:[%s231 + $0x2b8] sm:$0xff] %v4728
      %4987 = vst [vmem:[%s231 + $0x2c0] sm:$0xff] %v3866
      %4988 = vst [vmem:[%s231 + $0x2c8] sm:$0xff] %v4155
      %4989 = vst [vmem:[%s231 + $0x2d0] sm:$0xff] %v4444
      %4990 = vst [vmem:[%s231 + $0x2d8] sm:$0xff] %v4733
      %4991 = vst [vmem:[%s231 + $0x2e0] sm:$0xff] %v3869
      %4992 = vst [vmem:[%s231 + $0x2e8] sm:$0xff] %v4158
      %4993 = vst [vmem:[%s231 + $0x2f0] sm:$0xff] %v4447
      %4994 = vst [vmem:[%s231 + $0x2f8] sm:$0xff] %v4736
      %4995 = vst [vmem:[%s231 + $0x300] sm:$0xff] %v3874
      %4996 = vst [vmem:[%s231 + $0x308] sm:$0xff] %v4163
      %4997 = vst [vmem:[%s231 + $0x310] sm:$0xff] %v4452
      %4998 = vst [vmem:[%s231 + $0x318] sm:$0xff] %v4741
      %4999 = vst [vmem:[%s231 + $0x320] sm:$0xff] %v3877
      %5000 = vst [vmem:[%s231 + $0x328] sm:$0xff] %v4166
      %5001 = vst [vmem:[%s231 + $0x330] sm:$0xff] %v4455
      %5002 = vst [vmem:[%s231 + $0x338] sm:$0xff] %v4744
      %5003 = vst [vmem:[%s231 + $0x340] sm:$0xff] %v3882
      %5004 = vst [vmem:[%s231 + $0x348] sm:$0xff] %v4171
      %5005 = vst [vmem:[%s231 + $0x350] sm:$0xff] %v4460
      %5006 = vst [vmem:[%s231 + $0x358] sm:$0xff] %v4749
      %5007 = vst [vmem:[%s231 + $0x360] sm:$0xff] %v3885
      %5008 = vst [vmem:[%s231 + $0x368] sm:$0xff] %v4174
      %5009 = vst [vmem:[%s231 + $0x370] sm:$0xff] %v4463
      %5010 = vst [vmem:[%s231 + $0x378] sm:$0xff] %v4752
      %5011 = vst [vmem:[%s231 + $0x380] sm:$0xff] %v3890
      %5012 = vst [vmem:[%s231 + $0x388] sm:$0xff] %v4179
      %5013 = vst [vmem:[%s231 + $0x390] sm:$0xff] %v4468
      %5014 = vst [vmem:[%s231 + $0x398] sm:$0xff] %v4757
      %5015 = vst [vmem:[%s231 + $0x3a0] sm:$0xff] %v3893
      %5016 = vst [vmem:[%s231 + $0x3a8] sm:$0xff] %v4182
      %5017 = vst [vmem:[%s231 + $0x3b0] sm:$0xff] %v4471
      %5018 = vst [vmem:[%s231 + $0x3b8] sm:$0xff] %v4760
      %5019 = vst [vmem:[%s231 + $0x3c0] sm:$0xff] %v3898
      %5020 = vst [vmem:[%s231 + $0x3c8] sm:$0xff] %v4187
      %5021 = vst [vmem:[%s231 + $0x3d0] sm:$0xff] %v4476
      %5022 = vst [vmem:[%s231 + $0x3d8] sm:$0xff] %v4765
      %5023 = vst [vmem:[%s231 + $0x3e0] sm:$0xff] %v3901
      %5024 = vst [vmem:[%s231 + $0x3e8] sm:$0xff] %v4190
      %5025 = vst [vmem:[%s231 + $0x3f0] sm:$0xff] %v4479
      %5026 = vst [vmem:[%s231 + $0x3f8] sm:$0xff] %v4768
      %5027 = vst [vmem:[%s231 + $0x400] sm:$0xff] %v3906
      %5028 = vst [vmem:[%s231 + $0x408] sm:$0xff] %v4195
      %5029 = vst [vmem:[%s231 + $0x410] sm:$0xff] %v4484
      %5030 = vst [vmem:[%s231 + $0x418] sm:$0xff] %v4773
      %5031 = vst [vmem:[%s231 + $0x420] sm:$0xff] %v3909
      %5032 = vst [vmem:[%s231 + $0x428] sm:$0xff] %v4198
      %5033 = vst [vmem:[%s231 + $0x430] sm:$0xff] %v4487
      %5034 = vst [vmem:[%s231 + $0x438] sm:$0xff] %v4776
      %5035 = vst [vmem:[%s231 + $0x440] sm:$0xff] %v3914
      %5036 = vst [vmem:[%s231 + $0x448] sm:$0xff] %v4203
      %5037 = vst [vmem:[%s231 + $0x450] sm:$0xff] %v4492
      %5038 = vst [vmem:[%s231 + $0x458] sm:$0xff] %v4781
      %5039 = vst [vmem:[%s231 + $0x460] sm:$0xff] %v3917
      %5040 = vst [vmem:[%s231 + $0x468] sm:$0xff] %v4206
      %5041 = vst [vmem:[%s231 + $0x470] sm:$0xff] %v4495
      %5042 = vst [vmem:[%s231 + $0x478] sm:$0xff] %v4784
      %5043 = vst [vmem:[%s231 + $0x480] sm:$0xff] %v3922
      %5044 = vst [vmem:[%s231 + $0x488] sm:$0xff] %v4211
      %5045 = vst [vmem:[%s231 + $0x490] sm:$0xff] %v4500
      %5046 = vst [vmem:[%s231 + $0x498] sm:$0xff] %v4789
      %5047 = vst [vmem:[%s231 + $0x4a0] sm:$0xff] %v3925
      %5048 = vst [vmem:[%s231 + $0x4a8] sm:$0xff] %v4214
      %5049 = vst [vmem:[%s231 + $0x4b0] sm:$0xff] %v4503
      %5050 = vst [vmem:[%s231 + $0x4b8] sm:$0xff] %v4792
      %5051 = vst [vmem:[%s231 + $0x4c0] sm:$0xff] %v3930
      %5052 = vst [vmem:[%s231 + $0x4c8] sm:$0xff] %v4219
      %5053 = vst [vmem:[%s231 + $0x4d0] sm:$0xff] %v4508
      %5054 = vst [vmem:[%s231 + $0x4d8] sm:$0xff] %v4797
      %5055 = vst [vmem:[%s231 + $0x4e0] sm:$0xff] %v3933
      %5056 = vst [vmem:[%s231 + $0x4e8] sm:$0xff] %v4222
      %5057 = vst [vmem:[%s231 + $0x4f0] sm:$0xff] %v4511
      %5058 = vst [vmem:[%s231 + $0x4f8] sm:$0xff] %v4800
      %5059 = vst [vmem:[%s231 + $0x500] sm:$0xff] %v3938
      %5060 = vst [vmem:[%s231 + $0x508] sm:$0xff] %v4227
      %5061 = vst [vmem:[%s231 + $0x510] sm:$0xff] %v4516
      %5062 = vst [vmem:[%s231 + $0x518] sm:$0xff] %v4805
      %5063 = vst [vmem:[%s231 + $0x520] sm:$0xff] %v3941
      %5064 = vst [vmem:[%s231 + $0x528] sm:$0xff] %v4230
      %5065 = vst [vmem:[%s231 + $0x530] sm:$0xff] %v4519
      %5066 = vst [vmem:[%s231 + $0x538] sm:$0xff] %v4808
      %5067 = vst [vmem:[%s231 + $0x540] sm:$0xff] %v3946
      %5068 = vst [vmem:[%s231 + $0x548] sm:$0xff] %v4235
      %5069 = vst [vmem:[%s231 + $0x550] sm:$0xff] %v4524
      %5070 = vst [vmem:[%s231 + $0x558] sm:$0xff] %v4813
      %5071 = vst [vmem:[%s231 + $0x560] sm:$0xff] %v3949
      %5072 = vst [vmem:[%s231 + $0x568] sm:$0xff] %v4238
      %5073 = vst [vmem:[%s231 + $0x570] sm:$0xff] %v4527
      %5074 = vst [vmem:[%s231 + $0x578] sm:$0xff] %v4816
      %5075 = vst [vmem:[%s231 + $0x580] sm:$0xff] %v3954
      %5076 = vst [vmem:[%s231 + $0x588] sm:$0xff] %v4243
      %5077 = vst [vmem:[%s231 + $0x590] sm:$0xff] %v4532
      %5078 = vst [vmem:[%s231 + $0x598] sm:$0xff] %v4821
      %5079 = vst [vmem:[%s231 + $0x5a0] sm:$0xff] %v3957
      %5080 = vst [vmem:[%s231 + $0x5a8] sm:$0xff] %v4246
      %5081 = vst [vmem:[%s231 + $0x5b0] sm:$0xff] %v4535
      %5082 = vst [vmem:[%s231 + $0x5b8] sm:$0xff] %v4824
      %5083 = vst [vmem:[%s231 + $0x5c0] sm:$0xff] %v3962
      %5084 = vst [vmem:[%s231 + $0x5c8] sm:$0xff] %v4251
      %5085 = vst [vmem:[%s231 + $0x5d0] sm:$0xff] %v4540
      %5086 = vst [vmem:[%s231 + $0x5d8] sm:$0xff] %v4829
      %5087 = vst [vmem:[%s231 + $0x5e0] sm:$0xff] %v3965
      %5088 = vst [vmem:[%s231 + $0x5e8] sm:$0xff] %v4254
      %5089 = vst [vmem:[%s231 + $0x5f0] sm:$0xff] %v4543
      %5090 = vst [vmem:[%s231 + $0x5f8] sm:$0xff] %v4832
      %5091 = vst [vmem:[%s231 + $0x600] sm:$0xff] %v3970
      %5092 = vst [vmem:[%s231 + $0x608] sm:$0xff] %v4259
      %5093 = vst [vmem:[%s231 + $0x610] sm:$0xff] %v4548
      %5094 = vst [vmem:[%s231 + $0x618] sm:$0xff] %v4837
      %5095 = vst [vmem:[%s231 + $0x620] sm:$0xff] %v3973
      %5096 = vst [vmem:[%s231 + $0x628] sm:$0xff] %v4262
      %5097 = vst [vmem:[%s231 + $0x630] sm:$0xff] %v4551
      %5098 = vst [vmem:[%s231 + $0x638] sm:$0xff] %v4840
      %5099 = vst [vmem:[%s231 + $0x640] sm:$0xff] %v3978
      %5100 = vst [vmem:[%s231 + $0x648] sm:$0xff] %v4267
      %5101 = vst [vmem:[%s231 + $0x650] sm:$0xff] %v4556
      %5102 = vst [vmem:[%s231 + $0x658] sm:$0xff] %v4845
      %5103 = vst [vmem:[%s231 + $0x660] sm:$0xff] %v3981
      %5104 = vst [vmem:[%s231 + $0x668] sm:$0xff] %v4270
      %5105 = vst [vmem:[%s231 + $0x670] sm:$0xff] %v4559
      %5106 = vst [vmem:[%s231 + $0x678] sm:$0xff] %v4848
      %5107 = vst [vmem:[%s231 + $0x680] sm:$0xff] %v3986
      %5108 = vst [vmem:[%s231 + $0x688] sm:$0xff] %v4275
      %5109 = vst [vmem:[%s231 + $0x690] sm:$0xff] %v4564
      %5110 = vst [vmem:[%s231 + $0x698] sm:$0xff] %v4853
      %5111 = vst [vmem:[%s231 + $0x6a0] sm:$0xff] %v3989
      %5112 = vst [vmem:[%s231 + $0x6a8] sm:$0xff] %v4278
      %5113 = vst [vmem:[%s231 + $0x6b0] sm:$0xff] %v4567
      %5114 = vst [vmem:[%s231 + $0x6b8] sm:$0xff] %v4856
      %5115 = vst [vmem:[%s231 + $0x6c0] sm:$0xff] %v3994
      %5116 = vst [vmem:[%s231 + $0x6c8] sm:$0xff] %v4283
      %5117 = vst [vmem:[%s231 + $0x6d0] sm:$0xff] %v4572
      %5118 = vst [vmem:[%s231 + $0x6d8] sm:$0xff] %v4861
      %5119 = vst [vmem:[%s231 + $0x6e0] sm:$0xff] %v3997
      %5120 = vst [vmem:[%s231 + $0x6e8] sm:$0xff] %v4286
      %5121 = vst [vmem:[%s231 + $0x6f0] sm:$0xff] %v4575
      %5122 = vst [vmem:[%s231 + $0x6f8] sm:$0xff] %v4864
      %5123 = vst [vmem:[%s231 + $0x700] sm:$0xff] %v4002
      %5124 = vst [vmem:[%s231 + $0x708] sm:$0xff] %v4291
      %5125 = vst [vmem:[%s231 + $0x710] sm:$0xff] %v4580
      %5126 = vst [vmem:[%s231 + $0x718] sm:$0xff] %v4869
      %5127 = vst [vmem:[%s231 + $0x720] sm:$0xff] %v4005
      %5128 = vst [vmem:[%s231 + $0x728] sm:$0xff] %v4294
      %5129 = vst [vmem:[%s231 + $0x730] sm:$0xff] %v4583
      %5130 = vst [vmem:[%s231 + $0x738] sm:$0xff] %v4872
      %5131 = vst [vmem:[%s231 + $0x740] sm:$0xff] %v4010
      %5132 = vst [vmem:[%s231 + $0x748] sm:$0xff] %v4299
      %5133 = vst [vmem:[%s231 + $0x750] sm:$0xff] %v4588
      %5134 = vst [vmem:[%s231 + $0x758] sm:$0xff] %v4877
      %5135 = vst [vmem:[%s231 + $0x760] sm:$0xff] %v4013
      %5136 = vst [vmem:[%s231 + $0x768] sm:$0xff] %v4302
      %5137 = vst [vmem:[%s231 + $0x770] sm:$0xff] %v4591
      %5138 = vst [vmem:[%s231 + $0x778] sm:$0xff] %v4880
      %5139 = vst [vmem:[%s231 + $0x780] sm:$0xff] %v4018
      %5140 = vst [vmem:[%s231 + $0x788] sm:$0xff] %v4307
      %5141 = vst [vmem:[%s231 + $0x790] sm:$0xff] %v4596
      %5142 = vst [vmem:[%s231 + $0x798] sm:$0xff] %v4885
      %5143 = vst [vmem:[%s231 + $0x7a0] sm:$0xff] %v4021
      %5144 = vst [vmem:[%s231 + $0x7a8] sm:$0xff] %v4310
      %5145 = vst [vmem:[%s231 + $0x7b0] sm:$0xff] %v4599
      %5146 = vst [vmem:[%s231 + $0x7b8] sm:$0xff] %v4888
      %5147 = vst [vmem:[%s231 + $0x7c0] sm:$0xff] %v4026
      %5148 = vst [vmem:[%s231 + $0x7c8] sm:$0xff] %v4315
      %5149 = vst [vmem:[%s231 + $0x7d0] sm:$0xff] %v4604
      %5150 = vst [vmem:[%s231 + $0x7d8] sm:$0xff] %v4893
      %5151 = vst [vmem:[%s231 + $0x7e0] sm:$0xff] %v4029
      %5152 = vst [vmem:[%s231 + $0x7e8] sm:$0xff] %v4318
      %5153 = vst [vmem:[%s231 + $0x7f0] sm:$0xff] %v4607
      %5154 = vst [vmem:[%s231 + $0x7f8] sm:$0xff] %v4896
      %s5155 = smul.u32 64, %s16
      %p5156 = scmp.lt.s32.totalorder %s5155, 255
      %s5157 = scalar_select %p5156, %s5155, 255
      %s5158 = smul.addr %s5157, 4
      %s5159 = smul.addr %s5158, 8
      %s5160 = scalar_lea.vmem %s5, %s5159
      // Predicated region
      $region41: #{instance_segmentation_heads.3} parent=39 // pred_check
        %p5161 = pneg %p144
      $region42: #{instance_segmentation_heads.3} parent=39 // pred_check_branch
        %5163 = sbr.rel (%p5161) target = $region44
      $region43: #{instance_segmentation_heads.3} parent=39 // pred_region
        %s5164 = smul.u32 64, %s16
      $region44: #{instance_segmentation_heads.3} parent=39 // pred_fallthru
        _
    $region40: #{instance_segmentation_heads.3} parent=5 // pred_fallthru
      _
    %p5165 = scmp.le.s32.totalorder 2, %s11
    // Predicated region
    $region45: #{instance_segmentation_heads.3} parent=5 // pred_check
      %p5166 = pneg %p5165
    $region46: #{instance_segmentation_heads.3} parent=5 // pred_check_branch
      %5168 = sbr.rel (%p5166) target = $region48
    $region47: #{instance_segmentation_heads.3} parent=5 // pred_region
      %s5169 = ssub.s32 %s11, 2
      // Predicated region
      $region49: #{instance_segmentation_heads.3} parent=47 // pred_check
        %p5170 = pneg %p150
      $region50: #{instance_segmentation_heads.3} parent=47 // pred_check_branch
        %5172 = sbr.rel (%p5170) target = $region52
      $region51: #{instance_segmentation_heads.3} parent=47 // pred_region
        %s5173 = smul.u32 64, %s17
        %p5174 = scmp.lt.s32.totalorder %s5173, 255
        %s5175 = scalar_select %p5174, %s5173, 255
        %s5176 = smul.addr %s5175, 4
        %s5177 = smul.addr %s5176, 8
        %s5178 = scalar_lea.vmem %s5, %s5177
      $region52: #{instance_segmentation_heads.3} parent=47 // pred_fallthru
        _
    $region48: #{instance_segmentation_heads.3} parent=5 // pred_fallthru
      _
  $region6: #{instance_segmentation_heads.3} parent=0 // loop_footer
    %s15 = sadd.s32 1, %s11
  $region7: #{instance_segmentation_heads.3} parent=0 // loop_footer_branch
    %10 = sbr.rel target = $region3
  $region8: #{instance_segmentation_heads.3} parent=0 // loop_exit
    _

</llo_original>
